<compile_context>
chip_gen: v6e
topology: v6e:2x2x1
jax: 0.10.0
libtpu: 0.0.40
codegen_flags: <defaults>
</compile_context>

<pallas_src>
import functools
import numpy as np
import jax
import jax.numpy as jnp
from jax import lax
from jax.experimental import pallas as pl
from jax.experimental.pallas import tpu as pltpu

LANE = 128
_LB = 16          # left border width of the conv2 pad scratch (bf16 tile aligned)


def _round_up(v, m):
    return (v + m - 1) // m * m


def _pad_to(a, shape):
    return jnp.pad(a, [(0, t - s) for s, t in zip(a.shape, shape)])


# ------------------------------- kernel -------------------------------------

def _bottleneck_kernel(*refs, stride, has_proj, pad_bottom, lb):
    """Grid = (batch, row_block).  One output row block per step; the whole
    residual block (conv1+bn1+relu -> conv2+bn2+relu -> conv3+bn3 -> +shortcut
    -> relu) is fused in VMEM.  The wrapper pre-pads x with the conv2 zero
    rows (1 on top, `pad_bottom` on the bottom) so every step reads a
    fixed-size, in-bounds row window; image-boundary rows of o1 are re-zeroed
    in the scratch (bn1 bias would otherwise leak through the zero padding)."""
    if has_proj:
        (x_ref, w1_ref, s1_ref, b1_ref, w2_ref, s2_ref, b2_ref,
         w3_ref, s3_ref, b3_ref, ws_ref, ss_ref, bs_ref,
         out_ref, pad_ref) = refs
    else:
        (x_ref, w1_ref, s1_ref, b1_ref, w2_ref, s2_ref, b2_ref,
         w3_ref, s3_ref, b3_ref, out_ref, pad_ref) = refs
        ws_ref = ss_ref = bs_ref = None

    f32, bf16 = jnp.float32, jnp.bfloat16
    W, Cin = x_ref.shape[2], x_ref.shape[3]
    P = w1_ref.shape[1]                       # padded planes (mult of 128)
    C4 = w3_ref.shape[1]                      # padded 4*planes
    THo, Wo = out_ref.shape[1], out_ref.shape[2]
    TH_pad = pad_ref.shape[0]                 # = (THo-1)*stride + 3

    hb = pl.program_id(1)
    n_hb = pl.num_programs(1)
    # First conv2-padded row handled by this block.  Because x was pre-padded
    # with one zero row on top, padded-row j of the conv == row j of x_ref.
    j0 = pl.multiple_of(hb * (THo * stride), THo * stride)

    # ---- conv1 (1x1, no bias) + bn1 + relu over this block's rows + halo ----
    xw = x_ref[0, pl.ds(j0, TH_pad), :, :]                    # (TH_pad, W, Cin)
    o1 = jnp.dot(xw.reshape(TH_pad * W, Cin).astype(bf16), w1_ref[...],
                 preferred_element_type=f32)
    o1 = jnp.maximum(o1 * s1_ref[...] + b1_ref[...], 0.0)
    o1 = o1.astype(bf16).reshape(TH_pad, W, P)                # bf16 from here

    # ---- fill the bf16 conv2 pad scratch.  The interior store starts at
    # sublane column `lb` (multiple of 16 -> aligned for bf16 tiling); only
    # the two 1-wide border columns need zeroing each step (scratch persists
    # across grid steps / per megacore core, so do NOT guard this on step 0).
    zcol = jnp.zeros((TH_pad, 1, P), bf16)
    pad_ref[:, lb - 1:lb, :] = zcol                           # left zero pad
    pad_ref[:, lb + W:lb + W + 1, :] = zcol                   # right zero pad
    pad_ref[:, lb:lb + W, :] = o1                             # aligned interior

    # Image-boundary rows: the conv's zero-pad rows went through bn1+relu
    # above (-> relu(b1) != 0); overwrite them with true zeros.
    @pl.when(hb == 0)
    def _():
        pad_ref[0:1, lb - 1:lb + W + 1, :] = jnp.zeros((1, W + 2, P), bf16)

    if pad_bottom > 0:
        @pl.when(hb == n_hb - 1)
        def _():
            pad_ref[TH_pad - pad_bottom:TH_pad, lb - 1:lb + W + 1, :] = (
                jnp.zeros((pad_bottom, W + 2, P), bf16))

    # ---- conv2 (3x3, pad=1, stride) + bn2 + relu: one bf16 im2col matmul ----
    patches = []
    for kh in range(3):
        for kw in range(3):
            c0 = lb - 1 + kw
            if stride == 1:
                p = pad_ref[kh:kh + THo, c0:c0 + Wo, :]
            else:
                # TODO(synk): strided-gather path not exercised by __main__.
                p = pad_ref[pl.ds(kh, THo, stride), pl.ds(c0, Wo, stride), :]
            patches.append(p.reshape(THo * Wo, P))
    im2col = jnp.concatenate(patches, axis=-1)                # (THo*Wo, 9P) bf16
    o2 = jnp.dot(im2col, w2_ref[...], preferred_element_type=f32)
    o2 = jnp.maximum(o2 * s2_ref[...] + b2_ref[...], 0.0).astype(bf16)

    # ---- shortcut first; conv3+bn3 is accumulated into it ----
    if has_proj:
        if stride == 1:
            xs = x_ref[0, pl.ds(j0 + 1, THo), :, :]
        else:
            xs = x_ref[0, pl.ds(j0 + 1, THo, stride), pl.ds(0, Wo, stride), :]
        acc = (jnp.dot(xs.reshape(THo * Wo, Cin).astype(bf16), ws_ref[...],
                       preferred_element_type=f32)
               * ss_ref[...] + bs_ref[...])
    else:
        # identity shortcut kept in f32 (Cin_p == C4_p, asserted in wrapper)
        acc = x_ref[0, pl.ds(j0 + 1, THo), :, :].reshape(THo * Wo, C4)

    acc = acc + (jnp.dot(o2, w3_ref[...], preferred_element_type=f32)
                 * s3_ref[...] + b3_ref[...])
    out_ref[...] = jnp.maximum(acc, 0.0).reshape(1, THo, Wo, C4).astype(
        out_ref.dtype)


# ------------------------------- wrapper -------------------------------------

def _vmem_estimate(THo, *, stride, H_x, W, Wo, Cin_p, P_p, C4_p, x_bytes,
                   has_proj, lb):
    """Rough per-step working-set bytes for row-block height THo."""
    TH_pad = (THo - 1) * stride + 3
    est = H_x * W * Cin_p * x_bytes                    # resident input image
    w_bytes = (Cin_p * P_p + 9 * P_p * P_p + P_p * C4_p) * 2
    if has_proj:
        w_bytes += Cin_p * C4_p * 2
    est += w_bytes                                     # weights (single buf)
    est += TH_pad * (lb + W + 1) * P_p * 2             # bf16 pad scratch
    est += TH_pad * W * P_p * 4                        # o1 f32 (transient)
    est += THo * Wo * 9 * P_p * 2                      # bf16 im2col
    est += THo * Wo * P_p * (4 + 2)                    # o2 f32 + bf16
    est += THo * Wo * C4_p * 4                         # accumulator
    est += 2 * THo * Wo * C4_p * 4                     # double-buffered out
    return est


def bottleneck_pallas(x, params, *, stride=1, has_proj=True, row_block=None,
                      out_dtype=jnp.float32):
    """x: (N, H, W, Cin) NHWC float32.  params: 12-tuple (see __main__).
    Inference-mode BatchNorm (running stats folded into scale/bias)."""
    N, H, W, Cin = x.shape
    w1, s1, b1, w2, s2, b2, w3, s3, b3, ws, ss, bs = params
    P, C4 = w1.shape[1], w3.shape[1]
    if not has_proj:
        assert stride == 1 and Cin == C4, (
            "identity shortcut requires stride==1 and in_planes == 4*planes")
    Ho = (H - 1) // stride + 1
    Wo = (W - 1) // stride + 1

    # Channel dims -> multiples of 128 (lane-dense vregs, unmasked stores).
    Cin_p, P_p, C4_p = (_round_up(c, LANE) for c in (Cin, P, C4))
    if not has_proj:                   # identity add needs matching padded dims
        Cin_p = C4_p = max(Cin_p, C4_p)

    f32, bf16 = jnp.float32, jnp.bfloat16
    # x is only ever a matmul operand when the shortcut is a projection, so
    # DMA/hold it in bf16 there; keep f32 for the identity residual add.
    x_dtype = bf16 if has_proj else f32

    # Pre-pad x rows with the conv2 zero padding so every row block reads a
    # fixed-size, in-bounds window (1 top row; pad_bottom bottom rows).
    pad_bottom = max(0, (Ho - 1) * stride + 2 - H)
    H_x = H + 1 + pad_bottom
    x_p = jnp.pad(x.astype(x_dtype),
                  ((0, 0), (1, pad_bottom), (0, 0), (0, Cin_p - Cin)))

    w1_p = _pad_to(w1, (Cin_p, P_p)).astype(bf16)
    w2_p = _pad_to(w2, (9, P_p, P_p)).reshape(9 * P_p, P_p).astype(bf16)
    w3_p = _pad_to(w3, (P_p, C4_p)).astype(bf16)
    # NOTE: padded scale/bias lanes MUST stay exactly zero -- that is what
    # keeps padded channels zero through BN+ReLU+residual.
    s1_p, b1_p = _pad_to(s1, (1, P_p)), _pad_to(b1, (1, P_p))
    s2_p, b2_p = _pad_to(s2, (1, P_p)), _pad_to(b2, (1, P_p))
    s3_p, b3_p = _pad_to(s3, (1, C4_p)), _pad_to(b3, (1, C4_p))

    operands = [x_p, w1_p, s1_p, b1_p, w2_p, s2_p, b2_p, w3_p, s3_p, b3_p]
    if has_proj:
        operands += [_pad_to(ws, (Cin_p, C4_p)).astype(bf16),
                     _pad_to(ss, (1, C4_p)), _pad_to(bs, (1, C4_p))]

    # ---- per-generation VMEM budget -> row-block height + explicit limit ----
    try:
        vmem_cap = pltpu.get_tpu_info().vmem_capacity_bytes
    except Exception:
        vmem_cap = 64 * 1024 * 1024            # v7x-safe fallback
    vmem_limit = min(int(vmem_cap * 0.85), 100 * 1024 * 1024)
    budget = int(vmem_limit * 0.75)
    est = functools.partial(
        _vmem_estimate, stride=stride, H_x=H_x, W=W, Wo=Wo, Cin_p=Cin_p,
        P_p=P_p, C4_p=C4_p, x_bytes=2 if has_proj else 4, has_proj=has_proj,
        lb=_LB)
    if row_block is None:
        row_block = 1
        for d in range(1, Ho + 1):             # largest divisor that fits
            if Ho % d == 0 and est(d) <= budget:
                row_block = d
    assert Ho % row_block == 0, "row_block must divide the output height"
    n_hb = Ho // row_block
    TH_pad = (row_block - 1) * stride + 3

    kernel = functools.partial(_bottleneck_kernel, stride=stride,
                               has_proj=has_proj, pad_bottom=pad_bottom,
                               lb=_LB)

    x_spec = pl.BlockSpec((1, H_x, W, Cin_p), lambda n, hb: (n, 0, 0, 0))
    out_spec = pl.BlockSpec((1, row_block, Wo, C4_p),
                            lambda n, hb: (n, hb, 0, 0))

    def call(single_buffer_weights):
        def const_spec(a):
            nd = a.ndim
            if single_buffer_weights:
                # Grid-invariant operands: no point double-buffering them.
                return pl.BlockSpec(a.shape,
                                    lambda n, hb, _nd=nd: (0,) * _nd,
                                    pipeline_mode=pl.Buffered(buffer_count=1))
            return pl.BlockSpec(a.shape, lambda n, hb, _nd=nd: (0,) * _nd)

        return pl.pallas_call(
            kernel,
            out_shape=jax.ShapeDtypeStruct((N, Ho, Wo, C4_p), out_dtype),
            grid=(N, n_hb),
            in_specs=[x_spec] + [const_spec(a) for a in operands[1:]],
            out_specs=out_spec,
            scratch_shapes=[pltpu.VMEM((TH_pad, _LB + W + 1, P_p), bf16)],
            compiler_params=pltpu.CompilerParams(
                dimension_semantics=("parallel", "parallel"),
                vmem_limit_bytes=vmem_limit),
        )(*operands)

    try:
        out = jax.block_until_ready(call(True))
    except Exception:
        # pipeline_mode=pl.Buffered(1) is not supported on every jax version;
        # fall back to default double buffering of the weight operands.
        out = call(False)
    return out[..., :C4]


# ----------------------- reference + parameter setup ------------------------

def fold_bn(gamma, beta, mean, var, eps=1e-5):
    scale = gamma / jnp.sqrt(var + eps)
    bias = beta - mean * scale
    return scale[None, :], bias[None, :]


def ref_forward(x, params, w2_hwio, *, stride, has_proj):
    """Pure-JAX f32 reference of the Bottleneck forward (inference BN)."""
    w1, s1, b1, w2, s2, b2, w3, s3, b3, ws, ss, bs = params
    hi = lax.Precision.HIGHEST
    o1 = jax.nn.relu(jnp.einsum('nhwc,cp->nhwp', x, w1, precision=hi)
                     * s1[0] + b1[0])
    o2 = lax.conv_general_dilated(o1, w2_hwio, (stride, stride),
                                  ((1, 1), (1, 1)),
                                  dimension_numbers=('NHWC', 'HWIO', 'NHWC'),
                                  precision=hi)
    o2 = jax.nn.relu(o2 * s2[0] + b2[0])
    o3 = jnp.einsum('nhwc,cp->nhwp', o2, w3, precision=hi) * s3[0] + b3[0]
    if has_proj:
        xs = x[:, ::stride, ::stride, :]
        sc = jnp.einsum('nhwc,cp->nhwp', xs, ws, precision=hi) * ss[0] + bs[0]
    else:
        sc = x
    return jax.nn.relu(o3 + sc)


if __name__ == "__main__":
    key = jax.random.PRNGKey(0)

    def make_params(key, in_planes, planes):
        C4 = 4 * planes
        ks = jax.random.split(key, 8)

        def conv_w(k, cin, cout):
            return 0.2 * jax.random.normal(k, (cin, cout), jnp.float32)

        def bn(k, c):
            k1, k2, k3, k4 = jax.random.split(k, 4)
            gamma = 1.0 + 0.1 * jax.random.normal(k1, (c,), jnp.float32)
            beta = 0.1 * jax.random.normal(k2, (c,), jnp.float32)
            mean = 0.1 * jax.random.normal(k3, (c,), jnp.float32)
            var = 1.0 + 0.1 * jax.random.uniform(k4, (c,), jnp.float32)
            return fold_bn(gamma, beta, mean, var)

        w1 = conv_w(ks[0], in_planes, planes)
        s1, b1 = bn(ks[1], planes)
        w2 = 0.2 * jax.random.normal(ks[2], (9, planes, planes), jnp.float32)
        s2, b2 = bn(ks[3], planes)
        w3 = conv_w(ks[4], planes, C4)
        s3, b3 = bn(ks[5], C4)
        ws = conv_w(ks[6], in_planes, C4)
        ss, bs = bn(ks[7], C4)
        return (w1, s1, b1, w2, s2, b2, w3, s3, b3, ws, ss, bs)

    def run_case(k, *, N, H, W, in_planes, planes, stride, row_block):
        kx, kp = jax.random.split(k)
        C4 = 4 * planes
        has_proj = (stride != 1) or (in_planes != C4)
        x = jax.random.normal(kx, (N, H, W, in_planes), jnp.float32)
        params = make_params(kp, in_planes, planes)
        out = bottleneck_pallas(x, params, stride=stride, has_proj=has_proj,
                                row_block=row_block)
        out = jax.block_until_ready(out)
        ref = ref_forward(x, params,
                          params[3].reshape(3, 3, planes, planes),
                          stride=stride, has_proj=has_proj)
        # Kernel uses single-pass bf16 MXU matmuls (f32 accumulate); the
        # reference is full f32, so allow bf16-level tolerance.
        np.testing.assert_allclose(np.asarray(out), np.asarray(ref),
                                   rtol=5e-2, atol=5e-2)

    k1, k2 = jax.random.split(key)
    # projection shortcut; two row blocks exercise the halo/boundary logic
    run_case(k1, N=2, H=16, W=16, in_planes=16, planes=16, stride=1,
             row_block=8)
    # identity shortcut (in_planes == 4*planes); automatic row-block selection
    run_case(k2, N=2, H=8, W=8, in_planes=32, planes=8, stride=1,
             row_block=None)
    print("KERNEL_OK")
</pallas_src>

<mosaic_0001>
module attributes {stable_mosaic.version = 11 : i64} {
  func.func @_bottleneck_kernel(%arg0: i32, %arg1: i32, %arg2: memref<1x18x16x128xbf16, #tpu.memory_space<vmem>>, %arg3: memref<128x128xbf16, #tpu.memory_space<vmem>>, %arg4: memref<1x128xf32, #tpu.memory_space<vmem>>, %arg5: memref<1x128xf32, #tpu.memory_space<vmem>>, %arg6: memref<1152x128xbf16, #tpu.memory_space<vmem>>, %arg7: memref<1x128xf32, #tpu.memory_space<vmem>>, %arg8: memref<1x128xf32, #tpu.memory_space<vmem>>, %arg9: memref<128x128xbf16, #tpu.memory_space<vmem>>, %arg10: memref<1x128xf32, #tpu.memory_space<vmem>>, %arg11: memref<1x128xf32, #tpu.memory_space<vmem>>, %arg12: memref<128x128xbf16, #tpu.memory_space<vmem>>, %arg13: memref<1x128xf32, #tpu.memory_space<vmem>>, %arg14: memref<1x128xf32, #tpu.memory_space<vmem>>, %arg15: memref<1x8x16x128xf32, #tpu.memory_space<vmem>>, %arg16: memref<10x33x128xbf16, #tpu.memory_space<vmem>>) attributes {dimension_semantics = [#tpu.dimension_semantics<parallel>, #tpu.dimension_semantics<parallel>], iteration_bounds = array<i64: 2, 2>, scalar_prefetch = 0 : i64, scratch_operands = 1 : i64, tpu.core_type = #tpu.core_type<tc>, window_params = [{transform_indices = @transform_0, window_bounds = array<i64: 1, 18, 16, 128>}, {pipeline_mode = #tpu.pipeline_mode<synchronous>, transform_indices = @transform_1, window_bounds = array<i64: 128, 128>}, {pipeline_mode = #tpu.pipeline_mode<synchronous>, transform_indices = @transform_2, window_bounds = array<i64: 1, 128>}, {pipeline_mode = #tpu.pipeline_mode<synchronous>, transform_indices = @transform_3, window_bounds = array<i64: 1, 128>}, {pipeline_mode = #tpu.pipeline_mode<synchronous>, transform_indices = @transform_4, window_bounds = array<i64: 1152, 128>}, {pipeline_mode = #tpu.pipeline_mode<synchronous>, transform_indices = @transform_5, window_bounds = array<i64: 1, 128>}, {pipeline_mode = #tpu.pipeline_mode<synchronous>, transform_indices = @transform_6, window_bounds = array<i64: 1, 128>}, {pipeline_mode = #tpu.pipeline_mode<synchronous>, transform_indices = @transform_7, window_bounds = array<i64: 128, 128>}, {pipeline_mode = #tpu.pipeline_mode<synchronous>, transform_indices = @transform_8, window_bounds = array<i64: 1, 128>}, {pipeline_mode = #tpu.pipeline_mode<synchronous>, transform_indices = @transform_9, window_bounds = array<i64: 1, 128>}, {pipeline_mode = #tpu.pipeline_mode<synchronous>, transform_indices = @transform_10, window_bounds = array<i64: 128, 128>}, {pipeline_mode = #tpu.pipeline_mode<synchronous>, transform_indices = @transform_11, window_bounds = array<i64: 1, 128>}, {pipeline_mode = #tpu.pipeline_mode<synchronous>, transform_indices = @transform_12, window_bounds = array<i64: 1, 128>}, {transform_indices = @transform_13, window_bounds = array<i64: 1, 8, 16, 128>}]} {
    %c8_i32 = arith.constant 8 : i32
    %0 = arith.muli %arg1, %c8_i32 : i32
    %1 = tpu.assume_multiple %0, 8 : i32
    %c0 = arith.constant 0 : index
    %2 = arith.index_cast %1 : i32 to index
    %c0_0 = arith.constant 0 : index
    %c0_1 = arith.constant 0 : index
    %3 = vector.load %arg2[%c0, %2, %c0_0, %c0_1] : memref<1x18x16x128xbf16, #tpu.memory_space<vmem>>, vector<1x10x16x128xbf16>
    %4 = vector.shape_cast %3 : vector<1x10x16x128xbf16> to vector<10x16x128xbf16>
    %5 = vector.shape_cast %4 : vector<10x16x128xbf16> to vector<160x128xbf16>
    %c0_2 = arith.constant 0 : index
    %c0_3 = arith.constant 0 : index
    %6 = vector.load %arg3[%c0_2, %c0_3] : memref<128x128xbf16, #tpu.memory_space<vmem>>, vector<128x128xbf16>
    %cst = arith.constant dense<0.000000e+00> : vector<160x128xf32>
    %7 = tpu.matmul %5, %6, %cst {dimension_numbers = #tpu.dot_dimension_numbers<[1], [0], [0], [1], [0, 0, 1, 1], [], []>} : vector<160x128xbf16>, vector<128x128xbf16>, vector<160x128xf32> -> vector<160x128xf32>
    %c0_4 = arith.constant 0 : index
    %c0_5 = arith.constant 0 : index
    %8 = vector.load %arg4[%c0_4, %c0_5] : memref<1x128xf32, #tpu.memory_space<vmem>>, vector<1x128xf32>
    %9 = vector.broadcast %8 : vector<1x128xf32> to vector<160x128xf32>
    %10 = arith.mulf %7, %9 : vector<160x128xf32>
    %c0_6 = arith.constant 0 : index
    %c0_7 = arith.constant 0 : index
    %11 = vector.load %arg5[%c0_6, %c0_7] : memref<1x128xf32, #tpu.memory_space<vmem>>, vector<1x128xf32>
    %12 = vector.broadcast %11 : vector<1x128xf32> to vector<160x128xf32>
    %13 = arith.addf %10, %12 : vector<160x128xf32>
    %cst_8 = arith.constant 0.000000e+00 : f32
    %14 = vector.broadcast %cst_8 : f32 to vector<160x128xf32>
    %15 = arith.maximumf %13, %14 : vector<160x128xf32>
    %16 = arith.truncf %15 : vector<160x128xf32> to vector<160x128xbf16>
    %17 = vector.shape_cast %16 : vector<160x128xbf16> to vector<10x16x128xbf16>
    %cst_9 = arith.constant 0.000000e+00 : bf16
    %18 = vector.broadcast %cst_9 : bf16 to vector<10x1x128xbf16>
    %c0_10 = arith.constant 0 : index
    %c15 = arith.constant 15 : index
    %c0_11 = arith.constant 0 : index
    %19 = vector.load %arg16[%c0_10, %c15, %c0_11] : memref<10x33x128xbf16, #tpu.memory_space<vmem>>, vector<10x1x128xbf16>
    tpu.vector_store %arg16[%c0_10, %c15, %c0_11], %18 {strides = array<i32>} : memref<10x33x128xbf16, #tpu.memory_space<vmem>>, vector<10x1x128xbf16>,
    %c0_12 = arith.constant 0 : index
    %c32 = arith.constant 32 : index
    %c0_13 = arith.constant 0 : index
    %20 = vector.load %arg16[%c0_12, %c32, %c0_13] : memref<10x33x128xbf16, #tpu.memory_space<vmem>>, vector<10x1x128xbf16>
    tpu.vector_store %arg16[%c0_12, %c32, %c0_13], %18 {strides = array<i32>} : memref<10x33x128xbf16, #tpu.memory_space<vmem>>, vector<10x1x128xbf16>,
    %c0_14 = arith.constant 0 : index
    %c16 = arith.constant 16 : index
    %c0_15 = arith.constant 0 : index
    %21 = vector.load %arg16[%c0_14, %c16, %c0_15] : memref<10x33x128xbf16, #tpu.memory_space<vmem>>, vector<10x16x128xbf16>
    tpu.vector_store %arg16[%c0_14, %c16, %c0_15], %17 {strides = array<i32>} : memref<10x33x128xbf16, #tpu.memory_space<vmem>>, vector<10x16x128xbf16>,
    %c0_i32 = arith.constant 0 : i32
    %22 = arith.cmpi eq, %arg1, %c0_i32 : i32
    %23 = arith.extui %22 : i1 to i32
    %c0_i32_16 = arith.constant 0 : i32
    %24 = arith.cmpi ne, %23, %c0_i32_16 : i32
    scf.if %24 {
      %cst_73 = arith.constant 0.000000e+00 : bf16
      %84 = vector.broadcast %cst_73 : bf16 to vector<1x18x128xbf16>
      %c0_74 = arith.constant 0 : index
      %c15_75 = arith.constant 15 : index
      %c0_76 = arith.constant 0 : index
      %85 = vector.load %arg16[%c0_74, %c15_75, %c0_76] : memref<10x33x128xbf16, #tpu.memory_space<vmem>>, vector<1x18x128xbf16>
      tpu.vector_store %arg16[%c0_74, %c15_75, %c0_76], %84 {strides = array<i32>} : memref<10x33x128xbf16, #tpu.memory_space<vmem>>, vector<1x18x128xbf16>,
    } else {
    }
    %c1_i32 = arith.constant 1 : i32
    %25 = arith.cmpi eq, %arg1, %c1_i32 : i32
    %26 = arith.extui %25 : i1 to i32
    %c0_i32_17 = arith.constant 0 : i32
    %27 = arith.cmpi ne, %26, %c0_i32_17 : i32
    scf.if %27 {
      %cst_73 = arith.constant 0.000000e+00 : bf16
      %84 = vector.broadcast %cst_73 : bf16 to vector<1x18x128xbf16>
      %c9 = arith.constant 9 : index
      %c15_74 = arith.constant 15 : index
      %c0_75 = arith.constant 0 : index
      %85 = vector.load %arg16[%c9, %c15_74, %c0_75] : memref<10x33x128xbf16, #tpu.memory_space<vmem>>, vector<1x18x128xbf16>
      tpu.vector_store %arg16[%c9, %c15_74, %c0_75], %84 {strides = array<i32>} : memref<10x33x128xbf16, #tpu.memory_space<vmem>>, vector<1x18x128xbf16>,
    } else {
    }
    %c0_18 = arith.constant 0 : index
    %c15_19 = arith.constant 15 : index
    %c0_20 = arith.constant 0 : index
    %28 = vector.load %arg16[%c0_18, %c15_19, %c0_20] : memref<10x33x128xbf16, #tpu.memory_space<vmem>>, vector<8x16x128xbf16>
    %29 = vector.shape_cast %28 : vector<8x16x128xbf16> to vector<128x128xbf16>
    %c0_21 = arith.constant 0 : index
    %c16_22 = arith.constant 16 : index
    %c0_23 = arith.constant 0 : index
    %30 = vector.load %arg16[%c0_21, %c16_22, %c0_23] : memref<10x33x128xbf16, #tpu.memory_space<vmem>>, vector<8x16x128xbf16>
    %31 = vector.shape_cast %30 : vector<8x16x128xbf16> to vector<128x128xbf16>
    %c0_24 = arith.constant 0 : index
    %c17 = arith.constant 17 : index
    %c0_25 = arith.constant 0 : index
    %32 = vector.load %arg16[%c0_24, %c17, %c0_25] : memref<10x33x128xbf16, #tpu.memory_space<vmem>>, vector<8x16x128xbf16>
    %33 = vector.shape_cast %32 : vector<8x16x128xbf16> to vector<128x128xbf16>
    %c1 = arith.constant 1 : index
    %c15_26 = arith.constant 15 : index
    %c0_27 = arith.constant 0 : index
    %34 = vector.load %arg16[%c1, %c15_26, %c0_27] : memref<10x33x128xbf16, #tpu.memory_space<vmem>>, vector<8x16x128xbf16>
    %35 = vector.shape_cast %34 : vector<8x16x128xbf16> to vector<128x128xbf16>
    %c1_28 = arith.constant 1 : index
    %c16_29 = arith.constant 16 : index
    %c0_30 = arith.constant 0 : index
    %36 = vector.load %arg16[%c1_28, %c16_29, %c0_30] : memref<10x33x128xbf16, #tpu.memory_space<vmem>>, vector<8x16x128xbf16>
    %37 = vector.shape_cast %36 : vector<8x16x128xbf16> to vector<128x128xbf16>
    %c1_31 = arith.constant 1 : index
    %c17_32 = arith.constant 17 : index
    %c0_33 = arith.constant 0 : index
    %38 = vector.load %arg16[%c1_31, %c17_32, %c0_33] : memref<10x33x128xbf16, #tpu.memory_space<vmem>>, vector<8x16x128xbf16>
    %39 = vector.shape_cast %38 : vector<8x16x128xbf16> to vector<128x128xbf16>
    %c2 = arith.constant 2 : index
    %c15_34 = arith.constant 15 : index
    %c0_35 = arith.constant 0 : index
    %40 = vector.load %arg16[%c2, %c15_34, %c0_35] : memref<10x33x128xbf16, #tpu.memory_space<vmem>>, vector<8x16x128xbf16>
    %41 = vector.shape_cast %40 : vector<8x16x128xbf16> to vector<128x128xbf16>
    %c2_36 = arith.constant 2 : index
    %c16_37 = arith.constant 16 : index
    %c0_38 = arith.constant 0 : index
    %42 = vector.load %arg16[%c2_36, %c16_37, %c0_38] : memref<10x33x128xbf16, #tpu.memory_space<vmem>>, vector<8x16x128xbf16>
    %43 = vector.shape_cast %42 : vector<8x16x128xbf16> to vector<128x128xbf16>
    %c2_39 = arith.constant 2 : index
    %c17_40 = arith.constant 17 : index
    %c0_41 = arith.constant 0 : index
    %44 = vector.load %arg16[%c2_39, %c17_40, %c0_41] : memref<10x33x128xbf16, #tpu.memory_space<vmem>>, vector<8x16x128xbf16>
    %45 = vector.shape_cast %44 : vector<8x16x128xbf16> to vector<128x128xbf16>
    %46 = tpu.concatenate %29, %31, %33, %35, %37, %39, %41, %43, %45 in 1 : vector<128x128xbf16>, vector<128x128xbf16>, vector<128x128xbf16>, vector<128x128xbf16>, vector<128x128xbf16>, vector<128x128xbf16>, vector<128x128xbf16>, vector<128x128xbf16>, vector<128x128xbf16> -> vector<128x1152xbf16>
    %c0_42 = arith.constant 0 : index
    %c0_43 = arith.constant 0 : index
    %47 = vector.load %arg6[%c0_42, %c0_43] : memref<1152x128xbf16, #tpu.memory_space<vmem>>, vector<1152x128xbf16>
    %cst_44 = arith.constant dense<0.000000e+00> : vector<128x128xf32>
    %48 = tpu.matmul %46, %47, %cst_44 {dimension_numbers = #tpu.dot_dimension_numbers<[1], [0], [0], [1], [0, 0, 1, 1], [], []>} : vector<128x1152xbf16>, vector<1152x128xbf16>, vector<128x128xf32> -> vector<128x128xf32>
    %c0_45 = arith.constant 0 : index
    %c0_46 = arith.constant 0 : index
    %49 = vector.load %arg7[%c0_45, %c0_46] : memref<1x128xf32, #tpu.memory_space<vmem>>, vector<1x128xf32>
    %50 = vector.broadcast %49 : vector<1x128xf32> to vector<128x128xf32>
    %51 = arith.mulf %48, %50 : vector<128x128xf32>
    %c0_47 = arith.constant 0 : index
    %c0_48 = arith.constant 0 : index
    %52 = vector.load %arg8[%c0_47, %c0_48] : memref<1x128xf32, #tpu.memory_space<vmem>>, vector<1x128xf32>
    %53 = vector.broadcast %52 : vector<1x128xf32> to vector<128x128xf32>
    %54 = arith.addf %51, %53 : vector<128x128xf32>
    %cst_49 = arith.constant 0.000000e+00 : f32
    %55 = vector.broadcast %cst_49 : f32 to vector<128x128xf32>
    %56 = arith.maximumf %54, %55 : vector<128x128xf32>
    %57 = arith.truncf %56 : vector<128x128xf32> to vector<128x128xbf16>
    %c1_i32_50 = arith.constant 1 : i32
    %58 = arith.addi %1, %c1_i32_50 : i32
    %c0_51 = arith.constant 0 : index
    %59 = arith.index_cast %58 : i32 to index
    %c0_52 = arith.constant 0 : index
    %c0_53 = arith.constant 0 : index
    %60 = vector.load %arg2[%c0_51, %59, %c0_52, %c0_53] : memref<1x18x16x128xbf16, #tpu.memory_space<vmem>>, vector<1x8x16x128xbf16>
    %61 = vector.shape_cast %60 : vector<1x8x16x128xbf16> to vector<8x16x128xbf16>
    %62 = vector.shape_cast %61 : vector<8x16x128xbf16> to vector<128x128xbf16>
    %c0_54 = arith.constant 0 : index
    %c0_55 = arith.constant 0 : index
    %63 = vector.load %arg12[%c0_54, %c0_55] : memref<128x128xbf16, #tpu.memory_space<vmem>>, vector<128x128xbf16>
    %cst_56 = arith.constant dense<0.000000e+00> : vector<128x128xf32>
    %64 = tpu.matmul %62, %63, %cst_56 {dimension_numbers = #tpu.dot_dimension_numbers<[1], [0], [0], [1], [0, 0, 1, 1], [], []>} : vector<128x128xbf16>, vector<128x128xbf16>, vector<128x128xf32> -> vector<128x128xf32>
    %c0_57 = arith.constant 0 : index
    %c0_58 = arith.constant 0 : index
    %65 = vector.load %arg13[%c0_57, %c0_58] : memref<1x128xf32, #tpu.memory_space<vmem>>, vector<1x128xf32>
    %66 = vector.broadcast %65 : vector<1x128xf32> to vector<128x128xf32>
    %67 = arith.mulf %64, %66 : vector<128x128xf32>
    %c0_59 = arith.constant 0 : index
    %c0_60 = arith.constant 0 : index
    %68 = vector.load %arg14[%c0_59, %c0_60] : memref<1x128xf32, #tpu.memory_space<vmem>>, vector<1x128xf32>
    %69 = vector.broadcast %68 : vector<1x128xf32> to vector<128x128xf32>
    %70 = arith.addf %67, %69 : vector<128x128xf32>
    %c0_61 = arith.constant 0 : index
    %c0_62 = arith.constant 0 : index
    %71 = vector.load %arg9[%c0_61, %c0_62] : memref<128x128xbf16, #tpu.memory_space<vmem>>, vector<128x128xbf16>
    %cst_63 = arith.constant dense<0.000000e+00> : vector<128x128xf32>
    %72 = tpu.matmul %57, %71, %cst_63 {dimension_numbers = #tpu.dot_dimension_numbers<[1], [0], [0], [1], [0, 0, 1, 1], [], []>} : vector<128x128xbf16>, vector<128x128xbf16>, vector<128x128xf32> -> vector<128x128xf32>
    %c0_64 = arith.constant 0 : index
    %c0_65 = arith.constant 0 : index
    %73 = vector.load %arg10[%c0_64, %c0_65] : memref<1x128xf32, #tpu.memory_space<vmem>>, vector<1x128xf32>
    %74 = vector.broadcast %73 : vector<1x128xf32> to vector<128x128xf32>
    %75 = arith.mulf %72, %74 : vector<128x128xf32>
    %c0_66 = arith.constant 0 : index
    %c0_67 = arith.constant 0 : index
    %76 = vector.load %arg11[%c0_66, %c0_67] : memref<1x128xf32, #tpu.memory_space<vmem>>, vector<1x128xf32>
    %77 = vector.broadcast %76 : vector<1x128xf32> to vector<128x128xf32>
    %78 = arith.addf %75, %77 : vector<128x128xf32>
    %79 = arith.addf %70, %78 : vector<128x128xf32>
    %cst_68 = arith.constant 0.000000e+00 : f32
    %80 = vector.broadcast %cst_68 : f32 to vector<128x128xf32>
    %81 = arith.maximumf %79, %80 : vector<128x128xf32>
    %82 = vector.shape_cast %81 : vector<128x128xf32> to vector<1x8x16x128xf32>
    %c0_69 = arith.constant 0 : index
    %c0_70 = arith.constant 0 : index
    %c0_71 = arith.constant 0 : index
    %c0_72 = arith.constant 0 : index
    %83 = vector.load %arg15[%c0_69, %c0_70, %c0_71, %c0_72] : memref<1x8x16x128xf32, #tpu.memory_space<vmem>>, vector<1x8x16x128xf32>
    tpu.vector_store %arg15[%c0_69, %c0_70, %c0_71, %c0_72], %82 {strides = array<i32>} : memref<1x8x16x128xf32, #tpu.memory_space<vmem>>, vector<1x8x16x128xf32>,
    return
  }
  func.func @transform_0(%arg0: i32, %arg1: i32) -> (i32, i32, i32, i32) {
    %c0_i32 = arith.constant 0 : i32
    %c0_i32_0 = arith.constant 0 : i32
    %c0_i32_1 = arith.constant 0 : i32
    %c0_i32_2 = arith.constant 0 : i32
    return %arg0, %c0_i32, %c0_i32_0, %c0_i32_1 : i32, i32, i32, i32
  }
  func.func @transform_1(%arg0: i32, %arg1: i32) -> (i32, i32) {
    %c0_i32 = arith.constant 0 : i32
    %c0_i32_0 = arith.constant 0 : i32
    %c0_i32_1 = arith.constant 0 : i32
    return %c0_i32, %c0_i32_0 : i32, i32
  }
  func.func @transform_2(%arg0: i32, %arg1: i32) -> (i32, i32) {
    %c0_i32 = arith.constant 0 : i32
    %c0_i32_0 = arith.constant 0 : i32
    %c0_i32_1 = arith.constant 0 : i32
    return %c0_i32, %c0_i32_0 : i32, i32
  }
  func.func @transform_3(%arg0: i32, %arg1: i32) -> (i32, i32) {
    %c0_i32 = arith.constant 0 : i32
    %c0_i32_0 = arith.constant 0 : i32
    %c0_i32_1 = arith.constant 0 : i32
    return %c0_i32, %c0_i32_0 : i32, i32
  }
  func.func @transform_4(%arg0: i32, %arg1: i32) -> (i32, i32) {
    %c0_i32 = arith.constant 0 : i32
    %c0_i32_0 = arith.constant 0 : i32
    %c0_i32_1 = arith.constant 0 : i32
    return %c0_i32, %c0_i32_0 : i32, i32
  }
  func.func @transform_5(%arg0: i32, %arg1: i32) -> (i32, i32) {
    %c0_i32 = arith.constant 0 : i32
    %c0_i32_0 = arith.constant 0 : i32
    %c0_i32_1 = arith.constant 0 : i32
    return %c0_i32, %c0_i32_0 : i32, i32
  }
  func.func @transform_6(%arg0: i32, %arg1: i32) -> (i32, i32) {
    %c0_i32 = arith.constant 0 : i32
    %c0_i32_0 = arith.constant 0 : i32
    %c0_i32_1 = arith.constant 0 : i32
    return %c0_i32, %c0_i32_0 : i32, i32
  }
  func.func @transform_7(%arg0: i32, %arg1: i32) -> (i32, i32) {
    %c0_i32 = arith.constant 0 : i32
    %c0_i32_0 = arith.constant 0 : i32
    %c0_i32_1 = arith.constant 0 : i32
    return %c0_i32, %c0_i32_0 : i32, i32
  }
  func.func @transform_8(%arg0: i32, %arg1: i32) -> (i32, i32) {
    %c0_i32 = arith.constant 0 : i32
    %c0_i32_0 = arith.constant 0 : i32
    %c0_i32_1 = arith.constant 0 : i32
    return %c0_i32, %c0_i32_0 : i32, i32
  }
  func.func @transform_9(%arg0: i32, %arg1: i32) -> (i32, i32) {
    %c0_i32 = arith.constant 0 : i32
    %c0_i32_0 = arith.constant 0 : i32
    %c0_i32_1 = arith.constant 0 : i32
    return %c0_i32, %c0_i32_0 : i32, i32
  }
  func.func @transform_10(%arg0: i32, %arg1: i32) -> (i32, i32) {
    %c0_i32 = arith.constant 0 : i32
    %c0_i32_0 = arith.constant 0 : i32
    %c0_i32_1 = arith.constant 0 : i32
    return %c0_i32, %c0_i32_0 : i32, i32
  }
  func.func @transform_11(%arg0: i32, %arg1: i32) -> (i32, i32) {
    %c0_i32 = arith.constant 0 : i32
    %c0_i32_0 = arith.constant 0 : i32
    %c0_i32_1 = arith.constant 0 : i32
    return %c0_i32, %c0_i32_0 : i32, i32
  }
  func.func @transform_12(%arg0: i32, %arg1: i32) -> (i32, i32) {
    %c0_i32 = arith.constant 0 : i32
    %c0_i32_0 = arith.constant 0 : i32
    %c0_i32_1 = arith.constant 0 : i32
    return %c0_i32, %c0_i32_0 : i32, i32
  }
  func.func @transform_13(%arg0: i32, %arg1: i32) -> (i32, i32, i32, i32) {
    %c0_i32 = arith.constant 0 : i32
    %c0_i32_0 = arith.constant 0 : i32
    %c0_i32_1 = arith.constant 0 : i32
    return %arg0, %arg1, %c0_i32, %c0_i32_0 : i32, i32, i32, i32
  }
}

module attributes {stable_mosaic.version = 11 : i64} {
  func.func @_bottleneck_kernel(%arg0: i32, %arg1: i32, %arg2: memref<1x18x16x128xbf16, #tpu.memory_space<vmem>>, %arg3: memref<128x128xbf16, #tpu.memory_space<vmem>>, %arg4: memref<1x128xf32, #tpu.memory_space<vmem>>, %arg5: memref<1x128xf32, #tpu.memory_space<vmem>>, %arg6: memref<1152x128xbf16, #tpu.memory_space<vmem>>, %arg7: memref<1x128xf32, #tpu.memory_space<vmem>>, %arg8: memref<1x128xf32, #tpu.memory_space<vmem>>, %arg9: memref<128x128xbf16, #tpu.memory_space<vmem>>, %arg10: memref<1x128xf32, #tpu.memory_space<vmem>>, %arg11: memref<1x128xf32, #tpu.memory_space<vmem>>, %arg12: memref<128x128xbf16, #tpu.memory_space<vmem>>, %arg13: memref<1x128xf32, #tpu.memory_space<vmem>>, %arg14: memref<1x128xf32, #tpu.memory_space<vmem>>, %arg15: memref<1x8x16x128xf32, #tpu.memory_space<vmem>>, %arg16: memref<10x33x128xbf16, #tpu.memory_space<vmem>>) attributes {dimension_semantics = [#tpu.dimension_semantics<parallel>, #tpu.dimension_semantics<parallel>], iteration_bounds = array<i64: 2, 2>, scalar_prefetch = 0 : i64, scratch_operands = 1 : i64, tpu.core_type = #tpu.core_type<tc>, window_params = [{transform_indices = @transform_0, window_bounds = array<i64: 1, 18, 16, 128>}, {pipeline_mode = #tpu.pipeline_mode<synchronous>, transform_indices = @transform_1, window_bounds = array<i64: 128, 128>}, {pipeline_mode = #tpu.pipeline_mode<synchronous>, transform_indices = @transform_2, window_bounds = array<i64: 1, 128>}, {pipeline_mode = #tpu.pipeline_mode<synchronous>, transform_indices = @transform_3, window_bounds = array<i64: 1, 128>}, {pipeline_mode = #tpu.pipeline_mode<synchronous>, transform_indices = @transform_4, window_bounds = array<i64: 1152, 128>}, {pipeline_mode = #tpu.pipeline_mode<synchronous>, transform_indices = @transform_5, window_bounds = array<i64: 1, 128>}, {pipeline_mode = #tpu.pipeline_mode<synchronous>, transform_indices = @transform_6, window_bounds = array<i64: 1, 128>}, {pipeline_mode = #tpu.pipeline_mode<synchronous>, transform_indices = @transform_7, window_bounds = array<i64: 128, 128>}, {pipeline_mode = #tpu.pipeline_mode<synchronous>, transform_indices = @transform_8, window_bounds = array<i64: 1, 128>}, {pipeline_mode = #tpu.pipeline_mode<synchronous>, transform_indices = @transform_9, window_bounds = array<i64: 1, 128>}, {pipeline_mode = #tpu.pipeline_mode<synchronous>, transform_indices = @transform_10, window_bounds = array<i64: 128, 128>}, {pipeline_mode = #tpu.pipeline_mode<synchronous>, transform_indices = @transform_11, window_bounds = array<i64: 1, 128>}, {pipeline_mode = #tpu.pipeline_mode<synchronous>, transform_indices = @transform_12, window_bounds = array<i64: 1, 128>}, {transform_indices = @transform_13, window_bounds = array<i64: 1, 8, 16, 128>}]} {
    %c8_i32 = arith.constant 8 : i32
    %0 = arith.muli %arg1, %c8_i32 : i32
    %1 = tpu.assume_multiple %0, 8 : i32
    %c0 = arith.constant 0 : index
    %2 = arith.index_cast %1 : i32 to index
    %c0_0 = arith.constant 0 : index
    %c0_1 = arith.constant 0 : index
    %3 = vector.load %arg2[%c0, %2, %c0_0, %c0_1] : memref<1x18x16x128xbf16, #tpu.memory_space<vmem>>, vector<1x10x16x128xbf16>
    %4 = vector.shape_cast %3 : vector<1x10x16x128xbf16> to vector<10x16x128xbf16>
    %5 = vector.shape_cast %4 : vector<10x16x128xbf16> to vector<160x128xbf16>
    %c0_2 = arith.constant 0 : index
    %c0_3 = arith.constant 0 : index
    %6 = vector.load %arg3[%c0_2, %c0_3] : memref<128x128xbf16, #tpu.memory_space<vmem>>, vector<128x128xbf16>
    %cst = arith.constant dense<0.000000e+00> : vector<160x128xf32>
    %7 = tpu.matmul %5, %6, %cst {dimension_numbers = #tpu.dot_dimension_numbers<[1], [0], [0], [1], [0, 0, 1, 1], [], []>} : vector<160x128xbf16>, vector<128x128xbf16>, vector<160x128xf32> -> vector<160x128xf32>
    %c0_4 = arith.constant 0 : index
    %c0_5 = arith.constant 0 : index
    %8 = vector.load %arg4[%c0_4, %c0_5] : memref<1x128xf32, #tpu.memory_space<vmem>>, vector<1x128xf32>
    %9 = vector.broadcast %8 : vector<1x128xf32> to vector<160x128xf32>
    %10 = arith.mulf %7, %9 : vector<160x128xf32>
    %c0_6 = arith.constant 0 : index
    %c0_7 = arith.constant 0 : index
    %11 = vector.load %arg5[%c0_6, %c0_7] : memref<1x128xf32, #tpu.memory_space<vmem>>, vector<1x128xf32>
    %12 = vector.broadcast %11 : vector<1x128xf32> to vector<160x128xf32>
    %13 = arith.addf %10, %12 : vector<160x128xf32>
    %cst_8 = arith.constant 0.000000e+00 : f32
    %14 = vector.broadcast %cst_8 : f32 to vector<160x128xf32>
    %15 = arith.maximumf %13, %14 : vector<160x128xf32>
    %16 = arith.truncf %15 : vector<160x128xf32> to vector<160x128xbf16>
    %17 = vector.shape_cast %16 : vector<160x128xbf16> to vector<10x16x128xbf16>
    %cst_9 = arith.constant 0.000000e+00 : bf16
    %18 = vector.broadcast %cst_9 : bf16 to vector<10x1x128xbf16>
    %c0_10 = arith.constant 0 : index
    %c15 = arith.constant 15 : index
    %c0_11 = arith.constant 0 : index
    %19 = vector.load %arg16[%c0_10, %c15, %c0_11] : memref<10x33x128xbf16, #tpu.memory_space<vmem>>, vector<10x1x128xbf16>
    tpu.vector_store %arg16[%c0_10, %c15, %c0_11], %18 {strides = array<i32>} : memref<10x33x128xbf16, #tpu.memory_space<vmem>>, vector<10x1x128xbf16>,
    %c0_12 = arith.constant 0 : index
    %c32 = arith.constant 32 : index
    %c0_13 = arith.constant 0 : index
    %20 = vector.load %arg16[%c0_12, %c32, %c0_13] : memref<10x33x128xbf16, #tpu.memory_space<vmem>>, vector<10x1x128xbf16>
    tpu.vector_store %arg16[%c0_12, %c32, %c0_13], %18 {strides = array<i32>} : memref<10x33x128xbf16, #tpu.memory_space<vmem>>, vector<10x1x128xbf16>,
    %c0_14 = arith.constant 0 : index
    %c16 = arith.constant 16 : index
    %c0_15 = arith.constant 0 : index
    %21 = vector.load %arg16[%c0_14, %c16, %c0_15] : memref<10x33x128xbf16, #tpu.memory_space<vmem>>, vector<10x16x128xbf16>
    tpu.vector_store %arg16[%c0_14, %c16, %c0_15], %17 {strides = array<i32>} : memref<10x33x128xbf16, #tpu.memory_space<vmem>>, vector<10x16x128xbf16>,
    %c0_i32 = arith.constant 0 : i32
    %22 = arith.cmpi eq, %arg1, %c0_i32 : i32
    %23 = arith.extui %22 : i1 to i32
    %c0_i32_16 = arith.constant 0 : i32
    %24 = arith.cmpi ne, %23, %c0_i32_16 : i32
    scf.if %24 {
      %cst_73 = arith.constant 0.000000e+00 : bf16
      %84 = vector.broadcast %cst_73 : bf16 to vector<1x18x128xbf16>
      %c0_74 = arith.constant 0 : index
      %c15_75 = arith.constant 15 : index
      %c0_76 = arith.constant 0 : index
      %85 = vector.load %arg16[%c0_74, %c15_75, %c0_76] : memref<10x33x128xbf16, #tpu.memory_space<vmem>>, vector<1x18x128xbf16>
      tpu.vector_store %arg16[%c0_74, %c15_75, %c0_76], %84 {strides = array<i32>} : memref<10x33x128xbf16, #tpu.memory_space<vmem>>, vector<1x18x128xbf16>,
    } else {
    }
    %c1_i32 = arith.constant 1 : i32
    %25 = arith.cmpi eq, %arg1, %c1_i32 : i32
    %26 = arith.extui %25 : i1 to i32
    %c0_i32_17 = arith.constant 0 : i32
    %27 = arith.cmpi ne, %26, %c0_i32_17 : i32
    scf.if %27 {
      %cst_73 = arith.constant 0.000000e+00 : bf16
      %84 = vector.broadcast %cst_73 : bf16 to vector<1x18x128xbf16>
      %c9 = arith.constant 9 : index
      %c15_74 = arith.constant 15 : index
      %c0_75 = arith.constant 0 : index
      %85 = vector.load %arg16[%c9, %c15_74, %c0_75] : memref<10x33x128xbf16, #tpu.memory_space<vmem>>, vector<1x18x128xbf16>
      tpu.vector_store %arg16[%c9, %c15_74, %c0_75], %84 {strides = array<i32>} : memref<10x33x128xbf16, #tpu.memory_space<vmem>>, vector<1x18x128xbf16>,
    } else {
    }
    %c0_18 = arith.constant 0 : index
    %c15_19 = arith.constant 15 : index
    %c0_20 = arith.constant 0 : index
    %28 = vector.load %arg16[%c0_18, %c15_19, %c0_20] : memref<10x33x128xbf16, #tpu.memory_space<vmem>>, vector<8x16x128xbf16>
    %29 = vector.shape_cast %28 : vector<8x16x128xbf16> to vector<128x128xbf16>
    %c0_21 = arith.constant 0 : index
    %c16_22 = arith.constant 16 : index
    %c0_23 = arith.constant 0 : index
    %30 = vector.load %arg16[%c0_21, %c16_22, %c0_23] : memref<10x33x128xbf16, #tpu.memory_space<vmem>>, vector<8x16x128xbf16>
    %31 = vector.shape_cast %30 : vector<8x16x128xbf16> to vector<128x128xbf16>
    %c0_24 = arith.constant 0 : index
    %c17 = arith.constant 17 : index
    %c0_25 = arith.constant 0 : index
    %32 = vector.load %arg16[%c0_24, %c17, %c0_25] : memref<10x33x128xbf16, #tpu.memory_space<vmem>>, vector<8x16x128xbf16>
    %33 = vector.shape_cast %32 : vector<8x16x128xbf16> to vector<128x128xbf16>
    %c1 = arith.constant 1 : index
    %c15_26 = arith.constant 15 : index
    %c0_27 = arith.constant 0 : index
    %34 = vector.load %arg16[%c1, %c15_26, %c0_27] : memref<10x33x128xbf16, #tpu.memory_space<vmem>>, vector<8x16x128xbf16>
    %35 = vector.shape_cast %34 : vector<8x16x128xbf16> to vector<128x128xbf16>
    %c1_28 = arith.constant 1 : index
    %c16_29 = arith.constant 16 : index
    %c0_30 = arith.constant 0 : index
    %36 = vector.load %arg16[%c1_28, %c16_29, %c0_30] : memref<10x33x128xbf16, #tpu.memory_space<vmem>>, vector<8x16x128xbf16>
    %37 = vector.shape_cast %36 : vector<8x16x128xbf16> to vector<128x128xbf16>
    %c1_31 = arith.constant 1 : index
    %c17_32 = arith.constant 17 : index
    %c0_33 = arith.constant 0 : index
    %38 = vector.load %arg16[%c1_31, %c17_32, %c0_33] : memref<10x33x128xbf16, #tpu.memory_space<vmem>>, vector<8x16x128xbf16>
    %39 = vector.shape_cast %38 : vector<8x16x128xbf16> to vector<128x128xbf16>
    %c2 = arith.constant 2 : index
    %c15_34 = arith.constant 15 : index
    %c0_35 = arith.constant 0 : index
    %40 = vector.load %arg16[%c2, %c15_34, %c0_35] : memref<10x33x128xbf16, #tpu.memory_space<vmem>>, vector<8x16x128xbf16>
    %41 = vector.shape_cast %40 : vector<8x16x128xbf16> to vector<128x128xbf16>
    %c2_36 = arith.constant 2 : index
    %c16_37 = arith.constant 16 : index
    %c0_38 = arith.constant 0 : index
    %42 = vector.load %arg16[%c2_36, %c16_37, %c0_38] : memref<10x33x128xbf16, #tpu.memory_space<vmem>>, vector<8x16x128xbf16>
    %43 = vector.shape_cast %42 : vector<8x16x128xbf16> to vector<128x128xbf16>
    %c2_39 = arith.constant 2 : index
    %c17_40 = arith.constant 17 : index
    %c0_41 = arith.constant 0 : index
    %44 = vector.load %arg16[%c2_39, %c17_40, %c0_41] : memref<10x33x128xbf16, #tpu.memory_space<vmem>>, vector<8x16x128xbf16>
    %45 = vector.shape_cast %44 : vector<8x16x128xbf16> to vector<128x128xbf16>
    %46 = tpu.concatenate %29, %31, %33, %35, %37, %39, %41, %43, %45 in 1 : vector<128x128xbf16>, vector<128x128xbf16>, vector<128x128xbf16>, vector<128x128xbf16>, vector<128x128xbf16>, vector<128x128xbf16>, vector<128x128xbf16>, vector<128x128xbf16>, vector<128x128xbf16> -> vector<128x1152xbf16>
    %c0_42 = arith.constant 0 : index
    %c0_43 = arith.constant 0 : index
    %47 = vector.load %arg6[%c0_42, %c0_43] : memref<1152x128xbf16, #tpu.memory_space<vmem>>, vector<1152x128xbf16>
    %cst_44 = arith.constant dense<0.000000e+00> : vector<128x128xf32>
    %48 = tpu.matmul %46, %47, %cst_44 {dimension_numbers = #tpu.dot_dimension_numbers<[1], [0], [0], [1], [0, 0, 1, 1], [], []>} : vector<128x1152xbf16>, vector<1152x128xbf16>, vector<128x128xf32> -> vector<128x128xf32>
    %c0_45 = arith.constant 0 : index
    %c0_46 = arith.constant 0 : index
    %49 = vector.load %arg7[%c0_45, %c0_46] : memref<1x128xf32, #tpu.memory_space<vmem>>, vector<1x128xf32>
    %50 = vector.broadcast %49 : vector<1x128xf32> to vector<128x128xf32>
    %51 = arith.mulf %48, %50 : vector<128x128xf32>
    %c0_47 = arith.constant 0 : index
    %c0_48 = arith.constant 0 : index
    %52 = vector.load %arg8[%c0_47, %c0_48] : memref<1x128xf32, #tpu.memory_space<vmem>>, vector<1x128xf32>
    %53 = vector.broadcast %52 : vector<1x128xf32> to vector<128x128xf32>
    %54 = arith.addf %51, %53 : vector<128x128xf32>
    %cst_49 = arith.constant 0.000000e+00 : f32
    %55 = vector.broadcast %cst_49 : f32 to vector<128x128xf32>
    %56 = arith.maximumf %54, %55 : vector<128x128xf32>
    %57 = arith.truncf %56 : vector<128x128xf32> to vector<128x128xbf16>
    %c1_i32_50 = arith.constant 1 : i32
    %58 = arith.addi %1, %c1_i32_50 : i32
    %c0_51 = arith.constant 0 : index
    %59 = arith.index_cast %58 : i32 to index
    %c0_52 = arith.constant 0 : index
    %c0_53 = arith.constant 0 : index
    %60 = vector.load %arg2[%c0_51, %59, %c0_52, %c0_53] : memref<1x18x16x128xbf16, #tpu.memory_space<vmem>>, vector<1x8x16x128xbf16>
    %61 = vector.shape_cast %60 : vector<1x8x16x128xbf16> to vector<8x16x128xbf16>
    %62 = vector.shape_cast %61 : vector<8x16x128xbf16> to vector<128x128xbf16>
    %c0_54 = arith.constant 0 : index
    %c0_55 = arith.constant 0 : index
    %63 = vector.load %arg12[%c0_54, %c0_55] : memref<128x128xbf16, #tpu.memory_space<vmem>>, vector<128x128xbf16>
    %cst_56 = arith.constant dense<0.000000e+00> : vector<128x128xf32>
    %64 = tpu.matmul %62, %63, %cst_56 {dimension_numbers = #tpu.dot_dimension_numbers<[1], [0], [0], [1], [0, 0, 1, 1], [], []>} : vector<128x128xbf16>, vector<128x128xbf16>, vector<128x128xf32> -> vector<128x128xf32>
    %c0_57 = arith.constant 0 : index
    %c0_58 = arith.constant 0 : index
    %65 = vector.load %arg13[%c0_57, %c0_58] : memref<1x128xf32, #tpu.memory_space<vmem>>, vector<1x128xf32>
    %66 = vector.broadcast %65 : vector<1x128xf32> to vector<128x128xf32>
    %67 = arith.mulf %64, %66 : vector<128x128xf32>
    %c0_59 = arith.constant 0 : index
    %c0_60 = arith.constant 0 : index
    %68 = vector.load %arg14[%c0_59, %c0_60] : memref<1x128xf32, #tpu.memory_space<vmem>>, vector<1x128xf32>
    %69 = vector.broadcast %68 : vector<1x128xf32> to vector<128x128xf32>
    %70 = arith.addf %67, %69 : vector<128x128xf32>
    %c0_61 = arith.constant 0 : index
    %c0_62 = arith.constant 0 : index
    %71 = vector.load %arg9[%c0_61, %c0_62] : memref<128x128xbf16, #tpu.memory_space<vmem>>, vector<128x128xbf16>
    %cst_63 = arith.constant dense<0.000000e+00> : vector<128x128xf32>
    %72 = tpu.matmul %57, %71, %cst_63 {dimension_numbers = #tpu.dot_dimension_numbers<[1], [0], [0], [1], [0, 0, 1, 1], [], []>} : vector<128x128xbf16>, vector<128x128xbf16>, vector<128x128xf32> -> vector<128x128xf32>
    %c0_64 = arith.constant 0 : index
    %c0_65 = arith.constant 0 : index
    %73 = vector.load %arg10[%c0_64, %c0_65] : memref<1x128xf32, #tpu.memory_space<vmem>>, vector<1x128xf32>
    %74 = vector.broadcast %73 : vector<1x128xf32> to vector<128x128xf32>
    %75 = arith.mulf %72, %74 : vector<128x128xf32>
    %c0_66 = arith.constant 0 : index
    %c0_67 = arith.constant 0 : index
    %76 = vector.load %arg11[%c0_66, %c0_67] : memref<1x128xf32, #tpu.memory_space<vmem>>, vector<1x128xf32>
    %77 = vector.broadcast %76 : vector<1x128xf32> to vector<128x128xf32>
    %78 = arith.addf %75, %77 : vector<128x128xf32>
    %79 = arith.addf %70, %78 : vector<128x128xf32>
    %cst_68 = arith.constant 0.000000e+00 : f32
    %80 = vector.broadcast %cst_68 : f32 to vector<128x128xf32>
    %81 = arith.maximumf %79, %80 : vector<128x128xf32>
    %82 = vector.shape_cast %81 : vector<128x128xf32> to vector<1x8x16x128xf32>
    %c0_69 = arith.constant 0 : index
    %c0_70 = arith.constant 0 : index
    %c0_71 = arith.constant 0 : index
    %c0_72 = arith.constant 0 : index
    %83 = vector.load %arg15[%c0_69, %c0_70, %c0_71, %c0_72] : memref<1x8x16x128xf32, #tpu.memory_space<vmem>>, vector<1x8x16x128xf32>
    tpu.vector_store %arg15[%c0_69, %c0_70, %c0_71, %c0_72], %82 {strides = array<i32>} : memref<1x8x16x128xf32, #tpu.memory_space<vmem>>, vector<1x8x16x128xf32>,
    return
  }
  func.func @transform_0(%arg0: i32, %arg1: i32) -> (i32, i32, i32, i32) {
    %c0_i32 = arith.constant 0 : i32
    %c0_i32_0 = arith.constant 0 : i32
    %c0_i32_1 = arith.constant 0 : i32
    %c0_i32_2 = arith.constant 0 : i32
    return %arg0, %c0_i32, %c0_i32_0, %c0_i32_1 : i32, i32, i32, i32
  }
  func.func @transform_1(%arg0: i32, %arg1: i32) -> (i32, i32) {
    %c0_i32 = arith.constant 0 : i32
    %c0_i32_0 = arith.constant 0 : i32
    %c0_i32_1 = arith.constant 0 : i32
    return %c0_i32, %c0_i32_0 : i32, i32
  }
  func.func @transform_2(%arg0: i32, %arg1: i32) -> (i32, i32) {
    %c0_i32 = arith.constant 0 : i32
    %c0_i32_0 = arith.constant 0 : i32
    %c0_i32_1 = arith.constant 0 : i32
    return %c0_i32, %c0_i32_0 : i32, i32
  }
  func.func @transform_3(%arg0: i32, %arg1: i32) -> (i32, i32) {
    %c0_i32 = arith.constant 0 : i32
    %c0_i32_0 = arith.constant 0 : i32
    %c0_i32_1 = arith.constant 0 : i32
    return %c0_i32, %c0_i32_0 : i32, i32
  }
  func.func @transform_4(%arg0: i32, %arg1: i32) -> (i32, i32) {
    %c0_i32 = arith.constant 0 : i32
    %c0_i32_0 = arith.constant 0 : i32
    %c0_i32_1 = arith.constant 0 : i32
    return %c0_i32, %c0_i32_0 : i32, i32
  }
  func.func @transform_5(%arg0: i32, %arg1: i32) -> (i32, i32) {
    %c0_i32 = arith.constant 0 : i32
    %c0_i32_0 = arith.constant 0 : i32
    %c0_i32_1 = arith.constant 0 : i32
    return %c0_i32, %c0_i32_0 : i32, i32
  }
  func.func @transform_6(%arg0: i32, %arg1: i32) -> (i32, i32) {
    %c0_i32 = arith.constant 0 : i32
    %c0_i32_0 = arith.constant 0 : i32
    %c0_i32_1 = arith.constant 0 : i32
    return %c0_i32, %c0_i32_0 : i32, i32
  }
  func.func @transform_7(%arg0: i32, %arg1: i32) -> (i32, i32) {
    %c0_i32 = arith.constant 0 : i32
    %c0_i32_0 = arith.constant 0 : i32
    %c0_i32_1 = arith.constant 0 : i32
    return %c0_i32, %c0_i32_0 : i32, i32
  }
  func.func @transform_8(%arg0: i32, %arg1: i32) -> (i32, i32) {
    %c0_i32 = arith.constant 0 : i32
    %c0_i32_0 = arith.constant 0 : i32
    %c0_i32_1 = arith.constant 0 : i32
    return %c0_i32, %c0_i32_0 : i32, i32
  }
  func.func @transform_9(%arg0: i32, %arg1: i32) -> (i32, i32) {
    %c0_i32 = arith.constant 0 : i32
    %c0_i32_0 = arith.constant 0 : i32
    %c0_i32_1 = arith.constant 0 : i32
    return %c0_i32, %c0_i32_0 : i32, i32
  }
  func.func @transform_10(%arg0: i32, %arg1: i32) -> (i32, i32) {
    %c0_i32 = arith.constant 0 : i32
    %c0_i32_0 = arith.constant 0 : i32
    %c0_i32_1 = arith.constant 0 : i32
    return %c0_i32, %c0_i32_0 : i32, i32
  }
  func.func @transform_11(%arg0: i32, %arg1: i32) -> (i32, i32) {
    %c0_i32 = arith.constant 0 : i32
    %c0_i32_0 = arith.constant 0 : i32
    %c0_i32_1 = arith.constant 0 : i32
    return %c0_i32, %c0_i32_0 : i32, i32
  }
  func.func @transform_12(%arg0: i32, %arg1: i32) -> (i32, i32) {
    %c0_i32 = arith.constant 0 : i32
    %c0_i32_0 = arith.constant 0 : i32
    %c0_i32_1 = arith.constant 0 : i32
    return %c0_i32, %c0_i32_0 : i32, i32
  }
  func.func @transform_13(%arg0: i32, %arg1: i32) -> (i32, i32, i32, i32) {
    %c0_i32 = arith.constant 0 : i32
    %c0_i32_0 = arith.constant 0 : i32
    %c0_i32_1 = arith.constant 0 : i32
    return %arg0, %arg1, %c0_i32, %c0_i32_0 : i32, i32, i32, i32
  }
}

</mosaic_0001>

<llo_original>
// kernel: tpu_custom_call.1
$region0: #{tpu_custom_call.1}
  #allocation0 [shape = 'u32[]', space=smem, size = 0x4, offset = 0x4, fixed_abs, tag = 'smem constant byte address 0x4 - core index']
  #allocation1 [shape = 'u32[144,128]{1,0:T(1,128)}', space=vmem, size = 0x12000, scoped, tag = 'internal scratch']
  #allocation2 [shape = 'bf16[10,33,128]{2,1,0:T(8,128)(2,1)}', space=vmem, size = 0x19000, scoped, tag = 'scratch operand']
  %s0 = inlined_call_operand.hbm [shape: bf16[2,18,16,128], index: 0, kind: input, shape index: {}]
  %s1 = inlined_call_operand.hbm [shape: bf16[128,128], index: 1, kind: input, shape index: {}]
  %s2 = inlined_call_operand.vmem [shape: f32[1,128], index: 2, kind: input, shape index: {}]
  %s3 = inlined_call_operand.vmem [shape: f32[1,128], index: 3, kind: input, shape index: {}]
  %s4 = inlined_call_operand.hbm [shape: bf16[1152,128], index: 4, kind: input, shape index: {}]
  %s5 = inlined_call_operand.vmem [shape: f32[1,128], index: 5, kind: input, shape index: {}]
  %s6 = inlined_call_operand.vmem [shape: f32[1,128], index: 6, kind: input, shape index: {}]
  %s7 = inlined_call_operand.hbm [shape: bf16[128,128], index: 7, kind: input, shape index: {}]
  %s8 = inlined_call_operand.vmem [shape: f32[1,128], index: 8, kind: input, shape index: {}]
  %s9 = inlined_call_operand.vmem [shape: f32[1,128], index: 9, kind: input, shape index: {}]
  %s10 = inlined_call_operand.hbm [shape: bf16[128,128], index: 10, kind: input, shape index: {}]
  %s11 = inlined_call_operand.vmem [shape: f32[1,128], index: 11, kind: input, shape index: {}]
  %s12 = inlined_call_operand.vmem [shape: f32[1,128], index: 12, kind: input, shape index: {}]
  %s13 = inlined_call_operand.hbm [shape: f32[2,16,16,128], index: 13, kind: output, shape index: {}]
  %s14 = sld [smem:[#allocation0]]
  $region113: #{tpu_custom_call.1} parent=0
    _
  %s16 = ssub.s32 1, %s14
  %s17 = scalar_select 0, %s16, %s14
  $region1: #{tpu_custom_call.1} parent=0
    #allocation3 [shape = 'u8[147456]{0}', space=vmem, size = 0x24000, scoped, tag = 'input window, operand 0']
    #allocation4 [shape = 's32[2]{0}', space=sflag, size = 0x8, scoped, tag = 'scoped memory for tpu_custom_call.1']
    #allocation5 [shape = 's32[2]{0}', space=sflag, size = 0x8, scoped, tag = 'scoped memory for tpu_custom_call.1']
    #allocation6 [shape = 'u8[32768]{0}', space=vmem, size = 0x8000, scoped, tag = 'input window, operand 1, single buffered']
    #allocation7 [shape = 's32[1]{0}', space=sflag, size = 0x4, scoped, tag = 'scoped memory for tpu_custom_call.1']
    #allocation8 [shape = 'u8[294912]{0}', space=vmem, size = 0x48000, scoped, tag = 'input window, operand 4, single buffered']
    #allocation9 [shape = 'u8[32768]{0}', space=vmem, size = 0x8000, scoped, tag = 'input window, operand 7, single buffered']
    #allocation10 [shape = 's32[1]{0}', space=sflag, size = 0x4, scoped, tag = 'scoped memory for tpu_custom_call.1']
    #allocation11 [shape = 'u8[32768]{0}', space=vmem, size = 0x8000, scoped, tag = 'input window, operand 10, single buffered']
    #allocation12 [shape = 'u8[131072]{0}', space=vmem, size = 0x20000, scoped, tag = 'output window, operand 0']
    %18 = vsyncpa [#allocation4], 0
    %s19 = scalar_lea.sflag [#allocation4], 1
    %20 = vsyncpa %s19, 0
    %21 = vsyncpa [#allocation7], 0
    %22 = vsyncpa [#allocation10], 0
    %23 = vsyncpa [#allocation5], 0
    %s24 = scalar_lea.sflag [#allocation5], 1
    %25 = vsyncpa %s24, 0
    loop: start=0, step=1, limit=6
    $region2: #{tpu_custom_call.1} parent=1 // loop_pre_header
      _
    $region3: #{tpu_custom_call.1} parent=1 // loop_header
      %s27 = sphi 0, %s31
      %p28 = scmp.ge.s32.totalorder %s27, 6
      %s34 = sphi 0, %s46
      %s35 = sphi 0, %s42
      %s36 = sphi 0, %s34
      %s37 = sphi 0, %s35
      %s38 = sphi 0, %s36
      %s39 = sphi 0, %s37
      %s49 = sphi 0, %s51
      %s52 = sphi 0, %s49
      %s53 = sphi 0, %s52
      %s69 = sphi 0, %s53
      %s73 = sphi 0, %s73
      %s75 = sphi 0, %s73
      %s76 = sphi 0, %s75
      %s90 = sphi 0, %s76
      %s94 = sphi 0, %s94
      %s96 = sphi 0, %s94
      %s97 = sphi 0, %s96
      %s111 = sphi 0, %s97
      %s115 = sphi 0, %s115
      %s117 = sphi 0, %s115
      %s118 = sphi 0, %s117
      %s132 = sphi 0, %s118
      %s136 = sphi 0, %s136
      %s138 = sphi 0, %s136
      %s139 = sphi 0, %s138
      %s153 = sphi 0, %s139
      %s157 = sphi 0, %s157
      %s159 = sphi 0, %s157
      %s160 = sphi 0, %s159
      %s174 = sphi 0, %s160
      %s178 = sphi 0, %s178
      %s180 = sphi 0, %s178
      %s181 = sphi 0, %s180
      %s195 = sphi 0, %s181
      %s199 = sphi 0, %s199
      %s201 = sphi 0, %s199
      %s202 = sphi 0, %s201
      %s216 = sphi 0, %s202
      %s220 = sphi 0, %s220
      %s222 = sphi 0, %s220
      %s223 = sphi 0, %s222
      %s237 = sphi 0, %s223
      %s241 = sphi 0, %s241
      %s243 = sphi 0, %s241
      %s244 = sphi 0, %s243
      %s258 = sphi 0, %s244
      %s262 = sphi 0, %s262
      %s264 = sphi 0, %s262
      %s265 = sphi 0, %s264
      %s279 = sphi 0, %s265
      %s283 = sphi 0, %s283
      %s285 = sphi 0, %s283
      %s286 = sphi 0, %s285
      %s300 = sphi 0, %s286
      %s304 = sphi 0, %s304
      %s306 = sphi 0, %s304
      %s307 = sphi 0, %s306
      %s321 = sphi 0, %s307
      %s329 = sphi 0, %s331
      %s332 = sphi 0, %s329
      %s333 = sphi 0, %s332
      %s349 = sphi 0, %s333
    $region4: #{tpu_custom_call.1} parent=1 // loop_header_branch
      %30 = sbr.rel (%p28) target = $region8
    $region5: #{tpu_custom_call.1} parent=1 // loop_body
      %s32 = ssub.s32 %s27, 1
      %s33 = ssub.s32 %s27, 2
      %s40 = sadd.s32 1, %s35
      %p41 = scmp.ge.s32.totalorder %s40, 2
      %s42 = scalar_select %p41, 0, %s40
      %s43 = sadd.s32 1, %s34
      %s44 = scalar_select %p41, %s43, %s34
      %p45 = scmp.ge.s32.totalorder %s44, 2
      %s46 = scalar_select %p45, 0, %s44
      %s47 = ssub.s32 %s34, %s46
      %p48 = scmp.eq.s32.totalorder %s47, 0
      %s50 = sadd.s32 %s49, 1
      %s51 = scalar_select %p48, %s49, %s50
      %p54 = pneg %p48
      %p55 = scmp.eq.s32.totalorder %s27, 3
      %p56 = por %p54, %p55
      %p57 = scmp.ne.s32.totalorder %s49, %s52
      %p58 = scmp.eq.s32.totalorder %s27, 0
      %p59 = por %p57, %p58
      %p60 = scmp.ne.s32.totalorder %s49, %s52
      %p61 = scmp.eq.s32.totalorder %s32, 3
      %p62 = por %p60, %p61
      %p63 = scmp.ne.s32.totalorder %s52, %s53
      %p64 = scmp.eq.s32.totalorder %s32, 0
      %p65 = por %p63, %p64
      %p66 = scmp.ne.s32.totalorder %s52, %s53
      %p67 = scmp.eq.s32.totalorder %s33, 3
      %p68 = por %p66, %p67
      %p70 = scmp.ne.s32.totalorder %s53, %s69
      %p71 = scmp.eq.s32.totalorder %s33, 0
      %p72 = por %p70, %p71
      %s74 = sadd.s32 %s73, 1
      %p77 = scmp.eq.s32.totalorder %s27, 3
      %p78 = scmp.ne.s32.totalorder %s73, %s75
      %p79 = scmp.eq.s32.totalorder %s27, 0
      %p80 = por %p78, %p79
      %p81 = scmp.ne.s32.totalorder %s73, %s75
      %p82 = scmp.eq.s32.totalorder %s32, 3
      %p83 = por %p81, %p82
      %p84 = scmp.ne.s32.totalorder %s75, %s76
      %p85 = scmp.eq.s32.totalorder %s32, 0
      %p86 = por %p84, %p85
      %p87 = scmp.ne.s32.totalorder %s75, %s76
      %p88 = scmp.eq.s32.totalorder %s33, 3
      %p89 = por %p87, %p88
      %p91 = scmp.ne.s32.totalorder %s76, %s90
      %p92 = scmp.eq.s32.totalorder %s33, 0
      %p93 = por %p91, %p92
      %s95 = sadd.s32 %s94, 1
      %p98 = scmp.eq.s32.totalorder %s27, 3
      %p99 = scmp.ne.s32.totalorder %s94, %s96
      %p100 = scmp.eq.s32.totalorder %s27, 0
      %p101 = por %p99, %p100
      %p102 = scmp.ne.s32.totalorder %s94, %s96
      %p103 = scmp.eq.s32.totalorder %s32, 3
      %p104 = por %p102, %p103
      %p105 = scmp.ne.s32.totalorder %s96, %s97
      %p106 = scmp.eq.s32.totalorder %s32, 0
      %p107 = por %p105, %p106
      %p108 = scmp.ne.s32.totalorder %s96, %s97
      %p109 = scmp.eq.s32.totalorder %s33, 3
      %p110 = por %p108, %p109
      %p112 = scmp.ne.s32.totalorder %s97, %s111
      %p113 = scmp.eq.s32.totalorder %s33, 0
      %p114 = por %p112, %p113
      %s116 = sadd.s32 %s115, 1
      %p119 = scmp.eq.s32.totalorder %s27, 3
      %p120 = scmp.ne.s32.totalorder %s115, %s117
      %p121 = scmp.eq.s32.totalorder %s27, 0
      %p122 = por %p120, %p121
      %p123 = scmp.ne.s32.totalorder %s115, %s117
      %p124 = scmp.eq.s32.totalorder %s32, 3
      %p125 = por %p123, %p124
      %p126 = scmp.ne.s32.totalorder %s117, %s118
      %p127 = scmp.eq.s32.totalorder %s32, 0
      %p128 = por %p126, %p127
      %p129 = scmp.ne.s32.totalorder %s117, %s118
      %p130 = scmp.eq.s32.totalorder %s33, 3
      %p131 = por %p129, %p130
      %p133 = scmp.ne.s32.totalorder %s118, %s132
      %p134 = scmp.eq.s32.totalorder %s33, 0
      %p135 = por %p133, %p134
      %s137 = sadd.s32 %s136, 1
      %p140 = scmp.eq.s32.totalorder %s27, 3
      %p141 = scmp.ne.s32.totalorder %s136, %s138
      %p142 = scmp.eq.s32.totalorder %s27, 0
      %p143 = por %p141, %p142
      %p144 = scmp.ne.s32.totalorder %s136, %s138
      %p145 = scmp.eq.s32.totalorder %s32, 3
      %p146 = por %p144, %p145
      %p147 = scmp.ne.s32.totalorder %s138, %s139
      %p148 = scmp.eq.s32.totalorder %s32, 0
      %p149 = por %p147, %p148
      %p150 = scmp.ne.s32.totalorder %s138, %s139
      %p151 = scmp.eq.s32.totalorder %s33, 3
      %p152 = por %p150, %p151
      %p154 = scmp.ne.s32.totalorder %s139, %s153
      %p155 = scmp.eq.s32.totalorder %s33, 0
      %p156 = por %p154, %p155
      %s158 = sadd.s32 %s157, 1
      %p161 = scmp.eq.s32.totalorder %s27, 3
      %p162 = scmp.ne.s32.totalorder %s157, %s159
      %p163 = scmp.eq.s32.totalorder %s27, 0
      %p164 = por %p162, %p163
      %p165 = scmp.ne.s32.totalorder %s157, %s159
      %p166 = scmp.eq.s32.totalorder %s32, 3
      %p167 = por %p165, %p166
      %p168 = scmp.ne.s32.totalorder %s159, %s160
      %p169 = scmp.eq.s32.totalorder %s32, 0
      %p170 = por %p168, %p169
      %p171 = scmp.ne.s32.totalorder %s159, %s160
      %p172 = scmp.eq.s32.totalorder %s33, 3
      %p173 = por %p171, %p172
      %p175 = scmp.ne.s32.totalorder %s160, %s174
      %p176 = scmp.eq.s32.totalorder %s33, 0
      %p177 = por %p175, %p176
      %s179 = sadd.s32 %s178, 1
      %p182 = scmp.eq.s32.totalorder %s27, 3
      %p183 = scmp.ne.s32.totalorder %s178, %s180
      %p184 = scmp.eq.s32.totalorder %s27, 0
      %p185 = por %p183, %p184
      %p186 = scmp.ne.s32.totalorder %s178, %s180
      %p187 = scmp.eq.s32.totalorder %s32, 3
      %p188 = por %p186, %p187
      %p189 = scmp.ne.s32.totalorder %s180, %s181
      %p190 = scmp.eq.s32.totalorder %s32, 0
      %p191 = por %p189, %p190
      %p192 = scmp.ne.s32.totalorder %s180, %s181
      %p193 = scmp.eq.s32.totalorder %s33, 3
      %p194 = por %p192, %p193
      %p196 = scmp.ne.s32.totalorder %s181, %s195
      %p197 = scmp.eq.s32.totalorder %s33, 0
      %p198 = por %p196, %p197
      %s200 = sadd.s32 %s199, 1
      %p203 = scmp.eq.s32.totalorder %s27, 3
      %p204 = scmp.ne.s32.totalorder %s199, %s201
      %p205 = scmp.eq.s32.totalorder %s27, 0
      %p206 = por %p204, %p205
      %p207 = scmp.ne.s32.totalorder %s199, %s201
      %p208 = scmp.eq.s32.totalorder %s32, 3
      %p209 = por %p207, %p208
      %p210 = scmp.ne.s32.totalorder %s201, %s202
      %p211 = scmp.eq.s32.totalorder %s32, 0
      %p212 = por %p210, %p211
      %p213 = scmp.ne.s32.totalorder %s201, %s202
      %p214 = scmp.eq.s32.totalorder %s33, 3
      %p215 = por %p213, %p214
      %p217 = scmp.ne.s32.totalorder %s202, %s216
      %p218 = scmp.eq.s32.totalorder %s33, 0
      %p219 = por %p217, %p218
      %s221 = sadd.s32 %s220, 1
      %p224 = scmp.eq.s32.totalorder %s27, 3
      %p225 = scmp.ne.s32.totalorder %s220, %s222
      %p226 = scmp.eq.s32.totalorder %s27, 0
      %p227 = por %p225, %p226
      %p228 = scmp.ne.s32.totalorder %s220, %s222
      %p229 = scmp.eq.s32.totalorder %s32, 3
      %p230 = por %p228, %p229
      %p231 = scmp.ne.s32.totalorder %s222, %s223
      %p232 = scmp.eq.s32.totalorder %s32, 0
      %p233 = por %p231, %p232
      %p234 = scmp.ne.s32.totalorder %s222, %s223
      %p235 = scmp.eq.s32.totalorder %s33, 3
      %p236 = por %p234, %p235
      %p238 = scmp.ne.s32.totalorder %s223, %s237
      %p239 = scmp.eq.s32.totalorder %s33, 0
      %p240 = por %p238, %p239
      %s242 = sadd.s32 %s241, 1
      %p245 = scmp.eq.s32.totalorder %s27, 3
      %p246 = scmp.ne.s32.totalorder %s241, %s243
      %p247 = scmp.eq.s32.totalorder %s27, 0
      %p248 = por %p246, %p247
      %p249 = scmp.ne.s32.totalorder %s241, %s243
      %p250 = scmp.eq.s32.totalorder %s32, 3
      %p251 = por %p249, %p250
      %p252 = scmp.ne.s32.totalorder %s243, %s244
      %p253 = scmp.eq.s32.totalorder %s32, 0
      %p254 = por %p252, %p253
      %p255 = scmp.ne.s32.totalorder %s243, %s244
      %p256 = scmp.eq.s32.totalorder %s33, 3
      %p257 = por %p255, %p256
      %p259 = scmp.ne.s32.totalorder %s244, %s258
      %p260 = scmp.eq.s32.totalorder %s33, 0
      %p261 = por %p259, %p260
      %s263 = sadd.s32 %s262, 1
      %p266 = scmp.eq.s32.totalorder %s27, 3
      %p267 = scmp.ne.s32.totalorder %s262, %s264
      %p268 = scmp.eq.s32.totalorder %s27, 0
      %p269 = por %p267, %p268
      %p270 = scmp.ne.s32.totalorder %s262, %s264
      %p271 = scmp.eq.s32.totalorder %s32, 3
      %p272 = por %p270, %p271
      %p273 = scmp.ne.s32.totalorder %s264, %s265
      %p274 = scmp.eq.s32.totalorder %s32, 0
      %p275 = por %p273, %p274
      %p276 = scmp.ne.s32.totalorder %s264, %s265
      %p277 = scmp.eq.s32.totalorder %s33, 3
      %p278 = por %p276, %p277
      %p280 = scmp.ne.s32.totalorder %s265, %s279
      %p281 = scmp.eq.s32.totalorder %s33, 0
      %p282 = por %p280, %p281
      %s284 = sadd.s32 %s283, 1
      %p287 = scmp.eq.s32.totalorder %s27, 3
      %p288 = scmp.ne.s32.totalorder %s283, %s285
      %p289 = scmp.eq.s32.totalorder %s27, 0
      %p290 = por %p288, %p289
      %p291 = scmp.ne.s32.totalorder %s283, %s285
      %p292 = scmp.eq.s32.totalorder %s32, 3
      %p293 = por %p291, %p292
      %p294 = scmp.ne.s32.totalorder %s285, %s286
      %p295 = scmp.eq.s32.totalorder %s32, 0
      %p296 = por %p294, %p295
      %p297 = scmp.ne.s32.totalorder %s285, %s286
      %p298 = scmp.eq.s32.totalorder %s33, 3
      %p299 = por %p297, %p298
      %p301 = scmp.ne.s32.totalorder %s286, %s300
      %p302 = scmp.eq.s32.totalorder %s33, 0
      %p303 = por %p301, %p302
      %s305 = sadd.s32 %s304, 1
      %p308 = scmp.eq.s32.totalorder %s27, 3
      %p309 = scmp.ne.s32.totalorder %s304, %s306
      %p310 = scmp.eq.s32.totalorder %s27, 0
      %p311 = por %p309, %p310
      %p312 = scmp.ne.s32.totalorder %s304, %s306
      %p313 = scmp.eq.s32.totalorder %s32, 3
      %p314 = por %p312, %p313
      %p315 = scmp.ne.s32.totalorder %s306, %s307
      %p316 = scmp.eq.s32.totalorder %s32, 0
      %p317 = por %p315, %p316
      %p318 = scmp.ne.s32.totalorder %s306, %s307
      %p319 = scmp.eq.s32.totalorder %s33, 3
      %p320 = por %p318, %p319
      %p322 = scmp.ne.s32.totalorder %s307, %s321
      %p323 = scmp.eq.s32.totalorder %s33, 0
      %p324 = por %p322, %p323
      %s325 = ssub.s32 %s34, %s46
      %s326 = ssub.s32 %s35, %s42
      %s327 = sor.u32 %s325, %s326
      %p328 = scmp.eq.s32.totalorder %s327, 0
      %s330 = sadd.s32 %s329, 1
      %s331 = scalar_select %p328, %s329, %s330
      %p334 = pneg %p328
      %p335 = scmp.eq.s32.totalorder %s27, 3
      %p336 = por %p334, %p335
      %p337 = scmp.ne.s32.totalorder %s329, %s332
      %p338 = scmp.eq.s32.totalorder %s27, 0
      %p339 = por %p337, %p338
      %p340 = scmp.ne.s32.totalorder %s329, %s332
      %p341 = scmp.eq.s32.totalorder %s32, 3
      %p342 = por %p340, %p341
      %p343 = scmp.ne.s32.totalorder %s332, %s333
      %p344 = scmp.eq.s32.totalorder %s32, 0
      %p345 = por %p343, %p344
      %p346 = scmp.ne.s32.totalorder %s332, %s333
      %p347 = scmp.eq.s32.totalorder %s33, 3
      %p348 = por %p346, %p347
      %p350 = scmp.ne.s32.totalorder %s333, %s349
      %p351 = scmp.eq.s32.totalorder %s33, 0
      %p352 = por %p350, %p351
      %p353 = scmp.le.s32.totalorder 1, %s27
      %p354 = scmp.lt.s32.totalorder %s27, 5
      %p355 = pnand %p353, %p354
      %p356 = pneg %p355
      // Predicated region
      $region9: #{tpu_custom_call.1} parent=5 // pred_check
        _
      $region10: #{tpu_custom_call.1} parent=5 // pred_check_branch
        %358 = sbr.rel (%p355) target = $region12
      $region11: #{tpu_custom_call.1} parent=5 // pred_region
        %s359 = ssub.s32 %s27, 1
        // Predicated region
        $region13: #{tpu_custom_call.1} parent=11 // pred_check
          %p360 = pneg %p86
        $region14: #{tpu_custom_call.1} parent=11 // pred_check_branch
          %362 = sbr.rel (%p360) target = $region16
        $region15: #{tpu_custom_call.1} parent=11 // pred_region
          %s364 = ssub.s32 1024, 1024
          %365 = vsyncadd [#allocation7], %s364
          %s366 = sshll.u32 [#allocation6], 4
          %s367 = int_to_ptr.vmem [resolvable:$true] %s366
          %372 = dma.hbm_to_vmem [thread:$0]  %s1, 1024, %s367, [#allocation7], 64, 64, 4
        $region16: #{tpu_custom_call.1} parent=11 // pred_fallthru
          _
        // Predicated region
        $region17: #{tpu_custom_call.1} parent=11 // pred_check
          %p373 = pneg %p107
        $region18: #{tpu_custom_call.1} parent=11 // pred_check_branch
          %375 = sbr.rel (%p373) target = $region20
        $region19: #{tpu_custom_call.1} parent=11 // pred_region
          _
        $region20: #{tpu_custom_call.1} parent=11 // pred_fallthru
          _
        // Predicated region
        $region21: #{tpu_custom_call.1} parent=11 // pred_check
          %p376 = pneg %p128
        $region22: #{tpu_custom_call.1} parent=11 // pred_check_branch
          %378 = sbr.rel (%p376) target = $region24
        $region23: #{tpu_custom_call.1} parent=11 // pred_region
          _
        $region24: #{tpu_custom_call.1} parent=11 // pred_fallthru
          _
        // Predicated region
        $region25: #{tpu_custom_call.1} parent=11 // pred_check
          %p379 = pneg %p149
        $region26: #{tpu_custom_call.1} parent=11 // pred_check_branch
          %381 = sbr.rel (%p379) target = $region28
        $region27: #{tpu_custom_call.1} parent=11 // pred_region
          %s383 = ssub.s32 9216, 9216
          %384 = vsyncadd [#allocation7], %s383
          %s385 = sshll.u32 [#allocation8], 4
          %s386 = int_to_ptr.vmem [resolvable:$true] %s385
          %391 = dma.hbm_to_vmem [thread:$0]  %s4, 9216, %s386, [#allocation7], 64, 64, 4
        $region28: #{tpu_custom_call.1} parent=11 // pred_fallthru
          _
        // Predicated region
        $region29: #{tpu_custom_call.1} parent=11 // pred_check
          %p392 = pneg %p170
        $region30: #{tpu_custom_call.1} parent=11 // pred_check_branch
          %394 = sbr.rel (%p392) target = $region32
        $region31: #{tpu_custom_call.1} parent=11 // pred_region
          _
        $region32: #{tpu_custom_call.1} parent=11 // pred_fallthru
          _
        // Predicated region
        $region33: #{tpu_custom_call.1} parent=11 // pred_check
          %p395 = pneg %p191
        $region34: #{tpu_custom_call.1} parent=11 // pred_check_branch
          %397 = sbr.rel (%p395) target = $region36
        $region35: #{tpu_custom_call.1} parent=11 // pred_region
          _
        $region36: #{tpu_custom_call.1} parent=11 // pred_fallthru
          _
        // Predicated region
        $region37: #{tpu_custom_call.1} parent=11 // pred_check
          %p398 = pneg %p212
        $region38: #{tpu_custom_call.1} parent=11 // pred_check_branch
          %400 = sbr.rel (%p398) target = $region40
        $region39: #{tpu_custom_call.1} parent=11 // pred_region
          %s402 = ssub.s32 1024, 1024
          %403 = vsyncadd [#allocation10], %s402
          %s404 = sshll.u32 [#allocation9], 4
          %s405 = int_to_ptr.vmem [resolvable:$true] %s404
          %410 = dma.hbm_to_vmem [thread:$0]  %s7, 1024, %s405, [#allocation10], 64, 64, 4
        $region40: #{tpu_custom_call.1} parent=11 // pred_fallthru
          _
        // Predicated region
        $region41: #{tpu_custom_call.1} parent=11 // pred_check
          %p411 = pneg %p233
        $region42: #{tpu_custom_call.1} parent=11 // pred_check_branch
          %413 = sbr.rel (%p411) target = $region44
        $region43: #{tpu_custom_call.1} parent=11 // pred_region
          _
        $region44: #{tpu_custom_call.1} parent=11 // pred_fallthru
          _
        // Predicated region
        $region45: #{tpu_custom_call.1} parent=11 // pred_check
          %p414 = pneg %p254
        $region46: #{tpu_custom_call.1} parent=11 // pred_check_branch
          %416 = sbr.rel (%p414) target = $region48
        $region47: #{tpu_custom_call.1} parent=11 // pred_region
          _
        $region48: #{tpu_custom_call.1} parent=11 // pred_fallthru
          _
        // Predicated region
        $region49: #{tpu_custom_call.1} parent=11 // pred_check
          %p417 = pneg %p275
        $region50: #{tpu_custom_call.1} parent=11 // pred_check_branch
          %419 = sbr.rel (%p417) target = $region52
        $region51: #{tpu_custom_call.1} parent=11 // pred_region
          %s421 = ssub.s32 1024, 1024
          %422 = vsyncadd [#allocation10], %s421
          %s423 = sshll.u32 [#allocation11], 4
          %s424 = int_to_ptr.vmem [resolvable:$true] %s423
          %429 = dma.hbm_to_vmem [thread:$0]  %s10, 1024, %s424, [#allocation10], 64, 64, 4
        $region52: #{tpu_custom_call.1} parent=11 // pred_fallthru
          _
        // Predicated region
        $region53: #{tpu_custom_call.1} parent=11 // pred_check
          %p430 = pneg %p296
        $region54: #{tpu_custom_call.1} parent=11 // pred_check_branch
          %432 = sbr.rel (%p430) target = $region56
        $region55: #{tpu_custom_call.1} parent=11 // pred_region
          _
        $region56: #{tpu_custom_call.1} parent=11 // pred_fallthru
          _
        // Predicated region
        $region57: #{tpu_custom_call.1} parent=11 // pred_check
          %p433 = pneg %p317
        $region58: #{tpu_custom_call.1} parent=11 // pred_check_branch
          %435 = sbr.rel (%p433) target = $region60
        $region59: #{tpu_custom_call.1} parent=11 // pred_region
          _
        $region60: #{tpu_custom_call.1} parent=11 // pred_fallthru
          _
      $region12: #{tpu_custom_call.1} parent=5 // pred_fallthru
        _
      %p436 = scmp.lt.s32.totalorder %s27, 4
      // Predicated region
      $region61: #{tpu_custom_call.1} parent=5 // pred_check
        %p437 = pneg %p436
      $region62: #{tpu_custom_call.1} parent=5 // pred_check_branch
        %439 = sbr.rel (%p437) target = $region64
      $region63: #{tpu_custom_call.1} parent=5 // pred_region
        // Predicated region
        $region65: #{tpu_custom_call.1} parent=63 // pred_check
          %p440 = pneg %p59
        $region66: #{tpu_custom_call.1} parent=63 // pred_check_branch
          %442 = sbr.rel (%p440) target = $region68
        $region67: #{tpu_custom_call.1} parent=63 // pred_region
          %s443 = sand.u32 %s49, 1
          %s444 = scalar_lea.sflag [#allocation4], %s443
          %s445 = sand.u32 %s49, 1
          %s446 = smul.addr %s445, 144
          %s447 = scalar_lea.vmem [#allocation3], %s446
          %s449 = ssub.s32 2304, 2304
          %450 = vsyncadd %s444, %s449
          %s451 = smul.addr %s34, 36
          %s452 = smul.addr %s451, 64
          %s453 = scalar_lea.hbm %s0, %s452
          %s454 = sshll.u32 %s447, 4
          %s455 = int_to_ptr.vmem [resolvable:$true] %s454
          %460 = dma.hbm_to_vmem [thread:$0]  %s453, 2304, %s455, %s444, 64, 64, 4
        $region68: #{tpu_custom_call.1} parent=63 // pred_fallthru
          _
      $region64: #{tpu_custom_call.1} parent=5 // pred_fallthru
        _
      %p461 = scmp.le.s32.totalorder 1, %s27
      %p462 = scmp.lt.s32.totalorder %s27, 5
      %p463 = pnand %p461, %p462
      %p464 = pneg %p463
      // Predicated region
      $region69: #{tpu_custom_call.1} parent=5 // pred_check
        _
      $region70: #{tpu_custom_call.1} parent=5 // pred_check_branch
        %466 = sbr.rel (%p463) target = $region72
      $region71: #{tpu_custom_call.1} parent=5 // pred_region
        %s467 = ssub.s32 %s27, 1
        %s468 = sand.u32 %s52, 1
        %s469 = scalar_lea.sflag [#allocation4], %s468
        %s470 = sand.u32 %s52, 1
        %s471 = smul.addr %s470, 144
        %s472 = scalar_lea.vmem [#allocation3], %s471
        // Predicated region
        $region73: #{tpu_custom_call.1} parent=71 // pred_check
          %p473 = pneg %p65
        $region74: #{tpu_custom_call.1} parent=71 // pred_check_branch
          %475 = sbr.rel (%p473) target = $region76
        $region75: #{tpu_custom_call.1} parent=71 // pred_region
          %476 = dma.done %s469, 2304
        $region76: #{tpu_custom_call.1} parent=71 // pred_fallthru
          _
        // Predicated region
        $region77: #{tpu_custom_call.1} parent=71 // pred_check
          %p477 = pneg %p86
        $region78: #{tpu_custom_call.1} parent=71 // pred_check_branch
          %479 = sbr.rel (%p477) target = $region80
        $region79: #{tpu_custom_call.1} parent=71 // pred_region
          %480 = dma.done [#allocation7], 1024
        $region80: #{tpu_custom_call.1} parent=71 // pred_fallthru
          _
        // Predicated region
        $region81: #{tpu_custom_call.1} parent=71 // pred_check
          %p481 = pneg %p149
        $region82: #{tpu_custom_call.1} parent=71 // pred_check_branch
          %483 = sbr.rel (%p481) target = $region84
        $region83: #{tpu_custom_call.1} parent=71 // pred_region
          %484 = dma.done [#allocation7], 9216
        $region84: #{tpu_custom_call.1} parent=71 // pred_fallthru
          _
        // Predicated region
        $region85: #{tpu_custom_call.1} parent=71 // pred_check
          %p485 = pneg %p212
        $region86: #{tpu_custom_call.1} parent=71 // pred_check_branch
          %487 = sbr.rel (%p485) target = $region88
        $region87: #{tpu_custom_call.1} parent=71 // pred_region
          %488 = dma.done [#allocation10], 1024
        $region88: #{tpu_custom_call.1} parent=71 // pred_fallthru
          _
        // Predicated region
        $region89: #{tpu_custom_call.1} parent=71 // pred_check
          %p489 = pneg %p275
        $region90: #{tpu_custom_call.1} parent=71 // pred_check_branch
          %491 = sbr.rel (%p489) target = $region92
        $region91: #{tpu_custom_call.1} parent=71 // pred_region
          %492 = dma.done [#allocation10], 1024
        $region92: #{tpu_custom_call.1} parent=71 // pred_fallthru
          _
        %s493 = sand.u32 %s52, 1
        %s494 = scalar_lea.sflag [#allocation4], %s493
        %s495 = sand.u32 %s52, 1
        %s496 = smul.addr %s495, 144
        %s497 = scalar_lea.vmem [#allocation3], %s496
        %p498 = pneg %p65
        %p499 = pneg %p62
        %p500 = pneg %p86
        %p501 = pneg %p83
        %p502 = pneg %p107
        %p503 = pneg %p104
        %p504 = pneg %p128
        %p505 = pneg %p125
        %p506 = pneg %p149
        %p507 = pneg %p146
        %p508 = pneg %p170
        %p509 = pneg %p167
        %p510 = pneg %p191
        %p511 = pneg %p188
        %p512 = pneg %p212
        %p513 = pneg %p209
        %p514 = pneg %p233
        %p515 = pneg %p230
        %p516 = pneg %p254
        %p517 = pneg %p251
        %p518 = pneg %p275
        %p519 = pneg %p272
        %p520 = pneg %p296
        %p521 = pneg %p293
        %p522 = pneg %p317
        %p523 = pneg %p314
        %p524 = pneg %p345
        %p525 = pneg %p342
        %s526 = sand.u32 %s332, 1
        %s527 = scalar_lea.sflag [#allocation5], %s526
        %s528 = sand.u32 %s332, 1
        %s529 = smul.addr %s528, 128
        %s530 = scalar_lea.vmem [#allocation12], %s529
        %s531 = smul.u32 8, %s37
        %s533 = smul.u32 %s37, 8
        %s534 = smul.u32 %s533, 2
        %s535 = smul.addr %s534, 4
        %s536 = scalar_lea.vmem %s472, %s535 [#allocation3]
        %v537 = vld [vmem:[%s536] sm:$0xf]
        %v538 = vld [vmem:[%s536 + $0x4] sm:$0xf]
        %v539 = vld [vmem:[%s536 + $0x8] sm:$0xf]
        %v540 = vld [vmem:[%s536 + $0xc] sm:$0xf]
        %v541 = vld [vmem:[%s536 + $0x10] sm:$0xf]
        %v542 = vld [vmem:[%s536 + $0x14] sm:$0xf]
        %v543 = vld [vmem:[%s536 + $0x18] sm:$0xf]
        %v544 = vld [vmem:[%s536 + $0x1c] sm:$0xf]
        %v545 = vld [vmem:[%s536 + $0x20] sm:$0xf]
        %v546 = vld [vmem:[%s536 + $0x24] sm:$0xf]
        %v547 = vld [vmem:[%s536 + $0x28] sm:$0xf]
        %v548 = vld [vmem:[%s536 + $0x2c] sm:$0xf]
        %v549 = vld [vmem:[%s536 + $0x30] sm:$0xf]
        %v550 = vld [vmem:[%s536 + $0x34] sm:$0xf]
        %v551 = vld [vmem:[%s536 + $0x38] sm:$0xf]
        %v552 = vld [vmem:[%s536 + $0x3c] sm:$0xf]
        %v553 = vld [vmem:[%s536 + $0x40] sm:$0xf]
        %v554 = vld [vmem:[%s536 + $0x44] sm:$0xf]
        %v555 = vld [vmem:[%s536 + $0x48] sm:$0xf]
        %v556 = vld [vmem:[%s536 + $0x4c] sm:$0xf]
        %v557 = vld [vmem:[#allocation6] sm:$0xf]
        %v558 = vld [vmem:[#allocation6 + $0x4] sm:$0xf]
        %v559 = vld [vmem:[#allocation6 + $0x8] sm:$0xf]
        %v560 = vld [vmem:[#allocation6 + $0xc] sm:$0xf]
        %v561 = vld [vmem:[#allocation6 + $0x10] sm:$0xf]
        %v562 = vld [vmem:[#allocation6 + $0x14] sm:$0xf]
        %v563 = vld [vmem:[#allocation6 + $0x18] sm:$0xf]
        %v564 = vld [vmem:[#allocation6 + $0x1c] sm:$0xf]
        %v565 = vld [vmem:[#allocation6 + $0x20] sm:$0xf]
        %v566 = vld [vmem:[#allocation6 + $0x24] sm:$0xf]
        %v567 = vld [vmem:[#allocation6 + $0x28] sm:$0xf]
        %v568 = vld [vmem:[#allocation6 + $0x2c] sm:$0xf]
        %v569 = vld [vmem:[#allocation6 + $0x30] sm:$0xf]
        %v570 = vld [vmem:[#allocation6 + $0x34] sm:$0xf]
        %v571 = vld [vmem:[#allocation6 + $0x38] sm:$0xf]
        %v572 = vld [vmem:[#allocation6 + $0x3c] sm:$0xf]
        %v593 = vunpack.c.l.b16 %v537
        %v594 = vunpack.c.l.b16 %v538
        %v595 = vunpack.c.l.b16 %v539
        %v596 = vunpack.c.l.b16 %v540
        %v597 = vunpack.c.l.b16 %v541
        %v598 = vunpack.c.l.b16 %v542
        %v599 = vunpack.c.l.b16 %v543
        %v600 = vunpack.c.l.b16 %v544
        %v601 = vunpack.c.l.b16 %v545
        %v602 = vunpack.c.l.b16 %v546
        %v603 = vunpack.c.l.b16 %v547
        %v604 = vunpack.c.l.b16 %v548
        %v605 = vunpack.c.l.b16 %v549
        %v606 = vunpack.c.l.b16 %v550
        %v607 = vunpack.c.l.b16 %v551
        %v608 = vunpack.c.l.b16 %v552
        %v609 = vunpack.c.l.b16 %v553
        %v610 = vunpack.c.l.b16 %v554
        %v611 = vunpack.c.l.b16 %v555
        %v612 = vunpack.c.l.b16 %v556
        %v613 = vpack.c.b16 %v594, %v593
        %v614 = vpack.c.b16 %v596, %v595
        %v615 = vpack.c.b16 %v598, %v597
        %v616 = vpack.c.b16 %v600, %v599
        %v617 = vpack.c.b16 %v602, %v601
        %v618 = vpack.c.b16 %v604, %v603
        %v619 = vpack.c.b16 %v606, %v605
        %v620 = vpack.c.b16 %v608, %v607
        %v621 = vpack.c.b16 %v610, %v609
        %v622 = vpack.c.b16 %v612, %v611
        %v649 = vunpack.c.l.b16 %v557
        %v650 = vunpack.c.l.b16 %v558
        %v651 = vunpack.c.l.b16 %v559
        %v652 = vunpack.c.l.b16 %v560
        %v653 = vunpack.c.l.b16 %v561
        %v654 = vunpack.c.l.b16 %v562
        %v655 = vunpack.c.l.b16 %v563
        %v656 = vunpack.c.l.b16 %v564
        %v657 = vunpack.c.l.b16 %v565
        %v658 = vunpack.c.l.b16 %v566
        %v659 = vunpack.c.l.b16 %v567
        %v660 = vunpack.c.l.b16 %v568
        %v661 = vunpack.c.l.b16 %v569
        %v662 = vunpack.c.l.b16 %v570
        %v663 = vunpack.c.l.b16 %v571
        %v664 = vunpack.c.l.b16 %v572
        %v665 = vpack.c.b16 %v650, %v649
        %v666 = vpack.c.b16 %v652, %v651
        %v667 = vpack.c.b16 %v654, %v653
        %v668 = vpack.c.b16 %v656, %v655
        %v669 = vpack.c.b16 %v658, %v657
        %v670 = vpack.c.b16 %v660, %v659
        %v671 = vpack.c.b16 %v662, %v661
        %v672 = vpack.c.b16 %v664, %v663
        %681 = vmatprep.subr.bf16.mxu0 0
        %682 = vmatpush1.bf16.msra.mxu0 %v672
        %683 = vmatprep.subr.bf16.mxu0 0
        %684 = vmatpush1.bf16.msra.mxu0 %v671
        %685 = vmatprep.subr.bf16.mxu0 0
        %686 = vmatpush1.bf16.msra.mxu0 %v670
        %687 = vmatprep.subr.bf16.mxu0 0
        %688 = vmatpush1.bf16.msra.mxu0 %v669
        %689 = vmatprep.subr.bf16.mxu0 0
        %690 = vmatpush1.bf16.msra.mxu0 %v668
        %691 = vmatprep.subr.bf16.mxu0 0
        %692 = vmatpush1.bf16.msra.mxu0 %v667
        %693 = vmatprep.subr.bf16.mxu0 0
        %694 = vmatpush1.bf16.msra.mxu0 %v666
        %695 = vmatprep.subr.bf16.mxu0 0
        %696 = vmatpush1.bf16.msra.mxu0 %v665
        %697 = vmatprep.subr.bf16.mxu0 0
        %698 = vmatpush2.bf16.msra.mxu0 0
        %699 = vmatprep.subr.bf16.mxu0 0
        %700 = vmatpush2.bf16.msra.mxu0 0
        %701 = vmatprep.subr.bf16.mxu0 0
        %702 = vmatpush2.bf16.msra.mxu0 0
        %703 = vmatprep.subr.bf16.mxu0 0
        %704 = vmatpush2.bf16.msra.mxu0 0
        %705 = vmatprep.subr.bf16.mxu0 0
        %706 = vmatpush2.bf16.msra.mxu0 0
        %707 = vmatprep.subr.bf16.mxu0 0
        %708 = vmatpush2.bf16.msra.mxu0 0
        %709 = vmatprep.subr.bf16.mxu0 0
        %710 = vmatpush2.bf16.msra.mxu0 0
        %711 = vmatprep.subr.bf16.mxu0 0
        %712 = vmatpush2.bf16.msra.mxu0 0
        %713 = vmatprep.mubr.bf16.mxu0 0
        %714 = vmatmul.mubr.bf16.gmra.mxu0 %v613
        %v715 = vpop.f32.mrf.mxu0
        %v716 = vadd.f32 0.0, %v715
        %v717 = vpop.f32.mrf.mxu0
        %v718 = vpop.f32.mrf.mxu0
        %v719 = vadd.f32 0.0, %v718
        %v720 = vpop.f32.mrf.mxu0
        %721 = vmatprep.mubr.bf16.mxu0 0
        %722 = vmatmul.mubr.bf16.gmra.mxu0 %v614
        %v723 = vpop.f32.mrf.mxu0
        %v724 = vadd.f32 0.0, %v723
        %v725 = vpop.f32.mrf.mxu0
        %v726 = vpop.f32.mrf.mxu0
        %v727 = vadd.f32 0.0, %v726
        %v728 = vpop.f32.mrf.mxu0
        %729 = vmatprep.mubr.bf16.mxu0 0
        %730 = vmatmul.mubr.bf16.gmra.mxu0 %v615
        %v731 = vpop.f32.mrf.mxu0
        %v732 = vadd.f32 0.0, %v731
        %v733 = vpop.f32.mrf.mxu0
        %v734 = vpop.f32.mrf.mxu0
        %v735 = vadd.f32 0.0, %v734
        %v736 = vpop.f32.mrf.mxu0
        %737 = vmatprep.mubr.bf16.mxu0 0
        %738 = vmatmul.mubr.bf16.gmra.mxu0 %v616
        %v739 = vpop.f32.mrf.mxu0
        %v740 = vadd.f32 0.0, %v739
        %v741 = vpop.f32.mrf.mxu0
        %v742 = vpop.f32.mrf.mxu0
        %v743 = vadd.f32 0.0, %v742
        %v744 = vpop.f32.mrf.mxu0
        %745 = vmatprep.mubr.bf16.mxu0 0
        %746 = vmatmul.mubr.bf16.gmra.mxu0 %v617
        %v747 = vpop.f32.mrf.mxu0
        %v748 = vadd.f32 0.0, %v747
        %v749 = vpop.f32.mrf.mxu0
        %v750 = vpop.f32.mrf.mxu0
        %v751 = vadd.f32 0.0, %v750
        %v752 = vpop.f32.mrf.mxu0
        %753 = vmatprep.mubr.bf16.mxu0 0
        %754 = vmatmul.mubr.bf16.gmra.mxu0 %v618
        %v755 = vpop.f32.mrf.mxu0
        %v756 = vadd.f32 0.0, %v755
        %v757 = vpop.f32.mrf.mxu0
        %v758 = vpop.f32.mrf.mxu0
        %v759 = vadd.f32 0.0, %v758
        %v760 = vpop.f32.mrf.mxu0
        %761 = vmatprep.mubr.bf16.mxu0 0
        %762 = vmatmul.mubr.bf16.gmra.mxu0 %v619
        %v763 = vpop.f32.mrf.mxu0
        %v764 = vadd.f32 0.0, %v763
        %v765 = vpop.f32.mrf.mxu0
        %v766 = vpop.f32.mrf.mxu0
        %v767 = vadd.f32 0.0, %v766
        %v768 = vpop.f32.mrf.mxu0
        %769 = vmatprep.mubr.bf16.mxu0 0
        %770 = vmatmul.mubr.bf16.gmra.mxu0 %v620
        %v771 = vpop.f32.mrf.mxu0
        %v772 = vadd.f32 0.0, %v771
        %v773 = vpop.f32.mrf.mxu0
        %v774 = vpop.f32.mrf.mxu0
        %v775 = vadd.f32 0.0, %v774
        %v776 = vpop.f32.mrf.mxu0
        %777 = vmatprep.mubr.bf16.mxu0 0
        %778 = vmatmul.mubr.bf16.gmra.mxu0 %v621
        %v779 = vpop.f32.mrf.mxu0
        %v780 = vadd.f32 0.0, %v779
        %v781 = vpop.f32.mrf.mxu0
        %v782 = vpop.f32.mrf.mxu0
        %v783 = vadd.f32 0.0, %v782
        %v784 = vpop.f32.mrf.mxu0
        %785 = vmatprep.mubr.bf16.mxu0 0
        %786 = vmatmul.mubr.bf16.gmra.mxu0 %v622
        %v787 = vpop.f32.mrf.mxu0
        %v788 = vadd.f32 0.0, %v787
        %v789 = vpop.f32.mrf.mxu0
        %v790 = vpop.f32.mrf.mxu0
        %v791 = vadd.f32 0.0, %v790
        %v792 = vpop.f32.mrf.mxu0
        %793 = vdwg.mxu0
        %v794 = vld [vmem:[%s2] sm:$0x1]
        %v796 = vlaneseq
        %v797 = vshrl.u32 %v796, 7
        %v798 = vsub.s32 0, %v797
        %v799 = vrot.slane %v794, %v798
        %v801 = vmul.f32 %v716, %v799
        %v802 = vmul.f32 %v719, %v799
        %v803 = vmul.f32 %v724, %v799
        %v804 = vmul.f32 %v727, %v799
        %v805 = vmul.f32 %v732, %v799
        %v806 = vmul.f32 %v735, %v799
        %v807 = vmul.f32 %v740, %v799
        %v808 = vmul.f32 %v743, %v799
        %v809 = vmul.f32 %v748, %v799
        %v810 = vmul.f32 %v751, %v799
        %v811 = vmul.f32 %v756, %v799
        %v812 = vmul.f32 %v759, %v799
        %v813 = vmul.f32 %v764, %v799
        %v814 = vmul.f32 %v767, %v799
        %v815 = vmul.f32 %v772, %v799
        %v816 = vmul.f32 %v775, %v799
        %v817 = vmul.f32 %v780, %v799
        %v818 = vmul.f32 %v783, %v799
        %v819 = vmul.f32 %v788, %v799
        %v820 = vmul.f32 %v791, %v799
        %v821 = vld [vmem:[%s3] sm:$0x1]
        %v823 = vlaneseq
        %v824 = vshrl.u32 %v823, 7
        %v825 = vsub.s32 0, %v824
        %v826 = vrot.slane %v821, %v825
        %v828 = vadd.f32 %v801, %v826
        %v829 = vadd.f32 %v802, %v826
        %v830 = vadd.f32 %v803, %v826
        %v831 = vadd.f32 %v804, %v826
        %v832 = vadd.f32 %v805, %v826
        %v833 = vadd.f32 %v806, %v826
        %v834 = vadd.f32 %v807, %v826
        %v835 = vadd.f32 %v808, %v826
        %v836 = vadd.f32 %v809, %v826
        %v837 = vadd.f32 %v810, %v826
        %v838 = vadd.f32 %v811, %v826
        %v839 = vadd.f32 %v812, %v826
        %v840 = vadd.f32 %v813, %v826
        %v841 = vadd.f32 %v814, %v826
        %v842 = vadd.f32 %v815, %v826
        %v843 = vadd.f32 %v816, %v826
        %v844 = vadd.f32 %v817, %v826
        %v845 = vadd.f32 %v818, %v826
        %v846 = vadd.f32 %v819, %v826
        %v847 = vadd.f32 %v820, %v826
        %v848 = vmax.f32 %v828, 0.0
        %v849 = vmax.f32 %v829, 0.0
        %v850 = vmax.f32 %v830, 0.0
        %v851 = vmax.f32 %v831, 0.0
        %v852 = vmax.f32 %v832, 0.0
        %v853 = vmax.f32 %v833, 0.0
        %v854 = vmax.f32 %v834, 0.0
        %v855 = vmax.f32 %v835, 0.0
        %v856 = vmax.f32 %v836, 0.0
        %v857 = vmax.f32 %v837, 0.0
        %v858 = vmax.f32 %v838, 0.0
        %v859 = vmax.f32 %v839, 0.0
        %v860 = vmax.f32 %v840, 0.0
        %v861 = vmax.f32 %v841, 0.0
        %v862 = vmax.f32 %v842, 0.0
        %v863 = vmax.f32 %v843, 0.0
        %v864 = vmax.f32 %v844, 0.0
        %v865 = vmax.f32 %v845, 0.0
        %v866 = vmax.f32 %v846, 0.0
        %v867 = vmax.f32 %v847, 0.0
        %v868 = vpack.c.bf16 %v849, %v848
        %v869 = vpack.c.bf16 %v851, %v850
        %v870 = vpack.c.bf16 %v853, %v852
        %v871 = vpack.c.bf16 %v855, %v854
        %v872 = vpack.c.bf16 %v857, %v856
        %v873 = vpack.c.bf16 %v859, %v858
        %v874 = vpack.c.bf16 %v861, %v860
        %v875 = vpack.c.bf16 %v863, %v862
        %v876 = vpack.c.bf16 %v865, %v864
        %v877 = vpack.c.bf16 %v867, %v866
        %vm878 = vcmask 1043459
        %vm879 = vsmask.f32 7950
        %vm880 = vmand %vm878, %vm879
        %v881 = vld [vmem:[#allocation2 + $0x4] sm:$0x8]
        %v882 = vsel %vm880, 0, %v881
        %883 = vst [vmem:[#allocation2 + $0x4] sm:$0x8] %v882
        %v884 = vld [vmem:[#allocation2 + $0x18] sm:$0x8]
        %v885 = vsel %vm880, 0, %v884
        %886 = vst [vmem:[#allocation2 + $0x18] sm:$0x8] %v885
        %v887 = vld [vmem:[#allocation2 + $0x2c] sm:$0x8]
        %v888 = vsel %vm880, 0, %v887
        %889 = vst [vmem:[#allocation2 + $0x2c] sm:$0x8] %v888
        %v890 = vld [vmem:[#allocation2 + $0x40] sm:$0x8]
        %v891 = vsel %vm880, 0, %v890
        %892 = vst [vmem:[#allocation2 + $0x40] sm:$0x8] %v891
        %v893 = vld [vmem:[#allocation2 + $0x54] sm:$0x8]
        %v894 = vsel %vm880, 0, %v893
        %895 = vst [vmem:[#allocation2 + $0x54] sm:$0x8] %v894
        %v896 = vld [vmem:[#allocation2 + $0x68] sm:$0x8]
        %v897 = vsel %vm880, 0, %v896
        %898 = vst [vmem:[#allocation2 + $0x68] sm:$0x8] %v897
        %v899 = vld [vmem:[#allocation2 + $0x7c] sm:$0x8]
        %v900 = vsel %vm880, 0, %v899
        %901 = vst [vmem:[#allocation2 + $0x7c] sm:$0x8] %v900
        %v902 = vld [vmem:[#allocation2 + $0x90] sm:$0x8]
        %v903 = vsel %vm880, 0, %v902
        %904 = vst [vmem:[#allocation2 + $0x90] sm:$0x8] %v903
        %v905 = vld [vmem:[#allocation2 + $0xa4] sm:$0x8]
        %v906 = vsel %vm880, 0, %v905
        %907 = vst [vmem:[#allocation2 + $0xa4] sm:$0x8] %v906
        %v908 = vld [vmem:[#allocation2 + $0xb8] sm:$0x8]
        %v909 = vsel %vm880, 0, %v908
        %910 = vst [vmem:[#allocation2 + $0xb8] sm:$0x8] %v909
        %vm911 = vcmask 1040384
        %vm912 = vsmask.f32 256
        %vm913 = vmand %vm911, %vm912
        %v914 = vld [vmem:[#allocation2 + $0x10] sm:$0x1]
        %v915 = vsel %vm913, 0, %v914
        %916 = vst [vmem:[#allocation2 + $0x10] sm:$0x1] %v915
        %v917 = vld [vmem:[#allocation2 + $0x24] sm:$0x1]
        %v918 = vsel %vm913, 0, %v917
        %919 = vst [vmem:[#allocation2 + $0x24] sm:$0x1] %v918
        %v920 = vld [vmem:[#allocation2 + $0x38] sm:$0x1]
        %v921 = vsel %vm913, 0, %v920
        %922 = vst [vmem:[#allocation2 + $0x38] sm:$0x1] %v921
        %v923 = vld [vmem:[#allocation2 + $0x4c] sm:$0x1]
        %v924 = vsel %vm913, 0, %v923
        %925 = vst [vmem:[#allocation2 + $0x4c] sm:$0x1] %v924
        %v926 = vld [vmem:[#allocation2 + $0x60] sm:$0x1]
        %v927 = vsel %vm913, 0, %v926
        %928 = vst [vmem:[#allocation2 + $0x60] sm:$0x1] %v927
        %v929 = vld [vmem:[#allocation2 + $0x74] sm:$0x1]
        %v930 = vsel %vm913, 0, %v929
        %931 = vst [vmem:[#allocation2 + $0x74] sm:$0x1] %v930
        %v932 = vld [vmem:[#allocation2 + $0x88] sm:$0x1]
        %v933 = vsel %vm913, 0, %v932
        %934 = vst [vmem:[#allocation2 + $0x88] sm:$0x1] %v933
        %v935 = vld [vmem:[#allocation2 + $0x9c] sm:$0x1]
        %v936 = vsel %vm913, 0, %v935
        %937 = vst [vmem:[#allocation2 + $0x9c] sm:$0x1] %v936
        %v938 = vld [vmem:[#allocation2 + $0xb0] sm:$0x1]
        %v939 = vsel %vm913, 0, %v938
        %940 = vst [vmem:[#allocation2 + $0xb0] sm:$0x1] %v939
        %v941 = vld [vmem:[#allocation2 + $0xc4] sm:$0x1]
        %v942 = vsel %vm913, 0, %v941
        %943 = vst [vmem:[#allocation2 + $0xc4] sm:$0x1] %v942
        %v954 = vunpack.c.l.b16 %v868
        %v955 = vunpack.c.h.b16 %v868
        %v956 = vunpack.c.l.b16 %v869
        %v957 = vunpack.c.h.b16 %v869
        %v958 = vunpack.c.l.b16 %v870
        %v959 = vunpack.c.h.b16 %v870
        %v960 = vunpack.c.l.b16 %v871
        %v961 = vunpack.c.h.b16 %v871
        %v962 = vunpack.c.l.b16 %v872
        %v963 = vunpack.c.h.b16 %v872
        %v964 = vunpack.c.l.b16 %v873
        %v965 = vunpack.c.h.b16 %v873
        %v966 = vunpack.c.l.b16 %v874
        %v967 = vunpack.c.h.b16 %v874
        %v968 = vunpack.c.l.b16 %v875
        %v969 = vunpack.c.h.b16 %v875
        %v970 = vunpack.c.l.b16 %v876
        %v971 = vunpack.c.h.b16 %v876
        %v972 = vunpack.c.l.b16 %v877
        %v973 = vunpack.c.h.b16 %v877
        %v974 = vpack.c.b16 %v954, %v954
        %v975 = vpack.c.b16 %v955, %v955
        %v976 = vpack.c.b16 %v956, %v956
        %v977 = vpack.c.b16 %v957, %v957
        %v978 = vpack.c.b16 %v958, %v958
        %v979 = vpack.c.b16 %v959, %v959
        %v980 = vpack.c.b16 %v960, %v960
        %v981 = vpack.c.b16 %v961, %v961
        %v982 = vpack.c.b16 %v962, %v962
        %v983 = vpack.c.b16 %v963, %v963
        %v984 = vpack.c.b16 %v964, %v964
        %v985 = vpack.c.b16 %v965, %v965
        %v986 = vpack.c.b16 %v966, %v966
        %v987 = vpack.c.b16 %v967, %v967
        %v988 = vpack.c.b16 %v968, %v968
        %v989 = vpack.c.b16 %v969, %v969
        %v990 = vpack.c.b16 %v970, %v970
        %v991 = vpack.c.b16 %v971, %v971
        %v992 = vpack.c.b16 %v972, %v972
        %v993 = vpack.c.b16 %v973, %v973
        %1014 = vst [vmem:[#allocation2 + $0x8] sm:$0xf] %v974
        %1015 = vst [vmem:[#allocation2 + $0xc] sm:$0xf] %v975
        %1016 = vst [vmem:[#allocation2 + $0x1c] sm:$0xf] %v976
        %1017 = vst [vmem:[#allocation2 + $0x20] sm:$0xf] %v977
        %1018 = vst [vmem:[#allocation2 + $0x30] sm:$0xf] %v978
        %1019 = vst [vmem:[#allocation2 + $0x34] sm:$0xf] %v979
        %1020 = vst [vmem:[#allocation2 + $0x44] sm:$0xf] %v980
        %1021 = vst [vmem:[#allocation2 + $0x48] sm:$0xf] %v981
        %1022 = vst [vmem:[#allocation2 + $0x58] sm:$0xf] %v982
        %1023 = vst [vmem:[#allocation2 + $0x5c] sm:$0xf] %v983
        %1024 = vst [vmem:[#allocation2 + $0x6c] sm:$0xf] %v984
        %1025 = vst [vmem:[#allocation2 + $0x70] sm:$0xf] %v985
        %1026 = vst [vmem:[#allocation2 + $0x80] sm:$0xf] %v986
        %1027 = vst [vmem:[#allocation2 + $0x84] sm:$0xf] %v987
        %1028 = vst [vmem:[#allocation2 + $0x94] sm:$0xf] %v988
        %1029 = vst [vmem:[#allocation2 + $0x98] sm:$0xf] %v989
        %1030 = vst [vmem:[#allocation2 + $0xa8] sm:$0xf] %v990
        %1031 = vst [vmem:[#allocation2 + $0xac] sm:$0xf] %v991
        %1032 = vst [vmem:[#allocation2 + $0xbc] sm:$0xf] %v992
        %1033 = vst [vmem:[#allocation2 + $0xc0] sm:$0xf] %v993
        %p1034 = scmp.eq.s32.totalorder %s37, 0
        // Predicated region
        $region93: #{tpu_custom_call.1} parent=71 // pred_check
          %p1035 = pneg %p1034
        $region94: #{tpu_custom_call.1} parent=71 // pred_check_branch
          %1037 = sbr.rel (%p1035) target = $region96
        $region95: #{tpu_custom_call.1} parent=71 // pred_region
          %v1038 = vld [vmem:[#allocation2 + $0x4] sm:$0x8]
          %v1039 = vsel %vm880, 0, %v1038
          %1040 = vst [vmem:[#allocation2 + $0x4] sm:$0x8] %v1039
          %1041 = vst [vmem:[#allocation2 + $0x8] sm:$0xf] 0
          %1042 = vst [vmem:[#allocation2 + $0xc] sm:$0xf] 0
          %v1043 = vld [vmem:[#allocation2 + $0x10] sm:$0x1]
          %v1044 = vsel %vm913, 0, %v1043
          %1045 = vst [vmem:[#allocation2 + $0x10] sm:$0x1] %v1044
        $region96: #{tpu_custom_call.1} parent=71 // pred_fallthru
          _
        %p1046 = scmp.eq.s32.totalorder %s37, 1
        // Predicated region
        $region97: #{tpu_custom_call.1} parent=71 // pred_check
          %p1047 = pneg %p1046
        $region98: #{tpu_custom_call.1} parent=71 // pred_check_branch
          %1049 = sbr.rel (%p1047) target = $region100
        $region99: #{tpu_custom_call.1} parent=71 // pred_region
          %s1050 = scalar_lea.vmem [#allocation2], 180
          %v1051 = vld [vmem:[%s1050 + $0x4] sm:$0x8]
          %v1052 = vsel %vm880, 0, %v1051
          %1053 = vst [vmem:[%s1050 + $0x4] sm:$0x8] %v1052
          %1054 = vst [vmem:[%s1050 + $0x8] sm:$0xf] 0
          %1055 = vst [vmem:[%s1050 + $0xc] sm:$0xf] 0
          %v1056 = vld [vmem:[%s1050 + $0x10] sm:$0x1]
          %v1057 = vsel %vm913, 0, %v1056
          %1058 = vst [vmem:[%s1050 + $0x10] sm:$0x1] %v1057
        $region100: #{tpu_custom_call.1} parent=71 // pred_fallthru
          _
        %v1059 = vld [vmem:[#allocation2 + $0x4] sm:$0x8]
        %v1060 = vld [vmem:[#allocation2 + $0x8] sm:$0xf]
        %v1061 = vld [vmem:[#allocation2 + $0xc] sm:$0xf]
        %v1062 = vld [vmem:[#allocation2 + $0x18] sm:$0x8]
        %v1063 = vld [vmem:[#allocation2 + $0x1c] sm:$0xf]
        %v1064 = vld [vmem:[#allocation2 + $0x20] sm:$0xf]
        %v1065 = vld [vmem:[#allocation2 + $0x2c] sm:$0x8]
        %v1066 = vld [vmem:[#allocation2 + $0x30] sm:$0xf]
        %v1067 = vld [vmem:[#allocation2 + $0x34] sm:$0xf]
        %v1068 = vld [vmem:[#allocation2 + $0x40] sm:$0x8]
        %v1069 = vld [vmem:[#allocation2 + $0x44] sm:$0xf]
        %v1070 = vld [vmem:[#allocation2 + $0x48] sm:$0xf]
        %v1071 = vld [vmem:[#allocation2 + $0x54] sm:$0x8]
        %v1072 = vld [vmem:[#allocation2 + $0x58] sm:$0xf]
        %v1073 = vld [vmem:[#allocation2 + $0x5c] sm:$0xf]
        %v1074 = vld [vmem:[#allocation2 + $0x68] sm:$0x8]
        %v1075 = vld [vmem:[#allocation2 + $0x6c] sm:$0xf]
        %v1076 = vld [vmem:[#allocation2 + $0x70] sm:$0xf]
        %v1077 = vld [vmem:[#allocation2 + $0x7c] sm:$0x8]
        %v1078 = vld [vmem:[#allocation2 + $0x80] sm:$0xf]
        %v1079 = vld [vmem:[#allocation2 + $0x84] sm:$0xf]
        %v1080 = vld [vmem:[#allocation2 + $0x90] sm:$0x8]
        %v1081 = vld [vmem:[#allocation2 + $0x94] sm:$0xf]
        %v1082 = vld [vmem:[#allocation2 + $0x98] sm:$0xf]
        %vm1083 = vsmask.f32 4368
        %vm1084 = vmor %vm912, %vm1083
        %v1086 = vshrl.u32 %v1059, 16
        %v1088 = vrot.slane %v1086, 7
        %v1089 = vrot.slane %v1088, 4
        %v1091 = vshrl.u32 %v1060, 16
        %v1093 = vrot.slane %v1091, 7
        %v1094 = vshll.u32 %v1060, 16
        %v1096 = vor.u32 %v1093, %v1094
        %v1097 = vsel %vm1084, %v1089, %v1096
        %v1098 = vrot.slane %v1093, 4
        %v1100 = vshrl.u32 %v1061, 16
        %v1102 = vrot.slane %v1100, 7
        %v1103 = vshll.u32 %v1061, 16
        %v1105 = vor.u32 %v1102, %v1103
        %v1106 = vsel %vm1084, %v1098, %v1105
        %v1108 = vshrl.u32 %v1062, 16
        %v1110 = vrot.slane %v1108, 7
        %v1111 = vrot.slane %v1110, 4
        %v1113 = vshrl.u32 %v1063, 16
        %v1115 = vrot.slane %v1113, 7
        %v1116 = vshll.u32 %v1063, 16
        %v1118 = vor.u32 %v1115, %v1116
        %v1119 = vsel %vm1084, %v1111, %v1118
        %v1120 = vrot.slane %v1115, 4
        %v1122 = vshrl.u32 %v1064, 16
        %v1124 = vrot.slane %v1122, 7
        %v1125 = vshll.u32 %v1064, 16
        %v1127 = vor.u32 %v1124, %v1125
        %v1128 = vsel %vm1084, %v1120, %v1127
        %v1130 = vshrl.u32 %v1065, 16
        %v1132 = vrot.slane %v1130, 7
        %v1133 = vrot.slane %v1132, 4
        %v1135 = vshrl.u32 %v1066, 16
        %v1137 = vrot.slane %v1135, 7
        %v1138 = vshll.u32 %v1066, 16
        %v1140 = vor.u32 %v1137, %v1138
        %v1141 = vsel %vm1084, %v1133, %v1140
        %v1142 = vrot.slane %v1137, 4
        %v1144 = vshrl.u32 %v1067, 16
        %v1146 = vrot.slane %v1144, 7
        %v1147 = vshll.u32 %v1067, 16
        %v1149 = vor.u32 %v1146, %v1147
        %v1150 = vsel %vm1084, %v1142, %v1149
        %v1152 = vshrl.u32 %v1068, 16
        %v1154 = vrot.slane %v1152, 7
        %v1155 = vrot.slane %v1154, 4
        %v1157 = vshrl.u32 %v1069, 16
        %v1159 = vrot.slane %v1157, 7
        %v1160 = vshll.u32 %v1069, 16
        %v1162 = vor.u32 %v1159, %v1160
        %v1163 = vsel %vm1084, %v1155, %v1162
        %v1164 = vrot.slane %v1159, 4
        %v1166 = vshrl.u32 %v1070, 16
        %v1168 = vrot.slane %v1166, 7
        %v1169 = vshll.u32 %v1070, 16
        %v1171 = vor.u32 %v1168, %v1169
        %v1172 = vsel %vm1084, %v1164, %v1171
        %v1174 = vshrl.u32 %v1071, 16
        %v1176 = vrot.slane %v1174, 7
        %v1177 = vrot.slane %v1176, 4
        %v1179 = vshrl.u32 %v1072, 16
        %v1181 = vrot.slane %v1179, 7
        %v1182 = vshll.u32 %v1072, 16
        %v1184 = vor.u32 %v1181, %v1182
        %v1185 = vsel %vm1084, %v1177, %v1184
        %v1186 = vrot.slane %v1181, 4
        %v1188 = vshrl.u32 %v1073, 16
        %v1190 = vrot.slane %v1188, 7
        %v1191 = vshll.u32 %v1073, 16
        %v1193 = vor.u32 %v1190, %v1191
        %v1194 = vsel %vm1084, %v1186, %v1193
        %v1196 = vshrl.u32 %v1074, 16
        %v1198 = vrot.slane %v1196, 7
        %v1199 = vrot.slane %v1198, 4
        %v1201 = vshrl.u32 %v1075, 16
        %v1203 = vrot.slane %v1201, 7
        %v1204 = vshll.u32 %v1075, 16
        %v1206 = vor.u32 %v1203, %v1204
        %v1207 = vsel %vm1084, %v1199, %v1206
        %v1208 = vrot.slane %v1203, 4
        %v1210 = vshrl.u32 %v1076, 16
        %v1212 = vrot.slane %v1210, 7
        %v1213 = vshll.u32 %v1076, 16
        %v1215 = vor.u32 %v1212, %v1213
        %v1216 = vsel %vm1084, %v1208, %v1215
        %v1218 = vshrl.u32 %v1077, 16
        %v1220 = vrot.slane %v1218, 7
        %v1221 = vrot.slane %v1220, 4
        %v1223 = vshrl.u32 %v1078, 16
        %v1225 = vrot.slane %v1223, 7
        %v1226 = vshll.u32 %v1078, 16
        %v1228 = vor.u32 %v1225, %v1226
        %v1229 = vsel %vm1084, %v1221, %v1228
        %v1230 = vrot.slane %v1225, 4
        %v1232 = vshrl.u32 %v1079, 16
        %v1234 = vrot.slane %v1232, 7
        %v1235 = vshll.u32 %v1079, 16
        %v1237 = vor.u32 %v1234, %v1235
        %v1238 = vsel %vm1084, %v1230, %v1237
        %v1240 = vshrl.u32 %v1080, 16
        %v1242 = vrot.slane %v1240, 7
        %v1243 = vrot.slane %v1242, 4
        %v1245 = vshrl.u32 %v1081, 16
        %v1247 = vrot.slane %v1245, 7
        %v1248 = vshll.u32 %v1081, 16
        %v1250 = vor.u32 %v1247, %v1248
        %v1251 = vsel %vm1084, %v1243, %v1250
        %v1252 = vrot.slane %v1247, 4
        %v1254 = vshrl.u32 %v1082, 16
        %v1256 = vrot.slane %v1254, 7
        %v1257 = vshll.u32 %v1082, 16
        %v1259 = vor.u32 %v1256, %v1257
        %v1260 = vsel %vm1084, %v1252, %v1259
        %v1261 = vld [vmem:[#allocation2 + $0x10] sm:$0x1]
        %v1262 = vld [vmem:[#allocation2 + $0x24] sm:$0x1]
        %v1263 = vld [vmem:[#allocation2 + $0x38] sm:$0x1]
        %v1264 = vld [vmem:[#allocation2 + $0x4c] sm:$0x1]
        %v1265 = vld [vmem:[#allocation2 + $0x60] sm:$0x1]
        %v1266 = vld [vmem:[#allocation2 + $0x74] sm:$0x1]
        %v1267 = vld [vmem:[#allocation2 + $0x88] sm:$0x1]
        %v1268 = vld [vmem:[#allocation2 + $0x9c] sm:$0x1]
        %vm1269 = vsmask.f32 3328
        %vm1270 = vsmask.f32 7440
        %vm1271 = vmor %vm1269, %vm1270
        %v1272 = vrot.slane %v1091, 4
        %v1273 = vrot.slane %v1094, 5
        %v1274 = vor.u32 %v1272, %v1273
        %v1275 = vrot.slane %v1274, 4
        %v1276 = vrot.slane %v1103, 5
        %v1277 = vsel %vm1271, %v1275, %v1276
        %v1278 = vrot.slane %v1100, 4
        %v1279 = vor.u32 %v1278, %v1276
        %v1280 = vrot.slane %v1279, 4
        %v1282 = vshll.u32 %v1261, 16
        %v1284 = vrot.slane %v1282, 5
        %v1285 = vsel %vm1271, %v1280, %v1284
        %v1286 = vrot.slane %v1113, 4
        %v1287 = vrot.slane %v1116, 5
        %v1288 = vor.u32 %v1286, %v1287
        %v1289 = vrot.slane %v1288, 4
        %v1290 = vrot.slane %v1125, 5
        %v1291 = vsel %vm1271, %v1289, %v1290
        %v1292 = vrot.slane %v1122, 4
        %v1293 = vor.u32 %v1292, %v1290
        %v1294 = vrot.slane %v1293, 4
        %v1296 = vshll.u32 %v1262, 16
        %v1298 = vrot.slane %v1296, 5
        %v1299 = vsel %vm1271, %v1294, %v1298
        %v1300 = vrot.slane %v1135, 4
        %v1301 = vrot.slane %v1138, 5
        %v1302 = vor.u32 %v1300, %v1301
        %v1303 = vrot.slane %v1302, 4
        %v1304 = vrot.slane %v1147, 5
        %v1305 = vsel %vm1271, %v1303, %v1304
        %v1306 = vrot.slane %v1144, 4
        %v1307 = vor.u32 %v1306, %v1304
        %v1308 = vrot.slane %v1307, 4
        %v1310 = vshll.u32 %v1263, 16
        %v1312 = vrot.slane %v1310, 5
        %v1313 = vsel %vm1271, %v1308, %v1312
        %v1314 = vrot.slane %v1157, 4
        %v1315 = vrot.slane %v1160, 5
        %v1316 = vor.u32 %v1314, %v1315
        %v1317 = vrot.slane %v1316, 4
        %v1318 = vrot.slane %v1169, 5
        %v1319 = vsel %vm1271, %v1317, %v1318
        %v1320 = vrot.slane %v1166, 4
        %v1321 = vor.u32 %v1320, %v1318
        %v1322 = vrot.slane %v1321, 4
        %v1324 = vshll.u32 %v1264, 16
        %v1326 = vrot.slane %v1324, 5
        %v1327 = vsel %vm1271, %v1322, %v1326
        %v1328 = vrot.slane %v1179, 4
        %v1329 = vrot.slane %v1182, 5
        %v1330 = vor.u32 %v1328, %v1329
        %v1331 = vrot.slane %v1330, 4
        %v1332 = vrot.slane %v1191, 5
        %v1333 = vsel %vm1271, %v1331, %v1332
        %v1334 = vrot.slane %v1188, 4
        %v1335 = vor.u32 %v1334, %v1332
        %v1336 = vrot.slane %v1335, 4
        %v1338 = vshll.u32 %v1265, 16
        %v1340 = vrot.slane %v1338, 5
        %v1341 = vsel %vm1271, %v1336, %v1340
        %v1342 = vrot.slane %v1201, 4
        %v1343 = vrot.slane %v1204, 5
        %v1344 = vor.u32 %v1342, %v1343
        %v1345 = vrot.slane %v1344, 4
        %v1346 = vrot.slane %v1213, 5
        %v1347 = vsel %vm1271, %v1345, %v1346
        %v1348 = vrot.slane %v1210, 4
        %v1349 = vor.u32 %v1348, %v1346
        %v1350 = vrot.slane %v1349, 4
        %v1352 = vshll.u32 %v1266, 16
        %v1354 = vrot.slane %v1352, 5
        %v1355 = vsel %vm1271, %v1350, %v1354
        %v1356 = vrot.slane %v1223, 4
        %v1357 = vrot.slane %v1226, 5
        %v1358 = vor.u32 %v1356, %v1357
        %v1359 = vrot.slane %v1358, 4
        %v1360 = vrot.slane %v1235, 5
        %v1361 = vsel %vm1271, %v1359, %v1360
        %v1362 = vrot.slane %v1232, 4
        %v1363 = vor.u32 %v1362, %v1360
        %v1364 = vrot.slane %v1363, 4
        %v1366 = vshll.u32 %v1267, 16
        %v1368 = vrot.slane %v1366, 5
        %v1369 = vsel %vm1271, %v1364, %v1368
        %v1370 = vrot.slane %v1245, 4
        %v1371 = vrot.slane %v1248, 5
        %v1372 = vor.u32 %v1370, %v1371
        %v1373 = vrot.slane %v1372, 4
        %v1374 = vrot.slane %v1257, 5
        %v1375 = vsel %vm1271, %v1373, %v1374
        %v1376 = vrot.slane %v1254, 4
        %v1377 = vor.u32 %v1376, %v1374
        %v1378 = vrot.slane %v1377, 4
        %v1380 = vshll.u32 %v1268, 16
        %v1382 = vrot.slane %v1380, 5
        %v1383 = vsel %vm1271, %v1378, %v1382
        %s1384 = scalar_lea.vmem [#allocation2], 20
        %v1385 = vld [vmem:[%s1384 + $0x4] sm:$0x8]
        %v1386 = vld [vmem:[%s1384 + $0x8] sm:$0xf]
        %v1387 = vld [vmem:[%s1384 + $0xc] sm:$0xf]
        %v1388 = vld [vmem:[%s1384 + $0x18] sm:$0x8]
        %v1389 = vld [vmem:[%s1384 + $0x1c] sm:$0xf]
        %v1390 = vld [vmem:[%s1384 + $0x20] sm:$0xf]
        %v1391 = vld [vmem:[%s1384 + $0x2c] sm:$0x8]
        %v1392 = vld [vmem:[%s1384 + $0x30] sm:$0xf]
        %v1393 = vld [vmem:[%s1384 + $0x34] sm:$0xf]
        %v1394 = vld [vmem:[%s1384 + $0x40] sm:$0x8]
        %v1395 = vld [vmem:[%s1384 + $0x44] sm:$0xf]
        %v1396 = vld [vmem:[%s1384 + $0x48] sm:$0xf]
        %v1397 = vld [vmem:[%s1384 + $0x54] sm:$0x8]
        %v1398 = vld [vmem:[%s1384 + $0x58] sm:$0xf]
        %v1399 = vld [vmem:[%s1384 + $0x5c] sm:$0xf]
        %v1400 = vld [vmem:[%s1384 + $0x68] sm:$0x8]
        %v1401 = vld [vmem:[%s1384 + $0x6c] sm:$0xf]
        %v1402 = vld [vmem:[%s1384 + $0x70] sm:$0xf]
        %v1403 = vld [vmem:[%s1384 + $0x7c] sm:$0x8]
        %v1404 = vld [vmem:[%s1384 + $0x80] sm:$0xf]
        %v1405 = vld [vmem:[%s1384 + $0x84] sm:$0xf]
        %v1406 = vld [vmem:[%s1384 + $0x90] sm:$0x8]
        %v1407 = vld [vmem:[%s1384 + $0x94] sm:$0xf]
        %v1408 = vld [vmem:[%s1384 + $0x98] sm:$0xf]
        %v1410 = vshrl.u32 %v1385, 16
        %v1412 = vrot.slane %v1410, 7
        %v1413 = vrot.slane %v1412, 4
        %v1415 = vshrl.u32 %v1386, 16
        %v1417 = vrot.slane %v1415, 7
        %v1418 = vshll.u32 %v1386, 16
        %v1420 = vor.u32 %v1417, %v1418
        %v1421 = vsel %vm1084, %v1413, %v1420
        %v1422 = vrot.slane %v1417, 4
        %v1424 = vshrl.u32 %v1387, 16
        %v1426 = vrot.slane %v1424, 7
        %v1427 = vshll.u32 %v1387, 16
        %v1429 = vor.u32 %v1426, %v1427
        %v1430 = vsel %vm1084, %v1422, %v1429
        %v1432 = vshrl.u32 %v1388, 16
        %v1434 = vrot.slane %v1432, 7
        %v1435 = vrot.slane %v1434, 4
        %v1437 = vshrl.u32 %v1389, 16
        %v1439 = vrot.slane %v1437, 7
        %v1440 = vshll.u32 %v1389, 16
        %v1442 = vor.u32 %v1439, %v1440
        %v1443 = vsel %vm1084, %v1435, %v1442
        %v1444 = vrot.slane %v1439, 4
        %v1446 = vshrl.u32 %v1390, 16
        %v1448 = vrot.slane %v1446, 7
        %v1449 = vshll.u32 %v1390, 16
        %v1451 = vor.u32 %v1448, %v1449
        %v1452 = vsel %vm1084, %v1444, %v1451
        %v1454 = vshrl.u32 %v1391, 16
        %v1456 = vrot.slane %v1454, 7
        %v1457 = vrot.slane %v1456, 4
        %v1459 = vshrl.u32 %v1392, 16
        %v1461 = vrot.slane %v1459, 7
        %v1462 = vshll.u32 %v1392, 16
        %v1464 = vor.u32 %v1461, %v1462
        %v1465 = vsel %vm1084, %v1457, %v1464
        %v1466 = vrot.slane %v1461, 4
        %v1468 = vshrl.u32 %v1393, 16
        %v1470 = vrot.slane %v1468, 7
        %v1471 = vshll.u32 %v1393, 16
        %v1473 = vor.u32 %v1470, %v1471
        %v1474 = vsel %vm1084, %v1466, %v1473
        %v1476 = vshrl.u32 %v1394, 16
        %v1478 = vrot.slane %v1476, 7
        %v1479 = vrot.slane %v1478, 4
        %v1481 = vshrl.u32 %v1395, 16
        %v1483 = vrot.slane %v1481, 7
        %v1484 = vshll.u32 %v1395, 16
        %v1486 = vor.u32 %v1483, %v1484
        %v1487 = vsel %vm1084, %v1479, %v1486
        %v1488 = vrot.slane %v1483, 4
        %v1490 = vshrl.u32 %v1396, 16
        %v1492 = vrot.slane %v1490, 7
        %v1493 = vshll.u32 %v1396, 16
        %v1495 = vor.u32 %v1492, %v1493
        %v1496 = vsel %vm1084, %v1488, %v1495
        %v1498 = vshrl.u32 %v1397, 16
        %v1500 = vrot.slane %v1498, 7
        %v1501 = vrot.slane %v1500, 4
        %v1503 = vshrl.u32 %v1398, 16
        %v1505 = vrot.slane %v1503, 7
        %v1506 = vshll.u32 %v1398, 16
        %v1508 = vor.u32 %v1505, %v1506
        %v1509 = vsel %vm1084, %v1501, %v1508
        %v1510 = vrot.slane %v1505, 4
        %v1512 = vshrl.u32 %v1399, 16
        %v1514 = vrot.slane %v1512, 7
        %v1515 = vshll.u32 %v1399, 16
        %v1517 = vor.u32 %v1514, %v1515
        %v1518 = vsel %vm1084, %v1510, %v1517
        %v1520 = vshrl.u32 %v1400, 16
        %v1522 = vrot.slane %v1520, 7
        %v1523 = vrot.slane %v1522, 4
        %v1525 = vshrl.u32 %v1401, 16
        %v1527 = vrot.slane %v1525, 7
        %v1528 = vshll.u32 %v1401, 16
        %v1530 = vor.u32 %v1527, %v1528
        %v1531 = vsel %vm1084, %v1523, %v1530
        %v1532 = vrot.slane %v1527, 4
        %v1534 = vshrl.u32 %v1402, 16
        %v1536 = vrot.slane %v1534, 7
        %v1537 = vshll.u32 %v1402, 16
        %v1539 = vor.u32 %v1536, %v1537
        %v1540 = vsel %vm1084, %v1532, %v1539
        %v1542 = vshrl.u32 %v1403, 16
        %v1544 = vrot.slane %v1542, 7
        %v1545 = vrot.slane %v1544, 4
        %v1547 = vshrl.u32 %v1404, 16
        %v1549 = vrot.slane %v1547, 7
        %v1550 = vshll.u32 %v1404, 16
        %v1552 = vor.u32 %v1549, %v1550
        %v1553 = vsel %vm1084, %v1545, %v1552
        %v1554 = vrot.slane %v1549, 4
        %v1556 = vshrl.u32 %v1405, 16
        %v1558 = vrot.slane %v1556, 7
        %v1559 = vshll.u32 %v1405, 16
        %v1561 = vor.u32 %v1558, %v1559
        %v1562 = vsel %vm1084, %v1554, %v1561
        %v1564 = vshrl.u32 %v1406, 16
        %v1566 = vrot.slane %v1564, 7
        %v1567 = vrot.slane %v1566, 4
        %v1569 = vshrl.u32 %v1407, 16
        %v1571 = vrot.slane %v1569, 7
        %v1572 = vshll.u32 %v1407, 16
        %v1574 = vor.u32 %v1571, %v1572
        %v1575 = vsel %vm1084, %v1567, %v1574
        %v1576 = vrot.slane %v1571, 4
        %v1578 = vshrl.u32 %v1408, 16
        %v1580 = vrot.slane %v1578, 7
        %v1581 = vshll.u32 %v1408, 16
        %v1583 = vor.u32 %v1580, %v1581
        %v1584 = vsel %vm1084, %v1576, %v1583
        %v1585 = vld [vmem:[%s1384 + $0x10] sm:$0x1]
        %v1586 = vld [vmem:[%s1384 + $0x24] sm:$0x1]
        %v1587 = vld [vmem:[%s1384 + $0x38] sm:$0x1]
        %v1588 = vld [vmem:[%s1384 + $0x4c] sm:$0x1]
        %v1589 = vld [vmem:[%s1384 + $0x60] sm:$0x1]
        %v1590 = vld [vmem:[%s1384 + $0x74] sm:$0x1]
        %v1591 = vld [vmem:[%s1384 + $0x88] sm:$0x1]
        %v1592 = vld [vmem:[%s1384 + $0x9c] sm:$0x1]
        %v1593 = vrot.slane %v1415, 4
        %v1594 = vrot.slane %v1418, 5
        %v1595 = vor.u32 %v1593, %v1594
        %v1596 = vrot.slane %v1595, 4
        %v1597 = vrot.slane %v1427, 5
        %v1598 = vsel %vm1271, %v1596, %v1597
        %v1599 = vrot.slane %v1424, 4
        %v1600 = vor.u32 %v1599, %v1597
        %v1601 = vrot.slane %v1600, 4
        %v1603 = vshll.u32 %v1585, 16
        %v1605 = vrot.slane %v1603, 5
        %v1606 = vsel %vm1271, %v1601, %v1605
        %v1607 = vrot.slane %v1437, 4
        %v1608 = vrot.slane %v1440, 5
        %v1609 = vor.u32 %v1607, %v1608
        %v1610 = vrot.slane %v1609, 4
        %v1611 = vrot.slane %v1449, 5
        %v1612 = vsel %vm1271, %v1610, %v1611
        %v1613 = vrot.slane %v1446, 4
        %v1614 = vor.u32 %v1613, %v1611
        %v1615 = vrot.slane %v1614, 4
        %v1617 = vshll.u32 %v1586, 16
        %v1619 = vrot.slane %v1617, 5
        %v1620 = vsel %vm1271, %v1615, %v1619
        %v1621 = vrot.slane %v1459, 4
        %v1622 = vrot.slane %v1462, 5
        %v1623 = vor.u32 %v1621, %v1622
        %v1624 = vrot.slane %v1623, 4
        %v1625 = vrot.slane %v1471, 5
        %v1626 = vsel %vm1271, %v1624, %v1625
        %v1627 = vrot.slane %v1468, 4
        %v1628 = vor.u32 %v1627, %v1625
        %v1629 = vrot.slane %v1628, 4
        %v1631 = vshll.u32 %v1587, 16
        %v1633 = vrot.slane %v1631, 5
        %v1634 = vsel %vm1271, %v1629, %v1633
        %v1635 = vrot.slane %v1481, 4
        %v1636 = vrot.slane %v1484, 5
        %v1637 = vor.u32 %v1635, %v1636
        %v1638 = vrot.slane %v1637, 4
        %v1639 = vrot.slane %v1493, 5
        %v1640 = vsel %vm1271, %v1638, %v1639
        %v1641 = vrot.slane %v1490, 4
        %v1642 = vor.u32 %v1641, %v1639
        %v1643 = vrot.slane %v1642, 4
        %v1645 = vshll.u32 %v1588, 16
        %v1647 = vrot.slane %v1645, 5
        %v1648 = vsel %vm1271, %v1643, %v1647
        %v1649 = vrot.slane %v1503, 4
        %v1650 = vrot.slane %v1506, 5
        %v1651 = vor.u32 %v1649, %v1650
        %v1652 = vrot.slane %v1651, 4
        %v1653 = vrot.slane %v1515, 5
        %v1654 = vsel %vm1271, %v1652, %v1653
        %v1655 = vrot.slane %v1512, 4
        %v1656 = vor.u32 %v1655, %v1653
        %v1657 = vrot.slane %v1656, 4
        %v1659 = vshll.u32 %v1589, 16
        %v1661 = vrot.slane %v1659, 5
        %v1662 = vsel %vm1271, %v1657, %v1661
        %v1663 = vrot.slane %v1525, 4
        %v1664 = vrot.slane %v1528, 5
        %v1665 = vor.u32 %v1663, %v1664
        %v1666 = vrot.slane %v1665, 4
        %v1667 = vrot.slane %v1537, 5
        %v1668 = vsel %vm1271, %v1666, %v1667
        %v1669 = vrot.slane %v1534, 4
        %v1670 = vor.u32 %v1669, %v1667
        %v1671 = vrot.slane %v1670, 4
        %v1673 = vshll.u32 %v1590, 16
        %v1675 = vrot.slane %v1673, 5
        %v1676 = vsel %vm1271, %v1671, %v1675
        %v1677 = vrot.slane %v1547, 4
        %v1678 = vrot.slane %v1550, 5
        %v1679 = vor.u32 %v1677, %v1678
        %v1680 = vrot.slane %v1679, 4
        %v1681 = vrot.slane %v1559, 5
        %v1682 = vsel %vm1271, %v1680, %v1681
        %v1683 = vrot.slane %v1556, 4
        %v1684 = vor.u32 %v1683, %v1681
        %v1685 = vrot.slane %v1684, 4
        %v1687 = vshll.u32 %v1591, 16
        %v1689 = vrot.slane %v1687, 5
        %v1690 = vsel %vm1271, %v1685, %v1689
        %v1691 = vrot.slane %v1569, 4
        %v1692 = vrot.slane %v1572, 5
        %v1693 = vor.u32 %v1691, %v1692
        %v1694 = vrot.slane %v1693, 4
        %v1695 = vrot.slane %v1581, 5
        %v1696 = vsel %vm1271, %v1694, %v1695
        %v1697 = vrot.slane %v1578, 4
        %v1698 = vor.u32 %v1697, %v1695
        %v1699 = vrot.slane %v1698, 4
        %v1701 = vshll.u32 %v1592, 16
        %v1703 = vrot.slane %v1701, 5
        %v1704 = vsel %vm1271, %v1699, %v1703
        %s1705 = scalar_lea.vmem [#allocation2], 40
        %v1706 = vld [vmem:[%s1705 + $0x4] sm:$0x8]
        %v1707 = vld [vmem:[%s1705 + $0x8] sm:$0xf]
        %v1708 = vld [vmem:[%s1705 + $0xc] sm:$0xf]
        %v1709 = vld [vmem:[%s1705 + $0x18] sm:$0x8]
        %v1710 = vld [vmem:[%s1705 + $0x1c] sm:$0xf]
        %v1711 = vld [vmem:[%s1705 + $0x20] sm:$0xf]
        %v1712 = vld [vmem:[%s1705 + $0x2c] sm:$0x8]
        %v1713 = vld [vmem:[%s1705 + $0x30] sm:$0xf]
        %v1714 = vld [vmem:[%s1705 + $0x34] sm:$0xf]
        %v1715 = vld [vmem:[%s1705 + $0x40] sm:$0x8]
        %v1716 = vld [vmem:[%s1705 + $0x44] sm:$0xf]
        %v1717 = vld [vmem:[%s1705 + $0x48] sm:$0xf]
        %v1718 = vld [vmem:[%s1705 + $0x54] sm:$0x8]
        %v1719 = vld [vmem:[%s1705 + $0x58] sm:$0xf]
        %v1720 = vld [vmem:[%s1705 + $0x5c] sm:$0xf]
        %v1721 = vld [vmem:[%s1705 + $0x68] sm:$0x8]
        %v1722 = vld [vmem:[%s1705 + $0x6c] sm:$0xf]
        %v1723 = vld [vmem:[%s1705 + $0x70] sm:$0xf]
        %v1724 = vld [vmem:[%s1705 + $0x7c] sm:$0x8]
        %v1725 = vld [vmem:[%s1705 + $0x80] sm:$0xf]
        %v1726 = vld [vmem:[%s1705 + $0x84] sm:$0xf]
        %v1727 = vld [vmem:[%s1705 + $0x90] sm:$0x8]
        %v1728 = vld [vmem:[%s1705 + $0x94] sm:$0xf]
        %v1729 = vld [vmem:[%s1705 + $0x98] sm:$0xf]
        %v1731 = vshrl.u32 %v1706, 16
        %v1733 = vrot.slane %v1731, 7
        %v1734 = vrot.slane %v1733, 4
        %v1736 = vshrl.u32 %v1707, 16
        %v1738 = vrot.slane %v1736, 7
        %v1739 = vshll.u32 %v1707, 16
        %v1741 = vor.u32 %v1738, %v1739
        %v1742 = vsel %vm1084, %v1734, %v1741
        %v1743 = vrot.slane %v1738, 4
        %v1745 = vshrl.u32 %v1708, 16
        %v1747 = vrot.slane %v1745, 7
        %v1748 = vshll.u32 %v1708, 16
        %v1750 = vor.u32 %v1747, %v1748
        %v1751 = vsel %vm1084, %v1743, %v1750
        %v1753 = vshrl.u32 %v1709, 16
        %v1755 = vrot.slane %v1753, 7
        %v1756 = vrot.slane %v1755, 4
        %v1758 = vshrl.u32 %v1710, 16
        %v1760 = vrot.slane %v1758, 7
        %v1761 = vshll.u32 %v1710, 16
        %v1763 = vor.u32 %v1760, %v1761
        %v1764 = vsel %vm1084, %v1756, %v1763
        %v1765 = vrot.slane %v1760, 4
        %v1767 = vshrl.u32 %v1711, 16
        %v1769 = vrot.slane %v1767, 7
        %v1770 = vshll.u32 %v1711, 16
        %v1772 = vor.u32 %v1769, %v1770
        %v1773 = vsel %vm1084, %v1765, %v1772
        %v1775 = vshrl.u32 %v1712, 16
        %v1777 = vrot.slane %v1775, 7
        %v1778 = vrot.slane %v1777, 4
        %v1780 = vshrl.u32 %v1713, 16
        %v1782 = vrot.slane %v1780, 7
        %v1783 = vshll.u32 %v1713, 16
        %v1785 = vor.u32 %v1782, %v1783
        %v1786 = vsel %vm1084, %v1778, %v1785
        %v1787 = vrot.slane %v1782, 4
        %v1789 = vshrl.u32 %v1714, 16
        %v1791 = vrot.slane %v1789, 7
        %v1792 = vshll.u32 %v1714, 16
        %v1794 = vor.u32 %v1791, %v1792
        %v1795 = vsel %vm1084, %v1787, %v1794
        %v1797 = vshrl.u32 %v1715, 16
        %v1799 = vrot.slane %v1797, 7
        %v1800 = vrot.slane %v1799, 4
        %v1802 = vshrl.u32 %v1716, 16
        %v1804 = vrot.slane %v1802, 7
        %v1805 = vshll.u32 %v1716, 16
        %v1807 = vor.u32 %v1804, %v1805
        %v1808 = vsel %vm1084, %v1800, %v1807
        %v1809 = vrot.slane %v1804, 4
        %v1811 = vshrl.u32 %v1717, 16
        %v1813 = vrot.slane %v1811, 7
        %v1814 = vshll.u32 %v1717, 16
        %v1816 = vor.u32 %v1813, %v1814
        %v1817 = vsel %vm1084, %v1809, %v1816
        %v1819 = vshrl.u32 %v1718, 16
        %v1821 = vrot.slane %v1819, 7
        %v1822 = vrot.slane %v1821, 4
        %v1824 = vshrl.u32 %v1719, 16
        %v1826 = vrot.slane %v1824, 7
        %v1827 = vshll.u32 %v1719, 16
        %v1829 = vor.u32 %v1826, %v1827
        %v1830 = vsel %vm1084, %v1822, %v1829
        %v1831 = vrot.slane %v1826, 4
        %v1833 = vshrl.u32 %v1720, 16
        %v1835 = vrot.slane %v1833, 7
        %v1836 = vshll.u32 %v1720, 16
        %v1838 = vor.u32 %v1835, %v1836
        %v1839 = vsel %vm1084, %v1831, %v1838
        %v1841 = vshrl.u32 %v1721, 16
        %v1843 = vrot.slane %v1841, 7
        %v1844 = vrot.slane %v1843, 4
        %v1846 = vshrl.u32 %v1722, 16
        %v1848 = vrot.slane %v1846, 7
        %v1849 = vshll.u32 %v1722, 16
        %v1851 = vor.u32 %v1848, %v1849
        %v1852 = vsel %vm1084, %v1844, %v1851
        %v1853 = vrot.slane %v1848, 4
        %v1855 = vshrl.u32 %v1723, 16
        %v1857 = vrot.slane %v1855, 7
        %v1858 = vshll.u32 %v1723, 16
        %v1860 = vor.u32 %v1857, %v1858
        %v1861 = vsel %vm1084, %v1853, %v1860
        %v1863 = vshrl.u32 %v1724, 16
        %v1865 = vrot.slane %v1863, 7
        %v1866 = vrot.slane %v1865, 4
        %v1868 = vshrl.u32 %v1725, 16
        %v1870 = vrot.slane %v1868, 7
        %v1871 = vshll.u32 %v1725, 16
        %v1873 = vor.u32 %v1870, %v1871
        %v1874 = vsel %vm1084, %v1866, %v1873
        %v1875 = vrot.slane %v1870, 4
        %v1877 = vshrl.u32 %v1726, 16
        %v1879 = vrot.slane %v1877, 7
        %v1880 = vshll.u32 %v1726, 16
        %v1882 = vor.u32 %v1879, %v1880
        %v1883 = vsel %vm1084, %v1875, %v1882
        %v1885 = vshrl.u32 %v1727, 16
        %v1887 = vrot.slane %v1885, 7
        %v1888 = vrot.slane %v1887, 4
        %v1890 = vshrl.u32 %v1728, 16
        %v1892 = vrot.slane %v1890, 7
        %v1893 = vshll.u32 %v1728, 16
        %v1895 = vor.u32 %v1892, %v1893
        %v1896 = vsel %vm1084, %v1888, %v1895
        %v1897 = vrot.slane %v1892, 4
        %v1899 = vshrl.u32 %v1729, 16
        %v1901 = vrot.slane %v1899, 7
        %v1902 = vshll.u32 %v1729, 16
        %v1904 = vor.u32 %v1901, %v1902
        %v1905 = vsel %vm1084, %v1897, %v1904
        %v1906 = vld [vmem:[%s1705 + $0x10] sm:$0x1]
        %v1907 = vld [vmem:[%s1705 + $0x24] sm:$0x1]
        %v1908 = vld [vmem:[%s1705 + $0x38] sm:$0x1]
        %v1909 = vld [vmem:[%s1705 + $0x4c] sm:$0x1]
        %v1910 = vld [vmem:[%s1705 + $0x60] sm:$0x1]
        %v1911 = vld [vmem:[%s1705 + $0x74] sm:$0x1]
        %v1912 = vld [vmem:[%s1705 + $0x88] sm:$0x1]
        %v1913 = vld [vmem:[%s1705 + $0x9c] sm:$0x1]
        %v1914 = vrot.slane %v1736, 4
        %v1915 = vrot.slane %v1739, 5
        %v1916 = vor.u32 %v1914, %v1915
        %v1917 = vrot.slane %v1916, 4
        %v1918 = vrot.slane %v1748, 5
        %v1919 = vsel %vm1271, %v1917, %v1918
        %v1920 = vrot.slane %v1745, 4
        %v1921 = vor.u32 %v1920, %v1918
        %v1922 = vrot.slane %v1921, 4
        %v1924 = vshll.u32 %v1906, 16
        %v1926 = vrot.slane %v1924, 5
        %v1927 = vsel %vm1271, %v1922, %v1926
        %v1928 = vrot.slane %v1758, 4
        %v1929 = vrot.slane %v1761, 5
        %v1930 = vor.u32 %v1928, %v1929
        %v1931 = vrot.slane %v1930, 4
        %v1932 = vrot.slane %v1770, 5
        %v1933 = vsel %vm1271, %v1931, %v1932
        %v1934 = vrot.slane %v1767, 4
        %v1935 = vor.u32 %v1934, %v1932
        %v1936 = vrot.slane %v1935, 4
        %v1938 = vshll.u32 %v1907, 16
        %v1940 = vrot.slane %v1938, 5
        %v1941 = vsel %vm1271, %v1936, %v1940
        %v1942 = vrot.slane %v1780, 4
        %v1943 = vrot.slane %v1783, 5
        %v1944 = vor.u32 %v1942, %v1943
        %v1945 = vrot.slane %v1944, 4
        %v1946 = vrot.slane %v1792, 5
        %v1947 = vsel %vm1271, %v1945, %v1946
        %v1948 = vrot.slane %v1789, 4
        %v1949 = vor.u32 %v1948, %v1946
        %v1950 = vrot.slane %v1949, 4
        %v1952 = vshll.u32 %v1908, 16
        %v1954 = vrot.slane %v1952, 5
        %v1955 = vsel %vm1271, %v1950, %v1954
        %v1956 = vrot.slane %v1802, 4
        %v1957 = vrot.slane %v1805, 5
        %v1958 = vor.u32 %v1956, %v1957
        %v1959 = vrot.slane %v1958, 4
        %v1960 = vrot.slane %v1814, 5
        %v1961 = vsel %vm1271, %v1959, %v1960
        %v1962 = vrot.slane %v1811, 4
        %v1963 = vor.u32 %v1962, %v1960
        %v1964 = vrot.slane %v1963, 4
        %v1966 = vshll.u32 %v1909, 16
        %v1968 = vrot.slane %v1966, 5
        %v1969 = vsel %vm1271, %v1964, %v1968
        %v1970 = vrot.slane %v1824, 4
        %v1971 = vrot.slane %v1827, 5
        %v1972 = vor.u32 %v1970, %v1971
        %v1973 = vrot.slane %v1972, 4
        %v1974 = vrot.slane %v1836, 5
        %v1975 = vsel %vm1271, %v1973, %v1974
        %v1976 = vrot.slane %v1833, 4
        %v1977 = vor.u32 %v1976, %v1974
        %v1978 = vrot.slane %v1977, 4
        %v1980 = vshll.u32 %v1910, 16
        %v1982 = vrot.slane %v1980, 5
        %v1983 = vsel %vm1271, %v1978, %v1982
        %v1984 = vrot.slane %v1846, 4
        %v1985 = vrot.slane %v1849, 5
        %v1986 = vor.u32 %v1984, %v1985
        %v1987 = vrot.slane %v1986, 4
        %v1988 = vrot.slane %v1858, 5
        %v1989 = vsel %vm1271, %v1987, %v1988
        %v1990 = vrot.slane %v1855, 4
        %v1991 = vor.u32 %v1990, %v1988
        %v1992 = vrot.slane %v1991, 4
        %v1994 = vshll.u32 %v1911, 16
        %v1996 = vrot.slane %v1994, 5
        %v1997 = vsel %vm1271, %v1992, %v1996
        %v1998 = vrot.slane %v1868, 4
        %v1999 = vrot.slane %v1871, 5
        %v2000 = vor.u32 %v1998, %v1999
        %v2001 = vrot.slane %v2000, 4
        %v2002 = vrot.slane %v1880, 5
        %v2003 = vsel %vm1271, %v2001, %v2002
        %v2004 = vrot.slane %v1877, 4
        %v2005 = vor.u32 %v2004, %v2002
        %v2006 = vrot.slane %v2005, 4
        %v2008 = vshll.u32 %v1912, 16
        %v2010 = vrot.slane %v2008, 5
        %v2011 = vsel %vm1271, %v2006, %v2010
        %v2012 = vrot.slane %v1890, 4
        %v2013 = vrot.slane %v1893, 5
        %v2014 = vor.u32 %v2012, %v2013
        %v2015 = vrot.slane %v2014, 4
        %v2016 = vrot.slane %v1902, 5
        %v2017 = vsel %vm1271, %v2015, %v2016
        %v2018 = vrot.slane %v1899, 4
        %v2019 = vor.u32 %v2018, %v2016
        %v2020 = vrot.slane %v2019, 4
        %v2022 = vshll.u32 %v1913, 16
        %v2024 = vrot.slane %v2022, 5
        %v2025 = vsel %vm1271, %v2020, %v2024
        %v2026 = vunpack.c.l.b16 %v1097
        %v2027 = vunpack.c.l.b16 %v1106
        %v2028 = vunpack.c.l.b16 %v1119
        %v2029 = vunpack.c.l.b16 %v1128
        %v2030 = vunpack.c.l.b16 %v1141
        %v2031 = vunpack.c.l.b16 %v1150
        %v2032 = vunpack.c.l.b16 %v1163
        %v2033 = vunpack.c.l.b16 %v1172
        %v2034 = vunpack.c.l.b16 %v1185
        %v2035 = vunpack.c.l.b16 %v1194
        %v2036 = vunpack.c.l.b16 %v1207
        %v2037 = vunpack.c.l.b16 %v1216
        %v2038 = vunpack.c.l.b16 %v1229
        %v2039 = vunpack.c.l.b16 %v1238
        %v2040 = vunpack.c.l.b16 %v1251
        %v2041 = vunpack.c.l.b16 %v1260
        %v2042 = vpack.c.b16 %v2027, %v2026
        %v2043 = vpack.c.b16 %v2029, %v2028
        %v2044 = vpack.c.b16 %v2031, %v2030
        %v2045 = vpack.c.b16 %v2033, %v2032
        %v2046 = vpack.c.b16 %v2035, %v2034
        %v2047 = vpack.c.b16 %v2037, %v2036
        %v2048 = vpack.c.b16 %v2039, %v2038
        %v2049 = vpack.c.b16 %v2041, %v2040
        %v2074 = vunpack.c.l.b16 %v1060
        %v2075 = vunpack.c.l.b16 %v1061
        %v2076 = vunpack.c.l.b16 %v1063
        %v2077 = vunpack.c.l.b16 %v1064
        %v2078 = vunpack.c.l.b16 %v1066
        %v2079 = vunpack.c.l.b16 %v1067
        %v2080 = vunpack.c.l.b16 %v1069
        %v2081 = vunpack.c.l.b16 %v1070
        %v2082 = vunpack.c.l.b16 %v1072
        %v2083 = vunpack.c.l.b16 %v1073
        %v2084 = vunpack.c.l.b16 %v1075
        %v2085 = vunpack.c.l.b16 %v1076
        %v2086 = vunpack.c.l.b16 %v1078
        %v2087 = vunpack.c.l.b16 %v1079
        %v2088 = vunpack.c.l.b16 %v1081
        %v2089 = vunpack.c.l.b16 %v1082
        %v2090 = vpack.c.b16 %v2075, %v2074
        %v2091 = vpack.c.b16 %v2077, %v2076
        %v2092 = vpack.c.b16 %v2079, %v2078
        %v2093 = vpack.c.b16 %v2081, %v2080
        %v2094 = vpack.c.b16 %v2083, %v2082
        %v2095 = vpack.c.b16 %v2085, %v2084
        %v2096 = vpack.c.b16 %v2087, %v2086
        %v2097 = vpack.c.b16 %v2089, %v2088
        %v2106 = vunpack.c.l.b16 %v1277
        %v2107 = vunpack.c.l.b16 %v1285
        %v2108 = vunpack.c.l.b16 %v1291
        %v2109 = vunpack.c.l.b16 %v1299
        %v2110 = vunpack.c.l.b16 %v1305
        %v2111 = vunpack.c.l.b16 %v1313
        %v2112 = vunpack.c.l.b16 %v1319
        %v2113 = vunpack.c.l.b16 %v1327
        %v2114 = vunpack.c.l.b16 %v1333
        %v2115 = vunpack.c.l.b16 %v1341
        %v2116 = vunpack.c.l.b16 %v1347
        %v2117 = vunpack.c.l.b16 %v1355
        %v2118 = vunpack.c.l.b16 %v1361
        %v2119 = vunpack.c.l.b16 %v1369
        %v2120 = vunpack.c.l.b16 %v1375
        %v2121 = vunpack.c.l.b16 %v1383
        %v2122 = vpack.c.b16 %v2107, %v2106
        %v2123 = vpack.c.b16 %v2109, %v2108
        %v2124 = vpack.c.b16 %v2111, %v2110
        %v2125 = vpack.c.b16 %v2113, %v2112
        %v2126 = vpack.c.b16 %v2115, %v2114
        %v2127 = vpack.c.b16 %v2117, %v2116
        %v2128 = vpack.c.b16 %v2119, %v2118
        %v2129 = vpack.c.b16 %v2121, %v2120
        %v2138 = vunpack.c.l.b16 %v1421
        %v2139 = vunpack.c.l.b16 %v1430
        %v2140 = vunpack.c.l.b16 %v1443
        %v2141 = vunpack.c.l.b16 %v1452
        %v2142 = vunpack.c.l.b16 %v1465
        %v2143 = vunpack.c.l.b16 %v1474
        %v2144 = vunpack.c.l.b16 %v1487
        %v2145 = vunpack.c.l.b16 %v1496
        %v2146 = vunpack.c.l.b16 %v1509
        %v2147 = vunpack.c.l.b16 %v1518
        %v2148 = vunpack.c.l.b16 %v1531
        %v2149 = vunpack.c.l.b16 %v1540
        %v2150 = vunpack.c.l.b16 %v1553
        %v2151 = vunpack.c.l.b16 %v1562
        %v2152 = vunpack.c.l.b16 %v1575
        %v2153 = vunpack.c.l.b16 %v1584
        %v2154 = vpack.c.b16 %v2139, %v2138
        %v2155 = vpack.c.b16 %v2141, %v2140
        %v2156 = vpack.c.b16 %v2143, %v2142
        %v2157 = vpack.c.b16 %v2145, %v2144
        %v2158 = vpack.c.b16 %v2147, %v2146
        %v2159 = vpack.c.b16 %v2149, %v2148
        %v2160 = vpack.c.b16 %v2151, %v2150
        %v2161 = vpack.c.b16 %v2153, %v2152
        %v2186 = vunpack.c.l.b16 %v1386
        %v2187 = vunpack.c.l.b16 %v1387
        %v2188 = vunpack.c.l.b16 %v1389
        %v2189 = vunpack.c.l.b16 %v1390
        %v2190 = vunpack.c.l.b16 %v1392
        %v2191 = vunpack.c.l.b16 %v1393
        %v2192 = vunpack.c.l.b16 %v1395
        %v2193 = vunpack.c.l.b16 %v1396
        %v2194 = vunpack.c.l.b16 %v1398
        %v2195 = vunpack.c.l.b16 %v1399
        %v2196 = vunpack.c.l.b16 %v1401
        %v2197 = vunpack.c.l.b16 %v1402
        %v2198 = vunpack.c.l.b16 %v1404
        %v2199 = vunpack.c.l.b16 %v1405
        %v2200 = vunpack.c.l.b16 %v1407
        %v2201 = vunpack.c.l.b16 %v1408
        %v2202 = vpack.c.b16 %v2187, %v2186
        %v2203 = vpack.c.b16 %v2189, %v2188
        %v2204 = vpack.c.b16 %v2191, %v2190
        %v2205 = vpack.c.b16 %v2193, %v2192
        %v2206 = vpack.c.b16 %v2195, %v2194
        %v2207 = vpack.c.b16 %v2197, %v2196
        %v2208 = vpack.c.b16 %v2199, %v2198
        %v2209 = vpack.c.b16 %v2201, %v2200
        %v2218 = vunpack.c.l.b16 %v1598
        %v2219 = vunpack.c.l.b16 %v1606
        %v2220 = vunpack.c.l.b16 %v1612
        %v2221 = vunpack.c.l.b16 %v1620
        %v2222 = vunpack.c.l.b16 %v1626
        %v2223 = vunpack.c.l.b16 %v1634
        %v2224 = vunpack.c.l.b16 %v1640
        %v2225 = vunpack.c.l.b16 %v1648
        %v2226 = vunpack.c.l.b16 %v1654
        %v2227 = vunpack.c.l.b16 %v1662
        %v2228 = vunpack.c.l.b16 %v1668
        %v2229 = vunpack.c.l.b16 %v1676
        %v2230 = vunpack.c.l.b16 %v1682
        %v2231 = vunpack.c.l.b16 %v1690
        %v2232 = vunpack.c.l.b16 %v1696
        %v2233 = vunpack.c.l.b16 %v1704
        %v2234 = vpack.c.b16 %v2219, %v2218
        %v2235 = vpack.c.b16 %v2221, %v2220
        %v2236 = vpack.c.b16 %v2223, %v2222
        %v2237 = vpack.c.b16 %v2225, %v2224
        %v2238 = vpack.c.b16 %v2227, %v2226
        %v2239 = vpack.c.b16 %v2229, %v2228
        %v2240 = vpack.c.b16 %v2231, %v2230
        %v2241 = vpack.c.b16 %v2233, %v2232
        %v2250 = vunpack.c.l.b16 %v1742
        %v2251 = vunpack.c.l.b16 %v1751
        %v2252 = vunpack.c.l.b16 %v1764
        %v2253 = vunpack.c.l.b16 %v1773
        %v2254 = vunpack.c.l.b16 %v1786
        %v2255 = vunpack.c.l.b16 %v1795
        %v2256 = vunpack.c.l.b16 %v1808
        %v2257 = vunpack.c.l.b16 %v1817
        %v2258 = vunpack.c.l.b16 %v1830
        %v2259 = vunpack.c.l.b16 %v1839
        %v2260 = vunpack.c.l.b16 %v1852
        %v2261 = vunpack.c.l.b16 %v1861
        %v2262 = vunpack.c.l.b16 %v1874
        %v2263 = vunpack.c.l.b16 %v1883
        %v2264 = vunpack.c.l.b16 %v1896
        %v2265 = vunpack.c.l.b16 %v1905
        %v2266 = vpack.c.b16 %v2251, %v2250
        %v2267 = vpack.c.b16 %v2253, %v2252
        %v2268 = vpack.c.b16 %v2255, %v2254
        %v2269 = vpack.c.b16 %v2257, %v2256
        %v2270 = vpack.c.b16 %v2259, %v2258
        %v2271 = vpack.c.b16 %v2261, %v2260
        %v2272 = vpack.c.b16 %v2263, %v2262
        %v2273 = vpack.c.b16 %v2265, %v2264
        %v2298 = vunpack.c.l.b16 %v1707
        %v2299 = vunpack.c.l.b16 %v1708
        %v2300 = vunpack.c.l.b16 %v1710
        %v2301 = vunpack.c.l.b16 %v1711
        %v2302 = vunpack.c.l.b16 %v1713
        %v2303 = vunpack.c.l.b16 %v1714
        %v2304 = vunpack.c.l.b16 %v1716
        %v2305 = vunpack.c.l.b16 %v1717
        %v2306 = vunpack.c.l.b16 %v1719
        %v2307 = vunpack.c.l.b16 %v1720
        %v2308 = vunpack.c.l.b16 %v1722
        %v2309 = vunpack.c.l.b16 %v1723
        %v2310 = vunpack.c.l.b16 %v1725
        %v2311 = vunpack.c.l.b16 %v1726
        %v2312 = vunpack.c.l.b16 %v1728
        %v2313 = vunpack.c.l.b16 %v1729
        %v2314 = vpack.c.b16 %v2299, %v2298
        %v2315 = vpack.c.b16 %v2301, %v2300
        %v2316 = vpack.c.b16 %v2303, %v2302
        %v2317 = vpack.c.b16 %v2305, %v2304
        %v2318 = vpack.c.b16 %v2307, %v2306
        %v2319 = vpack.c.b16 %v2309, %v2308
        %v2320 = vpack.c.b16 %v2311, %v2310
        %v2321 = vpack.c.b16 %v2313, %v2312
        %v2330 = vunpack.c.l.b16 %v1919
        %v2331 = vunpack.c.l.b16 %v1927
        %v2332 = vunpack.c.l.b16 %v1933
        %v2333 = vunpack.c.l.b16 %v1941
        %v2334 = vunpack.c.l.b16 %v1947
        %v2335 = vunpack.c.l.b16 %v1955
        %v2336 = vunpack.c.l.b16 %v1961
        %v2337 = vunpack.c.l.b16 %v1969
        %v2338 = vunpack.c.l.b16 %v1975
        %v2339 = vunpack.c.l.b16 %v1983
        %v2340 = vunpack.c.l.b16 %v1989
        %v2341 = vunpack.c.l.b16 %v1997
        %v2342 = vunpack.c.l.b16 %v2003
        %v2343 = vunpack.c.l.b16 %v2011
        %v2344 = vunpack.c.l.b16 %v2017
        %v2345 = vunpack.c.l.b16 %v2025
        %v2346 = vpack.c.b16 %v2331, %v2330
        %v2347 = vpack.c.b16 %v2333, %v2332
        %v2348 = vpack.c.b16 %v2335, %v2334
        %v2349 = vpack.c.b16 %v2337, %v2336
        %v2350 = vpack.c.b16 %v2339, %v2338
        %v2351 = vpack.c.b16 %v2341, %v2340
        %v2352 = vpack.c.b16 %v2343, %v2342
        %v2353 = vpack.c.b16 %v2345, %v2344
        %v2362 = vld [vmem:[#allocation8] sm:$0xf]
        %v2363 = vld [vmem:[#allocation8 + $0x4] sm:$0xf]
        %v2364 = vld [vmem:[#allocation8 + $0x8] sm:$0xf]
        %v2365 = vld [vmem:[#allocation8 + $0xc] sm:$0xf]
        %v2366 = vld [vmem:[#allocation8 + $0x10] sm:$0xf]
        %v2367 = vld [vmem:[#allocation8 + $0x14] sm:$0xf]
        %v2368 = vld [vmem:[#allocation8 + $0x18] sm:$0xf]
        %v2369 = vld [vmem:[#allocation8 + $0x1c] sm:$0xf]
        %v2370 = vld [vmem:[#allocation8 + $0x20] sm:$0xf]
        %v2371 = vld [vmem:[#allocation8 + $0x24] sm:$0xf]
        %v2372 = vld [vmem:[#allocation8 + $0x28] sm:$0xf]
        %v2373 = vld [vmem:[#allocation8 + $0x2c] sm:$0xf]
        %v2374 = vld [vmem:[#allocation8 + $0x30] sm:$0xf]
        %v2375 = vld [vmem:[#allocation8 + $0x34] sm:$0xf]
        %v2376 = vld [vmem:[#allocation8 + $0x38] sm:$0xf]
        %v2377 = vld [vmem:[#allocation8 + $0x3c] sm:$0xf]
        %v2378 = vld [vmem:[#allocation8 + $0x40] sm:$0xf]
        %v2379 = vld [vmem:[#allocation8 + $0x44] sm:$0xf]
        %v2380 = vld [vmem:[#allocation8 + $0x48] sm:$0xf]
        %v2381 = vld [vmem:[#allocation8 + $0x4c] sm:$0xf]
        %v2382 = vld [vmem:[#allocation8 + $0x50] sm:$0xf]
        %v2383 = vld [vmem:[#allocation8 + $0x54] sm:$0xf]
        %v2384 = vld [vmem:[#allocation8 + $0x58] sm:$0xf]
        %v2385 = vld [vmem:[#allocation8 + $0x5c] sm:$0xf]
        %v2386 = vld [vmem:[#allocation8 + $0x60] sm:$0xf]
        %v2387 = vld [vmem:[#allocation8 + $0x64] sm:$0xf]
        %v2388 = vld [vmem:[#allocation8 + $0x68] sm:$0xf]
        %v2389 = vld [vmem:[#allocation8 + $0x6c] sm:$0xf]
        %v2390 = vld [vmem:[#allocation8 + $0x70] sm:$0xf]
        %v2391 = vld [vmem:[#allocation8 + $0x74] sm:$0xf]
        %v2392 = vld [vmem:[#allocation8 + $0x78] sm:$0xf]
        %v2393 = vld [vmem:[#allocation8 + $0x7c] sm:$0xf]
        %v2394 = vld [vmem:[#allocation8 + $0x80] sm:$0xf]
        %v2395 = vld [vmem:[#allocation8 + $0x84] sm:$0xf]
        %v2396 = vld [vmem:[#allocation8 + $0x88] sm:$0xf]
        %v2397 = vld [vmem:[#allocation8 + $0x8c] sm:$0xf]
        %v2398 = vld [vmem:[#allocation8 + $0x90] sm:$0xf]
        %v2399 = vld [vmem:[#allocation8 + $0x94] sm:$0xf]
        %v2400 = vld [vmem:[#allocation8 + $0x98] sm:$0xf]
        %v2401 = vld [vmem:[#allocation8 + $0x9c] sm:$0xf]
        %v2402 = vld [vmem:[#allocation8 + $0xa0] sm:$0xf]
        %v2403 = vld [vmem:[#allocation8 + $0xa4] sm:$0xf]
        %v2404 = vld [vmem:[#allocation8 + $0xa8] sm:$0xf]
        %v2405 = vld [vmem:[#allocation8 + $0xac] sm:$0xf]
        %v2406 = vld [vmem:[#allocation8 + $0xb0] sm:$0xf]
        %v2407 = vld [vmem:[#allocation8 + $0xb4] sm:$0xf]
        %v2408 = vld [vmem:[#allocation8 + $0xb8] sm:$0xf]
        %v2409 = vld [vmem:[#allocation8 + $0xbc] sm:$0xf]
        %v2410 = vld [vmem:[#allocation8 + $0xc0] sm:$0xf]
        %v2411 = vld [vmem:[#allocation8 + $0xc4] sm:$0xf]
        %v2412 = vld [vmem:[#allocation8 + $0xc8] sm:$0xf]
        %v2413 = vld [vmem:[#allocation8 + $0xcc] sm:$0xf]
        %v2414 = vld [vmem:[#allocation8 + $0xd0] sm:$0xf]
        %v2415 = vld [vmem:[#allocation8 + $0xd4] sm:$0xf]
        %v2416 = vld [vmem:[#allocation8 + $0xd8] sm:$0xf]
        %v2417 = vld [vmem:[#allocation8 + $0xdc] sm:$0xf]
        %v2418 = vld [vmem:[#allocation8 + $0xe0] sm:$0xf]
        %v2419 = vld [vmem:[#allocation8 + $0xe4] sm:$0xf]
        %v2420 = vld [vmem:[#allocation8 + $0xe8] sm:$0xf]
        %v2421 = vld [vmem:[#allocation8 + $0xec] sm:$0xf]
        %v2422 = vld [vmem:[#allocation8 + $0xf0] sm:$0xf]
        %v2423 = vld [vmem:[#allocation8 + $0xf4] sm:$0xf]
        %v2424 = vld [vmem:[#allocation8 + $0xf8] sm:$0xf]
        %v2425 = vld [vmem:[#allocation8 + $0xfc] sm:$0xf]
        %v2426 = vld [vmem:[#allocation8 + $0x100] sm:$0xf]
        %v2427 = vld [vmem:[#allocation8 + $0x104] sm:$0xf]
        %v2428 = vld [vmem:[#allocation8 + $0x108] sm:$0xf]
        %v2429 = vld [vmem:[#allocation8 + $0x10c] sm:$0xf]
        %v2430 = vld [vmem:[#allocation8 + $0x110] sm:$0xf]
        %v2431 = vld [vmem:[#allocation8 + $0x114] sm:$0xf]
        %v2432 = vld [vmem:[#allocation8 + $0x118] sm:$0xf]
        %v2433 = vld [vmem:[#allocation8 + $0x11c] sm:$0xf]
        %v2434 = vld [vmem:[#allocation8 + $0x120] sm:$0xf]
        %v2435 = vld [vmem:[#allocation8 + $0x124] sm:$0xf]
        %v2436 = vld [vmem:[#allocation8 + $0x128] sm:$0xf]
        %v2437 = vld [vmem:[#allocation8 + $0x12c] sm:$0xf]
        %v2438 = vld [vmem:[#allocation8 + $0x130] sm:$0xf]
        %v2439 = vld [vmem:[#allocation8 + $0x134] sm:$0xf]
        %v2440 = vld [vmem:[#allocation8 + $0x138] sm:$0xf]
        %v2441 = vld [vmem:[#allocation8 + $0x13c] sm:$0xf]
        %v2442 = vld [vmem:[#allocation8 + $0x140] sm:$0xf]
        %v2443 = vld [vmem:[#allocation8 + $0x144] sm:$0xf]
        %v2444 = vld [vmem:[#allocation8 + $0x148] sm:$0xf]
        %v2445 = vld [vmem:[#allocation8 + $0x14c] sm:$0xf]
        %v2446 = vld [vmem:[#allocation8 + $0x150] sm:$0xf]
        %v2447 = vld [vmem:[#allocation8 + $0x154] sm:$0xf]
        %v2448 = vld [vmem:[#allocation8 + $0x158] sm:$0xf]
        %v2449 = vld [vmem:[#allocation8 + $0x15c] sm:$0xf]
        %v2450 = vld [vmem:[#allocation8 + $0x160] sm:$0xf]
        %v2451 = vld [vmem:[#allocation8 + $0x164] sm:$0xf]
        %v2452 = vld [vmem:[#allocation8 + $0x168] sm:$0xf]
        %v2453 = vld [vmem:[#allocation8 + $0x16c] sm:$0xf]
        %v2454 = vld [vmem:[#allocation8 + $0x170] sm:$0xf]
        %v2455 = vld [vmem:[#allocation8 + $0x174] sm:$0xf]
        %v2456 = vld [vmem:[#allocation8 + $0x178] sm:$0xf]
        %v2457 = vld [vmem:[#allocation8 + $0x17c] sm:$0xf]
        %v2458 = vld [vmem:[#allocation8 + $0x180] sm:$0xf]
        %v2459 = vld [vmem:[#allocation8 + $0x184] sm:$0xf]
        %v2460 = vld [vmem:[#allocation8 + $0x188] sm:$0xf]
        %v2461 = vld [vmem:[#allocation8 + $0x18c] sm:$0xf]
        %v2462 = vld [vmem:[#allocation8 + $0x190] sm:$0xf]
        %v2463 = vld [vmem:[#allocation8 + $0x194] sm:$0xf]
        %v2464 = vld [vmem:[#allocation8 + $0x198] sm:$0xf]
        %v2465 = vld [vmem:[#allocation8 + $0x19c] sm:$0xf]
        %v2466 = vld [vmem:[#allocation8 + $0x1a0] sm:$0xf]
        %v2467 = vld [vmem:[#allocation8 + $0x1a4] sm:$0xf]
        %v2468 = vld [vmem:[#allocation8 + $0x1a8] sm:$0xf]
        %v2469 = vld [vmem:[#allocation8 + $0x1ac] sm:$0xf]
        %v2470 = vld [vmem:[#allocation8 + $0x1b0] sm:$0xf]
        %v2471 = vld [vmem:[#allocation8 + $0x1b4] sm:$0xf]
        %v2472 = vld [vmem:[#allocation8 + $0x1b8] sm:$0xf]
        %v2473 = vld [vmem:[#allocation8 + $0x1bc] sm:$0xf]
        %v2474 = vld [vmem:[#allocation8 + $0x1c0] sm:$0xf]
        %v2475 = vld [vmem:[#allocation8 + $0x1c4] sm:$0xf]
        %v2476 = vld [vmem:[#allocation8 + $0x1c8] sm:$0xf]
        %v2477 = vld [vmem:[#allocation8 + $0x1cc] sm:$0xf]
        %v2478 = vld [vmem:[#allocation8 + $0x1d0] sm:$0xf]
        %v2479 = vld [vmem:[#allocation8 + $0x1d4] sm:$0xf]
        %v2480 = vld [vmem:[#allocation8 + $0x1d8] sm:$0xf]
        %v2481 = vld [vmem:[#allocation8 + $0x1dc] sm:$0xf]
        %v2482 = vld [vmem:[#allocation8 + $0x1e0] sm:$0xf]
        %v2483 = vld [vmem:[#allocation8 + $0x1e4] sm:$0xf]
        %v2484 = vld [vmem:[#allocation8 + $0x1e8] sm:$0xf]
        %v2485 = vld [vmem:[#allocation8 + $0x1ec] sm:$0xf]
        %v2486 = vld [vmem:[#allocation8 + $0x1f0] sm:$0xf]
        %v2487 = vld [vmem:[#allocation8 + $0x1f4] sm:$0xf]
        %v2488 = vld [vmem:[#allocation8 + $0x1f8] sm:$0xf]
        %v2489 = vld [vmem:[#allocation8 + $0x1fc] sm:$0xf]
        %v2490 = vld [vmem:[#allocation8 + $0x200] sm:$0xf]
        %v2491 = vld [vmem:[#allocation8 + $0x204] sm:$0xf]
        %v2492 = vld [vmem:[#allocation8 + $0x208] sm:$0xf]
        %v2493 = vld [vmem:[#allocation8 + $0x20c] sm:$0xf]
        %v2494 = vld [vmem:[#allocation8 + $0x210] sm:$0xf]
        %v2495 = vld [vmem:[#allocation8 + $0x214] sm:$0xf]
        %v2496 = vld [vmem:[#allocation8 + $0x218] sm:$0xf]
        %v2497 = vld [vmem:[#allocation8 + $0x21c] sm:$0xf]
        %v2498 = vld [vmem:[#allocation8 + $0x220] sm:$0xf]
        %v2499 = vld [vmem:[#allocation8 + $0x224] sm:$0xf]
        %v2500 = vld [vmem:[#allocation8 + $0x228] sm:$0xf]
        %v2501 = vld [vmem:[#allocation8 + $0x22c] sm:$0xf]
        %v2502 = vld [vmem:[#allocation8 + $0x230] sm:$0xf]
        %v2503 = vld [vmem:[#allocation8 + $0x234] sm:$0xf]
        %v2504 = vld [vmem:[#allocation8 + $0x238] sm:$0xf]
        %v2505 = vld [vmem:[#allocation8 + $0x23c] sm:$0xf]
        %v2650 = vunpack.c.l.b16 %v2362
        %v2651 = vunpack.c.l.b16 %v2363
        %v2652 = vunpack.c.l.b16 %v2364
        %v2653 = vunpack.c.l.b16 %v2365
        %v2654 = vunpack.c.l.b16 %v2366
        %v2655 = vunpack.c.l.b16 %v2367
        %v2656 = vunpack.c.l.b16 %v2368
        %v2657 = vunpack.c.l.b16 %v2369
        %v2658 = vunpack.c.l.b16 %v2370
        %v2659 = vunpack.c.l.b16 %v2371
        %v2660 = vunpack.c.l.b16 %v2372
        %v2661 = vunpack.c.l.b16 %v2373
        %v2662 = vunpack.c.l.b16 %v2374
        %v2663 = vunpack.c.l.b16 %v2375
        %v2664 = vunpack.c.l.b16 %v2376
        %v2665 = vunpack.c.l.b16 %v2377
        %v2666 = vunpack.c.l.b16 %v2378
        %v2667 = vunpack.c.l.b16 %v2379
        %v2668 = vunpack.c.l.b16 %v2380
        %v2669 = vunpack.c.l.b16 %v2381
        %v2670 = vunpack.c.l.b16 %v2382
        %v2671 = vunpack.c.l.b16 %v2383
        %v2672 = vunpack.c.l.b16 %v2384
        %v2673 = vunpack.c.l.b16 %v2385
        %v2674 = vunpack.c.l.b16 %v2386
        %v2675 = vunpack.c.l.b16 %v2387
        %v2676 = vunpack.c.l.b16 %v2388
        %v2677 = vunpack.c.l.b16 %v2389
        %v2678 = vunpack.c.l.b16 %v2390
        %v2679 = vunpack.c.l.b16 %v2391
        %v2680 = vunpack.c.l.b16 %v2392
        %v2681 = vunpack.c.l.b16 %v2393
        %v2682 = vunpack.c.l.b16 %v2394
        %v2683 = vunpack.c.l.b16 %v2395
        %v2684 = vunpack.c.l.b16 %v2396
        %v2685 = vunpack.c.l.b16 %v2397
        %v2686 = vunpack.c.l.b16 %v2398
        %v2687 = vunpack.c.l.b16 %v2399
        %v2688 = vunpack.c.l.b16 %v2400
        %v2689 = vunpack.c.l.b16 %v2401
        %v2690 = vunpack.c.l.b16 %v2402
        %v2691 = vunpack.c.l.b16 %v2403
        %v2692 = vunpack.c.l.b16 %v2404
        %v2693 = vunpack.c.l.b16 %v2405
        %v2694 = vunpack.c.l.b16 %v2406
        %v2695 = vunpack.c.l.b16 %v2407
        %v2696 = vunpack.c.l.b16 %v2408
        %v2697 = vunpack.c.l.b16 %v2409
        %v2698 = vunpack.c.l.b16 %v2410
        %v2699 = vunpack.c.l.b16 %v2411
        %v2700 = vunpack.c.l.b16 %v2412
        %v2701 = vunpack.c.l.b16 %v2413
        %v2702 = vunpack.c.l.b16 %v2414
        %v2703 = vunpack.c.l.b16 %v2415
        %v2704 = vunpack.c.l.b16 %v2416
        %v2705 = vunpack.c.l.b16 %v2417
        %v2706 = vunpack.c.l.b16 %v2418
        %v2707 = vunpack.c.l.b16 %v2419
        %v2708 = vunpack.c.l.b16 %v2420
        %v2709 = vunpack.c.l.b16 %v2421
        %v2710 = vunpack.c.l.b16 %v2422
        %v2711 = vunpack.c.l.b16 %v2423
        %v2712 = vunpack.c.l.b16 %v2424
        %v2713 = vunpack.c.l.b16 %v2425
        %v2714 = vunpack.c.l.b16 %v2426
        %v2715 = vunpack.c.l.b16 %v2427
        %v2716 = vunpack.c.l.b16 %v2428
        %v2717 = vunpack.c.l.b16 %v2429
        %v2718 = vunpack.c.l.b16 %v2430
        %v2719 = vunpack.c.l.b16 %v2431
        %v2720 = vunpack.c.l.b16 %v2432
        %v2721 = vunpack.c.l.b16 %v2433
        %v2722 = vunpack.c.l.b16 %v2434
        %v2723 = vunpack.c.l.b16 %v2435
        %v2724 = vunpack.c.l.b16 %v2436
        %v2725 = vunpack.c.l.b16 %v2437
        %v2726 = vunpack.c.l.b16 %v2438
        %v2727 = vunpack.c.l.b16 %v2439
        %v2728 = vunpack.c.l.b16 %v2440
        %v2729 = vunpack.c.l.b16 %v2441
        %v2730 = vunpack.c.l.b16 %v2442
        %v2731 = vunpack.c.l.b16 %v2443
        %v2732 = vunpack.c.l.b16 %v2444
        %v2733 = vunpack.c.l.b16 %v2445
        %v2734 = vunpack.c.l.b16 %v2446
        %v2735 = vunpack.c.l.b16 %v2447
        %v2736 = vunpack.c.l.b16 %v2448
        %v2737 = vunpack.c.l.b16 %v2449
        %v2738 = vunpack.c.l.b16 %v2450
        %v2739 = vunpack.c.l.b16 %v2451
        %v2740 = vunpack.c.l.b16 %v2452
        %v2741 = vunpack.c.l.b16 %v2453
        %v2742 = vunpack.c.l.b16 %v2454
        %v2743 = vunpack.c.l.b16 %v2455
        %v2744 = vunpack.c.l.b16 %v2456
        %v2745 = vunpack.c.l.b16 %v2457
        %v2746 = vunpack.c.l.b16 %v2458
        %v2747 = vunpack.c.l.b16 %v2459
        %v2748 = vunpack.c.l.b16 %v2460
        %v2749 = vunpack.c.l.b16 %v2461
        %v2750 = vunpack.c.l.b16 %v2462
        %v2751 = vunpack.c.l.b16 %v2463
        %v2752 = vunpack.c.l.b16 %v2464
        %v2753 = vunpack.c.l.b16 %v2465
        %v2754 = vunpack.c.l.b16 %v2466
        %v2755 = vunpack.c.l.b16 %v2467
        %v2756 = vunpack.c.l.b16 %v2468
        %v2757 = vunpack.c.l.b16 %v2469
        %v2758 = vunpack.c.l.b16 %v2470
        %v2759 = vunpack.c.l.b16 %v2471
        %v2760 = vunpack.c.l.b16 %v2472
        %v2761 = vunpack.c.l.b16 %v2473
        %v2762 = vunpack.c.l.b16 %v2474
        %v2763 = vunpack.c.l.b16 %v2475
        %v2764 = vunpack.c.l.b16 %v2476
        %v2765 = vunpack.c.l.b16 %v2477
        %v2766 = vunpack.c.l.b16 %v2478
        %v2767 = vunpack.c.l.b16 %v2479
        %v2768 = vunpack.c.l.b16 %v2480
        %v2769 = vunpack.c.l.b16 %v2481
        %v2770 = vunpack.c.l.b16 %v2482
        %v2771 = vunpack.c.l.b16 %v2483
        %v2772 = vunpack.c.l.b16 %v2484
        %v2773 = vunpack.c.l.b16 %v2485
        %v2774 = vunpack.c.l.b16 %v2486
        %v2775 = vunpack.c.l.b16 %v2487
        %v2776 = vunpack.c.l.b16 %v2488
        %v2777 = vunpack.c.l.b16 %v2489
        %v2778 = vunpack.c.l.b16 %v2490
        %v2779 = vunpack.c.l.b16 %v2491
        %v2780 = vunpack.c.l.b16 %v2492
        %v2781 = vunpack.c.l.b16 %v2493
        %v2782 = vunpack.c.l.b16 %v2494
        %v2783 = vunpack.c.l.b16 %v2495
        %v2784 = vunpack.c.l.b16 %v2496
        %v2785 = vunpack.c.l.b16 %v2497
        %v2786 = vunpack.c.l.b16 %v2498
        %v2787 = vunpack.c.l.b16 %v2499
        %v2788 = vunpack.c.l.b16 %v2500
        %v2789 = vunpack.c.l.b16 %v2501
        %v2790 = vunpack.c.l.b16 %v2502
        %v2791 = vunpack.c.l.b16 %v2503
        %v2792 = vunpack.c.l.b16 %v2504
        %v2793 = vunpack.c.l.b16 %v2505
        %v2794 = vpack.c.b16 %v2651, %v2650
        %v2795 = vpack.c.b16 %v2653, %v2652
        %v2796 = vpack.c.b16 %v2655, %v2654
        %v2797 = vpack.c.b16 %v2657, %v2656
        %v2798 = vpack.c.b16 %v2659, %v2658
        %v2799 = vpack.c.b16 %v2661, %v2660
        %v2800 = vpack.c.b16 %v2663, %v2662
        %v2801 = vpack.c.b16 %v2665, %v2664
        %v2802 = vpack.c.b16 %v2667, %v2666
        %v2803 = vpack.c.b16 %v2669, %v2668
        %v2804 = vpack.c.b16 %v2671, %v2670
        %v2805 = vpack.c.b16 %v2673, %v2672
        %v2806 = vpack.c.b16 %v2675, %v2674
        %v2807 = vpack.c.b16 %v2677, %v2676
        %v2808 = vpack.c.b16 %v2679, %v2678
        %v2809 = vpack.c.b16 %v2681, %v2680
        %v2810 = vpack.c.b16 %v2683, %v2682
        %v2811 = vpack.c.b16 %v2685, %v2684
        %v2812 = vpack.c.b16 %v2687, %v2686
        %v2813 = vpack.c.b16 %v2689, %v2688
        %v2814 = vpack.c.b16 %v2691, %v2690
        %v2815 = vpack.c.b16 %v2693, %v2692
        %v2816 = vpack.c.b16 %v2695, %v2694
        %v2817 = vpack.c.b16 %v2697, %v2696
        %v2818 = vpack.c.b16 %v2699, %v2698
        %v2819 = vpack.c.b16 %v2701, %v2700
        %v2820 = vpack.c.b16 %v2703, %v2702
        %v2821 = vpack.c.b16 %v2705, %v2704
        %v2822 = vpack.c.b16 %v2707, %v2706
        %v2823 = vpack.c.b16 %v2709, %v2708
        %v2824 = vpack.c.b16 %v2711, %v2710
        %v2825 = vpack.c.b16 %v2713, %v2712
        %v2826 = vpack.c.b16 %v2715, %v2714
        %v2827 = vpack.c.b16 %v2717, %v2716
        %v2828 = vpack.c.b16 %v2719, %v2718
        %v2829 = vpack.c.b16 %v2721, %v2720
        %v2830 = vpack.c.b16 %v2723, %v2722
        %v2831 = vpack.c.b16 %v2725, %v2724
        %v2832 = vpack.c.b16 %v2727, %v2726
        %v2833 = vpack.c.b16 %v2729, %v2728
        %v2834 = vpack.c.b16 %v2731, %v2730
        %v2835 = vpack.c.b16 %v2733, %v2732
        %v2836 = vpack.c.b16 %v2735, %v2734
        %v2837 = vpack.c.b16 %v2737, %v2736
        %v2838 = vpack.c.b16 %v2739, %v2738
        %v2839 = vpack.c.b16 %v2741, %v2740
        %v2840 = vpack.c.b16 %v2743, %v2742
        %v2841 = vpack.c.b16 %v2745, %v2744
        %v2842 = vpack.c.b16 %v2747, %v2746
        %v2843 = vpack.c.b16 %v2749, %v2748
        %v2844 = vpack.c.b16 %v2751, %v2750
        %v2845 = vpack.c.b16 %v2753, %v2752
        %v2846 = vpack.c.b16 %v2755, %v2754
        %v2847 = vpack.c.b16 %v2757, %v2756
        %v2848 = vpack.c.b16 %v2759, %v2758
        %v2849 = vpack.c.b16 %v2761, %v2760
        %v2850 = vpack.c.b16 %v2763, %v2762
        %v2851 = vpack.c.b16 %v2765, %v2764
        %v2852 = vpack.c.b16 %v2767, %v2766
        %v2853 = vpack.c.b16 %v2769, %v2768
        %v2854 = vpack.c.b16 %v2771, %v2770
        %v2855 = vpack.c.b16 %v2773, %v2772
        %v2856 = vpack.c.b16 %v2775, %v2774
        %v2857 = vpack.c.b16 %v2777, %v2776
        %v2858 = vpack.c.b16 %v2779, %v2778
        %v2859 = vpack.c.b16 %v2781, %v2780
        %v2860 = vpack.c.b16 %v2783, %v2782
        %v2861 = vpack.c.b16 %v2785, %v2784
        %v2862 = vpack.c.b16 %v2787, %v2786
        %v2863 = vpack.c.b16 %v2789, %v2788
        %v2864 = vpack.c.b16 %v2791, %v2790
        %v2865 = vpack.c.b16 %v2793, %v2792
        %2938 = vmatprep.subr.bf16.mxu0 0
        %2939 = vmatpush1.bf16.msra.mxu0 %v2801
        %2940 = vmatprep.subr.bf16.mxu0 0
        %2941 = vmatpush1.bf16.msra.mxu0 %v2800
        %2942 = vmatprep.subr.bf16.mxu0 0
        %2943 = vmatpush1.bf16.msra.mxu0 %v2799
        %2944 = vmatprep.subr.bf16.mxu0 0
        %2945 = vmatpush1.bf16.msra.mxu0 %v2798
        %2946 = vmatprep.subr.bf16.mxu0 0
        %2947 = vmatpush1.bf16.msra.mxu0 %v2797
        %2948 = vmatprep.subr.bf16.mxu0 0
        %2949 = vmatpush1.bf16.msra.mxu0 %v2796
        %2950 = vmatprep.subr.bf16.mxu0 0
        %2951 = vmatpush1.bf16.msra.mxu0 %v2795
        %2952 = vmatprep.subr.bf16.mxu0 0
        %2953 = vmatpush1.bf16.msra.mxu0 %v2794
        %2954 = vmatprep.subr.bf16.mxu0 0
        %2955 = vmatpush2.bf16.msra.mxu0 %v2809
        %2956 = vmatprep.subr.bf16.mxu0 0
        %2957 = vmatpush2.bf16.msra.mxu0 %v2808
        %2958 = vmatprep.subr.bf16.mxu0 0
        %2959 = vmatpush2.bf16.msra.mxu0 %v2807
        %2960 = vmatprep.subr.bf16.mxu0 0
        %2961 = vmatpush2.bf16.msra.mxu0 %v2806
        %2962 = vmatprep.subr.bf16.mxu0 0
        %2963 = vmatpush2.bf16.msra.mxu0 %v2805
        %2964 = vmatprep.subr.bf16.mxu0 0
        %2965 = vmatpush2.bf16.msra.mxu0 %v2804
        %2966 = vmatprep.subr.bf16.mxu0 0
        %2967 = vmatpush2.bf16.msra.mxu0 %v2803
        %2968 = vmatprep.subr.bf16.mxu0 0
        %2969 = vmatpush2.bf16.msra.mxu0 %v2802
        %2970 = vmatprep.mubr.bf16.mxu0 %v2090
        %2971 = vmatmul.mubr.bf16.gmra.mxu0 %v2042
        %v2972 = vpop.f32.mrf.mxu0
        %v2973 = vadd.f32 0.0, %v2972
        %v2974 = vpop.f32.mrf.mxu0
        %v2975 = vpop.f32.mrf.mxu0
        %v2976 = vadd.f32 0.0, %v2975
        %v2977 = vpop.f32.mrf.mxu0
        %2978 = vmatprep.mubr.bf16.mxu0 %v2091
        %2979 = vmatmul.mubr.bf16.gmra.mxu0 %v2043
        %v2980 = vpop.f32.mrf.mxu0
        %v2981 = vadd.f32 0.0, %v2980
        %v2982 = vpop.f32.mrf.mxu0
        %v2983 = vpop.f32.mrf.mxu0
        %v2984 = vadd.f32 0.0, %v2983
        %v2985 = vpop.f32.mrf.mxu0
        %2986 = vmatprep.mubr.bf16.mxu0 %v2092
        %2987 = vmatmul.mubr.bf16.gmra.mxu0 %v2044
        %v2988 = vpop.f32.mrf.mxu0
        %v2989 = vadd.f32 0.0, %v2988
        %v2990 = vpop.f32.mrf.mxu0
        %v2991 = vpop.f32.mrf.mxu0
        %v2992 = vadd.f32 0.0, %v2991
        %v2993 = vpop.f32.mrf.mxu0
        %2994 = vmatprep.mubr.bf16.mxu0 %v2093
        %2995 = vmatmul.mubr.bf16.gmra.mxu0 %v2045
        %v2996 = vpop.f32.mrf.mxu0
        %v2997 = vadd.f32 0.0, %v2996
        %v2998 = vpop.f32.mrf.mxu0
        %v2999 = vpop.f32.mrf.mxu0
        %v3000 = vadd.f32 0.0, %v2999
        %v3001 = vpop.f32.mrf.mxu0
        %3002 = vmatprep.mubr.bf16.mxu0 %v2094
        %3003 = vmatmul.mubr.bf16.gmra.mxu0 %v2046
        %v3004 = vpop.f32.mrf.mxu0
        %v3005 = vadd.f32 0.0, %v3004
        %v3006 = vpop.f32.mrf.mxu0
        %v3007 = vpop.f32.mrf.mxu0
        %v3008 = vadd.f32 0.0, %v3007
        %v3009 = vpop.f32.mrf.mxu0
        %3010 = vmatprep.mubr.bf16.mxu0 %v2095
        %3011 = vmatmul.mubr.bf16.gmra.mxu0 %v2047
        %v3012 = vpop.f32.mrf.mxu0
        %v3013 = vadd.f32 0.0, %v3012
        %v3014 = vpop.f32.mrf.mxu0
        %v3015 = vpop.f32.mrf.mxu0
        %v3016 = vadd.f32 0.0, %v3015
        %v3017 = vpop.f32.mrf.mxu0
        %3018 = vmatprep.mubr.bf16.mxu0 %v2096
        %3019 = vmatmul.mubr.bf16.gmra.mxu0 %v2048
        %v3020 = vpop.f32.mrf.mxu0
        %v3021 = vadd.f32 0.0, %v3020
        %v3022 = vpop.f32.mrf.mxu0
        %v3023 = vpop.f32.mrf.mxu0
        %v3024 = vadd.f32 0.0, %v3023
        %v3025 = vpop.f32.mrf.mxu0
        %3026 = vmatprep.mubr.bf16.mxu0 %v2097
        %3027 = vmatmul.mubr.bf16.gmra.mxu0 %v2049
        %v3028 = vpop.f32.mrf.mxu0
        %v3029 = vadd.f32 0.0, %v3028
        %v3030 = vpop.f32.mrf.mxu0
        %v3031 = vpop.f32.mrf.mxu0
        %v3032 = vadd.f32 0.0, %v3031
        %v3033 = vpop.f32.mrf.mxu0
        %3034 = vdwg.mxu0
        %3035 = vmatprep.subr.bf16.mxu0 0
        %3036 = vmatpush1.bf16.msra.mxu0 %v2817
        %3037 = vmatprep.subr.bf16.mxu0 0
        %3038 = vmatpush1.bf16.msra.mxu0 %v2816
        %3039 = vmatprep.subr.bf16.mxu0 0
        %3040 = vmatpush1.bf16.msra.mxu0 %v2815
        %3041 = vmatprep.subr.bf16.mxu0 0
        %3042 = vmatpush1.bf16.msra.mxu0 %v2814
        %3043 = vmatprep.subr.bf16.mxu0 0
        %3044 = vmatpush1.bf16.msra.mxu0 %v2813
        %3045 = vmatprep.subr.bf16.mxu0 0
        %3046 = vmatpush1.bf16.msra.mxu0 %v2812
        %3047 = vmatprep.subr.bf16.mxu0 0
        %3048 = vmatpush1.bf16.msra.mxu0 %v2811
        %3049 = vmatprep.subr.bf16.mxu0 0
        %3050 = vmatpush1.bf16.msra.mxu0 %v2810
        %3051 = vmatprep.subr.bf16.mxu0 0
        %3052 = vmatpush2.bf16.msra.mxu0 %v2825
        %3053 = vmatprep.subr.bf16.mxu0 0
        %3054 = vmatpush2.bf16.msra.mxu0 %v2824
        %3055 = vmatprep.subr.bf16.mxu0 0
        %3056 = vmatpush2.bf16.msra.mxu0 %v2823
        %3057 = vmatprep.subr.bf16.mxu0 0
        %3058 = vmatpush2.bf16.msra.mxu0 %v2822
        %3059 = vmatprep.subr.bf16.mxu0 0
        %3060 = vmatpush2.bf16.msra.mxu0 %v2821
        %3061 = vmatprep.subr.bf16.mxu0 0
        %3062 = vmatpush2.bf16.msra.mxu0 %v2820
        %3063 = vmatprep.subr.bf16.mxu0 0
        %3064 = vmatpush2.bf16.msra.mxu0 %v2819
        %3065 = vmatprep.subr.bf16.mxu0 0
        %3066 = vmatpush2.bf16.msra.mxu0 %v2818
        %3067 = vmatprep.mubr.bf16.mxu0 %v2154
        %3068 = vmatmul.mubr.bf16.gmra.mxu0 %v2122
        %v3069 = vpop.f32.mrf.mxu0
        %v3070 = vadd.f32 %v2973, %v3069
        %v3071 = vpop.f32.mrf.mxu0
        %v3072 = vpop.f32.mrf.mxu0
        %v3073 = vadd.f32 %v2976, %v3072
        %v3074 = vpop.f32.mrf.mxu0
        %3075 = vmatprep.mubr.bf16.mxu0 %v2155
        %3076 = vmatmul.mubr.bf16.gmra.mxu0 %v2123
        %v3077 = vpop.f32.mrf.mxu0
        %v3078 = vadd.f32 %v2981, %v3077
        %v3079 = vpop.f32.mrf.mxu0
        %v3080 = vpop.f32.mrf.mxu0
        %v3081 = vadd.f32 %v2984, %v3080
        %v3082 = vpop.f32.mrf.mxu0
        %3083 = vmatprep.mubr.bf16.mxu0 %v2156
        %3084 = vmatmul.mubr.bf16.gmra.mxu0 %v2124
        %v3085 = vpop.f32.mrf.mxu0
        %v3086 = vadd.f32 %v2989, %v3085
        %v3087 = vpop.f32.mrf.mxu0
        %v3088 = vpop.f32.mrf.mxu0
        %v3089 = vadd.f32 %v2992, %v3088
        %v3090 = vpop.f32.mrf.mxu0
        %3091 = vmatprep.mubr.bf16.mxu0 %v2157
        %3092 = vmatmul.mubr.bf16.gmra.mxu0 %v2125
        %v3093 = vpop.f32.mrf.mxu0
        %v3094 = vadd.f32 %v2997, %v3093
        %v3095 = vpop.f32.mrf.mxu0
        %v3096 = vpop.f32.mrf.mxu0
        %v3097 = vadd.f32 %v3000, %v3096
        %v3098 = vpop.f32.mrf.mxu0
        %3099 = vmatprep.mubr.bf16.mxu0 %v2158
        %3100 = vmatmul.mubr.bf16.gmra.mxu0 %v2126
        %v3101 = vpop.f32.mrf.mxu0
        %v3102 = vadd.f32 %v3005, %v3101
        %v3103 = vpop.f32.mrf.mxu0
        %v3104 = vpop.f32.mrf.mxu0
        %v3105 = vadd.f32 %v3008, %v3104
        %v3106 = vpop.f32.mrf.mxu0
        %3107 = vmatprep.mubr.bf16.mxu0 %v2159
        %3108 = vmatmul.mubr.bf16.gmra.mxu0 %v2127
        %v3109 = vpop.f32.mrf.mxu0
        %v3110 = vadd.f32 %v3013, %v3109
        %v3111 = vpop.f32.mrf.mxu0
        %v3112 = vpop.f32.mrf.mxu0
        %v3113 = vadd.f32 %v3016, %v3112
        %v3114 = vpop.f32.mrf.mxu0
        %3115 = vmatprep.mubr.bf16.mxu0 %v2160
        %3116 = vmatmul.mubr.bf16.gmra.mxu0 %v2128
        %v3117 = vpop.f32.mrf.mxu0
        %v3118 = vadd.f32 %v3021, %v3117
        %v3119 = vpop.f32.mrf.mxu0
        %v3120 = vpop.f32.mrf.mxu0
        %v3121 = vadd.f32 %v3024, %v3120
        %v3122 = vpop.f32.mrf.mxu0
        %3123 = vmatprep.mubr.bf16.mxu0 %v2161
        %3124 = vmatmul.mubr.bf16.gmra.mxu0 %v2129
        %v3125 = vpop.f32.mrf.mxu0
        %v3126 = vadd.f32 %v3029, %v3125
        %v3127 = vpop.f32.mrf.mxu0
        %v3128 = vpop.f32.mrf.mxu0
        %v3129 = vadd.f32 %v3032, %v3128
        %v3130 = vpop.f32.mrf.mxu0
        %3131 = vdwg.mxu0
        %3132 = vmatprep.subr.bf16.mxu0 0
        %3133 = vmatpush1.bf16.msra.mxu0 %v2833
        %3134 = vmatprep.subr.bf16.mxu0 0
        %3135 = vmatpush1.bf16.msra.mxu0 %v2832
        %3136 = vmatprep.subr.bf16.mxu0 0
        %3137 = vmatpush1.bf16.msra.mxu0 %v2831
        %3138 = vmatprep.subr.bf16.mxu0 0
        %3139 = vmatpush1.bf16.msra.mxu0 %v2830
        %3140 = vmatprep.subr.bf16.mxu0 0
        %3141 = vmatpush1.bf16.msra.mxu0 %v2829
        %3142 = vmatprep.subr.bf16.mxu0 0
        %3143 = vmatpush1.bf16.msra.mxu0 %v2828
        %3144 = vmatprep.subr.bf16.mxu0 0
        %3145 = vmatpush1.bf16.msra.mxu0 %v2827
        %3146 = vmatprep.subr.bf16.mxu0 0
        %3147 = vmatpush1.bf16.msra.mxu0 %v2826
        %3148 = vmatprep.subr.bf16.mxu0 0
        %3149 = vmatpush2.bf16.msra.mxu0 %v2841
        %3150 = vmatprep.subr.bf16.mxu0 0
        %3151 = vmatpush2.bf16.msra.mxu0 %v2840
        %3152 = vmatprep.subr.bf16.mxu0 0
        %3153 = vmatpush2.bf16.msra.mxu0 %v2839
        %3154 = vmatprep.subr.bf16.mxu0 0
        %3155 = vmatpush2.bf16.msra.mxu0 %v2838
        %3156 = vmatprep.subr.bf16.mxu0 0
        %3157 = vmatpush2.bf16.msra.mxu0 %v2837
        %3158 = vmatprep.subr.bf16.mxu0 0
        %3159 = vmatpush2.bf16.msra.mxu0 %v2836
        %3160 = vmatprep.subr.bf16.mxu0 0
        %3161 = vmatpush2.bf16.msra.mxu0 %v2835
        %3162 = vmatprep.subr.bf16.mxu0 0
        %3163 = vmatpush2.bf16.msra.mxu0 %v2834
        %3164 = vmatprep.mubr.bf16.mxu0 %v2234
        %3165 = vmatmul.mubr.bf16.gmra.mxu0 %v2202
        %v3166 = vpop.f32.mrf.mxu0
        %v3167 = vadd.f32 %v3070, %v3166
        %v3168 = vpop.f32.mrf.mxu0
        %v3169 = vpop.f32.mrf.mxu0
        %v3170 = vadd.f32 %v3073, %v3169
        %v3171 = vpop.f32.mrf.mxu0
        %3172 = vmatprep.mubr.bf16.mxu0 %v2235
        %3173 = vmatmul.mubr.bf16.gmra.mxu0 %v2203
        %v3174 = vpop.f32.mrf.mxu0
        %v3175 = vadd.f32 %v3078, %v3174
        %v3176 = vpop.f32.mrf.mxu0
        %v3177 = vpop.f32.mrf.mxu0
        %v3178 = vadd.f32 %v3081, %v3177
        %v3179 = vpop.f32.mrf.mxu0
        %3180 = vmatprep.mubr.bf16.mxu0 %v2236
        %3181 = vmatmul.mubr.bf16.gmra.mxu0 %v2204
        %v3182 = vpop.f32.mrf.mxu0
        %v3183 = vadd.f32 %v3086, %v3182
        %v3184 = vpop.f32.mrf.mxu0
        %v3185 = vpop.f32.mrf.mxu0
        %v3186 = vadd.f32 %v3089, %v3185
        %v3187 = vpop.f32.mrf.mxu0
        %3188 = vmatprep.mubr.bf16.mxu0 %v2237
        %3189 = vmatmul.mubr.bf16.gmra.mxu0 %v2205
        %v3190 = vpop.f32.mrf.mxu0
        %v3191 = vadd.f32 %v3094, %v3190
        %v3192 = vpop.f32.mrf.mxu0
        %v3193 = vpop.f32.mrf.mxu0
        %v3194 = vadd.f32 %v3097, %v3193
        %v3195 = vpop.f32.mrf.mxu0
        %3196 = vmatprep.mubr.bf16.mxu0 %v2238
        %3197 = vmatmul.mubr.bf16.gmra.mxu0 %v2206
        %v3198 = vpop.f32.mrf.mxu0
        %v3199 = vadd.f32 %v3102, %v3198
        %v3200 = vpop.f32.mrf.mxu0
        %v3201 = vpop.f32.mrf.mxu0
        %v3202 = vadd.f32 %v3105, %v3201
        %v3203 = vpop.f32.mrf.mxu0
        %3204 = vmatprep.mubr.bf16.mxu0 %v2239
        %3205 = vmatmul.mubr.bf16.gmra.mxu0 %v2207
        %v3206 = vpop.f32.mrf.mxu0
        %v3207 = vadd.f32 %v3110, %v3206
        %v3208 = vpop.f32.mrf.mxu0
        %v3209 = vpop.f32.mrf.mxu0
        %v3210 = vadd.f32 %v3113, %v3209
        %v3211 = vpop.f32.mrf.mxu0
        %3212 = vmatprep.mubr.bf16.mxu0 %v2240
        %3213 = vmatmul.mubr.bf16.gmra.mxu0 %v2208
        %v3214 = vpop.f32.mrf.mxu0
        %v3215 = vadd.f32 %v3118, %v3214
        %v3216 = vpop.f32.mrf.mxu0
        %v3217 = vpop.f32.mrf.mxu0
        %v3218 = vadd.f32 %v3121, %v3217
        %v3219 = vpop.f32.mrf.mxu0
        %3220 = vmatprep.mubr.bf16.mxu0 %v2241
        %3221 = vmatmul.mubr.bf16.gmra.mxu0 %v2209
        %v3222 = vpop.f32.mrf.mxu0
        %v3223 = vadd.f32 %v3126, %v3222
        %v3224 = vpop.f32.mrf.mxu0
        %v3225 = vpop.f32.mrf.mxu0
        %v3226 = vadd.f32 %v3129, %v3225
        %v3227 = vpop.f32.mrf.mxu0
        %3228 = vdwg.mxu0
        %3229 = vmatprep.subr.bf16.mxu0 0
        %3230 = vmatpush1.bf16.msra.mxu0 %v2849
        %3231 = vmatprep.subr.bf16.mxu0 0
        %3232 = vmatpush1.bf16.msra.mxu0 %v2848
        %3233 = vmatprep.subr.bf16.mxu0 0
        %3234 = vmatpush1.bf16.msra.mxu0 %v2847
        %3235 = vmatprep.subr.bf16.mxu0 0
        %3236 = vmatpush1.bf16.msra.mxu0 %v2846
        %3237 = vmatprep.subr.bf16.mxu0 0
        %3238 = vmatpush1.bf16.msra.mxu0 %v2845
        %3239 = vmatprep.subr.bf16.mxu0 0
        %3240 = vmatpush1.bf16.msra.mxu0 %v2844
        %3241 = vmatprep.subr.bf16.mxu0 0
        %3242 = vmatpush1.bf16.msra.mxu0 %v2843
        %3243 = vmatprep.subr.bf16.mxu0 0
        %3244 = vmatpush1.bf16.msra.mxu0 %v2842
        %3245 = vmatprep.subr.bf16.mxu0 0
        %3246 = vmatpush2.bf16.msra.mxu0 %v2857
        %3247 = vmatprep.subr.bf16.mxu0 0
        %3248 = vmatpush2.bf16.msra.mxu0 %v2856
        %3249 = vmatprep.subr.bf16.mxu0 0
        %3250 = vmatpush2.bf16.msra.mxu0 %v2855
        %3251 = vmatprep.subr.bf16.mxu0 0
        %3252 = vmatpush2.bf16.msra.mxu0 %v2854
        %3253 = vmatprep.subr.bf16.mxu0 0
        %3254 = vmatpush2.bf16.msra.mxu0 %v2853
        %3255 = vmatprep.subr.bf16.mxu0 0
        %3256 = vmatpush2.bf16.msra.mxu0 %v2852
        %3257 = vmatprep.subr.bf16.mxu0 0
        %3258 = vmatpush2.bf16.msra.mxu0 %v2851
        %3259 = vmatprep.subr.bf16.mxu0 0
        %3260 = vmatpush2.bf16.msra.mxu0 %v2850
        %3261 = vmatprep.mubr.bf16.mxu0 %v2314
        %3262 = vmatmul.mubr.bf16.gmra.mxu0 %v2266
        %v3263 = vpop.f32.mrf.mxu0
        %v3264 = vadd.f32 %v3167, %v3263
        %v3265 = vpop.f32.mrf.mxu0
        %v3266 = vpop.f32.mrf.mxu0
        %v3267 = vadd.f32 %v3170, %v3266
        %v3268 = vpop.f32.mrf.mxu0
        %3269 = vmatprep.mubr.bf16.mxu0 %v2315
        %3270 = vmatmul.mubr.bf16.gmra.mxu0 %v2267
        %v3271 = vpop.f32.mrf.mxu0
        %v3272 = vadd.f32 %v3175, %v3271
        %v3273 = vpop.f32.mrf.mxu0
        %v3274 = vpop.f32.mrf.mxu0
        %v3275 = vadd.f32 %v3178, %v3274
        %v3276 = vpop.f32.mrf.mxu0
        %3277 = vmatprep.mubr.bf16.mxu0 %v2316
        %3278 = vmatmul.mubr.bf16.gmra.mxu0 %v2268
        %v3279 = vpop.f32.mrf.mxu0
        %v3280 = vadd.f32 %v3183, %v3279
        %v3281 = vpop.f32.mrf.mxu0
        %v3282 = vpop.f32.mrf.mxu0
        %v3283 = vadd.f32 %v3186, %v3282
        %v3284 = vpop.f32.mrf.mxu0
        %3285 = vmatprep.mubr.bf16.mxu0 %v2317
        %3286 = vmatmul.mubr.bf16.gmra.mxu0 %v2269
        %v3287 = vpop.f32.mrf.mxu0
        %v3288 = vadd.f32 %v3191, %v3287
        %v3289 = vpop.f32.mrf.mxu0
        %v3290 = vpop.f32.mrf.mxu0
        %v3291 = vadd.f32 %v3194, %v3290
        %v3292 = vpop.f32.mrf.mxu0
        %3293 = vmatprep.mubr.bf16.mxu0 %v2318
        %3294 = vmatmul.mubr.bf16.gmra.mxu0 %v2270
        %v3295 = vpop.f32.mrf.mxu0
        %v3296 = vadd.f32 %v3199, %v3295
        %v3297 = vpop.f32.mrf.mxu0
        %v3298 = vpop.f32.mrf.mxu0
        %v3299 = vadd.f32 %v3202, %v3298
        %v3300 = vpop.f32.mrf.mxu0
        %3301 = vmatprep.mubr.bf16.mxu0 %v2319
        %3302 = vmatmul.mubr.bf16.gmra.mxu0 %v2271
        %v3303 = vpop.f32.mrf.mxu0
        %v3304 = vadd.f32 %v3207, %v3303
        %v3305 = vpop.f32.mrf.mxu0
        %v3306 = vpop.f32.mrf.mxu0
        %v3307 = vadd.f32 %v3210, %v3306
        %v3308 = vpop.f32.mrf.mxu0
        %3309 = vmatprep.mubr.bf16.mxu0 %v2320
        %3310 = vmatmul.mubr.bf16.gmra.mxu0 %v2272
        %v3311 = vpop.f32.mrf.mxu0
        %v3312 = vadd.f32 %v3215, %v3311
        %v3313 = vpop.f32.mrf.mxu0
        %v3314 = vpop.f32.mrf.mxu0
        %v3315 = vadd.f32 %v3218, %v3314
        %v3316 = vpop.f32.mrf.mxu0
        %3317 = vmatprep.mubr.bf16.mxu0 %v2321
        %3318 = vmatmul.mubr.bf16.gmra.mxu0 %v2273
        %v3319 = vpop.f32.mrf.mxu0
        %v3320 = vadd.f32 %v3223, %v3319
        %v3321 = vpop.f32.mrf.mxu0
        %v3322 = vpop.f32.mrf.mxu0
        %v3323 = vadd.f32 %v3226, %v3322
        %v3324 = vpop.f32.mrf.mxu0
        %3325 = vdwg.mxu0
        %3326 = vmatprep.subr.bf16.mxu0 0
        %3327 = vmatpush1.bf16.msra.mxu0 %v2865
        %3328 = vmatprep.subr.bf16.mxu0 0
        %3329 = vmatpush1.bf16.msra.mxu0 %v2864
        %3330 = vmatprep.subr.bf16.mxu0 0
        %3331 = vmatpush1.bf16.msra.mxu0 %v2863
        %3332 = vmatprep.subr.bf16.mxu0 0
        %3333 = vmatpush1.bf16.msra.mxu0 %v2862
        %3334 = vmatprep.subr.bf16.mxu0 0
        %3335 = vmatpush1.bf16.msra.mxu0 %v2861
        %3336 = vmatprep.subr.bf16.mxu0 0
        %3337 = vmatpush1.bf16.msra.mxu0 %v2860
        %3338 = vmatprep.subr.bf16.mxu0 0
        %3339 = vmatpush1.bf16.msra.mxu0 %v2859
        %3340 = vmatprep.subr.bf16.mxu0 0
        %3341 = vmatpush1.bf16.msra.mxu0 %v2858
        %3342 = vmatprep.subr.bf16.mxu0 0
        %3343 = vmatpush2.bf16.msra.mxu0 0
        %3344 = vmatprep.subr.bf16.mxu0 0
        %3345 = vmatpush2.bf16.msra.mxu0 0
        %3346 = vmatprep.subr.bf16.mxu0 0
        %3347 = vmatpush2.bf16.msra.mxu0 0
        %3348 = vmatprep.subr.bf16.mxu0 0
        %3349 = vmatpush2.bf16.msra.mxu0 0
        %3350 = vmatprep.subr.bf16.mxu0 0
        %3351 = vmatpush2.bf16.msra.mxu0 0
        %3352 = vmatprep.subr.bf16.mxu0 0
        %3353 = vmatpush2.bf16.msra.mxu0 0
        %3354 = vmatprep.subr.bf16.mxu0 0
        %3355 = vmatpush2.bf16.msra.mxu0 0
        %3356 = vmatprep.subr.bf16.mxu0 0
        %3357 = vmatpush2.bf16.msra.mxu0 0
        %3358 = vmatprep.mubr.bf16.mxu0 0
        %3359 = vmatmul.mubr.bf16.gmra.mxu0 %v2346
        %v3360 = vpop.f32.mrf.mxu0
        %v3361 = vadd.f32 %v3264, %v3360
        %v3362 = vpop.f32.mrf.mxu0
        %v3363 = vpop.f32.mrf.mxu0
        %v3364 = vadd.f32 %v3267, %v3363
        %v3365 = vpop.f32.mrf.mxu0
        %3366 = vmatprep.mubr.bf16.mxu0 0
        %3367 = vmatmul.mubr.bf16.gmra.mxu0 %v2347
        %v3368 = vpop.f32.mrf.mxu0
        %v3369 = vadd.f32 %v3272, %v3368
        %v3370 = vpop.f32.mrf.mxu0
        %v3371 = vpop.f32.mrf.mxu0
        %v3372 = vadd.f32 %v3275, %v3371
        %v3373 = vpop.f32.mrf.mxu0
        %3374 = vmatprep.mubr.bf16.mxu0 0
        %3375 = vmatmul.mubr.bf16.gmra.mxu0 %v2348
        %v3376 = vpop.f32.mrf.mxu0
        %v3377 = vadd.f32 %v3280, %v3376
        %v3378 = vpop.f32.mrf.mxu0
        %v3379 = vpop.f32.mrf.mxu0
        %v3380 = vadd.f32 %v3283, %v3379
        %v3381 = vpop.f32.mrf.mxu0
        %3382 = vmatprep.mubr.bf16.mxu0 0
        %3383 = vmatmul.mubr.bf16.gmra.mxu0 %v2349
        %v3384 = vpop.f32.mrf.mxu0
        %v3385 = vadd.f32 %v3288, %v3384
        %v3386 = vpop.f32.mrf.mxu0
        %v3387 = vpop.f32.mrf.mxu0
        %v3388 = vadd.f32 %v3291, %v3387
        %v3389 = vpop.f32.mrf.mxu0
        %3390 = vmatprep.mubr.bf16.mxu0 0
        %3391 = vmatmul.mubr.bf16.gmra.mxu0 %v2350
        %v3392 = vpop.f32.mrf.mxu0
        %v3393 = vadd.f32 %v3296, %v3392
        %v3394 = vpop.f32.mrf.mxu0
        %v3395 = vpop.f32.mrf.mxu0
        %v3396 = vadd.f32 %v3299, %v3395
        %v3397 = vpop.f32.mrf.mxu0
        %3398 = vmatprep.mubr.bf16.mxu0 0
        %3399 = vmatmul.mubr.bf16.gmra.mxu0 %v2351
        %v3400 = vpop.f32.mrf.mxu0
        %v3401 = vadd.f32 %v3304, %v3400
        %v3402 = vpop.f32.mrf.mxu0
        %v3403 = vpop.f32.mrf.mxu0
        %v3404 = vadd.f32 %v3307, %v3403
        %v3405 = vpop.f32.mrf.mxu0
        %3406 = vmatprep.mubr.bf16.mxu0 0
        %3407 = vmatmul.mubr.bf16.gmra.mxu0 %v2352
        %v3408 = vpop.f32.mrf.mxu0
        %v3409 = vadd.f32 %v3312, %v3408
        %v3410 = vpop.f32.mrf.mxu0
        %v3411 = vpop.f32.mrf.mxu0
        %v3412 = vadd.f32 %v3315, %v3411
        %v3413 = vpop.f32.mrf.mxu0
        %3414 = vmatprep.mubr.bf16.mxu0 0
        %3415 = vmatmul.mubr.bf16.gmra.mxu0 %v2353
        %v3416 = vpop.f32.mrf.mxu0
        %v3417 = vadd.f32 %v3320, %v3416
        %v3418 = vpop.f32.mrf.mxu0
        %v3419 = vpop.f32.mrf.mxu0
        %v3420 = vadd.f32 %v3323, %v3419
        %v3421 = vpop.f32.mrf.mxu0
        %3422 = vdwg.mxu0
        %v3423 = vld [vmem:[%s5] sm:$0x1]
        %v3425 = vlaneseq
        %v3426 = vshrl.u32 %v3425, 7
        %v3427 = vsub.s32 0, %v3426
        %v3428 = vrot.slane %v3423, %v3427
        %v3430 = vmul.f32 %v3361, %v3428
        %v3431 = vmul.f32 %v3364, %v3428
        %v3432 = vmul.f32 %v3369, %v3428
        %v3433 = vmul.f32 %v3372, %v3428
        %v3434 = vmul.f32 %v3377, %v3428
        %v3435 = vmul.f32 %v3380, %v3428
        %v3436 = vmul.f32 %v3385, %v3428
        %v3437 = vmul.f32 %v3388, %v3428
        %v3438 = vmul.f32 %v3393, %v3428
        %v3439 = vmul.f32 %v3396, %v3428
        %v3440 = vmul.f32 %v3401, %v3428
        %v3441 = vmul.f32 %v3404, %v3428
        %v3442 = vmul.f32 %v3409, %v3428
        %v3443 = vmul.f32 %v3412, %v3428
        %v3444 = vmul.f32 %v3417, %v3428
        %v3445 = vmul.f32 %v3420, %v3428
        %v3446 = vld [vmem:[%s6] sm:$0x1]
        %v3448 = vlaneseq
        %v3449 = vshrl.u32 %v3448, 7
        %v3450 = vsub.s32 0, %v3449
        %v3451 = vrot.slane %v3446, %v3450
        %v3453 = vadd.f32 %v3430, %v3451
        %v3454 = vadd.f32 %v3431, %v3451
        %v3455 = vadd.f32 %v3432, %v3451
        %v3456 = vadd.f32 %v3433, %v3451
        %v3457 = vadd.f32 %v3434, %v3451
        %v3458 = vadd.f32 %v3435, %v3451
        %v3459 = vadd.f32 %v3436, %v3451
        %v3460 = vadd.f32 %v3437, %v3451
        %v3461 = vadd.f32 %v3438, %v3451
        %v3462 = vadd.f32 %v3439, %v3451
        %v3463 = vadd.f32 %v3440, %v3451
        %v3464 = vadd.f32 %v3441, %v3451
        %v3465 = vadd.f32 %v3442, %v3451
        %v3466 = vadd.f32 %v3443, %v3451
        %v3467 = vadd.f32 %v3444, %v3451
        %v3468 = vadd.f32 %v3445, %v3451
        %v3469 = vmax.f32 %v3453, 0.0
        %v3470 = vmax.f32 %v3454, 0.0
        %v3471 = vmax.f32 %v3455, 0.0
        %v3472 = vmax.f32 %v3456, 0.0
        %v3473 = vmax.f32 %v3457, 0.0
        %v3474 = vmax.f32 %v3458, 0.0
        %v3475 = vmax.f32 %v3459, 0.0
        %v3476 = vmax.f32 %v3460, 0.0
        %v3477 = vmax.f32 %v3461, 0.0
        %v3478 = vmax.f32 %v3462, 0.0
        %v3479 = vmax.f32 %v3463, 0.0
        %v3480 = vmax.f32 %v3464, 0.0
        %v3481 = vmax.f32 %v3465, 0.0
        %v3482 = vmax.f32 %v3466, 0.0
        %v3483 = vmax.f32 %v3467, 0.0
        %v3484 = vmax.f32 %v3468, 0.0
        %v3485 = vpack.c.bf16 %v3470, %v3469
        %v3486 = vpack.c.bf16 %v3472, %v3471
        %v3487 = vpack.c.bf16 %v3474, %v3473
        %v3488 = vpack.c.bf16 %v3476, %v3475
        %v3489 = vpack.c.bf16 %v3478, %v3477
        %v3490 = vpack.c.bf16 %v3480, %v3479
        %v3491 = vpack.c.bf16 %v3482, %v3481
        %v3492 = vpack.c.bf16 %v3484, %v3483
        %s3493 = sadd.s32 %s533, 1
        %s3494 = smul.u32 %s3493, 2
        %s3495 = smul.addr %s3494, 4
        %s3496 = scalar_lea.vmem %s472, %s3495 [#allocation3]
        %v3497 = vld [vmem:[%s3496] sm:$0xf]
        %v3498 = vld [vmem:[%s3496 + $0x4] sm:$0xf]
        %v3499 = vld [vmem:[%s3496 + $0x8] sm:$0xf]
        %v3500 = vld [vmem:[%s3496 + $0xc] sm:$0xf]
        %v3501 = vld [vmem:[%s3496 + $0x10] sm:$0xf]
        %v3502 = vld [vmem:[%s3496 + $0x14] sm:$0xf]
        %v3503 = vld [vmem:[%s3496 + $0x18] sm:$0xf]
        %v3504 = vld [vmem:[%s3496 + $0x1c] sm:$0xf]
        %v3505 = vld [vmem:[%s3496 + $0x20] sm:$0xf]
        %v3506 = vld [vmem:[%s3496 + $0x24] sm:$0xf]
        %v3507 = vld [vmem:[%s3496 + $0x28] sm:$0xf]
        %v3508 = vld [vmem:[%s3496 + $0x2c] sm:$0xf]
        %v3509 = vld [vmem:[%s3496 + $0x30] sm:$0xf]
        %v3510 = vld [vmem:[%s3496 + $0x34] sm:$0xf]
        %v3511 = vld [vmem:[%s3496 + $0x38] sm:$0xf]
        %v3512 = vld [vmem:[%s3496 + $0x3c] sm:$0xf]
        %v3513 = vld [vmem:[#allocation11] sm:$0xf]
        %v3514 = vld [vmem:[#allocation11 + $0x4] sm:$0xf]
        %v3515 = vld [vmem:[#allocation11 + $0x8] sm:$0xf]
        %v3516 = vld [vmem:[#allocation11 + $0xc] sm:$0xf]
        %v3517 = vld [vmem:[#allocation11 + $0x10] sm:$0xf]
        %v3518 = vld [vmem:[#allocation11 + $0x14] sm:$0xf]
        %v3519 = vld [vmem:[#allocation11 + $0x18] sm:$0xf]
        %v3520 = vld [vmem:[#allocation11 + $0x1c] sm:$0xf]
        %v3521 = vld [vmem:[#allocation11 + $0x20] sm:$0xf]
        %v3522 = vld [vmem:[#allocation11 + $0x24] sm:$0xf]
        %v3523 = vld [vmem:[#allocation11 + $0x28] sm:$0xf]
        %v3524 = vld [vmem:[#allocation11 + $0x2c] sm:$0xf]
        %v3525 = vld [vmem:[#allocation11 + $0x30] sm:$0xf]
        %v3526 = vld [vmem:[#allocation11 + $0x34] sm:$0xf]
        %v3527 = vld [vmem:[#allocation11 + $0x38] sm:$0xf]
        %v3528 = vld [vmem:[#allocation11 + $0x3c] sm:$0xf]
        %v3545 = vunpack.c.l.b16 %v3497
        %v3546 = vunpack.c.l.b16 %v3498
        %v3547 = vunpack.c.l.b16 %v3499
        %v3548 = vunpack.c.l.b16 %v3500
        %v3549 = vunpack.c.l.b16 %v3501
        %v3550 = vunpack.c.l.b16 %v3502
        %v3551 = vunpack.c.l.b16 %v3503
        %v3552 = vunpack.c.l.b16 %v3504
        %v3553 = vunpack.c.l.b16 %v3505
        %v3554 = vunpack.c.l.b16 %v3506
        %v3555 = vunpack.c.l.b16 %v3507
        %v3556 = vunpack.c.l.b16 %v3508
        %v3557 = vunpack.c.l.b16 %v3509
        %v3558 = vunpack.c.l.b16 %v3510
        %v3559 = vunpack.c.l.b16 %v3511
        %v3560 = vunpack.c.l.b16 %v3512
        %v3561 = vpack.c.b16 %v3546, %v3545
        %v3562 = vpack.c.b16 %v3548, %v3547
        %v3563 = vpack.c.b16 %v3550, %v3549
        %v3564 = vpack.c.b16 %v3552, %v3551
        %v3565 = vpack.c.b16 %v3554, %v3553
        %v3566 = vpack.c.b16 %v3556, %v3555
        %v3567 = vpack.c.b16 %v3558, %v3557
        %v3568 = vpack.c.b16 %v3560, %v3559
        %v3593 = vunpack.c.l.b16 %v3513
        %v3594 = vunpack.c.l.b16 %v3514
        %v3595 = vunpack.c.l.b16 %v3515
        %v3596 = vunpack.c.l.b16 %v3516
        %v3597 = vunpack.c.l.b16 %v3517
        %v3598 = vunpack.c.l.b16 %v3518
        %v3599 = vunpack.c.l.b16 %v3519
        %v3600 = vunpack.c.l.b16 %v3520
        %v3601 = vunpack.c.l.b16 %v3521
        %v3602 = vunpack.c.l.b16 %v3522
        %v3603 = vunpack.c.l.b16 %v3523
        %v3604 = vunpack.c.l.b16 %v3524
        %v3605 = vunpack.c.l.b16 %v3525
        %v3606 = vunpack.c.l.b16 %v3526
        %v3607 = vunpack.c.l.b16 %v3527
        %v3608 = vunpack.c.l.b16 %v3528
        %v3609 = vpack.c.b16 %v3594, %v3593
        %v3610 = vpack.c.b16 %v3596, %v3595
        %v3611 = vpack.c.b16 %v3598, %v3597
        %v3612 = vpack.c.b16 %v3600, %v3599
        %v3613 = vpack.c.b16 %v3602, %v3601
        %v3614 = vpack.c.b16 %v3604, %v3603
        %v3615 = vpack.c.b16 %v3606, %v3605
        %v3616 = vpack.c.b16 %v3608, %v3607
        %3625 = vmatprep.subr.bf16.mxu0 0
        %3626 = vmatpush1.bf16.msra.mxu0 %v3616
        %3627 = vmatprep.subr.bf16.mxu0 0
        %3628 = vmatpush1.bf16.msra.mxu0 %v3615
        %3629 = vmatprep.subr.bf16.mxu0 0
        %3630 = vmatpush1.bf16.msra.mxu0 %v3614
        %3631 = vmatprep.subr.bf16.mxu0 0
        %3632 = vmatpush1.bf16.msra.mxu0 %v3613
        %3633 = vmatprep.subr.bf16.mxu0 0
        %3634 = vmatpush1.bf16.msra.mxu0 %v3612
        %3635 = vmatprep.subr.bf16.mxu0 0
        %3636 = vmatpush1.bf16.msra.mxu0 %v3611
        %3637 = vmatprep.subr.bf16.mxu0 0
        %3638 = vmatpush1.bf16.msra.mxu0 %v3610
        %3639 = vmatprep.subr.bf16.mxu0 0
        %3640 = vmatpush1.bf16.msra.mxu0 %v3609
        %3641 = vmatprep.subr.bf16.mxu0 0
        %3642 = vmatpush2.bf16.msra.mxu0 0
        %3643 = vmatprep.subr.bf16.mxu0 0
        %3644 = vmatpush2.bf16.msra.mxu0 0
        %3645 = vmatprep.subr.bf16.mxu0 0
        %3646 = vmatpush2.bf16.msra.mxu0 0
        %3647 = vmatprep.subr.bf16.mxu0 0
        %3648 = vmatpush2.bf16.msra.mxu0 0
        %3649 = vmatprep.subr.bf16.mxu0 0
        %3650 = vmatpush2.bf16.msra.mxu0 0
        %3651 = vmatprep.subr.bf16.mxu0 0
        %3652 = vmatpush2.bf16.msra.mxu0 0
        %3653 = vmatprep.subr.bf16.mxu0 0
        %3654 = vmatpush2.bf16.msra.mxu0 0
        %3655 = vmatprep.subr.bf16.mxu0 0
        %3656 = vmatpush2.bf16.msra.mxu0 0
        %3657 = vmatprep.mubr.bf16.mxu0 0
        %3658 = vmatmul.mubr.bf16.gmra.mxu0 %v3561
        %v3659 = vpop.f32.mrf.mxu0
        %v3660 = vadd.f32 0.0, %v3659
        %v3661 = vpop.f32.mrf.mxu0
        %v3662 = vpop.f32.mrf.mxu0
        %v3663 = vadd.f32 0.0, %v3662
        %v3664 = vpop.f32.mrf.mxu0
        %3665 = vmatprep.mubr.bf16.mxu0 0
        %3666 = vmatmul.mubr.bf16.gmra.mxu0 %v3562
        %v3667 = vpop.f32.mrf.mxu0
        %v3668 = vadd.f32 0.0, %v3667
        %v3669 = vpop.f32.mrf.mxu0
        %v3670 = vpop.f32.mrf.mxu0
        %v3671 = vadd.f32 0.0, %v3670
        %v3672 = vpop.f32.mrf.mxu0
        %3673 = vmatprep.mubr.bf16.mxu0 0
        %3674 = vmatmul.mubr.bf16.gmra.mxu0 %v3563
        %v3675 = vpop.f32.mrf.mxu0
        %v3676 = vadd.f32 0.0, %v3675
        %v3677 = vpop.f32.mrf.mxu0
        %v3678 = vpop.f32.mrf.mxu0
        %v3679 = vadd.f32 0.0, %v3678
        %v3680 = vpop.f32.mrf.mxu0
        %3681 = vmatprep.mubr.bf16.mxu0 0
        %3682 = vmatmul.mubr.bf16.gmra.mxu0 %v3564
        %v3683 = vpop.f32.mrf.mxu0
        %v3684 = vadd.f32 0.0, %v3683
        %v3685 = vpop.f32.mrf.mxu0
        %v3686 = vpop.f32.mrf.mxu0
        %v3687 = vadd.f32 0.0, %v3686
        %v3688 = vpop.f32.mrf.mxu0
        %3689 = vmatprep.mubr.bf16.mxu0 0
        %3690 = vmatmul.mubr.bf16.gmra.mxu0 %v3565
        %v3691 = vpop.f32.mrf.mxu0
        %v3692 = vadd.f32 0.0, %v3691
        %v3693 = vpop.f32.mrf.mxu0
        %v3694 = vpop.f32.mrf.mxu0
        %v3695 = vadd.f32 0.0, %v3694
        %v3696 = vpop.f32.mrf.mxu0
        %3697 = vmatprep.mubr.bf16.mxu0 0
        %3698 = vmatmul.mubr.bf16.gmra.mxu0 %v3566
        %v3699 = vpop.f32.mrf.mxu0
        %v3700 = vadd.f32 0.0, %v3699
        %v3701 = vpop.f32.mrf.mxu0
        %v3702 = vpop.f32.mrf.mxu0
        %v3703 = vadd.f32 0.0, %v3702
        %v3704 = vpop.f32.mrf.mxu0
        %3705 = vmatprep.mubr.bf16.mxu0 0
        %3706 = vmatmul.mubr.bf16.gmra.mxu0 %v3567
        %v3707 = vpop.f32.mrf.mxu0
        %v3708 = vadd.f32 0.0, %v3707
        %v3709 = vpop.f32.mrf.mxu0
        %v3710 = vpop.f32.mrf.mxu0
        %v3711 = vadd.f32 0.0, %v3710
        %v3712 = vpop.f32.mrf.mxu0
        %3713 = vmatprep.mubr.bf16.mxu0 0
        %3714 = vmatmul.mubr.bf16.gmra.mxu0 %v3568
        %v3715 = vpop.f32.mrf.mxu0
        %v3716 = vadd.f32 0.0, %v3715
        %v3717 = vpop.f32.mrf.mxu0
        %v3718 = vpop.f32.mrf.mxu0
        %v3719 = vadd.f32 0.0, %v3718
        %v3720 = vpop.f32.mrf.mxu0
        %3721 = vdwg.mxu0
        %v3722 = vld [vmem:[%s11] sm:$0x1]
        %v3724 = vlaneseq
        %v3725 = vshrl.u32 %v3724, 7
        %v3726 = vsub.s32 0, %v3725
        %v3727 = vrot.slane %v3722, %v3726
        %v3729 = vmul.f32 %v3660, %v3727
        %v3730 = vmul.f32 %v3663, %v3727
        %v3731 = vmul.f32 %v3668, %v3727
        %v3732 = vmul.f32 %v3671, %v3727
        %v3733 = vmul.f32 %v3676, %v3727
        %v3734 = vmul.f32 %v3679, %v3727
        %v3735 = vmul.f32 %v3684, %v3727
        %v3736 = vmul.f32 %v3687, %v3727
        %v3737 = vmul.f32 %v3692, %v3727
        %v3738 = vmul.f32 %v3695, %v3727
        %v3739 = vmul.f32 %v3700, %v3727
        %v3740 = vmul.f32 %v3703, %v3727
        %v3741 = vmul.f32 %v3708, %v3727
        %v3742 = vmul.f32 %v3711, %v3727
        %v3743 = vmul.f32 %v3716, %v3727
        %v3744 = vmul.f32 %v3719, %v3727
        %v3745 = vld [vmem:[%s12] sm:$0x1]
        %v3747 = vlaneseq
        %v3748 = vshrl.u32 %v3747, 7
        %v3749 = vsub.s32 0, %v3748
        %v3750 = vrot.slane %v3745, %v3749
        %v3752 = vadd.f32 %v3729, %v3750
        %v3753 = vadd.f32 %v3730, %v3750
        %v3754 = vadd.f32 %v3731, %v3750
        %v3755 = vadd.f32 %v3732, %v3750
        %v3756 = vadd.f32 %v3733, %v3750
        %v3757 = vadd.f32 %v3734, %v3750
        %v3758 = vadd.f32 %v3735, %v3750
        %v3759 = vadd.f32 %v3736, %v3750
        %v3760 = vadd.f32 %v3737, %v3750
        %v3761 = vadd.f32 %v3738, %v3750
        %v3762 = vadd.f32 %v3739, %v3750
        %v3763 = vadd.f32 %v3740, %v3750
        %v3764 = vadd.f32 %v3741, %v3750
        %v3765 = vadd.f32 %v3742, %v3750
        %v3766 = vadd.f32 %v3743, %v3750
        %v3767 = vadd.f32 %v3744, %v3750
        %v3768 = vld [vmem:[#allocation9] sm:$0xf]
        %v3769 = vld [vmem:[#allocation9 + $0x4] sm:$0xf]
        %v3770 = vld [vmem:[#allocation9 + $0x8] sm:$0xf]
        %v3771 = vld [vmem:[#allocation9 + $0xc] sm:$0xf]
        %v3772 = vld [vmem:[#allocation9 + $0x10] sm:$0xf]
        %v3773 = vld [vmem:[#allocation9 + $0x14] sm:$0xf]
        %v3774 = vld [vmem:[#allocation9 + $0x18] sm:$0xf]
        %v3775 = vld [vmem:[#allocation9 + $0x1c] sm:$0xf]
        %v3776 = vld [vmem:[#allocation9 + $0x20] sm:$0xf]
        %v3777 = vld [vmem:[#allocation9 + $0x24] sm:$0xf]
        %v3778 = vld [vmem:[#allocation9 + $0x28] sm:$0xf]
        %v3779 = vld [vmem:[#allocation9 + $0x2c] sm:$0xf]
        %v3780 = vld [vmem:[#allocation9 + $0x30] sm:$0xf]
        %v3781 = vld [vmem:[#allocation9 + $0x34] sm:$0xf]
        %v3782 = vld [vmem:[#allocation9 + $0x38] sm:$0xf]
        %v3783 = vld [vmem:[#allocation9 + $0x3c] sm:$0xf]
        %v3800 = vunpack.c.l.b16 %v3768
        %v3801 = vunpack.c.l.b16 %v3769
        %v3802 = vunpack.c.l.b16 %v3770
        %v3803 = vunpack.c.l.b16 %v3771
        %v3804 = vunpack.c.l.b16 %v3772
        %v3805 = vunpack.c.l.b16 %v3773
        %v3806 = vunpack.c.l.b16 %v3774
        %v3807 = vunpack.c.l.b16 %v3775
        %v3808 = vunpack.c.l.b16 %v3776
        %v3809 = vunpack.c.l.b16 %v3777
        %v3810 = vunpack.c.l.b16 %v3778
        %v3811 = vunpack.c.l.b16 %v3779
        %v3812 = vunpack.c.l.b16 %v3780
        %v3813 = vunpack.c.l.b16 %v3781
        %v3814 = vunpack.c.l.b16 %v3782
        %v3815 = vunpack.c.l.b16 %v3783
        %v3816 = vpack.c.b16 %v3801, %v3800
        %v3817 = vpack.c.b16 %v3803, %v3802
        %v3818 = vpack.c.b16 %v3805, %v3804
        %v3819 = vpack.c.b16 %v3807, %v3806
        %v3820 = vpack.c.b16 %v3809, %v3808
        %v3821 = vpack.c.b16 %v3811, %v3810
        %v3822 = vpack.c.b16 %v3813, %v3812
        %v3823 = vpack.c.b16 %v3815, %v3814
        %3832 = vmatprep.subr.bf16.mxu0 0
        %3833 = vmatpush1.bf16.msra.mxu0 %v3823
        %3834 = vmatprep.subr.bf16.mxu0 0
        %3835 = vmatpush1.bf16.msra.mxu0 %v3822
        %3836 = vmatprep.subr.bf16.mxu0 0
        %3837 = vmatpush1.bf16.msra.mxu0 %v3821
        %3838 = vmatprep.subr.bf16.mxu0 0
        %3839 = vmatpush1.bf16.msra.mxu0 %v3820
        %3840 = vmatprep.subr.bf16.mxu0 0
        %3841 = vmatpush1.bf16.msra.mxu0 %v3819
        %3842 = vmatprep.subr.bf16.mxu0 0
        %3843 = vmatpush1.bf16.msra.mxu0 %v3818
        %3844 = vmatprep.subr.bf16.mxu0 0
        %3845 = vmatpush1.bf16.msra.mxu0 %v3817
        %3846 = vmatprep.subr.bf16.mxu0 0
        %3847 = vmatpush1.bf16.msra.mxu0 %v3816
        %3848 = vmatprep.subr.bf16.mxu0 0
        %3849 = vmatpush2.bf16.msra.mxu0 0
        %3850 = vmatprep.subr.bf16.mxu0 0
        %3851 = vmatpush2.bf16.msra.mxu0 0
        %3852 = vmatprep.subr.bf16.mxu0 0
        %3853 = vmatpush2.bf16.msra.mxu0 0
        %3854 = vmatprep.subr.bf16.mxu0 0
        %3855 = vmatpush2.bf16.msra.mxu0 0
        %3856 = vmatprep.subr.bf16.mxu0 0
        %3857 = vmatpush2.bf16.msra.mxu0 0
        %3858 = vmatprep.subr.bf16.mxu0 0
        %3859 = vmatpush2.bf16.msra.mxu0 0
        %3860 = vmatprep.subr.bf16.mxu0 0
        %3861 = vmatpush2.bf16.msra.mxu0 0
        %3862 = vmatprep.subr.bf16.mxu0 0
        %3863 = vmatpush2.bf16.msra.mxu0 0
        %3864 = vmatprep.mubr.bf16.mxu0 0
        %3865 = vmatmul.mubr.bf16.gmra.mxu0 %v3485
        %v3866 = vpop.f32.mrf.mxu0
        %v3867 = vadd.f32 0.0, %v3866
        %v3868 = vpop.f32.mrf.mxu0
        %v3869 = vpop.f32.mrf.mxu0
        %v3870 = vadd.f32 0.0, %v3869
        %v3871 = vpop.f32.mrf.mxu0
        %3872 = vmatprep.mubr.bf16.mxu0 0
        %3873 = vmatmul.mubr.bf16.gmra.mxu0 %v3486
        %v3874 = vpop.f32.mrf.mxu0
        %v3875 = vadd.f32 0.0, %v3874
        %v3876 = vpop.f32.mrf.mxu0
        %v3877 = vpop.f32.mrf.mxu0
        %v3878 = vadd.f32 0.0, %v3877
        %v3879 = vpop.f32.mrf.mxu0
        %3880 = vmatprep.mubr.bf16.mxu0 0
        %3881 = vmatmul.mubr.bf16.gmra.mxu0 %v3487
        %v3882 = vpop.f32.mrf.mxu0
        %v3883 = vadd.f32 0.0, %v3882
        %v3884 = vpop.f32.mrf.mxu0
        %v3885 = vpop.f32.mrf.mxu0
        %v3886 = vadd.f32 0.0, %v3885
        %v3887 = vpop.f32.mrf.mxu0
        %3888 = vmatprep.mubr.bf16.mxu0 0
        %3889 = vmatmul.mubr.bf16.gmra.mxu0 %v3488
        %v3890 = vpop.f32.mrf.mxu0
        %v3891 = vadd.f32 0.0, %v3890
        %v3892 = vpop.f32.mrf.mxu0
        %v3893 = vpop.f32.mrf.mxu0
        %v3894 = vadd.f32 0.0, %v3893
        %v3895 = vpop.f32.mrf.mxu0
        %3896 = vmatprep.mubr.bf16.mxu0 0
        %3897 = vmatmul.mubr.bf16.gmra.mxu0 %v3489
        %v3898 = vpop.f32.mrf.mxu0
        %v3899 = vadd.f32 0.0, %v3898
        %v3900 = vpop.f32.mrf.mxu0
        %v3901 = vpop.f32.mrf.mxu0
        %v3902 = vadd.f32 0.0, %v3901
        %v3903 = vpop.f32.mrf.mxu0
        %3904 = vmatprep.mubr.bf16.mxu0 0
        %3905 = vmatmul.mubr.bf16.gmra.mxu0 %v3490
        %v3906 = vpop.f32.mrf.mxu0
        %v3907 = vadd.f32 0.0, %v3906
        %v3908 = vpop.f32.mrf.mxu0
        %v3909 = vpop.f32.mrf.mxu0
        %v3910 = vadd.f32 0.0, %v3909
        %v3911 = vpop.f32.mrf.mxu0
        %3912 = vmatprep.mubr.bf16.mxu0 0
        %3913 = vmatmul.mubr.bf16.gmra.mxu0 %v3491
        %v3914 = vpop.f32.mrf.mxu0
        %v3915 = vadd.f32 0.0, %v3914
        %v3916 = vpop.f32.mrf.mxu0
        %v3917 = vpop.f32.mrf.mxu0
        %v3918 = vadd.f32 0.0, %v3917
        %v3919 = vpop.f32.mrf.mxu0
        %3920 = vmatprep.mubr.bf16.mxu0 0
        %3921 = vmatmul.mubr.bf16.gmra.mxu0 %v3492
        %v3922 = vpop.f32.mrf.mxu0
        %v3923 = vadd.f32 0.0, %v3922
        %v3924 = vpop.f32.mrf.mxu0
        %v3925 = vpop.f32.mrf.mxu0
        %v3926 = vadd.f32 0.0, %v3925
        %v3927 = vpop.f32.mrf.mxu0
        %3928 = vdwg.mxu0
        %v3929 = vld [vmem:[%s8] sm:$0x1]
        %v3931 = vlaneseq
        %v3932 = vshrl.u32 %v3931, 7
        %v3933 = vsub.s32 0, %v3932
        %v3934 = vrot.slane %v3929, %v3933
        %v3936 = vmul.f32 %v3867, %v3934
        %v3937 = vmul.f32 %v3870, %v3934
        %v3938 = vmul.f32 %v3875, %v3934
        %v3939 = vmul.f32 %v3878, %v3934
        %v3940 = vmul.f32 %v3883, %v3934
        %v3941 = vmul.f32 %v3886, %v3934
        %v3942 = vmul.f32 %v3891, %v3934
        %v3943 = vmul.f32 %v3894, %v3934
        %v3944 = vmul.f32 %v3899, %v3934
        %v3945 = vmul.f32 %v3902, %v3934
        %v3946 = vmul.f32 %v3907, %v3934
        %v3947 = vmul.f32 %v3910, %v3934
        %v3948 = vmul.f32 %v3915, %v3934
        %v3949 = vmul.f32 %v3918, %v3934
        %v3950 = vmul.f32 %v3923, %v3934
        %v3951 = vmul.f32 %v3926, %v3934
        %v3952 = vld [vmem:[%s9] sm:$0x1]
        %v3954 = vlaneseq
        %v3955 = vshrl.u32 %v3954, 7
        %v3956 = vsub.s32 0, %v3955
        %v3957 = vrot.slane %v3952, %v3956
        %v3959 = vadd.f32 %v3936, %v3957
        %v3960 = vadd.f32 %v3937, %v3957
        %v3961 = vadd.f32 %v3938, %v3957
        %v3962 = vadd.f32 %v3939, %v3957
        %v3963 = vadd.f32 %v3940, %v3957
        %v3964 = vadd.f32 %v3941, %v3957
        %v3965 = vadd.f32 %v3942, %v3957
        %v3966 = vadd.f32 %v3943, %v3957
        %v3967 = vadd.f32 %v3944, %v3957
        %v3968 = vadd.f32 %v3945, %v3957
        %v3969 = vadd.f32 %v3946, %v3957
        %v3970 = vadd.f32 %v3947, %v3957
        %v3971 = vadd.f32 %v3948, %v3957
        %v3972 = vadd.f32 %v3949, %v3957
        %v3973 = vadd.f32 %v3950, %v3957
        %v3974 = vadd.f32 %v3951, %v3957
        %v3975 = vadd.f32 %v3752, %v3959
        %v3976 = vadd.f32 %v3753, %v3960
        %v3977 = vadd.f32 %v3754, %v3961
        %v3978 = vadd.f32 %v3755, %v3962
        %v3979 = vadd.f32 %v3756, %v3963
        %v3980 = vadd.f32 %v3757, %v3964
        %v3981 = vadd.f32 %v3758, %v3965
        %v3982 = vadd.f32 %v3759, %v3966
        %v3983 = vadd.f32 %v3760, %v3967
        %v3984 = vadd.f32 %v3761, %v3968
        %v3985 = vadd.f32 %v3762, %v3969
        %v3986 = vadd.f32 %v3763, %v3970
        %v3987 = vadd.f32 %v3764, %v3971
        %v3988 = vadd.f32 %v3765, %v3972
        %v3989 = vadd.f32 %v3766, %v3973
        %v3990 = vadd.f32 %v3767, %v3974
        %v3991 = vmax.f32 %v3975, 0.0
        %v3992 = vmax.f32 %v3976, 0.0
        %v3993 = vmax.f32 %v3977, 0.0
        %v3994 = vmax.f32 %v3978, 0.0
        %v3995 = vmax.f32 %v3979, 0.0
        %v3996 = vmax.f32 %v3980, 0.0
        %v3997 = vmax.f32 %v3981, 0.0
        %v3998 = vmax.f32 %v3982, 0.0
        %v3999 = vmax.f32 %v3983, 0.0
        %v4000 = vmax.f32 %v3984, 0.0
        %v4001 = vmax.f32 %v3985, 0.0
        %v4002 = vmax.f32 %v3986, 0.0
        %v4003 = vmax.f32 %v3987, 0.0
        %v4004 = vmax.f32 %v3988, 0.0
        %v4005 = vmax.f32 %v3989, 0.0
        %v4006 = vmax.f32 %v3990, 0.0
        %4007 = vst [vmem:[%s530] sm:$0xff] %v3991
        %4008 = vst [vmem:[%s530 + $0x8] sm:$0xff] %v3992
        %4009 = vst [vmem:[%s530 + $0x10] sm:$0xff] %v3993
        %4010 = vst [vmem:[%s530 + $0x18] sm:$0xff] %v3994
        %4011 = vst [vmem:[%s530 + $0x20] sm:$0xff] %v3995
        %4012 = vst [vmem:[%s530 + $0x28] sm:$0xff] %v3996
        %4013 = vst [vmem:[%s530 + $0x30] sm:$0xff] %v3997
        %4014 = vst [vmem:[%s530 + $0x38] sm:$0xff] %v3998
        %4015 = vst [vmem:[%s530 + $0x40] sm:$0xff] %v3999
        %4016 = vst [vmem:[%s530 + $0x48] sm:$0xff] %v4000
        %4017 = vst [vmem:[%s530 + $0x50] sm:$0xff] %v4001
        %4018 = vst [vmem:[%s530 + $0x58] sm:$0xff] %v4002
        %4019 = vst [vmem:[%s530 + $0x60] sm:$0xff] %v4003
        %4020 = vst [vmem:[%s530 + $0x68] sm:$0xff] %v4004
        %4021 = vst [vmem:[%s530 + $0x70] sm:$0xff] %v4005
        %4022 = vst [vmem:[%s530 + $0x78] sm:$0xff] %v4006
        %s4023 = sand.u32 %s332, 1
        %s4024 = scalar_lea.sflag [#allocation5], %s4023
        %s4025 = sand.u32 %s332, 1
        %s4026 = smul.addr %s4025, 128
        %s4027 = scalar_lea.vmem [#allocation12], %s4026
        // Predicated region
        $region101: #{tpu_custom_call.1} parent=71 // pred_check
          %p4028 = pneg %p342
        $region102: #{tpu_custom_call.1} parent=71 // pred_check_branch
          %4030 = sbr.rel (%p4028) target = $region104
        $region103: #{tpu_custom_call.1} parent=71 // pred_region
          %s4031 = smul.u32 8, %s37
          %s4033 = ssub.s32 2048, 2048
          %4034 = vsyncadd %s4024, %s4033
          %s4035 = smul.addr %s4031, 2
          %s4036 = smul.addr %s36, 32
          %s4037 = sadd.s32 %s4035, %s4036
          %s4038 = smul.addr %s4037, 128
          %s4039 = scalar_lea.hbm %s13, %s4038
          %s4040 = sshll.u32 %s4027, 4
          %s4041 = int_to_ptr.vmem [resolvable:$true] %s4040
          %4046 = dma.vmem_to_hbm [thread:$0]  %s4041, 2048, %s4039, %s4024, 128, 128, 8
        $region104: #{tpu_custom_call.1} parent=71 // pred_fallthru
          _
      $region72: #{tpu_custom_call.1} parent=5 // pred_fallthru
        _
      %p4047 = scmp.le.s32.totalorder 2, %s27
      // Predicated region
      $region105: #{tpu_custom_call.1} parent=5 // pred_check
        %p4048 = pneg %p4047
      $region106: #{tpu_custom_call.1} parent=5 // pred_check_branch
        %4050 = sbr.rel (%p4048) target = $region108
      $region107: #{tpu_custom_call.1} parent=5 // pred_region
        %s4051 = ssub.s32 %s27, 2
        // Predicated region
        $region109: #{tpu_custom_call.1} parent=107 // pred_check
          %p4052 = pneg %p348
        $region110: #{tpu_custom_call.1} parent=107 // pred_check_branch
          %4054 = sbr.rel (%p4052) target = $region112
        $region111: #{tpu_custom_call.1} parent=107 // pred_region
          %s4055 = sand.u32 %s333, 1
          %s4056 = scalar_lea.sflag [#allocation5], %s4055
          %s4057 = sand.u32 %s333, 1
          %s4058 = smul.addr %s4057, 128
          %s4059 = scalar_lea.vmem [#allocation12], %s4058
          %4060 = dma.done %s4056, 2048
        $region112: #{tpu_custom_call.1} parent=107 // pred_fallthru
          _
      $region108: #{tpu_custom_call.1} parent=5 // pred_fallthru
        _
    $region6: #{tpu_custom_call.1} parent=1 // loop_footer
      %s31 = sadd.s32 1, %s27
    $region7: #{tpu_custom_call.1} parent=1 // loop_footer_branch
      %26 = sbr.rel target = $region3
    $region8: #{tpu_custom_call.1} parent=1 // loop_exit
      _
    %4061 = vsyncpa [#allocation4], 1
    %s4062 = scalar_lea.sflag [#allocation4], 1
    %4063 = vsyncpa %s4062, 1
    %4064 = vsyncpa [#allocation7], 1
    %4065 = vsyncpa [#allocation10], 1
    %4066 = vsyncpa [#allocation5], 1
    %s4067 = scalar_lea.sflag [#allocation5], 1
    %4068 = vsyncpa %s4067, 1

// kernel: tpu_custom_call.1
$region0: #{tpu_custom_call.1}
  #allocation0 [shape = 'u32[]', space=smem, size = 0x4, offset = 0x4, fixed_abs, tag = 'smem constant byte address 0x4 - core index']
  #allocation1 [shape = 'u32[144,128]{1,0:T(1,128)}', space=vmem, size = 0x12000, scoped, tag = 'internal scratch']
  #allocation2 [shape = 'bf16[10,33,128]{2,1,0:T(8,128)(2,1)}', space=vmem, size = 0x19000, scoped, tag = 'scratch operand']
  %s0 = inlined_call_operand.hbm [shape: bf16[2,18,16,128], index: 0, kind: input, shape index: {}]
  %s1 = inlined_call_operand.hbm [shape: bf16[128,128], index: 1, kind: input, shape index: {}]
  %s2 = inlined_call_operand.vmem [shape: f32[1,128], index: 2, kind: input, shape index: {}]
  %s3 = inlined_call_operand.vmem [shape: f32[1,128], index: 3, kind: input, shape index: {}]
  %s4 = inlined_call_operand.hbm [shape: bf16[1152,128], index: 4, kind: input, shape index: {}]
  %s5 = inlined_call_operand.vmem [shape: f32[1,128], index: 5, kind: input, shape index: {}]
  %s6 = inlined_call_operand.vmem [shape: f32[1,128], index: 6, kind: input, shape index: {}]
  %s7 = inlined_call_operand.hbm [shape: bf16[128,128], index: 7, kind: input, shape index: {}]
  %s8 = inlined_call_operand.vmem [shape: f32[1,128], index: 8, kind: input, shape index: {}]
  %s9 = inlined_call_operand.vmem [shape: f32[1,128], index: 9, kind: input, shape index: {}]
  %s10 = inlined_call_operand.hbm [shape: bf16[128,128], index: 10, kind: input, shape index: {}]
  %s11 = inlined_call_operand.vmem [shape: f32[1,128], index: 11, kind: input, shape index: {}]
  %s12 = inlined_call_operand.vmem [shape: f32[1,128], index: 12, kind: input, shape index: {}]
  %s13 = inlined_call_operand.hbm [shape: f32[2,16,16,128], index: 13, kind: output, shape index: {}]
  %s14 = sld [smem:[#allocation0]]
  $region113: #{tpu_custom_call.1} parent=0
    _
  %s16 = ssub.s32 1, %s14
  %s17 = scalar_select 0, %s16, %s14
  $region1: #{tpu_custom_call.1} parent=0
    #allocation3 [shape = 'u8[147456]{0}', space=vmem, size = 0x24000, scoped, tag = 'input window, operand 0']
    #allocation4 [shape = 's32[2]{0}', space=sflag, size = 0x8, scoped, tag = 'scoped memory for tpu_custom_call.1']
    #allocation5 [shape = 's32[2]{0}', space=sflag, size = 0x8, scoped, tag = 'scoped memory for tpu_custom_call.1']
    #allocation6 [shape = 'u8[32768]{0}', space=vmem, size = 0x8000, scoped, tag = 'input window, operand 1, single buffered']
    #allocation7 [shape = 's32[1]{0}', space=sflag, size = 0x4, scoped, tag = 'scoped memory for tpu_custom_call.1']
    #allocation8 [shape = 'u8[294912]{0}', space=vmem, size = 0x48000, scoped, tag = 'input window, operand 4, single buffered']
    #allocation9 [shape = 'u8[32768]{0}', space=vmem, size = 0x8000, scoped, tag = 'input window, operand 7, single buffered']
    #allocation10 [shape = 's32[1]{0}', space=sflag, size = 0x4, scoped, tag = 'scoped memory for tpu_custom_call.1']
    #allocation11 [shape = 'u8[32768]{0}', space=vmem, size = 0x8000, scoped, tag = 'input window, operand 10, single buffered']
    #allocation12 [shape = 'u8[131072]{0}', space=vmem, size = 0x20000, scoped, tag = 'output window, operand 0']
    %18 = vsyncpa [#allocation4], 0
    %s19 = scalar_lea.sflag [#allocation4], 1
    %20 = vsyncpa %s19, 0
    %21 = vsyncpa [#allocation7], 0
    %22 = vsyncpa [#allocation10], 0
    %23 = vsyncpa [#allocation5], 0
    %s24 = scalar_lea.sflag [#allocation5], 1
    %25 = vsyncpa %s24, 0
    loop: start=0, step=1, limit=6
    $region2: #{tpu_custom_call.1} parent=1 // loop_pre_header
      _
    $region3: #{tpu_custom_call.1} parent=1 // loop_header
      %s27 = sphi 0, %s31
      %p28 = scmp.ge.s32.totalorder %s27, 6
      %s34 = sphi 0, %s46
      %s35 = sphi 0, %s42
      %s36 = sphi 0, %s34
      %s37 = sphi 0, %s35
      %s38 = sphi 0, %s36
      %s39 = sphi 0, %s37
      %s49 = sphi 0, %s51
      %s52 = sphi 0, %s49
      %s53 = sphi 0, %s52
      %s69 = sphi 0, %s53
      %s73 = sphi 0, %s73
      %s75 = sphi 0, %s73
      %s76 = sphi 0, %s75
      %s90 = sphi 0, %s76
      %s94 = sphi 0, %s94
      %s96 = sphi 0, %s94
      %s97 = sphi 0, %s96
      %s111 = sphi 0, %s97
      %s115 = sphi 0, %s115
      %s117 = sphi 0, %s115
      %s118 = sphi 0, %s117
      %s132 = sphi 0, %s118
      %s136 = sphi 0, %s136
      %s138 = sphi 0, %s136
      %s139 = sphi 0, %s138
      %s153 = sphi 0, %s139
      %s157 = sphi 0, %s157
      %s159 = sphi 0, %s157
      %s160 = sphi 0, %s159
      %s174 = sphi 0, %s160
      %s178 = sphi 0, %s178
      %s180 = sphi 0, %s178
      %s181 = sphi 0, %s180
      %s195 = sphi 0, %s181
      %s199 = sphi 0, %s199
      %s201 = sphi 0, %s199
      %s202 = sphi 0, %s201
      %s216 = sphi 0, %s202
      %s220 = sphi 0, %s220
      %s222 = sphi 0, %s220
      %s223 = sphi 0, %s222
      %s237 = sphi 0, %s223
      %s241 = sphi 0, %s241
      %s243 = sphi 0, %s241
      %s244 = sphi 0, %s243
      %s258 = sphi 0, %s244
      %s262 = sphi 0, %s262
      %s264 = sphi 0, %s262
      %s265 = sphi 0, %s264
      %s279 = sphi 0, %s265
      %s283 = sphi 0, %s283
      %s285 = sphi 0, %s283
      %s286 = sphi 0, %s285
      %s300 = sphi 0, %s286
      %s304 = sphi 0, %s304
      %s306 = sphi 0, %s304
      %s307 = sphi 0, %s306
      %s321 = sphi 0, %s307
      %s329 = sphi 0, %s331
      %s332 = sphi 0, %s329
      %s333 = sphi 0, %s332
      %s349 = sphi 0, %s333
    $region4: #{tpu_custom_call.1} parent=1 // loop_header_branch
      %30 = sbr.rel (%p28) target = $region8
    $region5: #{tpu_custom_call.1} parent=1 // loop_body
      %s32 = ssub.s32 %s27, 1
      %s33 = ssub.s32 %s27, 2
      %s40 = sadd.s32 1, %s35
      %p41 = scmp.ge.s32.totalorder %s40, 2
      %s42 = scalar_select %p41, 0, %s40
      %s43 = sadd.s32 1, %s34
      %s44 = scalar_select %p41, %s43, %s34
      %p45 = scmp.ge.s32.totalorder %s44, 2
      %s46 = scalar_select %p45, 0, %s44
      %s47 = ssub.s32 %s34, %s46
      %p48 = scmp.eq.s32.totalorder %s47, 0
      %s50 = sadd.s32 %s49, 1
      %s51 = scalar_select %p48, %s49, %s50
      %p54 = pneg %p48
      %p55 = scmp.eq.s32.totalorder %s27, 3
      %p56 = por %p54, %p55
      %p57 = scmp.ne.s32.totalorder %s49, %s52
      %p58 = scmp.eq.s32.totalorder %s27, 0
      %p59 = por %p57, %p58
      %p60 = scmp.ne.s32.totalorder %s49, %s52
      %p61 = scmp.eq.s32.totalorder %s32, 3
      %p62 = por %p60, %p61
      %p63 = scmp.ne.s32.totalorder %s52, %s53
      %p64 = scmp.eq.s32.totalorder %s32, 0
      %p65 = por %p63, %p64
      %p66 = scmp.ne.s32.totalorder %s52, %s53
      %p67 = scmp.eq.s32.totalorder %s33, 3
      %p68 = por %p66, %p67
      %p70 = scmp.ne.s32.totalorder %s53, %s69
      %p71 = scmp.eq.s32.totalorder %s33, 0
      %p72 = por %p70, %p71
      %s74 = sadd.s32 %s73, 1
      %p77 = scmp.eq.s32.totalorder %s27, 3
      %p78 = scmp.ne.s32.totalorder %s73, %s75
      %p79 = scmp.eq.s32.totalorder %s27, 0
      %p80 = por %p78, %p79
      %p81 = scmp.ne.s32.totalorder %s73, %s75
      %p82 = scmp.eq.s32.totalorder %s32, 3
      %p83 = por %p81, %p82
      %p84 = scmp.ne.s32.totalorder %s75, %s76
      %p85 = scmp.eq.s32.totalorder %s32, 0
      %p86 = por %p84, %p85
      %p87 = scmp.ne.s32.totalorder %s75, %s76
      %p88 = scmp.eq.s32.totalorder %s33, 3
      %p89 = por %p87, %p88
      %p91 = scmp.ne.s32.totalorder %s76, %s90
      %p92 = scmp.eq.s32.totalorder %s33, 0
      %p93 = por %p91, %p92
      %s95 = sadd.s32 %s94, 1
      %p98 = scmp.eq.s32.totalorder %s27, 3
      %p99 = scmp.ne.s32.totalorder %s94, %s96
      %p100 = scmp.eq.s32.totalorder %s27, 0
      %p101 = por %p99, %p100
      %p102 = scmp.ne.s32.totalorder %s94, %s96
      %p103 = scmp.eq.s32.totalorder %s32, 3
      %p104 = por %p102, %p103
      %p105 = scmp.ne.s32.totalorder %s96, %s97
      %p106 = scmp.eq.s32.totalorder %s32, 0
      %p107 = por %p105, %p106
      %p108 = scmp.ne.s32.totalorder %s96, %s97
      %p109 = scmp.eq.s32.totalorder %s33, 3
      %p110 = por %p108, %p109
      %p112 = scmp.ne.s32.totalorder %s97, %s111
      %p113 = scmp.eq.s32.totalorder %s33, 0
      %p114 = por %p112, %p113
      %s116 = sadd.s32 %s115, 1
      %p119 = scmp.eq.s32.totalorder %s27, 3
      %p120 = scmp.ne.s32.totalorder %s115, %s117
      %p121 = scmp.eq.s32.totalorder %s27, 0
      %p122 = por %p120, %p121
      %p123 = scmp.ne.s32.totalorder %s115, %s117
      %p124 = scmp.eq.s32.totalorder %s32, 3
      %p125 = por %p123, %p124
      %p126 = scmp.ne.s32.totalorder %s117, %s118
      %p127 = scmp.eq.s32.totalorder %s32, 0
      %p128 = por %p126, %p127
      %p129 = scmp.ne.s32.totalorder %s117, %s118
      %p130 = scmp.eq.s32.totalorder %s33, 3
      %p131 = por %p129, %p130
      %p133 = scmp.ne.s32.totalorder %s118, %s132
      %p134 = scmp.eq.s32.totalorder %s33, 0
      %p135 = por %p133, %p134
      %s137 = sadd.s32 %s136, 1
      %p140 = scmp.eq.s32.totalorder %s27, 3
      %p141 = scmp.ne.s32.totalorder %s136, %s138
      %p142 = scmp.eq.s32.totalorder %s27, 0
      %p143 = por %p141, %p142
      %p144 = scmp.ne.s32.totalorder %s136, %s138
      %p145 = scmp.eq.s32.totalorder %s32, 3
      %p146 = por %p144, %p145
      %p147 = scmp.ne.s32.totalorder %s138, %s139
      %p148 = scmp.eq.s32.totalorder %s32, 0
      %p149 = por %p147, %p148
      %p150 = scmp.ne.s32.totalorder %s138, %s139
      %p151 = scmp.eq.s32.totalorder %s33, 3
      %p152 = por %p150, %p151
      %p154 = scmp.ne.s32.totalorder %s139, %s153
      %p155 = scmp.eq.s32.totalorder %s33, 0
      %p156 = por %p154, %p155
      %s158 = sadd.s32 %s157, 1
      %p161 = scmp.eq.s32.totalorder %s27, 3
      %p162 = scmp.ne.s32.totalorder %s157, %s159
      %p163 = scmp.eq.s32.totalorder %s27, 0
      %p164 = por %p162, %p163
      %p165 = scmp.ne.s32.totalorder %s157, %s159
      %p166 = scmp.eq.s32.totalorder %s32, 3
      %p167 = por %p165, %p166
      %p168 = scmp.ne.s32.totalorder %s159, %s160
      %p169 = scmp.eq.s32.totalorder %s32, 0
      %p170 = por %p168, %p169
      %p171 = scmp.ne.s32.totalorder %s159, %s160
      %p172 = scmp.eq.s32.totalorder %s33, 3
      %p173 = por %p171, %p172
      %p175 = scmp.ne.s32.totalorder %s160, %s174
      %p176 = scmp.eq.s32.totalorder %s33, 0
      %p177 = por %p175, %p176
      %s179 = sadd.s32 %s178, 1
      %p182 = scmp.eq.s32.totalorder %s27, 3
      %p183 = scmp.ne.s32.totalorder %s178, %s180
      %p184 = scmp.eq.s32.totalorder %s27, 0
      %p185 = por %p183, %p184
      %p186 = scmp.ne.s32.totalorder %s178, %s180
      %p187 = scmp.eq.s32.totalorder %s32, 3
      %p188 = por %p186, %p187
      %p189 = scmp.ne.s32.totalorder %s180, %s181
      %p190 = scmp.eq.s32.totalorder %s32, 0
      %p191 = por %p189, %p190
      %p192 = scmp.ne.s32.totalorder %s180, %s181
      %p193 = scmp.eq.s32.totalorder %s33, 3
      %p194 = por %p192, %p193
      %p196 = scmp.ne.s32.totalorder %s181, %s195
      %p197 = scmp.eq.s32.totalorder %s33, 0
      %p198 = por %p196, %p197
      %s200 = sadd.s32 %s199, 1
      %p203 = scmp.eq.s32.totalorder %s27, 3
      %p204 = scmp.ne.s32.totalorder %s199, %s201
      %p205 = scmp.eq.s32.totalorder %s27, 0
      %p206 = por %p204, %p205
      %p207 = scmp.ne.s32.totalorder %s199, %s201
      %p208 = scmp.eq.s32.totalorder %s32, 3
      %p209 = por %p207, %p208
      %p210 = scmp.ne.s32.totalorder %s201, %s202
      %p211 = scmp.eq.s32.totalorder %s32, 0
      %p212 = por %p210, %p211
      %p213 = scmp.ne.s32.totalorder %s201, %s202
      %p214 = scmp.eq.s32.totalorder %s33, 3
      %p215 = por %p213, %p214
      %p217 = scmp.ne.s32.totalorder %s202, %s216
      %p218 = scmp.eq.s32.totalorder %s33, 0
      %p219 = por %p217, %p218
      %s221 = sadd.s32 %s220, 1
      %p224 = scmp.eq.s32.totalorder %s27, 3
      %p225 = scmp.ne.s32.totalorder %s220, %s222
      %p226 = scmp.eq.s32.totalorder %s27, 0
      %p227 = por %p225, %p226
      %p228 = scmp.ne.s32.totalorder %s220, %s222
      %p229 = scmp.eq.s32.totalorder %s32, 3
      %p230 = por %p228, %p229
      %p231 = scmp.ne.s32.totalorder %s222, %s223
      %p232 = scmp.eq.s32.totalorder %s32, 0
      %p233 = por %p231, %p232
      %p234 = scmp.ne.s32.totalorder %s222, %s223
      %p235 = scmp.eq.s32.totalorder %s33, 3
      %p236 = por %p234, %p235
      %p238 = scmp.ne.s32.totalorder %s223, %s237
      %p239 = scmp.eq.s32.totalorder %s33, 0
      %p240 = por %p238, %p239
      %s242 = sadd.s32 %s241, 1
      %p245 = scmp.eq.s32.totalorder %s27, 3
      %p246 = scmp.ne.s32.totalorder %s241, %s243
      %p247 = scmp.eq.s32.totalorder %s27, 0
      %p248 = por %p246, %p247
      %p249 = scmp.ne.s32.totalorder %s241, %s243
      %p250 = scmp.eq.s32.totalorder %s32, 3
      %p251 = por %p249, %p250
      %p252 = scmp.ne.s32.totalorder %s243, %s244
      %p253 = scmp.eq.s32.totalorder %s32, 0
      %p254 = por %p252, %p253
      %p255 = scmp.ne.s32.totalorder %s243, %s244
      %p256 = scmp.eq.s32.totalorder %s33, 3
      %p257 = por %p255, %p256
      %p259 = scmp.ne.s32.totalorder %s244, %s258
      %p260 = scmp.eq.s32.totalorder %s33, 0
      %p261 = por %p259, %p260
      %s263 = sadd.s32 %s262, 1
      %p266 = scmp.eq.s32.totalorder %s27, 3
      %p267 = scmp.ne.s32.totalorder %s262, %s264
      %p268 = scmp.eq.s32.totalorder %s27, 0
      %p269 = por %p267, %p268
      %p270 = scmp.ne.s32.totalorder %s262, %s264
      %p271 = scmp.eq.s32.totalorder %s32, 3
      %p272 = por %p270, %p271
      %p273 = scmp.ne.s32.totalorder %s264, %s265
      %p274 = scmp.eq.s32.totalorder %s32, 0
      %p275 = por %p273, %p274
      %p276 = scmp.ne.s32.totalorder %s264, %s265
      %p277 = scmp.eq.s32.totalorder %s33, 3
      %p278 = por %p276, %p277
      %p280 = scmp.ne.s32.totalorder %s265, %s279
      %p281 = scmp.eq.s32.totalorder %s33, 0
      %p282 = por %p280, %p281
      %s284 = sadd.s32 %s283, 1
      %p287 = scmp.eq.s32.totalorder %s27, 3
      %p288 = scmp.ne.s32.totalorder %s283, %s285
      %p289 = scmp.eq.s32.totalorder %s27, 0
      %p290 = por %p288, %p289
      %p291 = scmp.ne.s32.totalorder %s283, %s285
      %p292 = scmp.eq.s32.totalorder %s32, 3
      %p293 = por %p291, %p292
      %p294 = scmp.ne.s32.totalorder %s285, %s286
      %p295 = scmp.eq.s32.totalorder %s32, 0
      %p296 = por %p294, %p295
      %p297 = scmp.ne.s32.totalorder %s285, %s286
      %p298 = scmp.eq.s32.totalorder %s33, 3
      %p299 = por %p297, %p298
      %p301 = scmp.ne.s32.totalorder %s286, %s300
      %p302 = scmp.eq.s32.totalorder %s33, 0
      %p303 = por %p301, %p302
      %s305 = sadd.s32 %s304, 1
      %p308 = scmp.eq.s32.totalorder %s27, 3
      %p309 = scmp.ne.s32.totalorder %s304, %s306
      %p310 = scmp.eq.s32.totalorder %s27, 0
      %p311 = por %p309, %p310
      %p312 = scmp.ne.s32.totalorder %s304, %s306
      %p313 = scmp.eq.s32.totalorder %s32, 3
      %p314 = por %p312, %p313
      %p315 = scmp.ne.s32.totalorder %s306, %s307
      %p316 = scmp.eq.s32.totalorder %s32, 0
      %p317 = por %p315, %p316
      %p318 = scmp.ne.s32.totalorder %s306, %s307
      %p319 = scmp.eq.s32.totalorder %s33, 3
      %p320 = por %p318, %p319
      %p322 = scmp.ne.s32.totalorder %s307, %s321
      %p323 = scmp.eq.s32.totalorder %s33, 0
      %p324 = por %p322, %p323
      %s325 = ssub.s32 %s34, %s46
      %s326 = ssub.s32 %s35, %s42
      %s327 = sor.u32 %s325, %s326
      %p328 = scmp.eq.s32.totalorder %s327, 0
      %s330 = sadd.s32 %s329, 1
      %s331 = scalar_select %p328, %s329, %s330
      %p334 = pneg %p328
      %p335 = scmp.eq.s32.totalorder %s27, 3
      %p336 = por %p334, %p335
      %p337 = scmp.ne.s32.totalorder %s329, %s332
      %p338 = scmp.eq.s32.totalorder %s27, 0
      %p339 = por %p337, %p338
      %p340 = scmp.ne.s32.totalorder %s329, %s332
      %p341 = scmp.eq.s32.totalorder %s32, 3
      %p342 = por %p340, %p341
      %p343 = scmp.ne.s32.totalorder %s332, %s333
      %p344 = scmp.eq.s32.totalorder %s32, 0
      %p345 = por %p343, %p344
      %p346 = scmp.ne.s32.totalorder %s332, %s333
      %p347 = scmp.eq.s32.totalorder %s33, 3
      %p348 = por %p346, %p347
      %p350 = scmp.ne.s32.totalorder %s333, %s349
      %p351 = scmp.eq.s32.totalorder %s33, 0
      %p352 = por %p350, %p351
      %p353 = scmp.le.s32.totalorder 1, %s27
      %p354 = scmp.lt.s32.totalorder %s27, 5
      %p355 = pnand %p353, %p354
      %p356 = pneg %p355
      // Predicated region
      $region9: #{tpu_custom_call.1} parent=5 // pred_check
        _
      $region10: #{tpu_custom_call.1} parent=5 // pred_check_branch
        %358 = sbr.rel (%p355) target = $region12
      $region11: #{tpu_custom_call.1} parent=5 // pred_region
        %s359 = ssub.s32 %s27, 1
        // Predicated region
        $region13: #{tpu_custom_call.1} parent=11 // pred_check
          %p360 = pneg %p86
        $region14: #{tpu_custom_call.1} parent=11 // pred_check_branch
          %362 = sbr.rel (%p360) target = $region16
        $region15: #{tpu_custom_call.1} parent=11 // pred_region
          %s364 = ssub.s32 1024, 1024
          %365 = vsyncadd [#allocation7], %s364
          %s366 = sshll.u32 [#allocation6], 4
          %s367 = int_to_ptr.vmem [resolvable:$true] %s366
          %372 = dma.hbm_to_vmem [thread:$0]  %s1, 1024, %s367, [#allocation7], 64, 64, 4
        $region16: #{tpu_custom_call.1} parent=11 // pred_fallthru
          _
        // Predicated region
        $region17: #{tpu_custom_call.1} parent=11 // pred_check
          %p373 = pneg %p107
        $region18: #{tpu_custom_call.1} parent=11 // pred_check_branch
          %375 = sbr.rel (%p373) target = $region20
        $region19: #{tpu_custom_call.1} parent=11 // pred_region
          _
        $region20: #{tpu_custom_call.1} parent=11 // pred_fallthru
          _
        // Predicated region
        $region21: #{tpu_custom_call.1} parent=11 // pred_check
          %p376 = pneg %p128
        $region22: #{tpu_custom_call.1} parent=11 // pred_check_branch
          %378 = sbr.rel (%p376) target = $region24
        $region23: #{tpu_custom_call.1} parent=11 // pred_region
          _
        $region24: #{tpu_custom_call.1} parent=11 // pred_fallthru
          _
        // Predicated region
        $region25: #{tpu_custom_call.1} parent=11 // pred_check
          %p379 = pneg %p149
        $region26: #{tpu_custom_call.1} parent=11 // pred_check_branch
          %381 = sbr.rel (%p379) target = $region28
        $region27: #{tpu_custom_call.1} parent=11 // pred_region
          %s383 = ssub.s32 9216, 9216
          %384 = vsyncadd [#allocation7], %s383
          %s385 = sshll.u32 [#allocation8], 4
          %s386 = int_to_ptr.vmem [resolvable:$true] %s385
          %391 = dma.hbm_to_vmem [thread:$0]  %s4, 9216, %s386, [#allocation7], 64, 64, 4
        $region28: #{tpu_custom_call.1} parent=11 // pred_fallthru
          _
        // Predicated region
        $region29: #{tpu_custom_call.1} parent=11 // pred_check
          %p392 = pneg %p170
        $region30: #{tpu_custom_call.1} parent=11 // pred_check_branch
          %394 = sbr.rel (%p392) target = $region32
        $region31: #{tpu_custom_call.1} parent=11 // pred_region
          _
        $region32: #{tpu_custom_call.1} parent=11 // pred_fallthru
          _
        // Predicated region
        $region33: #{tpu_custom_call.1} parent=11 // pred_check
          %p395 = pneg %p191
        $region34: #{tpu_custom_call.1} parent=11 // pred_check_branch
          %397 = sbr.rel (%p395) target = $region36
        $region35: #{tpu_custom_call.1} parent=11 // pred_region
          _
        $region36: #{tpu_custom_call.1} parent=11 // pred_fallthru
          _
        // Predicated region
        $region37: #{tpu_custom_call.1} parent=11 // pred_check
          %p398 = pneg %p212
        $region38: #{tpu_custom_call.1} parent=11 // pred_check_branch
          %400 = sbr.rel (%p398) target = $region40
        $region39: #{tpu_custom_call.1} parent=11 // pred_region
          %s402 = ssub.s32 1024, 1024
          %403 = vsyncadd [#allocation10], %s402
          %s404 = sshll.u32 [#allocation9], 4
          %s405 = int_to_ptr.vmem [resolvable:$true] %s404
          %410 = dma.hbm_to_vmem [thread:$0]  %s7, 1024, %s405, [#allocation10], 64, 64, 4
        $region40: #{tpu_custom_call.1} parent=11 // pred_fallthru
          _
        // Predicated region
        $region41: #{tpu_custom_call.1} parent=11 // pred_check
          %p411 = pneg %p233
        $region42: #{tpu_custom_call.1} parent=11 // pred_check_branch
          %413 = sbr.rel (%p411) target = $region44
        $region43: #{tpu_custom_call.1} parent=11 // pred_region
          _
        $region44: #{tpu_custom_call.1} parent=11 // pred_fallthru
          _
        // Predicated region
        $region45: #{tpu_custom_call.1} parent=11 // pred_check
          %p414 = pneg %p254
        $region46: #{tpu_custom_call.1} parent=11 // pred_check_branch
          %416 = sbr.rel (%p414) target = $region48
        $region47: #{tpu_custom_call.1} parent=11 // pred_region
          _
        $region48: #{tpu_custom_call.1} parent=11 // pred_fallthru
          _
        // Predicated region
        $region49: #{tpu_custom_call.1} parent=11 // pred_check
          %p417 = pneg %p275
        $region50: #{tpu_custom_call.1} parent=11 // pred_check_branch
          %419 = sbr.rel (%p417) target = $region52
        $region51: #{tpu_custom_call.1} parent=11 // pred_region
          %s421 = ssub.s32 1024, 1024
          %422 = vsyncadd [#allocation10], %s421
          %s423 = sshll.u32 [#allocation11], 4
          %s424 = int_to_ptr.vmem [resolvable:$true] %s423
          %429 = dma.hbm_to_vmem [thread:$0]  %s10, 1024, %s424, [#allocation10], 64, 64, 4
        $region52: #{tpu_custom_call.1} parent=11 // pred_fallthru
          _
        // Predicated region
        $region53: #{tpu_custom_call.1} parent=11 // pred_check
          %p430 = pneg %p296
        $region54: #{tpu_custom_call.1} parent=11 // pred_check_branch
          %432 = sbr.rel (%p430) target = $region56
        $region55: #{tpu_custom_call.1} parent=11 // pred_region
          _
        $region56: #{tpu_custom_call.1} parent=11 // pred_fallthru
          _
        // Predicated region
        $region57: #{tpu_custom_call.1} parent=11 // pred_check
          %p433 = pneg %p317
        $region58: #{tpu_custom_call.1} parent=11 // pred_check_branch
          %435 = sbr.rel (%p433) target = $region60
        $region59: #{tpu_custom_call.1} parent=11 // pred_region
          _
        $region60: #{tpu_custom_call.1} parent=11 // pred_fallthru
          _
      $region12: #{tpu_custom_call.1} parent=5 // pred_fallthru
        _
      %p436 = scmp.lt.s32.totalorder %s27, 4
      // Predicated region
      $region61: #{tpu_custom_call.1} parent=5 // pred_check
        %p437 = pneg %p436
      $region62: #{tpu_custom_call.1} parent=5 // pred_check_branch
        %439 = sbr.rel (%p437) target = $region64
      $region63: #{tpu_custom_call.1} parent=5 // pred_region
        // Predicated region
        $region65: #{tpu_custom_call.1} parent=63 // pred_check
          %p440 = pneg %p59
        $region66: #{tpu_custom_call.1} parent=63 // pred_check_branch
          %442 = sbr.rel (%p440) target = $region68
        $region67: #{tpu_custom_call.1} parent=63 // pred_region
          %s443 = sand.u32 %s49, 1
          %s444 = scalar_lea.sflag [#allocation4], %s443
          %s445 = sand.u32 %s49, 1
          %s446 = smul.addr %s445, 144
          %s447 = scalar_lea.vmem [#allocation3], %s446
          %s449 = ssub.s32 2304, 2304
          %450 = vsyncadd %s444, %s449
          %s451 = smul.addr %s34, 36
          %s452 = smul.addr %s451, 64
          %s453 = scalar_lea.hbm %s0, %s452
          %s454 = sshll.u32 %s447, 4
          %s455 = int_to_ptr.vmem [resolvable:$true] %s454
          %460 = dma.hbm_to_vmem [thread:$0]  %s453, 2304, %s455, %s444, 64, 64, 4
        $region68: #{tpu_custom_call.1} parent=63 // pred_fallthru
          _
      $region64: #{tpu_custom_call.1} parent=5 // pred_fallthru
        _
      %p461 = scmp.le.s32.totalorder 1, %s27
      %p462 = scmp.lt.s32.totalorder %s27, 5
      %p463 = pnand %p461, %p462
      %p464 = pneg %p463
      // Predicated region
      $region69: #{tpu_custom_call.1} parent=5 // pred_check
        _
      $region70: #{tpu_custom_call.1} parent=5 // pred_check_branch
        %466 = sbr.rel (%p463) target = $region72
      $region71: #{tpu_custom_call.1} parent=5 // pred_region
        %s467 = ssub.s32 %s27, 1
        %s468 = sand.u32 %s52, 1
        %s469 = scalar_lea.sflag [#allocation4], %s468
        %s470 = sand.u32 %s52, 1
        %s471 = smul.addr %s470, 144
        %s472 = scalar_lea.vmem [#allocation3], %s471
        // Predicated region
        $region73: #{tpu_custom_call.1} parent=71 // pred_check
          %p473 = pneg %p65
        $region74: #{tpu_custom_call.1} parent=71 // pred_check_branch
          %475 = sbr.rel (%p473) target = $region76
        $region75: #{tpu_custom_call.1} parent=71 // pred_region
          %476 = dma.done %s469, 2304
        $region76: #{tpu_custom_call.1} parent=71 // pred_fallthru
          _
        // Predicated region
        $region77: #{tpu_custom_call.1} parent=71 // pred_check
          %p477 = pneg %p86
        $region78: #{tpu_custom_call.1} parent=71 // pred_check_branch
          %479 = sbr.rel (%p477) target = $region80
        $region79: #{tpu_custom_call.1} parent=71 // pred_region
          %480 = dma.done [#allocation7], 1024
        $region80: #{tpu_custom_call.1} parent=71 // pred_fallthru
          _
        // Predicated region
        $region81: #{tpu_custom_call.1} parent=71 // pred_check
          %p481 = pneg %p149
        $region82: #{tpu_custom_call.1} parent=71 // pred_check_branch
          %483 = sbr.rel (%p481) target = $region84
        $region83: #{tpu_custom_call.1} parent=71 // pred_region
          %484 = dma.done [#allocation7], 9216
        $region84: #{tpu_custom_call.1} parent=71 // pred_fallthru
          _
        // Predicated region
        $region85: #{tpu_custom_call.1} parent=71 // pred_check
          %p485 = pneg %p212
        $region86: #{tpu_custom_call.1} parent=71 // pred_check_branch
          %487 = sbr.rel (%p485) target = $region88
        $region87: #{tpu_custom_call.1} parent=71 // pred_region
          %488 = dma.done [#allocation10], 1024
        $region88: #{tpu_custom_call.1} parent=71 // pred_fallthru
          _
        // Predicated region
        $region89: #{tpu_custom_call.1} parent=71 // pred_check
          %p489 = pneg %p275
        $region90: #{tpu_custom_call.1} parent=71 // pred_check_branch
          %491 = sbr.rel (%p489) target = $region92
        $region91: #{tpu_custom_call.1} parent=71 // pred_region
          %492 = dma.done [#allocation10], 1024
        $region92: #{tpu_custom_call.1} parent=71 // pred_fallthru
          _
        %s493 = sand.u32 %s52, 1
        %s494 = scalar_lea.sflag [#allocation4], %s493
        %s495 = sand.u32 %s52, 1
        %s496 = smul.addr %s495, 144
        %s497 = scalar_lea.vmem [#allocation3], %s496
        %p498 = pneg %p65
        %p499 = pneg %p62
        %p500 = pneg %p86
        %p501 = pneg %p83
        %p502 = pneg %p107
        %p503 = pneg %p104
        %p504 = pneg %p128
        %p505 = pneg %p125
        %p506 = pneg %p149
        %p507 = pneg %p146
        %p508 = pneg %p170
        %p509 = pneg %p167
        %p510 = pneg %p191
        %p511 = pneg %p188
        %p512 = pneg %p212
        %p513 = pneg %p209
        %p514 = pneg %p233
        %p515 = pneg %p230
        %p516 = pneg %p254
        %p517 = pneg %p251
        %p518 = pneg %p275
        %p519 = pneg %p272
        %p520 = pneg %p296
        %p521 = pneg %p293
        %p522 = pneg %p317
        %p523 = pneg %p314
        %p524 = pneg %p345
        %p525 = pneg %p342
        %s526 = sand.u32 %s332, 1
        %s527 = scalar_lea.sflag [#allocation5], %s526
        %s528 = sand.u32 %s332, 1
        %s529 = smul.addr %s528, 128
        %s530 = scalar_lea.vmem [#allocation12], %s529
        %s531 = smul.u32 8, %s37
        %s533 = smul.u32 %s37, 8
        %s534 = smul.u32 %s533, 2
        %s535 = smul.addr %s534, 4
        %s536 = scalar_lea.vmem %s472, %s535 [#allocation3]
        %v537 = vld [vmem:[%s536] sm:$0xf]
        %v538 = vld [vmem:[%s536 + $0x4] sm:$0xf]
        %v539 = vld [vmem:[%s536 + $0x8] sm:$0xf]
        %v540 = vld [vmem:[%s536 + $0xc] sm:$0xf]
        %v541 = vld [vmem:[%s536 + $0x10] sm:$0xf]
        %v542 = vld [vmem:[%s536 + $0x14] sm:$0xf]
        %v543 = vld [vmem:[%s536 + $0x18] sm:$0xf]
        %v544 = vld [vmem:[%s536 + $0x1c] sm:$0xf]
        %v545 = vld [vmem:[%s536 + $0x20] sm:$0xf]
        %v546 = vld [vmem:[%s536 + $0x24] sm:$0xf]
        %v547 = vld [vmem:[%s536 + $0x28] sm:$0xf]
        %v548 = vld [vmem:[%s536 + $0x2c] sm:$0xf]
        %v549 = vld [vmem:[%s536 + $0x30] sm:$0xf]
        %v550 = vld [vmem:[%s536 + $0x34] sm:$0xf]
        %v551 = vld [vmem:[%s536 + $0x38] sm:$0xf]
        %v552 = vld [vmem:[%s536 + $0x3c] sm:$0xf]
        %v553 = vld [vmem:[%s536 + $0x40] sm:$0xf]
        %v554 = vld [vmem:[%s536 + $0x44] sm:$0xf]
        %v555 = vld [vmem:[%s536 + $0x48] sm:$0xf]
        %v556 = vld [vmem:[%s536 + $0x4c] sm:$0xf]
        %v557 = vld [vmem:[#allocation6] sm:$0xf]
        %v558 = vld [vmem:[#allocation6 + $0x4] sm:$0xf]
        %v559 = vld [vmem:[#allocation6 + $0x8] sm:$0xf]
        %v560 = vld [vmem:[#allocation6 + $0xc] sm:$0xf]
        %v561 = vld [vmem:[#allocation6 + $0x10] sm:$0xf]
        %v562 = vld [vmem:[#allocation6 + $0x14] sm:$0xf]
        %v563 = vld [vmem:[#allocation6 + $0x18] sm:$0xf]
        %v564 = vld [vmem:[#allocation6 + $0x1c] sm:$0xf]
        %v565 = vld [vmem:[#allocation6 + $0x20] sm:$0xf]
        %v566 = vld [vmem:[#allocation6 + $0x24] sm:$0xf]
        %v567 = vld [vmem:[#allocation6 + $0x28] sm:$0xf]
        %v568 = vld [vmem:[#allocation6 + $0x2c] sm:$0xf]
        %v569 = vld [vmem:[#allocation6 + $0x30] sm:$0xf]
        %v570 = vld [vmem:[#allocation6 + $0x34] sm:$0xf]
        %v571 = vld [vmem:[#allocation6 + $0x38] sm:$0xf]
        %v572 = vld [vmem:[#allocation6 + $0x3c] sm:$0xf]
        %v593 = vunpack.c.l.b16 %v537
        %v594 = vunpack.c.l.b16 %v538
        %v595 = vunpack.c.l.b16 %v539
        %v596 = vunpack.c.l.b16 %v540
        %v597 = vunpack.c.l.b16 %v541
        %v598 = vunpack.c.l.b16 %v542
        %v599 = vunpack.c.l.b16 %v543
        %v600 = vunpack.c.l.b16 %v544
        %v601 = vunpack.c.l.b16 %v545
        %v602 = vunpack.c.l.b16 %v546
        %v603 = vunpack.c.l.b16 %v547
        %v604 = vunpack.c.l.b16 %v548
        %v605 = vunpack.c.l.b16 %v549
        %v606 = vunpack.c.l.b16 %v550
        %v607 = vunpack.c.l.b16 %v551
        %v608 = vunpack.c.l.b16 %v552
        %v609 = vunpack.c.l.b16 %v553
        %v610 = vunpack.c.l.b16 %v554
        %v611 = vunpack.c.l.b16 %v555
        %v612 = vunpack.c.l.b16 %v556
        %v613 = vpack.c.b16 %v594, %v593
        %v614 = vpack.c.b16 %v596, %v595
        %v615 = vpack.c.b16 %v598, %v597
        %v616 = vpack.c.b16 %v600, %v599
        %v617 = vpack.c.b16 %v602, %v601
        %v618 = vpack.c.b16 %v604, %v603
        %v619 = vpack.c.b16 %v606, %v605
        %v620 = vpack.c.b16 %v608, %v607
        %v621 = vpack.c.b16 %v610, %v609
        %v622 = vpack.c.b16 %v612, %v611
        %v649 = vunpack.c.l.b16 %v557
        %v650 = vunpack.c.l.b16 %v558
        %v651 = vunpack.c.l.b16 %v559
        %v652 = vunpack.c.l.b16 %v560
        %v653 = vunpack.c.l.b16 %v561
        %v654 = vunpack.c.l.b16 %v562
        %v655 = vunpack.c.l.b16 %v563
        %v656 = vunpack.c.l.b16 %v564
        %v657 = vunpack.c.l.b16 %v565
        %v658 = vunpack.c.l.b16 %v566
        %v659 = vunpack.c.l.b16 %v567
        %v660 = vunpack.c.l.b16 %v568
        %v661 = vunpack.c.l.b16 %v569
        %v662 = vunpack.c.l.b16 %v570
        %v663 = vunpack.c.l.b16 %v571
        %v664 = vunpack.c.l.b16 %v572
        %v665 = vpack.c.b16 %v650, %v649
        %v666 = vpack.c.b16 %v652, %v651
        %v667 = vpack.c.b16 %v654, %v653
        %v668 = vpack.c.b16 %v656, %v655
        %v669 = vpack.c.b16 %v658, %v657
        %v670 = vpack.c.b16 %v660, %v659
        %v671 = vpack.c.b16 %v662, %v661
        %v672 = vpack.c.b16 %v664, %v663
        %681 = vmatprep.subr.bf16.mxu0 0
        %682 = vmatpush1.bf16.msra.mxu0 %v672
        %683 = vmatprep.subr.bf16.mxu0 0
        %684 = vmatpush1.bf16.msra.mxu0 %v671
        %685 = vmatprep.subr.bf16.mxu0 0
        %686 = vmatpush1.bf16.msra.mxu0 %v670
        %687 = vmatprep.subr.bf16.mxu0 0
        %688 = vmatpush1.bf16.msra.mxu0 %v669
        %689 = vmatprep.subr.bf16.mxu0 0
        %690 = vmatpush1.bf16.msra.mxu0 %v668
        %691 = vmatprep.subr.bf16.mxu0 0
        %692 = vmatpush1.bf16.msra.mxu0 %v667
        %693 = vmatprep.subr.bf16.mxu0 0
        %694 = vmatpush1.bf16.msra.mxu0 %v666
        %695 = vmatprep.subr.bf16.mxu0 0
        %696 = vmatpush1.bf16.msra.mxu0 %v665
        %697 = vmatprep.subr.bf16.mxu0 0
        %698 = vmatpush2.bf16.msra.mxu0 0
        %699 = vmatprep.subr.bf16.mxu0 0
        %700 = vmatpush2.bf16.msra.mxu0 0
        %701 = vmatprep.subr.bf16.mxu0 0
        %702 = vmatpush2.bf16.msra.mxu0 0
        %703 = vmatprep.subr.bf16.mxu0 0
        %704 = vmatpush2.bf16.msra.mxu0 0
        %705 = vmatprep.subr.bf16.mxu0 0
        %706 = vmatpush2.bf16.msra.mxu0 0
        %707 = vmatprep.subr.bf16.mxu0 0
        %708 = vmatpush2.bf16.msra.mxu0 0
        %709 = vmatprep.subr.bf16.mxu0 0
        %710 = vmatpush2.bf16.msra.mxu0 0
        %711 = vmatprep.subr.bf16.mxu0 0
        %712 = vmatpush2.bf16.msra.mxu0 0
        %713 = vmatprep.mubr.bf16.mxu0 0
        %714 = vmatmul.mubr.bf16.gmra.mxu0 %v613
        %v715 = vpop.f32.mrf.mxu0
        %v716 = vadd.f32 0.0, %v715
        %v717 = vpop.f32.mrf.mxu0
        %v718 = vpop.f32.mrf.mxu0
        %v719 = vadd.f32 0.0, %v718
        %v720 = vpop.f32.mrf.mxu0
        %721 = vmatprep.mubr.bf16.mxu0 0
        %722 = vmatmul.mubr.bf16.gmra.mxu0 %v614
        %v723 = vpop.f32.mrf.mxu0
        %v724 = vadd.f32 0.0, %v723
        %v725 = vpop.f32.mrf.mxu0
        %v726 = vpop.f32.mrf.mxu0
        %v727 = vadd.f32 0.0, %v726
        %v728 = vpop.f32.mrf.mxu0
        %729 = vmatprep.mubr.bf16.mxu0 0
        %730 = vmatmul.mubr.bf16.gmra.mxu0 %v615
        %v731 = vpop.f32.mrf.mxu0
        %v732 = vadd.f32 0.0, %v731
        %v733 = vpop.f32.mrf.mxu0
        %v734 = vpop.f32.mrf.mxu0
        %v735 = vadd.f32 0.0, %v734
        %v736 = vpop.f32.mrf.mxu0
        %737 = vmatprep.mubr.bf16.mxu0 0
        %738 = vmatmul.mubr.bf16.gmra.mxu0 %v616
        %v739 = vpop.f32.mrf.mxu0
        %v740 = vadd.f32 0.0, %v739
        %v741 = vpop.f32.mrf.mxu0
        %v742 = vpop.f32.mrf.mxu0
        %v743 = vadd.f32 0.0, %v742
        %v744 = vpop.f32.mrf.mxu0
        %745 = vmatprep.mubr.bf16.mxu0 0
        %746 = vmatmul.mubr.bf16.gmra.mxu0 %v617
        %v747 = vpop.f32.mrf.mxu0
        %v748 = vadd.f32 0.0, %v747
        %v749 = vpop.f32.mrf.mxu0
        %v750 = vpop.f32.mrf.mxu0
        %v751 = vadd.f32 0.0, %v750
        %v752 = vpop.f32.mrf.mxu0
        %753 = vmatprep.mubr.bf16.mxu0 0
        %754 = vmatmul.mubr.bf16.gmra.mxu0 %v618
        %v755 = vpop.f32.mrf.mxu0
        %v756 = vadd.f32 0.0, %v755
        %v757 = vpop.f32.mrf.mxu0
        %v758 = vpop.f32.mrf.mxu0
        %v759 = vadd.f32 0.0, %v758
        %v760 = vpop.f32.mrf.mxu0
        %761 = vmatprep.mubr.bf16.mxu0 0
        %762 = vmatmul.mubr.bf16.gmra.mxu0 %v619
        %v763 = vpop.f32.mrf.mxu0
        %v764 = vadd.f32 0.0, %v763
        %v765 = vpop.f32.mrf.mxu0
        %v766 = vpop.f32.mrf.mxu0
        %v767 = vadd.f32 0.0, %v766
        %v768 = vpop.f32.mrf.mxu0
        %769 = vmatprep.mubr.bf16.mxu0 0
        %770 = vmatmul.mubr.bf16.gmra.mxu0 %v620
        %v771 = vpop.f32.mrf.mxu0
        %v772 = vadd.f32 0.0, %v771
        %v773 = vpop.f32.mrf.mxu0
        %v774 = vpop.f32.mrf.mxu0
        %v775 = vadd.f32 0.0, %v774
        %v776 = vpop.f32.mrf.mxu0
        %777 = vmatprep.mubr.bf16.mxu0 0
        %778 = vmatmul.mubr.bf16.gmra.mxu0 %v621
        %v779 = vpop.f32.mrf.mxu0
        %v780 = vadd.f32 0.0, %v779
        %v781 = vpop.f32.mrf.mxu0
        %v782 = vpop.f32.mrf.mxu0
        %v783 = vadd.f32 0.0, %v782
        %v784 = vpop.f32.mrf.mxu0
        %785 = vmatprep.mubr.bf16.mxu0 0
        %786 = vmatmul.mubr.bf16.gmra.mxu0 %v622
        %v787 = vpop.f32.mrf.mxu0
        %v788 = vadd.f32 0.0, %v787
        %v789 = vpop.f32.mrf.mxu0
        %v790 = vpop.f32.mrf.mxu0
        %v791 = vadd.f32 0.0, %v790
        %v792 = vpop.f32.mrf.mxu0
        %793 = vdwg.mxu0
        %v794 = vld [vmem:[%s2] sm:$0x1]
        %v796 = vlaneseq
        %v797 = vshrl.u32 %v796, 7
        %v798 = vsub.s32 0, %v797
        %v799 = vrot.slane %v794, %v798
        %v801 = vmul.f32 %v716, %v799
        %v802 = vmul.f32 %v719, %v799
        %v803 = vmul.f32 %v724, %v799
        %v804 = vmul.f32 %v727, %v799
        %v805 = vmul.f32 %v732, %v799
        %v806 = vmul.f32 %v735, %v799
        %v807 = vmul.f32 %v740, %v799
        %v808 = vmul.f32 %v743, %v799
        %v809 = vmul.f32 %v748, %v799
        %v810 = vmul.f32 %v751, %v799
        %v811 = vmul.f32 %v756, %v799
        %v812 = vmul.f32 %v759, %v799
        %v813 = vmul.f32 %v764, %v799
        %v814 = vmul.f32 %v767, %v799
        %v815 = vmul.f32 %v772, %v799
        %v816 = vmul.f32 %v775, %v799
        %v817 = vmul.f32 %v780, %v799
        %v818 = vmul.f32 %v783, %v799
        %v819 = vmul.f32 %v788, %v799
        %v820 = vmul.f32 %v791, %v799
        %v821 = vld [vmem:[%s3] sm:$0x1]
        %v823 = vlaneseq
        %v824 = vshrl.u32 %v823, 7
        %v825 = vsub.s32 0, %v824
        %v826 = vrot.slane %v821, %v825
        %v828 = vadd.f32 %v801, %v826
        %v829 = vadd.f32 %v802, %v826
        %v830 = vadd.f32 %v803, %v826
        %v831 = vadd.f32 %v804, %v826
        %v832 = vadd.f32 %v805, %v826
        %v833 = vadd.f32 %v806, %v826
        %v834 = vadd.f32 %v807, %v826
        %v835 = vadd.f32 %v808, %v826
        %v836 = vadd.f32 %v809, %v826
        %v837 = vadd.f32 %v810, %v826
        %v838 = vadd.f32 %v811, %v826
        %v839 = vadd.f32 %v812, %v826
        %v840 = vadd.f32 %v813, %v826
        %v841 = vadd.f32 %v814, %v826
        %v842 = vadd.f32 %v815, %v826
        %v843 = vadd.f32 %v816, %v826
        %v844 = vadd.f32 %v817, %v826
        %v845 = vadd.f32 %v818, %v826
        %v846 = vadd.f32 %v819, %v826
        %v847 = vadd.f32 %v820, %v826
        %v848 = vmax.f32 %v828, 0.0
        %v849 = vmax.f32 %v829, 0.0
        %v850 = vmax.f32 %v830, 0.0
        %v851 = vmax.f32 %v831, 0.0
        %v852 = vmax.f32 %v832, 0.0
        %v853 = vmax.f32 %v833, 0.0
        %v854 = vmax.f32 %v834, 0.0
        %v855 = vmax.f32 %v835, 0.0
        %v856 = vmax.f32 %v836, 0.0
        %v857 = vmax.f32 %v837, 0.0
        %v858 = vmax.f32 %v838, 0.0
        %v859 = vmax.f32 %v839, 0.0
        %v860 = vmax.f32 %v840, 0.0
        %v861 = vmax.f32 %v841, 0.0
        %v862 = vmax.f32 %v842, 0.0
        %v863 = vmax.f32 %v843, 0.0
        %v864 = vmax.f32 %v844, 0.0
        %v865 = vmax.f32 %v845, 0.0
        %v866 = vmax.f32 %v846, 0.0
        %v867 = vmax.f32 %v847, 0.0
        %v868 = vpack.c.bf16 %v849, %v848
        %v869 = vpack.c.bf16 %v851, %v850
        %v870 = vpack.c.bf16 %v853, %v852
        %v871 = vpack.c.bf16 %v855, %v854
        %v872 = vpack.c.bf16 %v857, %v856
        %v873 = vpack.c.bf16 %v859, %v858
        %v874 = vpack.c.bf16 %v861, %v860
        %v875 = vpack.c.bf16 %v863, %v862
        %v876 = vpack.c.bf16 %v865, %v864
        %v877 = vpack.c.bf16 %v867, %v866
        %vm878 = vcmask 1043459
        %vm879 = vsmask.f32 7950
        %vm880 = vmand %vm878, %vm879
        %v881 = vld [vmem:[#allocation2 + $0x4] sm:$0x8]
        %v882 = vsel %vm880, 0, %v881
        %883 = vst [vmem:[#allocation2 + $0x4] sm:$0x8] %v882
        %v884 = vld [vmem:[#allocation2 + $0x18] sm:$0x8]
        %v885 = vsel %vm880, 0, %v884
        %886 = vst [vmem:[#allocation2 + $0x18] sm:$0x8] %v885
        %v887 = vld [vmem:[#allocation2 + $0x2c] sm:$0x8]
        %v888 = vsel %vm880, 0, %v887
        %889 = vst [vmem:[#allocation2 + $0x2c] sm:$0x8] %v888
        %v890 = vld [vmem:[#allocation2 + $0x40] sm:$0x8]
        %v891 = vsel %vm880, 0, %v890
        %892 = vst [vmem:[#allocation2 + $0x40] sm:$0x8] %v891
        %v893 = vld [vmem:[#allocation2 + $0x54] sm:$0x8]
        %v894 = vsel %vm880, 0, %v893
        %895 = vst [vmem:[#allocation2 + $0x54] sm:$0x8] %v894
        %v896 = vld [vmem:[#allocation2 + $0x68] sm:$0x8]
        %v897 = vsel %vm880, 0, %v896
        %898 = vst [vmem:[#allocation2 + $0x68] sm:$0x8] %v897
        %v899 = vld [vmem:[#allocation2 + $0x7c] sm:$0x8]
        %v900 = vsel %vm880, 0, %v899
        %901 = vst [vmem:[#allocation2 + $0x7c] sm:$0x8] %v900
        %v902 = vld [vmem:[#allocation2 + $0x90] sm:$0x8]
        %v903 = vsel %vm880, 0, %v902
        %904 = vst [vmem:[#allocation2 + $0x90] sm:$0x8] %v903
        %v905 = vld [vmem:[#allocation2 + $0xa4] sm:$0x8]
        %v906 = vsel %vm880, 0, %v905
        %907 = vst [vmem:[#allocation2 + $0xa4] sm:$0x8] %v906
        %v908 = vld [vmem:[#allocation2 + $0xb8] sm:$0x8]
        %v909 = vsel %vm880, 0, %v908
        %910 = vst [vmem:[#allocation2 + $0xb8] sm:$0x8] %v909
        %vm911 = vcmask 1040384
        %vm912 = vsmask.f32 256
        %vm913 = vmand %vm911, %vm912
        %v914 = vld [vmem:[#allocation2 + $0x10] sm:$0x1]
        %v915 = vsel %vm913, 0, %v914
        %916 = vst [vmem:[#allocation2 + $0x10] sm:$0x1] %v915
        %v917 = vld [vmem:[#allocation2 + $0x24] sm:$0x1]
        %v918 = vsel %vm913, 0, %v917
        %919 = vst [vmem:[#allocation2 + $0x24] sm:$0x1] %v918
        %v920 = vld [vmem:[#allocation2 + $0x38] sm:$0x1]
        %v921 = vsel %vm913, 0, %v920
        %922 = vst [vmem:[#allocation2 + $0x38] sm:$0x1] %v921
        %v923 = vld [vmem:[#allocation2 + $0x4c] sm:$0x1]
        %v924 = vsel %vm913, 0, %v923
        %925 = vst [vmem:[#allocation2 + $0x4c] sm:$0x1] %v924
        %v926 = vld [vmem:[#allocation2 + $0x60] sm:$0x1]
        %v927 = vsel %vm913, 0, %v926
        %928 = vst [vmem:[#allocation2 + $0x60] sm:$0x1] %v927
        %v929 = vld [vmem:[#allocation2 + $0x74] sm:$0x1]
        %v930 = vsel %vm913, 0, %v929
        %931 = vst [vmem:[#allocation2 + $0x74] sm:$0x1] %v930
        %v932 = vld [vmem:[#allocation2 + $0x88] sm:$0x1]
        %v933 = vsel %vm913, 0, %v932
        %934 = vst [vmem:[#allocation2 + $0x88] sm:$0x1] %v933
        %v935 = vld [vmem:[#allocation2 + $0x9c] sm:$0x1]
        %v936 = vsel %vm913, 0, %v935
        %937 = vst [vmem:[#allocation2 + $0x9c] sm:$0x1] %v936
        %v938 = vld [vmem:[#allocation2 + $0xb0] sm:$0x1]
        %v939 = vsel %vm913, 0, %v938
        %940 = vst [vmem:[#allocation2 + $0xb0] sm:$0x1] %v939
        %v941 = vld [vmem:[#allocation2 + $0xc4] sm:$0x1]
        %v942 = vsel %vm913, 0, %v941
        %943 = vst [vmem:[#allocation2 + $0xc4] sm:$0x1] %v942
        %v954 = vunpack.c.l.b16 %v868
        %v955 = vunpack.c.h.b16 %v868
        %v956 = vunpack.c.l.b16 %v869
        %v957 = vunpack.c.h.b16 %v869
        %v958 = vunpack.c.l.b16 %v870
        %v959 = vunpack.c.h.b16 %v870
        %v960 = vunpack.c.l.b16 %v871
        %v961 = vunpack.c.h.b16 %v871
        %v962 = vunpack.c.l.b16 %v872
        %v963 = vunpack.c.h.b16 %v872
        %v964 = vunpack.c.l.b16 %v873
        %v965 = vunpack.c.h.b16 %v873
        %v966 = vunpack.c.l.b16 %v874
        %v967 = vunpack.c.h.b16 %v874
        %v968 = vunpack.c.l.b16 %v875
        %v969 = vunpack.c.h.b16 %v875
        %v970 = vunpack.c.l.b16 %v876
        %v971 = vunpack.c.h.b16 %v876
        %v972 = vunpack.c.l.b16 %v877
        %v973 = vunpack.c.h.b16 %v877
        %v974 = vpack.c.b16 %v954, %v954
        %v975 = vpack.c.b16 %v955, %v955
        %v976 = vpack.c.b16 %v956, %v956
        %v977 = vpack.c.b16 %v957, %v957
        %v978 = vpack.c.b16 %v958, %v958
        %v979 = vpack.c.b16 %v959, %v959
        %v980 = vpack.c.b16 %v960, %v960
        %v981 = vpack.c.b16 %v961, %v961
        %v982 = vpack.c.b16 %v962, %v962
        %v983 = vpack.c.b16 %v963, %v963
        %v984 = vpack.c.b16 %v964, %v964
        %v985 = vpack.c.b16 %v965, %v965
        %v986 = vpack.c.b16 %v966, %v966
        %v987 = vpack.c.b16 %v967, %v967
        %v988 = vpack.c.b16 %v968, %v968
        %v989 = vpack.c.b16 %v969, %v969
        %v990 = vpack.c.b16 %v970, %v970
        %v991 = vpack.c.b16 %v971, %v971
        %v992 = vpack.c.b16 %v972, %v972
        %v993 = vpack.c.b16 %v973, %v973
        %1014 = vst [vmem:[#allocation2 + $0x8] sm:$0xf] %v974
        %1015 = vst [vmem:[#allocation2 + $0xc] sm:$0xf] %v975
        %1016 = vst [vmem:[#allocation2 + $0x1c] sm:$0xf] %v976
        %1017 = vst [vmem:[#allocation2 + $0x20] sm:$0xf] %v977
        %1018 = vst [vmem:[#allocation2 + $0x30] sm:$0xf] %v978
        %1019 = vst [vmem:[#allocation2 + $0x34] sm:$0xf] %v979
        %1020 = vst [vmem:[#allocation2 + $0x44] sm:$0xf] %v980
        %1021 = vst [vmem:[#allocation2 + $0x48] sm:$0xf] %v981
        %1022 = vst [vmem:[#allocation2 + $0x58] sm:$0xf] %v982
        %1023 = vst [vmem:[#allocation2 + $0x5c] sm:$0xf] %v983
        %1024 = vst [vmem:[#allocation2 + $0x6c] sm:$0xf] %v984
        %1025 = vst [vmem:[#allocation2 + $0x70] sm:$0xf] %v985
        %1026 = vst [vmem:[#allocation2 + $0x80] sm:$0xf] %v986
        %1027 = vst [vmem:[#allocation2 + $0x84] sm:$0xf] %v987
        %1028 = vst [vmem:[#allocation2 + $0x94] sm:$0xf] %v988
        %1029 = vst [vmem:[#allocation2 + $0x98] sm:$0xf] %v989
        %1030 = vst [vmem:[#allocation2 + $0xa8] sm:$0xf] %v990
        %1031 = vst [vmem:[#allocation2 + $0xac] sm:$0xf] %v991
        %1032 = vst [vmem:[#allocation2 + $0xbc] sm:$0xf] %v992
        %1033 = vst [vmem:[#allocation2 + $0xc0] sm:$0xf] %v993
        %p1034 = scmp.eq.s32.totalorder %s37, 0
        // Predicated region
        $region93: #{tpu_custom_call.1} parent=71 // pred_check
          %p1035 = pneg %p1034
        $region94: #{tpu_custom_call.1} parent=71 // pred_check_branch
          %1037 = sbr.rel (%p1035) target = $region96
        $region95: #{tpu_custom_call.1} parent=71 // pred_region
          %v1038 = vld [vmem:[#allocation2 + $0x4] sm:$0x8]
          %v1039 = vsel %vm880, 0, %v1038
          %1040 = vst [vmem:[#allocation2 + $0x4] sm:$0x8] %v1039
          %1041 = vst [vmem:[#allocation2 + $0x8] sm:$0xf] 0
          %1042 = vst [vmem:[#allocation2 + $0xc] sm:$0xf] 0
          %v1043 = vld [vmem:[#allocation2 + $0x10] sm:$0x1]
          %v1044 = vsel %vm913, 0, %v1043
          %1045 = vst [vmem:[#allocation2 + $0x10] sm:$0x1] %v1044
        $region96: #{tpu_custom_call.1} parent=71 // pred_fallthru
          _
        %p1046 = scmp.eq.s32.totalorder %s37, 1
        // Predicated region
        $region97: #{tpu_custom_call.1} parent=71 // pred_check
          %p1047 = pneg %p1046
        $region98: #{tpu_custom_call.1} parent=71 // pred_check_branch
          %1049 = sbr.rel (%p1047) target = $region100
        $region99: #{tpu_custom_call.1} parent=71 // pred_region
          %s1050 = scalar_lea.vmem [#allocation2], 180
          %v1051 = vld [vmem:[%s1050 + $0x4] sm:$0x8]
          %v1052 = vsel %vm880, 0, %v1051
          %1053 = vst [vmem:[%s1050 + $0x4] sm:$0x8] %v1052
          %1054 = vst [vmem:[%s1050 + $0x8] sm:$0xf] 0
          %1055 = vst [vmem:[%s1050 + $0xc] sm:$0xf] 0
          %v1056 = vld [vmem:[%s1050 + $0x10] sm:$0x1]
          %v1057 = vsel %vm913, 0, %v1056
          %1058 = vst [vmem:[%s1050 + $0x10] sm:$0x1] %v1057
        $region100: #{tpu_custom_call.1} parent=71 // pred_fallthru
          _
        %v1059 = vld [vmem:[#allocation2 + $0x4] sm:$0x8]
        %v1060 = vld [vmem:[#allocation2 + $0x8] sm:$0xf]
        %v1061 = vld [vmem:[#allocation2 + $0xc] sm:$0xf]
        %v1062 = vld [vmem:[#allocation2 + $0x18] sm:$0x8]
        %v1063 = vld [vmem:[#allocation2 + $0x1c] sm:$0xf]
        %v1064 = vld [vmem:[#allocation2 + $0x20] sm:$0xf]
        %v1065 = vld [vmem:[#allocation2 + $0x2c] sm:$0x8]
        %v1066 = vld [vmem:[#allocation2 + $0x30] sm:$0xf]
        %v1067 = vld [vmem:[#allocation2 + $0x34] sm:$0xf]
        %v1068 = vld [vmem:[#allocation2 + $0x40] sm:$0x8]
        %v1069 = vld [vmem:[#allocation2 + $0x44] sm:$0xf]
        %v1070 = vld [vmem:[#allocation2 + $0x48] sm:$0xf]
        %v1071 = vld [vmem:[#allocation2 + $0x54] sm:$0x8]
        %v1072 = vld [vmem:[#allocation2 + $0x58] sm:$0xf]
        %v1073 = vld [vmem:[#allocation2 + $0x5c] sm:$0xf]
        %v1074 = vld [vmem:[#allocation2 + $0x68] sm:$0x8]
        %v1075 = vld [vmem:[#allocation2 + $0x6c] sm:$0xf]
        %v1076 = vld [vmem:[#allocation2 + $0x70] sm:$0xf]
        %v1077 = vld [vmem:[#allocation2 + $0x7c] sm:$0x8]
        %v1078 = vld [vmem:[#allocation2 + $0x80] sm:$0xf]
        %v1079 = vld [vmem:[#allocation2 + $0x84] sm:$0xf]
        %v1080 = vld [vmem:[#allocation2 + $0x90] sm:$0x8]
        %v1081 = vld [vmem:[#allocation2 + $0x94] sm:$0xf]
        %v1082 = vld [vmem:[#allocation2 + $0x98] sm:$0xf]
        %vm1083 = vsmask.f32 4368
        %vm1084 = vmor %vm912, %vm1083
        %v1086 = vshrl.u32 %v1059, 16
        %v1088 = vrot.slane %v1086, 7
        %v1089 = vrot.slane %v1088, 4
        %v1091 = vshrl.u32 %v1060, 16
        %v1093 = vrot.slane %v1091, 7
        %v1094 = vshll.u32 %v1060, 16
        %v1096 = vor.u32 %v1093, %v1094
        %v1097 = vsel %vm1084, %v1089, %v1096
        %v1098 = vrot.slane %v1093, 4
        %v1100 = vshrl.u32 %v1061, 16
        %v1102 = vrot.slane %v1100, 7
        %v1103 = vshll.u32 %v1061, 16
        %v1105 = vor.u32 %v1102, %v1103
        %v1106 = vsel %vm1084, %v1098, %v1105
        %v1108 = vshrl.u32 %v1062, 16
        %v1110 = vrot.slane %v1108, 7
        %v1111 = vrot.slane %v1110, 4
        %v1113 = vshrl.u32 %v1063, 16
        %v1115 = vrot.slane %v1113, 7
        %v1116 = vshll.u32 %v1063, 16
        %v1118 = vor.u32 %v1115, %v1116
        %v1119 = vsel %vm1084, %v1111, %v1118
        %v1120 = vrot.slane %v1115, 4
        %v1122 = vshrl.u32 %v1064, 16
        %v1124 = vrot.slane %v1122, 7
        %v1125 = vshll.u32 %v1064, 16
        %v1127 = vor.u32 %v1124, %v1125
        %v1128 = vsel %vm1084, %v1120, %v1127
        %v1130 = vshrl.u32 %v1065, 16
        %v1132 = vrot.slane %v1130, 7
        %v1133 = vrot.slane %v1132, 4
        %v1135 = vshrl.u32 %v1066, 16
        %v1137 = vrot.slane %v1135, 7
        %v1138 = vshll.u32 %v1066, 16
        %v1140 = vor.u32 %v1137, %v1138
        %v1141 = vsel %vm1084, %v1133, %v1140
        %v1142 = vrot.slane %v1137, 4
        %v1144 = vshrl.u32 %v1067, 16
        %v1146 = vrot.slane %v1144, 7
        %v1147 = vshll.u32 %v1067, 16
        %v1149 = vor.u32 %v1146, %v1147
        %v1150 = vsel %vm1084, %v1142, %v1149
        %v1152 = vshrl.u32 %v1068, 16
        %v1154 = vrot.slane %v1152, 7
        %v1155 = vrot.slane %v1154, 4
        %v1157 = vshrl.u32 %v1069, 16
        %v1159 = vrot.slane %v1157, 7
        %v1160 = vshll.u32 %v1069, 16
        %v1162 = vor.u32 %v1159, %v1160
        %v1163 = vsel %vm1084, %v1155, %v1162
        %v1164 = vrot.slane %v1159, 4
        %v1166 = vshrl.u32 %v1070, 16
        %v1168 = vrot.slane %v1166, 7
        %v1169 = vshll.u32 %v1070, 16
        %v1171 = vor.u32 %v1168, %v1169
        %v1172 = vsel %vm1084, %v1164, %v1171
        %v1174 = vshrl.u32 %v1071, 16
        %v1176 = vrot.slane %v1174, 7
        %v1177 = vrot.slane %v1176, 4
        %v1179 = vshrl.u32 %v1072, 16
        %v1181 = vrot.slane %v1179, 7
        %v1182 = vshll.u32 %v1072, 16
        %v1184 = vor.u32 %v1181, %v1182
        %v1185 = vsel %vm1084, %v1177, %v1184
        %v1186 = vrot.slane %v1181, 4
        %v1188 = vshrl.u32 %v1073, 16
        %v1190 = vrot.slane %v1188, 7
        %v1191 = vshll.u32 %v1073, 16
        %v1193 = vor.u32 %v1190, %v1191
        %v1194 = vsel %vm1084, %v1186, %v1193
        %v1196 = vshrl.u32 %v1074, 16
        %v1198 = vrot.slane %v1196, 7
        %v1199 = vrot.slane %v1198, 4
        %v1201 = vshrl.u32 %v1075, 16
        %v1203 = vrot.slane %v1201, 7
        %v1204 = vshll.u32 %v1075, 16
        %v1206 = vor.u32 %v1203, %v1204
        %v1207 = vsel %vm1084, %v1199, %v1206
        %v1208 = vrot.slane %v1203, 4
        %v1210 = vshrl.u32 %v1076, 16
        %v1212 = vrot.slane %v1210, 7
        %v1213 = vshll.u32 %v1076, 16
        %v1215 = vor.u32 %v1212, %v1213
        %v1216 = vsel %vm1084, %v1208, %v1215
        %v1218 = vshrl.u32 %v1077, 16
        %v1220 = vrot.slane %v1218, 7
        %v1221 = vrot.slane %v1220, 4
        %v1223 = vshrl.u32 %v1078, 16
        %v1225 = vrot.slane %v1223, 7
        %v1226 = vshll.u32 %v1078, 16
        %v1228 = vor.u32 %v1225, %v1226
        %v1229 = vsel %vm1084, %v1221, %v1228
        %v1230 = vrot.slane %v1225, 4
        %v1232 = vshrl.u32 %v1079, 16
        %v1234 = vrot.slane %v1232, 7
        %v1235 = vshll.u32 %v1079, 16
        %v1237 = vor.u32 %v1234, %v1235
        %v1238 = vsel %vm1084, %v1230, %v1237
        %v1240 = vshrl.u32 %v1080, 16
        %v1242 = vrot.slane %v1240, 7
        %v1243 = vrot.slane %v1242, 4
        %v1245 = vshrl.u32 %v1081, 16
        %v1247 = vrot.slane %v1245, 7
        %v1248 = vshll.u32 %v1081, 16
        %v1250 = vor.u32 %v1247, %v1248
        %v1251 = vsel %vm1084, %v1243, %v1250
        %v1252 = vrot.slane %v1247, 4
        %v1254 = vshrl.u32 %v1082, 16
        %v1256 = vrot.slane %v1254, 7
        %v1257 = vshll.u32 %v1082, 16
        %v1259 = vor.u32 %v1256, %v1257
        %v1260 = vsel %vm1084, %v1252, %v1259
        %v1261 = vld [vmem:[#allocation2 + $0x10] sm:$0x1]
        %v1262 = vld [vmem:[#allocation2 + $0x24] sm:$0x1]
        %v1263 = vld [vmem:[#allocation2 + $0x38] sm:$0x1]
        %v1264 = vld [vmem:[#allocation2 + $0x4c] sm:$0x1]
        %v1265 = vld [vmem:[#allocation2 + $0x60] sm:$0x1]
        %v1266 = vld [vmem:[#allocation2 + $0x74] sm:$0x1]
        %v1267 = vld [vmem:[#allocation2 + $0x88] sm:$0x1]
        %v1268 = vld [vmem:[#allocation2 + $0x9c] sm:$0x1]
        %vm1269 = vsmask.f32 3328
        %vm1270 = vsmask.f32 7440
        %vm1271 = vmor %vm1269, %vm1270
        %v1272 = vrot.slane %v1091, 4
        %v1273 = vrot.slane %v1094, 5
        %v1274 = vor.u32 %v1272, %v1273
        %v1275 = vrot.slane %v1274, 4
        %v1276 = vrot.slane %v1103, 5
        %v1277 = vsel %vm1271, %v1275, %v1276
        %v1278 = vrot.slane %v1100, 4
        %v1279 = vor.u32 %v1278, %v1276
        %v1280 = vrot.slane %v1279, 4
        %v1282 = vshll.u32 %v1261, 16
        %v1284 = vrot.slane %v1282, 5
        %v1285 = vsel %vm1271, %v1280, %v1284
        %v1286 = vrot.slane %v1113, 4
        %v1287 = vrot.slane %v1116, 5
        %v1288 = vor.u32 %v1286, %v1287
        %v1289 = vrot.slane %v1288, 4
        %v1290 = vrot.slane %v1125, 5
        %v1291 = vsel %vm1271, %v1289, %v1290
        %v1292 = vrot.slane %v1122, 4
        %v1293 = vor.u32 %v1292, %v1290
        %v1294 = vrot.slane %v1293, 4
        %v1296 = vshll.u32 %v1262, 16
        %v1298 = vrot.slane %v1296, 5
        %v1299 = vsel %vm1271, %v1294, %v1298
        %v1300 = vrot.slane %v1135, 4
        %v1301 = vrot.slane %v1138, 5
        %v1302 = vor.u32 %v1300, %v1301
        %v1303 = vrot.slane %v1302, 4
        %v1304 = vrot.slane %v1147, 5
        %v1305 = vsel %vm1271, %v1303, %v1304
        %v1306 = vrot.slane %v1144, 4
        %v1307 = vor.u32 %v1306, %v1304
        %v1308 = vrot.slane %v1307, 4
        %v1310 = vshll.u32 %v1263, 16
        %v1312 = vrot.slane %v1310, 5
        %v1313 = vsel %vm1271, %v1308, %v1312
        %v1314 = vrot.slane %v1157, 4
        %v1315 = vrot.slane %v1160, 5
        %v1316 = vor.u32 %v1314, %v1315
        %v1317 = vrot.slane %v1316, 4
        %v1318 = vrot.slane %v1169, 5
        %v1319 = vsel %vm1271, %v1317, %v1318
        %v1320 = vrot.slane %v1166, 4
        %v1321 = vor.u32 %v1320, %v1318
        %v1322 = vrot.slane %v1321, 4
        %v1324 = vshll.u32 %v1264, 16
        %v1326 = vrot.slane %v1324, 5
        %v1327 = vsel %vm1271, %v1322, %v1326
        %v1328 = vrot.slane %v1179, 4
        %v1329 = vrot.slane %v1182, 5
        %v1330 = vor.u32 %v1328, %v1329
        %v1331 = vrot.slane %v1330, 4
        %v1332 = vrot.slane %v1191, 5
        %v1333 = vsel %vm1271, %v1331, %v1332
        %v1334 = vrot.slane %v1188, 4
        %v1335 = vor.u32 %v1334, %v1332
        %v1336 = vrot.slane %v1335, 4
        %v1338 = vshll.u32 %v1265, 16
        %v1340 = vrot.slane %v1338, 5
        %v1341 = vsel %vm1271, %v1336, %v1340
        %v1342 = vrot.slane %v1201, 4
        %v1343 = vrot.slane %v1204, 5
        %v1344 = vor.u32 %v1342, %v1343
        %v1345 = vrot.slane %v1344, 4
        %v1346 = vrot.slane %v1213, 5
        %v1347 = vsel %vm1271, %v1345, %v1346
        %v1348 = vrot.slane %v1210, 4
        %v1349 = vor.u32 %v1348, %v1346
        %v1350 = vrot.slane %v1349, 4
        %v1352 = vshll.u32 %v1266, 16
        %v1354 = vrot.slane %v1352, 5
        %v1355 = vsel %vm1271, %v1350, %v1354
        %v1356 = vrot.slane %v1223, 4
        %v1357 = vrot.slane %v1226, 5
        %v1358 = vor.u32 %v1356, %v1357
        %v1359 = vrot.slane %v1358, 4
        %v1360 = vrot.slane %v1235, 5
        %v1361 = vsel %vm1271, %v1359, %v1360
        %v1362 = vrot.slane %v1232, 4
        %v1363 = vor.u32 %v1362, %v1360
        %v1364 = vrot.slane %v1363, 4
        %v1366 = vshll.u32 %v1267, 16
        %v1368 = vrot.slane %v1366, 5
        %v1369 = vsel %vm1271, %v1364, %v1368
        %v1370 = vrot.slane %v1245, 4
        %v1371 = vrot.slane %v1248, 5
        %v1372 = vor.u32 %v1370, %v1371
        %v1373 = vrot.slane %v1372, 4
        %v1374 = vrot.slane %v1257, 5
        %v1375 = vsel %vm1271, %v1373, %v1374
        %v1376 = vrot.slane %v1254, 4
        %v1377 = vor.u32 %v1376, %v1374
        %v1378 = vrot.slane %v1377, 4
        %v1380 = vshll.u32 %v1268, 16
        %v1382 = vrot.slane %v1380, 5
        %v1383 = vsel %vm1271, %v1378, %v1382
        %s1384 = scalar_lea.vmem [#allocation2], 20
        %v1385 = vld [vmem:[%s1384 + $0x4] sm:$0x8]
        %v1386 = vld [vmem:[%s1384 + $0x8] sm:$0xf]
        %v1387 = vld [vmem:[%s1384 + $0xc] sm:$0xf]
        %v1388 = vld [vmem:[%s1384 + $0x18] sm:$0x8]
        %v1389 = vld [vmem:[%s1384 + $0x1c] sm:$0xf]
        %v1390 = vld [vmem:[%s1384 + $0x20] sm:$0xf]
        %v1391 = vld [vmem:[%s1384 + $0x2c] sm:$0x8]
        %v1392 = vld [vmem:[%s1384 + $0x30] sm:$0xf]
        %v1393 = vld [vmem:[%s1384 + $0x34] sm:$0xf]
        %v1394 = vld [vmem:[%s1384 + $0x40] sm:$0x8]
        %v1395 = vld [vmem:[%s1384 + $0x44] sm:$0xf]
        %v1396 = vld [vmem:[%s1384 + $0x48] sm:$0xf]
        %v1397 = vld [vmem:[%s1384 + $0x54] sm:$0x8]
        %v1398 = vld [vmem:[%s1384 + $0x58] sm:$0xf]
        %v1399 = vld [vmem:[%s1384 + $0x5c] sm:$0xf]
        %v1400 = vld [vmem:[%s1384 + $0x68] sm:$0x8]
        %v1401 = vld [vmem:[%s1384 + $0x6c] sm:$0xf]
        %v1402 = vld [vmem:[%s1384 + $0x70] sm:$0xf]
        %v1403 = vld [vmem:[%s1384 + $0x7c] sm:$0x8]
        %v1404 = vld [vmem:[%s1384 + $0x80] sm:$0xf]
        %v1405 = vld [vmem:[%s1384 + $0x84] sm:$0xf]
        %v1406 = vld [vmem:[%s1384 + $0x90] sm:$0x8]
        %v1407 = vld [vmem:[%s1384 + $0x94] sm:$0xf]
        %v1408 = vld [vmem:[%s1384 + $0x98] sm:$0xf]
        %v1410 = vshrl.u32 %v1385, 16
        %v1412 = vrot.slane %v1410, 7
        %v1413 = vrot.slane %v1412, 4
        %v1415 = vshrl.u32 %v1386, 16
        %v1417 = vrot.slane %v1415, 7
        %v1418 = vshll.u32 %v1386, 16
        %v1420 = vor.u32 %v1417, %v1418
        %v1421 = vsel %vm1084, %v1413, %v1420
        %v1422 = vrot.slane %v1417, 4
        %v1424 = vshrl.u32 %v1387, 16
        %v1426 = vrot.slane %v1424, 7
        %v1427 = vshll.u32 %v1387, 16
        %v1429 = vor.u32 %v1426, %v1427
        %v1430 = vsel %vm1084, %v1422, %v1429
        %v1432 = vshrl.u32 %v1388, 16
        %v1434 = vrot.slane %v1432, 7
        %v1435 = vrot.slane %v1434, 4
        %v1437 = vshrl.u32 %v1389, 16
        %v1439 = vrot.slane %v1437, 7
        %v1440 = vshll.u32 %v1389, 16
        %v1442 = vor.u32 %v1439, %v1440
        %v1443 = vsel %vm1084, %v1435, %v1442
        %v1444 = vrot.slane %v1439, 4
        %v1446 = vshrl.u32 %v1390, 16
        %v1448 = vrot.slane %v1446, 7
        %v1449 = vshll.u32 %v1390, 16
        %v1451 = vor.u32 %v1448, %v1449
        %v1452 = vsel %vm1084, %v1444, %v1451
        %v1454 = vshrl.u32 %v1391, 16
        %v1456 = vrot.slane %v1454, 7
        %v1457 = vrot.slane %v1456, 4
        %v1459 = vshrl.u32 %v1392, 16
        %v1461 = vrot.slane %v1459, 7
        %v1462 = vshll.u32 %v1392, 16
        %v1464 = vor.u32 %v1461, %v1462
        %v1465 = vsel %vm1084, %v1457, %v1464
        %v1466 = vrot.slane %v1461, 4
        %v1468 = vshrl.u32 %v1393, 16
        %v1470 = vrot.slane %v1468, 7
        %v1471 = vshll.u32 %v1393, 16
        %v1473 = vor.u32 %v1470, %v1471
        %v1474 = vsel %vm1084, %v1466, %v1473
        %v1476 = vshrl.u32 %v1394, 16
        %v1478 = vrot.slane %v1476, 7
        %v1479 = vrot.slane %v1478, 4
        %v1481 = vshrl.u32 %v1395, 16
        %v1483 = vrot.slane %v1481, 7
        %v1484 = vshll.u32 %v1395, 16
        %v1486 = vor.u32 %v1483, %v1484
        %v1487 = vsel %vm1084, %v1479, %v1486
        %v1488 = vrot.slane %v1483, 4
        %v1490 = vshrl.u32 %v1396, 16
        %v1492 = vrot.slane %v1490, 7
        %v1493 = vshll.u32 %v1396, 16
        %v1495 = vor.u32 %v1492, %v1493
        %v1496 = vsel %vm1084, %v1488, %v1495
        %v1498 = vshrl.u32 %v1397, 16
        %v1500 = vrot.slane %v1498, 7
        %v1501 = vrot.slane %v1500, 4
        %v1503 = vshrl.u32 %v1398, 16
        %v1505 = vrot.slane %v1503, 7
        %v1506 = vshll.u32 %v1398, 16
        %v1508 = vor.u32 %v1505, %v1506
        %v1509 = vsel %vm1084, %v1501, %v1508
        %v1510 = vrot.slane %v1505, 4
        %v1512 = vshrl.u32 %v1399, 16
        %v1514 = vrot.slane %v1512, 7
        %v1515 = vshll.u32 %v1399, 16
        %v1517 = vor.u32 %v1514, %v1515
        %v1518 = vsel %vm1084, %v1510, %v1517
        %v1520 = vshrl.u32 %v1400, 16
        %v1522 = vrot.slane %v1520, 7
        %v1523 = vrot.slane %v1522, 4
        %v1525 = vshrl.u32 %v1401, 16
        %v1527 = vrot.slane %v1525, 7
        %v1528 = vshll.u32 %v1401, 16
        %v1530 = vor.u32 %v1527, %v1528
        %v1531 = vsel %vm1084, %v1523, %v1530
        %v1532 = vrot.slane %v1527, 4
        %v1534 = vshrl.u32 %v1402, 16
        %v1536 = vrot.slane %v1534, 7
        %v1537 = vshll.u32 %v1402, 16
        %v1539 = vor.u32 %v1536, %v1537
        %v1540 = vsel %vm1084, %v1532, %v1539
        %v1542 = vshrl.u32 %v1403, 16
        %v1544 = vrot.slane %v1542, 7
        %v1545 = vrot.slane %v1544, 4
        %v1547 = vshrl.u32 %v1404, 16
        %v1549 = vrot.slane %v1547, 7
        %v1550 = vshll.u32 %v1404, 16
        %v1552 = vor.u32 %v1549, %v1550
        %v1553 = vsel %vm1084, %v1545, %v1552
        %v1554 = vrot.slane %v1549, 4
        %v1556 = vshrl.u32 %v1405, 16
        %v1558 = vrot.slane %v1556, 7
        %v1559 = vshll.u32 %v1405, 16
        %v1561 = vor.u32 %v1558, %v1559
        %v1562 = vsel %vm1084, %v1554, %v1561
        %v1564 = vshrl.u32 %v1406, 16
        %v1566 = vrot.slane %v1564, 7
        %v1567 = vrot.slane %v1566, 4
        %v1569 = vshrl.u32 %v1407, 16
        %v1571 = vrot.slane %v1569, 7
        %v1572 = vshll.u32 %v1407, 16
        %v1574 = vor.u32 %v1571, %v1572
        %v1575 = vsel %vm1084, %v1567, %v1574
        %v1576 = vrot.slane %v1571, 4
        %v1578 = vshrl.u32 %v1408, 16
        %v1580 = vrot.slane %v1578, 7
        %v1581 = vshll.u32 %v1408, 16
        %v1583 = vor.u32 %v1580, %v1581
        %v1584 = vsel %vm1084, %v1576, %v1583
        %v1585 = vld [vmem:[%s1384 + $0x10] sm:$0x1]
        %v1586 = vld [vmem:[%s1384 + $0x24] sm:$0x1]
        %v1587 = vld [vmem:[%s1384 + $0x38] sm:$0x1]
        %v1588 = vld [vmem:[%s1384 + $0x4c] sm:$0x1]
        %v1589 = vld [vmem:[%s1384 + $0x60] sm:$0x1]
        %v1590 = vld [vmem:[%s1384 + $0x74] sm:$0x1]
        %v1591 = vld [vmem:[%s1384 + $0x88] sm:$0x1]
        %v1592 = vld [vmem:[%s1384 + $0x9c] sm:$0x1]
        %v1593 = vrot.slane %v1415, 4
        %v1594 = vrot.slane %v1418, 5
        %v1595 = vor.u32 %v1593, %v1594
        %v1596 = vrot.slane %v1595, 4
        %v1597 = vrot.slane %v1427, 5
        %v1598 = vsel %vm1271, %v1596, %v1597
        %v1599 = vrot.slane %v1424, 4
        %v1600 = vor.u32 %v1599, %v1597
        %v1601 = vrot.slane %v1600, 4
        %v1603 = vshll.u32 %v1585, 16
        %v1605 = vrot.slane %v1603, 5
        %v1606 = vsel %vm1271, %v1601, %v1605
        %v1607 = vrot.slane %v1437, 4
        %v1608 = vrot.slane %v1440, 5
        %v1609 = vor.u32 %v1607, %v1608
        %v1610 = vrot.slane %v1609, 4
        %v1611 = vrot.slane %v1449, 5
        %v1612 = vsel %vm1271, %v1610, %v1611
        %v1613 = vrot.slane %v1446, 4
        %v1614 = vor.u32 %v1613, %v1611
        %v1615 = vrot.slane %v1614, 4
        %v1617 = vshll.u32 %v1586, 16
        %v1619 = vrot.slane %v1617, 5
        %v1620 = vsel %vm1271, %v1615, %v1619
        %v1621 = vrot.slane %v1459, 4
        %v1622 = vrot.slane %v1462, 5
        %v1623 = vor.u32 %v1621, %v1622
        %v1624 = vrot.slane %v1623, 4
        %v1625 = vrot.slane %v1471, 5
        %v1626 = vsel %vm1271, %v1624, %v1625
        %v1627 = vrot.slane %v1468, 4
        %v1628 = vor.u32 %v1627, %v1625
        %v1629 = vrot.slane %v1628, 4
        %v1631 = vshll.u32 %v1587, 16
        %v1633 = vrot.slane %v1631, 5
        %v1634 = vsel %vm1271, %v1629, %v1633
        %v1635 = vrot.slane %v1481, 4
        %v1636 = vrot.slane %v1484, 5
        %v1637 = vor.u32 %v1635, %v1636
        %v1638 = vrot.slane %v1637, 4
        %v1639 = vrot.slane %v1493, 5
        %v1640 = vsel %vm1271, %v1638, %v1639
        %v1641 = vrot.slane %v1490, 4
        %v1642 = vor.u32 %v1641, %v1639
        %v1643 = vrot.slane %v1642, 4
        %v1645 = vshll.u32 %v1588, 16
        %v1647 = vrot.slane %v1645, 5
        %v1648 = vsel %vm1271, %v1643, %v1647
        %v1649 = vrot.slane %v1503, 4
        %v1650 = vrot.slane %v1506, 5
        %v1651 = vor.u32 %v1649, %v1650
        %v1652 = vrot.slane %v1651, 4
        %v1653 = vrot.slane %v1515, 5
        %v1654 = vsel %vm1271, %v1652, %v1653
        %v1655 = vrot.slane %v1512, 4
        %v1656 = vor.u32 %v1655, %v1653
        %v1657 = vrot.slane %v1656, 4
        %v1659 = vshll.u32 %v1589, 16
        %v1661 = vrot.slane %v1659, 5
        %v1662 = vsel %vm1271, %v1657, %v1661
        %v1663 = vrot.slane %v1525, 4
        %v1664 = vrot.slane %v1528, 5
        %v1665 = vor.u32 %v1663, %v1664
        %v1666 = vrot.slane %v1665, 4
        %v1667 = vrot.slane %v1537, 5
        %v1668 = vsel %vm1271, %v1666, %v1667
        %v1669 = vrot.slane %v1534, 4
        %v1670 = vor.u32 %v1669, %v1667
        %v1671 = vrot.slane %v1670, 4
        %v1673 = vshll.u32 %v1590, 16
        %v1675 = vrot.slane %v1673, 5
        %v1676 = vsel %vm1271, %v1671, %v1675
        %v1677 = vrot.slane %v1547, 4
        %v1678 = vrot.slane %v1550, 5
        %v1679 = vor.u32 %v1677, %v1678
        %v1680 = vrot.slane %v1679, 4
        %v1681 = vrot.slane %v1559, 5
        %v1682 = vsel %vm1271, %v1680, %v1681
        %v1683 = vrot.slane %v1556, 4
        %v1684 = vor.u32 %v1683, %v1681
        %v1685 = vrot.slane %v1684, 4
        %v1687 = vshll.u32 %v1591, 16
        %v1689 = vrot.slane %v1687, 5
        %v1690 = vsel %vm1271, %v1685, %v1689
        %v1691 = vrot.slane %v1569, 4
        %v1692 = vrot.slane %v1572, 5
        %v1693 = vor.u32 %v1691, %v1692
        %v1694 = vrot.slane %v1693, 4
        %v1695 = vrot.slane %v1581, 5
        %v1696 = vsel %vm1271, %v1694, %v1695
        %v1697 = vrot.slane %v1578, 4
        %v1698 = vor.u32 %v1697, %v1695
        %v1699 = vrot.slane %v1698, 4
        %v1701 = vshll.u32 %v1592, 16
        %v1703 = vrot.slane %v1701, 5
        %v1704 = vsel %vm1271, %v1699, %v1703
        %s1705 = scalar_lea.vmem [#allocation2], 40
        %v1706 = vld [vmem:[%s1705 + $0x4] sm:$0x8]
        %v1707 = vld [vmem:[%s1705 + $0x8] sm:$0xf]
        %v1708 = vld [vmem:[%s1705 + $0xc] sm:$0xf]
        %v1709 = vld [vmem:[%s1705 + $0x18] sm:$0x8]
        %v1710 = vld [vmem:[%s1705 + $0x1c] sm:$0xf]
        %v1711 = vld [vmem:[%s1705 + $0x20] sm:$0xf]
        %v1712 = vld [vmem:[%s1705 + $0x2c] sm:$0x8]
        %v1713 = vld [vmem:[%s1705 + $0x30] sm:$0xf]
        %v1714 = vld [vmem:[%s1705 + $0x34] sm:$0xf]
        %v1715 = vld [vmem:[%s1705 + $0x40] sm:$0x8]
        %v1716 = vld [vmem:[%s1705 + $0x44] sm:$0xf]
        %v1717 = vld [vmem:[%s1705 + $0x48] sm:$0xf]
        %v1718 = vld [vmem:[%s1705 + $0x54] sm:$0x8]
        %v1719 = vld [vmem:[%s1705 + $0x58] sm:$0xf]
        %v1720 = vld [vmem:[%s1705 + $0x5c] sm:$0xf]
        %v1721 = vld [vmem:[%s1705 + $0x68] sm:$0x8]
        %v1722 = vld [vmem:[%s1705 + $0x6c] sm:$0xf]
        %v1723 = vld [vmem:[%s1705 + $0x70] sm:$0xf]
        %v1724 = vld [vmem:[%s1705 + $0x7c] sm:$0x8]
        %v1725 = vld [vmem:[%s1705 + $0x80] sm:$0xf]
        %v1726 = vld [vmem:[%s1705 + $0x84] sm:$0xf]
        %v1727 = vld [vmem:[%s1705 + $0x90] sm:$0x8]
        %v1728 = vld [vmem:[%s1705 + $0x94] sm:$0xf]
        %v1729 = vld [vmem:[%s1705 + $0x98] sm:$0xf]
        %v1731 = vshrl.u32 %v1706, 16
        %v1733 = vrot.slane %v1731, 7
        %v1734 = vrot.slane %v1733, 4
        %v1736 = vshrl.u32 %v1707, 16
        %v1738 = vrot.slane %v1736, 7
        %v1739 = vshll.u32 %v1707, 16
        %v1741 = vor.u32 %v1738, %v1739
        %v1742 = vsel %vm1084, %v1734, %v1741
        %v1743 = vrot.slane %v1738, 4
        %v1745 = vshrl.u32 %v1708, 16
        %v1747 = vrot.slane %v1745, 7
        %v1748 = vshll.u32 %v1708, 16
        %v1750 = vor.u32 %v1747, %v1748
        %v1751 = vsel %vm1084, %v1743, %v1750
        %v1753 = vshrl.u32 %v1709, 16
        %v1755 = vrot.slane %v1753, 7
        %v1756 = vrot.slane %v1755, 4
        %v1758 = vshrl.u32 %v1710, 16
        %v1760 = vrot.slane %v1758, 7
        %v1761 = vshll.u32 %v1710, 16
        %v1763 = vor.u32 %v1760, %v1761
        %v1764 = vsel %vm1084, %v1756, %v1763
        %v1765 = vrot.slane %v1760, 4
        %v1767 = vshrl.u32 %v1711, 16
        %v1769 = vrot.slane %v1767, 7
        %v1770 = vshll.u32 %v1711, 16
        %v1772 = vor.u32 %v1769, %v1770
        %v1773 = vsel %vm1084, %v1765, %v1772
        %v1775 = vshrl.u32 %v1712, 16
        %v1777 = vrot.slane %v1775, 7
        %v1778 = vrot.slane %v1777, 4
        %v1780 = vshrl.u32 %v1713, 16
        %v1782 = vrot.slane %v1780, 7
        %v1783 = vshll.u32 %v1713, 16
        %v1785 = vor.u32 %v1782, %v1783
        %v1786 = vsel %vm1084, %v1778, %v1785
        %v1787 = vrot.slane %v1782, 4
        %v1789 = vshrl.u32 %v1714, 16
        %v1791 = vrot.slane %v1789, 7
        %v1792 = vshll.u32 %v1714, 16
        %v1794 = vor.u32 %v1791, %v1792
        %v1795 = vsel %vm1084, %v1787, %v1794
        %v1797 = vshrl.u32 %v1715, 16
        %v1799 = vrot.slane %v1797, 7
        %v1800 = vrot.slane %v1799, 4
        %v1802 = vshrl.u32 %v1716, 16
        %v1804 = vrot.slane %v1802, 7
        %v1805 = vshll.u32 %v1716, 16
        %v1807 = vor.u32 %v1804, %v1805
        %v1808 = vsel %vm1084, %v1800, %v1807
        %v1809 = vrot.slane %v1804, 4
        %v1811 = vshrl.u32 %v1717, 16
        %v1813 = vrot.slane %v1811, 7
        %v1814 = vshll.u32 %v1717, 16
        %v1816 = vor.u32 %v1813, %v1814
        %v1817 = vsel %vm1084, %v1809, %v1816
        %v1819 = vshrl.u32 %v1718, 16
        %v1821 = vrot.slane %v1819, 7
        %v1822 = vrot.slane %v1821, 4
        %v1824 = vshrl.u32 %v1719, 16
        %v1826 = vrot.slane %v1824, 7
        %v1827 = vshll.u32 %v1719, 16
        %v1829 = vor.u32 %v1826, %v1827
        %v1830 = vsel %vm1084, %v1822, %v1829
        %v1831 = vrot.slane %v1826, 4
        %v1833 = vshrl.u32 %v1720, 16
        %v1835 = vrot.slane %v1833, 7
        %v1836 = vshll.u32 %v1720, 16
        %v1838 = vor.u32 %v1835, %v1836
        %v1839 = vsel %vm1084, %v1831, %v1838
        %v1841 = vshrl.u32 %v1721, 16
        %v1843 = vrot.slane %v1841, 7
        %v1844 = vrot.slane %v1843, 4
        %v1846 = vshrl.u32 %v1722, 16
        %v1848 = vrot.slane %v1846, 7
        %v1849 = vshll.u32 %v1722, 16
        %v1851 = vor.u32 %v1848, %v1849
        %v1852 = vsel %vm1084, %v1844, %v1851
        %v1853 = vrot.slane %v1848, 4
        %v1855 = vshrl.u32 %v1723, 16
        %v1857 = vrot.slane %v1855, 7
        %v1858 = vshll.u32 %v1723, 16
        %v1860 = vor.u32 %v1857, %v1858
        %v1861 = vsel %vm1084, %v1853, %v1860
        %v1863 = vshrl.u32 %v1724, 16
        %v1865 = vrot.slane %v1863, 7
        %v1866 = vrot.slane %v1865, 4
        %v1868 = vshrl.u32 %v1725, 16
        %v1870 = vrot.slane %v1868, 7
        %v1871 = vshll.u32 %v1725, 16
        %v1873 = vor.u32 %v1870, %v1871
        %v1874 = vsel %vm1084, %v1866, %v1873
        %v1875 = vrot.slane %v1870, 4
        %v1877 = vshrl.u32 %v1726, 16
        %v1879 = vrot.slane %v1877, 7
        %v1880 = vshll.u32 %v1726, 16
        %v1882 = vor.u32 %v1879, %v1880
        %v1883 = vsel %vm1084, %v1875, %v1882
        %v1885 = vshrl.u32 %v1727, 16
        %v1887 = vrot.slane %v1885, 7
        %v1888 = vrot.slane %v1887, 4
        %v1890 = vshrl.u32 %v1728, 16
        %v1892 = vrot.slane %v1890, 7
        %v1893 = vshll.u32 %v1728, 16
        %v1895 = vor.u32 %v1892, %v1893
        %v1896 = vsel %vm1084, %v1888, %v1895
        %v1897 = vrot.slane %v1892, 4
        %v1899 = vshrl.u32 %v1729, 16
        %v1901 = vrot.slane %v1899, 7
        %v1902 = vshll.u32 %v1729, 16
        %v1904 = vor.u32 %v1901, %v1902
        %v1905 = vsel %vm1084, %v1897, %v1904
        %v1906 = vld [vmem:[%s1705 + $0x10] sm:$0x1]
        %v1907 = vld [vmem:[%s1705 + $0x24] sm:$0x1]
        %v1908 = vld [vmem:[%s1705 + $0x38] sm:$0x1]
        %v1909 = vld [vmem:[%s1705 + $0x4c] sm:$0x1]
        %v1910 = vld [vmem:[%s1705 + $0x60] sm:$0x1]
        %v1911 = vld [vmem:[%s1705 + $0x74] sm:$0x1]
        %v1912 = vld [vmem:[%s1705 + $0x88] sm:$0x1]
        %v1913 = vld [vmem:[%s1705 + $0x9c] sm:$0x1]
        %v1914 = vrot.slane %v1736, 4
        %v1915 = vrot.slane %v1739, 5
        %v1916 = vor.u32 %v1914, %v1915
        %v1917 = vrot.slane %v1916, 4
        %v1918 = vrot.slane %v1748, 5
        %v1919 = vsel %vm1271, %v1917, %v1918
        %v1920 = vrot.slane %v1745, 4
        %v1921 = vor.u32 %v1920, %v1918
        %v1922 = vrot.slane %v1921, 4
        %v1924 = vshll.u32 %v1906, 16
        %v1926 = vrot.slane %v1924, 5
        %v1927 = vsel %vm1271, %v1922, %v1926
        %v1928 = vrot.slane %v1758, 4
        %v1929 = vrot.slane %v1761, 5
        %v1930 = vor.u32 %v1928, %v1929
        %v1931 = vrot.slane %v1930, 4
        %v1932 = vrot.slane %v1770, 5
        %v1933 = vsel %vm1271, %v1931, %v1932
        %v1934 = vrot.slane %v1767, 4
        %v1935 = vor.u32 %v1934, %v1932
        %v1936 = vrot.slane %v1935, 4
        %v1938 = vshll.u32 %v1907, 16
        %v1940 = vrot.slane %v1938, 5
        %v1941 = vsel %vm1271, %v1936, %v1940
        %v1942 = vrot.slane %v1780, 4
        %v1943 = vrot.slane %v1783, 5
        %v1944 = vor.u32 %v1942, %v1943
        %v1945 = vrot.slane %v1944, 4
        %v1946 = vrot.slane %v1792, 5
        %v1947 = vsel %vm1271, %v1945, %v1946
        %v1948 = vrot.slane %v1789, 4
        %v1949 = vor.u32 %v1948, %v1946
        %v1950 = vrot.slane %v1949, 4
        %v1952 = vshll.u32 %v1908, 16
        %v1954 = vrot.slane %v1952, 5
        %v1955 = vsel %vm1271, %v1950, %v1954
        %v1956 = vrot.slane %v1802, 4
        %v1957 = vrot.slane %v1805, 5
        %v1958 = vor.u32 %v1956, %v1957
        %v1959 = vrot.slane %v1958, 4
        %v1960 = vrot.slane %v1814, 5
        %v1961 = vsel %vm1271, %v1959, %v1960
        %v1962 = vrot.slane %v1811, 4
        %v1963 = vor.u32 %v1962, %v1960
        %v1964 = vrot.slane %v1963, 4
        %v1966 = vshll.u32 %v1909, 16
        %v1968 = vrot.slane %v1966, 5
        %v1969 = vsel %vm1271, %v1964, %v1968
        %v1970 = vrot.slane %v1824, 4
        %v1971 = vrot.slane %v1827, 5
        %v1972 = vor.u32 %v1970, %v1971
        %v1973 = vrot.slane %v1972, 4
        %v1974 = vrot.slane %v1836, 5
        %v1975 = vsel %vm1271, %v1973, %v1974
        %v1976 = vrot.slane %v1833, 4
        %v1977 = vor.u32 %v1976, %v1974
        %v1978 = vrot.slane %v1977, 4
        %v1980 = vshll.u32 %v1910, 16
        %v1982 = vrot.slane %v1980, 5
        %v1983 = vsel %vm1271, %v1978, %v1982
        %v1984 = vrot.slane %v1846, 4
        %v1985 = vrot.slane %v1849, 5
        %v1986 = vor.u32 %v1984, %v1985
        %v1987 = vrot.slane %v1986, 4
        %v1988 = vrot.slane %v1858, 5
        %v1989 = vsel %vm1271, %v1987, %v1988
        %v1990 = vrot.slane %v1855, 4
        %v1991 = vor.u32 %v1990, %v1988
        %v1992 = vrot.slane %v1991, 4
        %v1994 = vshll.u32 %v1911, 16
        %v1996 = vrot.slane %v1994, 5
        %v1997 = vsel %vm1271, %v1992, %v1996
        %v1998 = vrot.slane %v1868, 4
        %v1999 = vrot.slane %v1871, 5
        %v2000 = vor.u32 %v1998, %v1999
        %v2001 = vrot.slane %v2000, 4
        %v2002 = vrot.slane %v1880, 5
        %v2003 = vsel %vm1271, %v2001, %v2002
        %v2004 = vrot.slane %v1877, 4
        %v2005 = vor.u32 %v2004, %v2002
        %v2006 = vrot.slane %v2005, 4
        %v2008 = vshll.u32 %v1912, 16
        %v2010 = vrot.slane %v2008, 5
        %v2011 = vsel %vm1271, %v2006, %v2010
        %v2012 = vrot.slane %v1890, 4
        %v2013 = vrot.slane %v1893, 5
        %v2014 = vor.u32 %v2012, %v2013
        %v2015 = vrot.slane %v2014, 4
        %v2016 = vrot.slane %v1902, 5
        %v2017 = vsel %vm1271, %v2015, %v2016
        %v2018 = vrot.slane %v1899, 4
        %v2019 = vor.u32 %v2018, %v2016
        %v2020 = vrot.slane %v2019, 4
        %v2022 = vshll.u32 %v1913, 16
        %v2024 = vrot.slane %v2022, 5
        %v2025 = vsel %vm1271, %v2020, %v2024
        %v2026 = vunpack.c.l.b16 %v1097
        %v2027 = vunpack.c.l.b16 %v1106
        %v2028 = vunpack.c.l.b16 %v1119
        %v2029 = vunpack.c.l.b16 %v1128
        %v2030 = vunpack.c.l.b16 %v1141
        %v2031 = vunpack.c.l.b16 %v1150
        %v2032 = vunpack.c.l.b16 %v1163
        %v2033 = vunpack.c.l.b16 %v1172
        %v2034 = vunpack.c.l.b16 %v1185
        %v2035 = vunpack.c.l.b16 %v1194
        %v2036 = vunpack.c.l.b16 %v1207
        %v2037 = vunpack.c.l.b16 %v1216
        %v2038 = vunpack.c.l.b16 %v1229
        %v2039 = vunpack.c.l.b16 %v1238
        %v2040 = vunpack.c.l.b16 %v1251
        %v2041 = vunpack.c.l.b16 %v1260
        %v2042 = vpack.c.b16 %v2027, %v2026
        %v2043 = vpack.c.b16 %v2029, %v2028
        %v2044 = vpack.c.b16 %v2031, %v2030
        %v2045 = vpack.c.b16 %v2033, %v2032
        %v2046 = vpack.c.b16 %v2035, %v2034
        %v2047 = vpack.c.b16 %v2037, %v2036
        %v2048 = vpack.c.b16 %v2039, %v2038
        %v2049 = vpack.c.b16 %v2041, %v2040
        %v2074 = vunpack.c.l.b16 %v1060
        %v2075 = vunpack.c.l.b16 %v1061
        %v2076 = vunpack.c.l.b16 %v1063
        %v2077 = vunpack.c.l.b16 %v1064
        %v2078 = vunpack.c.l.b16 %v1066
        %v2079 = vunpack.c.l.b16 %v1067
        %v2080 = vunpack.c.l.b16 %v1069
        %v2081 = vunpack.c.l.b16 %v1070
        %v2082 = vunpack.c.l.b16 %v1072
        %v2083 = vunpack.c.l.b16 %v1073
        %v2084 = vunpack.c.l.b16 %v1075
        %v2085 = vunpack.c.l.b16 %v1076
        %v2086 = vunpack.c.l.b16 %v1078
        %v2087 = vunpack.c.l.b16 %v1079
        %v2088 = vunpack.c.l.b16 %v1081
        %v2089 = vunpack.c.l.b16 %v1082
        %v2090 = vpack.c.b16 %v2075, %v2074
        %v2091 = vpack.c.b16 %v2077, %v2076
        %v2092 = vpack.c.b16 %v2079, %v2078
        %v2093 = vpack.c.b16 %v2081, %v2080
        %v2094 = vpack.c.b16 %v2083, %v2082
        %v2095 = vpack.c.b16 %v2085, %v2084
        %v2096 = vpack.c.b16 %v2087, %v2086
        %v2097 = vpack.c.b16 %v2089, %v2088
        %v2106 = vunpack.c.l.b16 %v1277
        %v2107 = vunpack.c.l.b16 %v1285
        %v2108 = vunpack.c.l.b16 %v1291
        %v2109 = vunpack.c.l.b16 %v1299
        %v2110 = vunpack.c.l.b16 %v1305
        %v2111 = vunpack.c.l.b16 %v1313
        %v2112 = vunpack.c.l.b16 %v1319
        %v2113 = vunpack.c.l.b16 %v1327
        %v2114 = vunpack.c.l.b16 %v1333
        %v2115 = vunpack.c.l.b16 %v1341
        %v2116 = vunpack.c.l.b16 %v1347
        %v2117 = vunpack.c.l.b16 %v1355
        %v2118 = vunpack.c.l.b16 %v1361
        %v2119 = vunpack.c.l.b16 %v1369
        %v2120 = vunpack.c.l.b16 %v1375
        %v2121 = vunpack.c.l.b16 %v1383
        %v2122 = vpack.c.b16 %v2107, %v2106
        %v2123 = vpack.c.b16 %v2109, %v2108
        %v2124 = vpack.c.b16 %v2111, %v2110
        %v2125 = vpack.c.b16 %v2113, %v2112
        %v2126 = vpack.c.b16 %v2115, %v2114
        %v2127 = vpack.c.b16 %v2117, %v2116
        %v2128 = vpack.c.b16 %v2119, %v2118
        %v2129 = vpack.c.b16 %v2121, %v2120
        %v2138 = vunpack.c.l.b16 %v1421
        %v2139 = vunpack.c.l.b16 %v1430
        %v2140 = vunpack.c.l.b16 %v1443
        %v2141 = vunpack.c.l.b16 %v1452
        %v2142 = vunpack.c.l.b16 %v1465
        %v2143 = vunpack.c.l.b16 %v1474
        %v2144 = vunpack.c.l.b16 %v1487
        %v2145 = vunpack.c.l.b16 %v1496
        %v2146 = vunpack.c.l.b16 %v1509
        %v2147 = vunpack.c.l.b16 %v1518
        %v2148 = vunpack.c.l.b16 %v1531
        %v2149 = vunpack.c.l.b16 %v1540
        %v2150 = vunpack.c.l.b16 %v1553
        %v2151 = vunpack.c.l.b16 %v1562
        %v2152 = vunpack.c.l.b16 %v1575
        %v2153 = vunpack.c.l.b16 %v1584
        %v2154 = vpack.c.b16 %v2139, %v2138
        %v2155 = vpack.c.b16 %v2141, %v2140
        %v2156 = vpack.c.b16 %v2143, %v2142
        %v2157 = vpack.c.b16 %v2145, %v2144
        %v2158 = vpack.c.b16 %v2147, %v2146
        %v2159 = vpack.c.b16 %v2149, %v2148
        %v2160 = vpack.c.b16 %v2151, %v2150
        %v2161 = vpack.c.b16 %v2153, %v2152
        %v2186 = vunpack.c.l.b16 %v1386
        %v2187 = vunpack.c.l.b16 %v1387
        %v2188 = vunpack.c.l.b16 %v1389
        %v2189 = vunpack.c.l.b16 %v1390
        %v2190 = vunpack.c.l.b16 %v1392
        %v2191 = vunpack.c.l.b16 %v1393
        %v2192 = vunpack.c.l.b16 %v1395
        %v2193 = vunpack.c.l.b16 %v1396
        %v2194 = vunpack.c.l.b16 %v1398
        %v2195 = vunpack.c.l.b16 %v1399
        %v2196 = vunpack.c.l.b16 %v1401
        %v2197 = vunpack.c.l.b16 %v1402
        %v2198 = vunpack.c.l.b16 %v1404
        %v2199 = vunpack.c.l.b16 %v1405
        %v2200 = vunpack.c.l.b16 %v1407
        %v2201 = vunpack.c.l.b16 %v1408
        %v2202 = vpack.c.b16 %v2187, %v2186
        %v2203 = vpack.c.b16 %v2189, %v2188
        %v2204 = vpack.c.b16 %v2191, %v2190
        %v2205 = vpack.c.b16 %v2193, %v2192
        %v2206 = vpack.c.b16 %v2195, %v2194
        %v2207 = vpack.c.b16 %v2197, %v2196
        %v2208 = vpack.c.b16 %v2199, %v2198
        %v2209 = vpack.c.b16 %v2201, %v2200
        %v2218 = vunpack.c.l.b16 %v1598
        %v2219 = vunpack.c.l.b16 %v1606
        %v2220 = vunpack.c.l.b16 %v1612
        %v2221 = vunpack.c.l.b16 %v1620
        %v2222 = vunpack.c.l.b16 %v1626
        %v2223 = vunpack.c.l.b16 %v1634
        %v2224 = vunpack.c.l.b16 %v1640
        %v2225 = vunpack.c.l.b16 %v1648
        %v2226 = vunpack.c.l.b16 %v1654
        %v2227 = vunpack.c.l.b16 %v1662
        %v2228 = vunpack.c.l.b16 %v1668
        %v2229 = vunpack.c.l.b16 %v1676
        %v2230 = vunpack.c.l.b16 %v1682
        %v2231 = vunpack.c.l.b16 %v1690
        %v2232 = vunpack.c.l.b16 %v1696
        %v2233 = vunpack.c.l.b16 %v1704
        %v2234 = vpack.c.b16 %v2219, %v2218
        %v2235 = vpack.c.b16 %v2221, %v2220
        %v2236 = vpack.c.b16 %v2223, %v2222
        %v2237 = vpack.c.b16 %v2225, %v2224
        %v2238 = vpack.c.b16 %v2227, %v2226
        %v2239 = vpack.c.b16 %v2229, %v2228
        %v2240 = vpack.c.b16 %v2231, %v2230
        %v2241 = vpack.c.b16 %v2233, %v2232
        %v2250 = vunpack.c.l.b16 %v1742
        %v2251 = vunpack.c.l.b16 %v1751
        %v2252 = vunpack.c.l.b16 %v1764
        %v2253 = vunpack.c.l.b16 %v1773
        %v2254 = vunpack.c.l.b16 %v1786
        %v2255 = vunpack.c.l.b16 %v1795
        %v2256 = vunpack.c.l.b16 %v1808
        %v2257 = vunpack.c.l.b16 %v1817
        %v2258 = vunpack.c.l.b16 %v1830
        %v2259 = vunpack.c.l.b16 %v1839
        %v2260 = vunpack.c.l.b16 %v1852
        %v2261 = vunpack.c.l.b16 %v1861
        %v2262 = vunpack.c.l.b16 %v1874
        %v2263 = vunpack.c.l.b16 %v1883
        %v2264 = vunpack.c.l.b16 %v1896
        %v2265 = vunpack.c.l.b16 %v1905
        %v2266 = vpack.c.b16 %v2251, %v2250
        %v2267 = vpack.c.b16 %v2253, %v2252
        %v2268 = vpack.c.b16 %v2255, %v2254
        %v2269 = vpack.c.b16 %v2257, %v2256
        %v2270 = vpack.c.b16 %v2259, %v2258
        %v2271 = vpack.c.b16 %v2261, %v2260
        %v2272 = vpack.c.b16 %v2263, %v2262
        %v2273 = vpack.c.b16 %v2265, %v2264
        %v2298 = vunpack.c.l.b16 %v1707
        %v2299 = vunpack.c.l.b16 %v1708
        %v2300 = vunpack.c.l.b16 %v1710
        %v2301 = vunpack.c.l.b16 %v1711
        %v2302 = vunpack.c.l.b16 %v1713
        %v2303 = vunpack.c.l.b16 %v1714
        %v2304 = vunpack.c.l.b16 %v1716
        %v2305 = vunpack.c.l.b16 %v1717
        %v2306 = vunpack.c.l.b16 %v1719
        %v2307 = vunpack.c.l.b16 %v1720
        %v2308 = vunpack.c.l.b16 %v1722
        %v2309 = vunpack.c.l.b16 %v1723
        %v2310 = vunpack.c.l.b16 %v1725
        %v2311 = vunpack.c.l.b16 %v1726
        %v2312 = vunpack.c.l.b16 %v1728
        %v2313 = vunpack.c.l.b16 %v1729
        %v2314 = vpack.c.b16 %v2299, %v2298
        %v2315 = vpack.c.b16 %v2301, %v2300
        %v2316 = vpack.c.b16 %v2303, %v2302
        %v2317 = vpack.c.b16 %v2305, %v2304
        %v2318 = vpack.c.b16 %v2307, %v2306
        %v2319 = vpack.c.b16 %v2309, %v2308
        %v2320 = vpack.c.b16 %v2311, %v2310
        %v2321 = vpack.c.b16 %v2313, %v2312
        %v2330 = vunpack.c.l.b16 %v1919
        %v2331 = vunpack.c.l.b16 %v1927
        %v2332 = vunpack.c.l.b16 %v1933
        %v2333 = vunpack.c.l.b16 %v1941
        %v2334 = vunpack.c.l.b16 %v1947
        %v2335 = vunpack.c.l.b16 %v1955
        %v2336 = vunpack.c.l.b16 %v1961
        %v2337 = vunpack.c.l.b16 %v1969
        %v2338 = vunpack.c.l.b16 %v1975
        %v2339 = vunpack.c.l.b16 %v1983
        %v2340 = vunpack.c.l.b16 %v1989
        %v2341 = vunpack.c.l.b16 %v1997
        %v2342 = vunpack.c.l.b16 %v2003
        %v2343 = vunpack.c.l.b16 %v2011
        %v2344 = vunpack.c.l.b16 %v2017
        %v2345 = vunpack.c.l.b16 %v2025
        %v2346 = vpack.c.b16 %v2331, %v2330
        %v2347 = vpack.c.b16 %v2333, %v2332
        %v2348 = vpack.c.b16 %v2335, %v2334
        %v2349 = vpack.c.b16 %v2337, %v2336
        %v2350 = vpack.c.b16 %v2339, %v2338
        %v2351 = vpack.c.b16 %v2341, %v2340
        %v2352 = vpack.c.b16 %v2343, %v2342
        %v2353 = vpack.c.b16 %v2345, %v2344
        %v2362 = vld [vmem:[#allocation8] sm:$0xf]
        %v2363 = vld [vmem:[#allocation8 + $0x4] sm:$0xf]
        %v2364 = vld [vmem:[#allocation8 + $0x8] sm:$0xf]
        %v2365 = vld [vmem:[#allocation8 + $0xc] sm:$0xf]
        %v2366 = vld [vmem:[#allocation8 + $0x10] sm:$0xf]
        %v2367 = vld [vmem:[#allocation8 + $0x14] sm:$0xf]
        %v2368 = vld [vmem:[#allocation8 + $0x18] sm:$0xf]
        %v2369 = vld [vmem:[#allocation8 + $0x1c] sm:$0xf]
        %v2370 = vld [vmem:[#allocation8 + $0x20] sm:$0xf]
        %v2371 = vld [vmem:[#allocation8 + $0x24] sm:$0xf]
        %v2372 = vld [vmem:[#allocation8 + $0x28] sm:$0xf]
        %v2373 = vld [vmem:[#allocation8 + $0x2c] sm:$0xf]
        %v2374 = vld [vmem:[#allocation8 + $0x30] sm:$0xf]
        %v2375 = vld [vmem:[#allocation8 + $0x34] sm:$0xf]
        %v2376 = vld [vmem:[#allocation8 + $0x38] sm:$0xf]
        %v2377 = vld [vmem:[#allocation8 + $0x3c] sm:$0xf]
        %v2378 = vld [vmem:[#allocation8 + $0x40] sm:$0xf]
        %v2379 = vld [vmem:[#allocation8 + $0x44] sm:$0xf]
        %v2380 = vld [vmem:[#allocation8 + $0x48] sm:$0xf]
        %v2381 = vld [vmem:[#allocation8 + $0x4c] sm:$0xf]
        %v2382 = vld [vmem:[#allocation8 + $0x50] sm:$0xf]
        %v2383 = vld [vmem:[#allocation8 + $0x54] sm:$0xf]
        %v2384 = vld [vmem:[#allocation8 + $0x58] sm:$0xf]
        %v2385 = vld [vmem:[#allocation8 + $0x5c] sm:$0xf]
        %v2386 = vld [vmem:[#allocation8 + $0x60] sm:$0xf]
        %v2387 = vld [vmem:[#allocation8 + $0x64] sm:$0xf]
        %v2388 = vld [vmem:[#allocation8 + $0x68] sm:$0xf]
        %v2389 = vld [vmem:[#allocation8 + $0x6c] sm:$0xf]
        %v2390 = vld [vmem:[#allocation8 + $0x70] sm:$0xf]
        %v2391 = vld [vmem:[#allocation8 + $0x74] sm:$0xf]
        %v2392 = vld [vmem:[#allocation8 + $0x78] sm:$0xf]
        %v2393 = vld [vmem:[#allocation8 + $0x7c] sm:$0xf]
        %v2394 = vld [vmem:[#allocation8 + $0x80] sm:$0xf]
        %v2395 = vld [vmem:[#allocation8 + $0x84] sm:$0xf]
        %v2396 = vld [vmem:[#allocation8 + $0x88] sm:$0xf]
        %v2397 = vld [vmem:[#allocation8 + $0x8c] sm:$0xf]
        %v2398 = vld [vmem:[#allocation8 + $0x90] sm:$0xf]
        %v2399 = vld [vmem:[#allocation8 + $0x94] sm:$0xf]
        %v2400 = vld [vmem:[#allocation8 + $0x98] sm:$0xf]
        %v2401 = vld [vmem:[#allocation8 + $0x9c] sm:$0xf]
        %v2402 = vld [vmem:[#allocation8 + $0xa0] sm:$0xf]
        %v2403 = vld [vmem:[#allocation8 + $0xa4] sm:$0xf]
        %v2404 = vld [vmem:[#allocation8 + $0xa8] sm:$0xf]
        %v2405 = vld [vmem:[#allocation8 + $0xac] sm:$0xf]
        %v2406 = vld [vmem:[#allocation8 + $0xb0] sm:$0xf]
        %v2407 = vld [vmem:[#allocation8 + $0xb4] sm:$0xf]
        %v2408 = vld [vmem:[#allocation8 + $0xb8] sm:$0xf]
        %v2409 = vld [vmem:[#allocation8 + $0xbc] sm:$0xf]
        %v2410 = vld [vmem:[#allocation8 + $0xc0] sm:$0xf]
        %v2411 = vld [vmem:[#allocation8 + $0xc4] sm:$0xf]
        %v2412 = vld [vmem:[#allocation8 + $0xc8] sm:$0xf]
        %v2413 = vld [vmem:[#allocation8 + $0xcc] sm:$0xf]
        %v2414 = vld [vmem:[#allocation8 + $0xd0] sm:$0xf]
        %v2415 = vld [vmem:[#allocation8 + $0xd4] sm:$0xf]
        %v2416 = vld [vmem:[#allocation8 + $0xd8] sm:$0xf]
        %v2417 = vld [vmem:[#allocation8 + $0xdc] sm:$0xf]
        %v2418 = vld [vmem:[#allocation8 + $0xe0] sm:$0xf]
        %v2419 = vld [vmem:[#allocation8 + $0xe4] sm:$0xf]
        %v2420 = vld [vmem:[#allocation8 + $0xe8] sm:$0xf]
        %v2421 = vld [vmem:[#allocation8 + $0xec] sm:$0xf]
        %v2422 = vld [vmem:[#allocation8 + $0xf0] sm:$0xf]
        %v2423 = vld [vmem:[#allocation8 + $0xf4] sm:$0xf]
        %v2424 = vld [vmem:[#allocation8 + $0xf8] sm:$0xf]
        %v2425 = vld [vmem:[#allocation8 + $0xfc] sm:$0xf]
        %v2426 = vld [vmem:[#allocation8 + $0x100] sm:$0xf]
        %v2427 = vld [vmem:[#allocation8 + $0x104] sm:$0xf]
        %v2428 = vld [vmem:[#allocation8 + $0x108] sm:$0xf]
        %v2429 = vld [vmem:[#allocation8 + $0x10c] sm:$0xf]
        %v2430 = vld [vmem:[#allocation8 + $0x110] sm:$0xf]
        %v2431 = vld [vmem:[#allocation8 + $0x114] sm:$0xf]
        %v2432 = vld [vmem:[#allocation8 + $0x118] sm:$0xf]
        %v2433 = vld [vmem:[#allocation8 + $0x11c] sm:$0xf]
        %v2434 = vld [vmem:[#allocation8 + $0x120] sm:$0xf]
        %v2435 = vld [vmem:[#allocation8 + $0x124] sm:$0xf]
        %v2436 = vld [vmem:[#allocation8 + $0x128] sm:$0xf]
        %v2437 = vld [vmem:[#allocation8 + $0x12c] sm:$0xf]
        %v2438 = vld [vmem:[#allocation8 + $0x130] sm:$0xf]
        %v2439 = vld [vmem:[#allocation8 + $0x134] sm:$0xf]
        %v2440 = vld [vmem:[#allocation8 + $0x138] sm:$0xf]
        %v2441 = vld [vmem:[#allocation8 + $0x13c] sm:$0xf]
        %v2442 = vld [vmem:[#allocation8 + $0x140] sm:$0xf]
        %v2443 = vld [vmem:[#allocation8 + $0x144] sm:$0xf]
        %v2444 = vld [vmem:[#allocation8 + $0x148] sm:$0xf]
        %v2445 = vld [vmem:[#allocation8 + $0x14c] sm:$0xf]
        %v2446 = vld [vmem:[#allocation8 + $0x150] sm:$0xf]
        %v2447 = vld [vmem:[#allocation8 + $0x154] sm:$0xf]
        %v2448 = vld [vmem:[#allocation8 + $0x158] sm:$0xf]
        %v2449 = vld [vmem:[#allocation8 + $0x15c] sm:$0xf]
        %v2450 = vld [vmem:[#allocation8 + $0x160] sm:$0xf]
        %v2451 = vld [vmem:[#allocation8 + $0x164] sm:$0xf]
        %v2452 = vld [vmem:[#allocation8 + $0x168] sm:$0xf]
        %v2453 = vld [vmem:[#allocation8 + $0x16c] sm:$0xf]
        %v2454 = vld [vmem:[#allocation8 + $0x170] sm:$0xf]
        %v2455 = vld [vmem:[#allocation8 + $0x174] sm:$0xf]
        %v2456 = vld [vmem:[#allocation8 + $0x178] sm:$0xf]
        %v2457 = vld [vmem:[#allocation8 + $0x17c] sm:$0xf]
        %v2458 = vld [vmem:[#allocation8 + $0x180] sm:$0xf]
        %v2459 = vld [vmem:[#allocation8 + $0x184] sm:$0xf]
        %v2460 = vld [vmem:[#allocation8 + $0x188] sm:$0xf]
        %v2461 = vld [vmem:[#allocation8 + $0x18c] sm:$0xf]
        %v2462 = vld [vmem:[#allocation8 + $0x190] sm:$0xf]
        %v2463 = vld [vmem:[#allocation8 + $0x194] sm:$0xf]
        %v2464 = vld [vmem:[#allocation8 + $0x198] sm:$0xf]
        %v2465 = vld [vmem:[#allocation8 + $0x19c] sm:$0xf]
        %v2466 = vld [vmem:[#allocation8 + $0x1a0] sm:$0xf]
        %v2467 = vld [vmem:[#allocation8 + $0x1a4] sm:$0xf]
        %v2468 = vld [vmem:[#allocation8 + $0x1a8] sm:$0xf]
        %v2469 = vld [vmem:[#allocation8 + $0x1ac] sm:$0xf]
        %v2470 = vld [vmem:[#allocation8 + $0x1b0] sm:$0xf]
        %v2471 = vld [vmem:[#allocation8 + $0x1b4] sm:$0xf]
        %v2472 = vld [vmem:[#allocation8 + $0x1b8] sm:$0xf]
        %v2473 = vld [vmem:[#allocation8 + $0x1bc] sm:$0xf]
        %v2474 = vld [vmem:[#allocation8 + $0x1c0] sm:$0xf]
        %v2475 = vld [vmem:[#allocation8 + $0x1c4] sm:$0xf]
        %v2476 = vld [vmem:[#allocation8 + $0x1c8] sm:$0xf]
        %v2477 = vld [vmem:[#allocation8 + $0x1cc] sm:$0xf]
        %v2478 = vld [vmem:[#allocation8 + $0x1d0] sm:$0xf]
        %v2479 = vld [vmem:[#allocation8 + $0x1d4] sm:$0xf]
        %v2480 = vld [vmem:[#allocation8 + $0x1d8] sm:$0xf]
        %v2481 = vld [vmem:[#allocation8 + $0x1dc] sm:$0xf]
        %v2482 = vld [vmem:[#allocation8 + $0x1e0] sm:$0xf]
        %v2483 = vld [vmem:[#allocation8 + $0x1e4] sm:$0xf]
        %v2484 = vld [vmem:[#allocation8 + $0x1e8] sm:$0xf]
        %v2485 = vld [vmem:[#allocation8 + $0x1ec] sm:$0xf]
        %v2486 = vld [vmem:[#allocation8 + $0x1f0] sm:$0xf]
        %v2487 = vld [vmem:[#allocation8 + $0x1f4] sm:$0xf]
        %v2488 = vld [vmem:[#allocation8 + $0x1f8] sm:$0xf]
        %v2489 = vld [vmem:[#allocation8 + $0x1fc] sm:$0xf]
        %v2490 = vld [vmem:[#allocation8 + $0x200] sm:$0xf]
        %v2491 = vld [vmem:[#allocation8 + $0x204] sm:$0xf]
        %v2492 = vld [vmem:[#allocation8 + $0x208] sm:$0xf]
        %v2493 = vld [vmem:[#allocation8 + $0x20c] sm:$0xf]
        %v2494 = vld [vmem:[#allocation8 + $0x210] sm:$0xf]
        %v2495 = vld [vmem:[#allocation8 + $0x214] sm:$0xf]
        %v2496 = vld [vmem:[#allocation8 + $0x218] sm:$0xf]
        %v2497 = vld [vmem:[#allocation8 + $0x21c] sm:$0xf]
        %v2498 = vld [vmem:[#allocation8 + $0x220] sm:$0xf]
        %v2499 = vld [vmem:[#allocation8 + $0x224] sm:$0xf]
        %v2500 = vld [vmem:[#allocation8 + $0x228] sm:$0xf]
        %v2501 = vld [vmem:[#allocation8 + $0x22c] sm:$0xf]
        %v2502 = vld [vmem:[#allocation8 + $0x230] sm:$0xf]
        %v2503 = vld [vmem:[#allocation8 + $0x234] sm:$0xf]
        %v2504 = vld [vmem:[#allocation8 + $0x238] sm:$0xf]
        %v2505 = vld [vmem:[#allocation8 + $0x23c] sm:$0xf]
        %v2650 = vunpack.c.l.b16 %v2362
        %v2651 = vunpack.c.l.b16 %v2363
        %v2652 = vunpack.c.l.b16 %v2364
        %v2653 = vunpack.c.l.b16 %v2365
        %v2654 = vunpack.c.l.b16 %v2366
        %v2655 = vunpack.c.l.b16 %v2367
        %v2656 = vunpack.c.l.b16 %v2368
        %v2657 = vunpack.c.l.b16 %v2369
        %v2658 = vunpack.c.l.b16 %v2370
        %v2659 = vunpack.c.l.b16 %v2371
        %v2660 = vunpack.c.l.b16 %v2372
        %v2661 = vunpack.c.l.b16 %v2373
        %v2662 = vunpack.c.l.b16 %v2374
        %v2663 = vunpack.c.l.b16 %v2375
        %v2664 = vunpack.c.l.b16 %v2376
        %v2665 = vunpack.c.l.b16 %v2377
        %v2666 = vunpack.c.l.b16 %v2378
        %v2667 = vunpack.c.l.b16 %v2379
        %v2668 = vunpack.c.l.b16 %v2380
        %v2669 = vunpack.c.l.b16 %v2381
        %v2670 = vunpack.c.l.b16 %v2382
        %v2671 = vunpack.c.l.b16 %v2383
        %v2672 = vunpack.c.l.b16 %v2384
        %v2673 = vunpack.c.l.b16 %v2385
        %v2674 = vunpack.c.l.b16 %v2386
        %v2675 = vunpack.c.l.b16 %v2387
        %v2676 = vunpack.c.l.b16 %v2388
        %v2677 = vunpack.c.l.b16 %v2389
        %v2678 = vunpack.c.l.b16 %v2390
        %v2679 = vunpack.c.l.b16 %v2391
        %v2680 = vunpack.c.l.b16 %v2392
        %v2681 = vunpack.c.l.b16 %v2393
        %v2682 = vunpack.c.l.b16 %v2394
        %v2683 = vunpack.c.l.b16 %v2395
        %v2684 = vunpack.c.l.b16 %v2396
        %v2685 = vunpack.c.l.b16 %v2397
        %v2686 = vunpack.c.l.b16 %v2398
        %v2687 = vunpack.c.l.b16 %v2399
        %v2688 = vunpack.c.l.b16 %v2400
        %v2689 = vunpack.c.l.b16 %v2401
        %v2690 = vunpack.c.l.b16 %v2402
        %v2691 = vunpack.c.l.b16 %v2403
        %v2692 = vunpack.c.l.b16 %v2404
        %v2693 = vunpack.c.l.b16 %v2405
        %v2694 = vunpack.c.l.b16 %v2406
        %v2695 = vunpack.c.l.b16 %v2407
        %v2696 = vunpack.c.l.b16 %v2408
        %v2697 = vunpack.c.l.b16 %v2409
        %v2698 = vunpack.c.l.b16 %v2410
        %v2699 = vunpack.c.l.b16 %v2411
        %v2700 = vunpack.c.l.b16 %v2412
        %v2701 = vunpack.c.l.b16 %v2413
        %v2702 = vunpack.c.l.b16 %v2414
        %v2703 = vunpack.c.l.b16 %v2415
        %v2704 = vunpack.c.l.b16 %v2416
        %v2705 = vunpack.c.l.b16 %v2417
        %v2706 = vunpack.c.l.b16 %v2418
        %v2707 = vunpack.c.l.b16 %v2419
        %v2708 = vunpack.c.l.b16 %v2420
        %v2709 = vunpack.c.l.b16 %v2421
        %v2710 = vunpack.c.l.b16 %v2422
        %v2711 = vunpack.c.l.b16 %v2423
        %v2712 = vunpack.c.l.b16 %v2424
        %v2713 = vunpack.c.l.b16 %v2425
        %v2714 = vunpack.c.l.b16 %v2426
        %v2715 = vunpack.c.l.b16 %v2427
        %v2716 = vunpack.c.l.b16 %v2428
        %v2717 = vunpack.c.l.b16 %v2429
        %v2718 = vunpack.c.l.b16 %v2430
        %v2719 = vunpack.c.l.b16 %v2431
        %v2720 = vunpack.c.l.b16 %v2432
        %v2721 = vunpack.c.l.b16 %v2433
        %v2722 = vunpack.c.l.b16 %v2434
        %v2723 = vunpack.c.l.b16 %v2435
        %v2724 = vunpack.c.l.b16 %v2436
        %v2725 = vunpack.c.l.b16 %v2437
        %v2726 = vunpack.c.l.b16 %v2438
        %v2727 = vunpack.c.l.b16 %v2439
        %v2728 = vunpack.c.l.b16 %v2440
        %v2729 = vunpack.c.l.b16 %v2441
        %v2730 = vunpack.c.l.b16 %v2442
        %v2731 = vunpack.c.l.b16 %v2443
        %v2732 = vunpack.c.l.b16 %v2444
        %v2733 = vunpack.c.l.b16 %v2445
        %v2734 = vunpack.c.l.b16 %v2446
        %v2735 = vunpack.c.l.b16 %v2447
        %v2736 = vunpack.c.l.b16 %v2448
        %v2737 = vunpack.c.l.b16 %v2449
        %v2738 = vunpack.c.l.b16 %v2450
        %v2739 = vunpack.c.l.b16 %v2451
        %v2740 = vunpack.c.l.b16 %v2452
        %v2741 = vunpack.c.l.b16 %v2453
        %v2742 = vunpack.c.l.b16 %v2454
        %v2743 = vunpack.c.l.b16 %v2455
        %v2744 = vunpack.c.l.b16 %v2456
        %v2745 = vunpack.c.l.b16 %v2457
        %v2746 = vunpack.c.l.b16 %v2458
        %v2747 = vunpack.c.l.b16 %v2459
        %v2748 = vunpack.c.l.b16 %v2460
        %v2749 = vunpack.c.l.b16 %v2461
        %v2750 = vunpack.c.l.b16 %v2462
        %v2751 = vunpack.c.l.b16 %v2463
        %v2752 = vunpack.c.l.b16 %v2464
        %v2753 = vunpack.c.l.b16 %v2465
        %v2754 = vunpack.c.l.b16 %v2466
        %v2755 = vunpack.c.l.b16 %v2467
        %v2756 = vunpack.c.l.b16 %v2468
        %v2757 = vunpack.c.l.b16 %v2469
        %v2758 = vunpack.c.l.b16 %v2470
        %v2759 = vunpack.c.l.b16 %v2471
        %v2760 = vunpack.c.l.b16 %v2472
        %v2761 = vunpack.c.l.b16 %v2473
        %v2762 = vunpack.c.l.b16 %v2474
        %v2763 = vunpack.c.l.b16 %v2475
        %v2764 = vunpack.c.l.b16 %v2476
        %v2765 = vunpack.c.l.b16 %v2477
        %v2766 = vunpack.c.l.b16 %v2478
        %v2767 = vunpack.c.l.b16 %v2479
        %v2768 = vunpack.c.l.b16 %v2480
        %v2769 = vunpack.c.l.b16 %v2481
        %v2770 = vunpack.c.l.b16 %v2482
        %v2771 = vunpack.c.l.b16 %v2483
        %v2772 = vunpack.c.l.b16 %v2484
        %v2773 = vunpack.c.l.b16 %v2485
        %v2774 = vunpack.c.l.b16 %v2486
        %v2775 = vunpack.c.l.b16 %v2487
        %v2776 = vunpack.c.l.b16 %v2488
        %v2777 = vunpack.c.l.b16 %v2489
        %v2778 = vunpack.c.l.b16 %v2490
        %v2779 = vunpack.c.l.b16 %v2491
        %v2780 = vunpack.c.l.b16 %v2492
        %v2781 = vunpack.c.l.b16 %v2493
        %v2782 = vunpack.c.l.b16 %v2494
        %v2783 = vunpack.c.l.b16 %v2495
        %v2784 = vunpack.c.l.b16 %v2496
        %v2785 = vunpack.c.l.b16 %v2497
        %v2786 = vunpack.c.l.b16 %v2498
        %v2787 = vunpack.c.l.b16 %v2499
        %v2788 = vunpack.c.l.b16 %v2500
        %v2789 = vunpack.c.l.b16 %v2501
        %v2790 = vunpack.c.l.b16 %v2502
        %v2791 = vunpack.c.l.b16 %v2503
        %v2792 = vunpack.c.l.b16 %v2504
        %v2793 = vunpack.c.l.b16 %v2505
        %v2794 = vpack.c.b16 %v2651, %v2650
        %v2795 = vpack.c.b16 %v2653, %v2652
        %v2796 = vpack.c.b16 %v2655, %v2654
        %v2797 = vpack.c.b16 %v2657, %v2656
        %v2798 = vpack.c.b16 %v2659, %v2658
        %v2799 = vpack.c.b16 %v2661, %v2660
        %v2800 = vpack.c.b16 %v2663, %v2662
        %v2801 = vpack.c.b16 %v2665, %v2664
        %v2802 = vpack.c.b16 %v2667, %v2666
        %v2803 = vpack.c.b16 %v2669, %v2668
        %v2804 = vpack.c.b16 %v2671, %v2670
        %v2805 = vpack.c.b16 %v2673, %v2672
        %v2806 = vpack.c.b16 %v2675, %v2674
        %v2807 = vpack.c.b16 %v2677, %v2676
        %v2808 = vpack.c.b16 %v2679, %v2678
        %v2809 = vpack.c.b16 %v2681, %v2680
        %v2810 = vpack.c.b16 %v2683, %v2682
        %v2811 = vpack.c.b16 %v2685, %v2684
        %v2812 = vpack.c.b16 %v2687, %v2686
        %v2813 = vpack.c.b16 %v2689, %v2688
        %v2814 = vpack.c.b16 %v2691, %v2690
        %v2815 = vpack.c.b16 %v2693, %v2692
        %v2816 = vpack.c.b16 %v2695, %v2694
        %v2817 = vpack.c.b16 %v2697, %v2696
        %v2818 = vpack.c.b16 %v2699, %v2698
        %v2819 = vpack.c.b16 %v2701, %v2700
        %v2820 = vpack.c.b16 %v2703, %v2702
        %v2821 = vpack.c.b16 %v2705, %v2704
        %v2822 = vpack.c.b16 %v2707, %v2706
        %v2823 = vpack.c.b16 %v2709, %v2708
        %v2824 = vpack.c.b16 %v2711, %v2710
        %v2825 = vpack.c.b16 %v2713, %v2712
        %v2826 = vpack.c.b16 %v2715, %v2714
        %v2827 = vpack.c.b16 %v2717, %v2716
        %v2828 = vpack.c.b16 %v2719, %v2718
        %v2829 = vpack.c.b16 %v2721, %v2720
        %v2830 = vpack.c.b16 %v2723, %v2722
        %v2831 = vpack.c.b16 %v2725, %v2724
        %v2832 = vpack.c.b16 %v2727, %v2726
        %v2833 = vpack.c.b16 %v2729, %v2728
        %v2834 = vpack.c.b16 %v2731, %v2730
        %v2835 = vpack.c.b16 %v2733, %v2732
        %v2836 = vpack.c.b16 %v2735, %v2734
        %v2837 = vpack.c.b16 %v2737, %v2736
        %v2838 = vpack.c.b16 %v2739, %v2738
        %v2839 = vpack.c.b16 %v2741, %v2740
        %v2840 = vpack.c.b16 %v2743, %v2742
        %v2841 = vpack.c.b16 %v2745, %v2744
        %v2842 = vpack.c.b16 %v2747, %v2746
        %v2843 = vpack.c.b16 %v2749, %v2748
        %v2844 = vpack.c.b16 %v2751, %v2750
        %v2845 = vpack.c.b16 %v2753, %v2752
        %v2846 = vpack.c.b16 %v2755, %v2754
        %v2847 = vpack.c.b16 %v2757, %v2756
        %v2848 = vpack.c.b16 %v2759, %v2758
        %v2849 = vpack.c.b16 %v2761, %v2760
        %v2850 = vpack.c.b16 %v2763, %v2762
        %v2851 = vpack.c.b16 %v2765, %v2764
        %v2852 = vpack.c.b16 %v2767, %v2766
        %v2853 = vpack.c.b16 %v2769, %v2768
        %v2854 = vpack.c.b16 %v2771, %v2770
        %v2855 = vpack.c.b16 %v2773, %v2772
        %v2856 = vpack.c.b16 %v2775, %v2774
        %v2857 = vpack.c.b16 %v2777, %v2776
        %v2858 = vpack.c.b16 %v2779, %v2778
        %v2859 = vpack.c.b16 %v2781, %v2780
        %v2860 = vpack.c.b16 %v2783, %v2782
        %v2861 = vpack.c.b16 %v2785, %v2784
        %v2862 = vpack.c.b16 %v2787, %v2786
        %v2863 = vpack.c.b16 %v2789, %v2788
        %v2864 = vpack.c.b16 %v2791, %v2790
        %v2865 = vpack.c.b16 %v2793, %v2792
        %2938 = vmatprep.subr.bf16.mxu0 0
        %2939 = vmatpush1.bf16.msra.mxu0 %v2801
        %2940 = vmatprep.subr.bf16.mxu0 0
        %2941 = vmatpush1.bf16.msra.mxu0 %v2800
        %2942 = vmatprep.subr.bf16.mxu0 0
        %2943 = vmatpush1.bf16.msra.mxu0 %v2799
        %2944 = vmatprep.subr.bf16.mxu0 0
        %2945 = vmatpush1.bf16.msra.mxu0 %v2798
        %2946 = vmatprep.subr.bf16.mxu0 0
        %2947 = vmatpush1.bf16.msra.mxu0 %v2797
        %2948 = vmatprep.subr.bf16.mxu0 0
        %2949 = vmatpush1.bf16.msra.mxu0 %v2796
        %2950 = vmatprep.subr.bf16.mxu0 0
        %2951 = vmatpush1.bf16.msra.mxu0 %v2795
        %2952 = vmatprep.subr.bf16.mxu0 0
        %2953 = vmatpush1.bf16.msra.mxu0 %v2794
        %2954 = vmatprep.subr.bf16.mxu0 0
        %2955 = vmatpush2.bf16.msra.mxu0 %v2809
        %2956 = vmatprep.subr.bf16.mxu0 0
        %2957 = vmatpush2.bf16.msra.mxu0 %v2808
        %2958 = vmatprep.subr.bf16.mxu0 0
        %2959 = vmatpush2.bf16.msra.mxu0 %v2807
        %2960 = vmatprep.subr.bf16.mxu0 0
        %2961 = vmatpush2.bf16.msra.mxu0 %v2806
        %2962 = vmatprep.subr.bf16.mxu0 0
        %2963 = vmatpush2.bf16.msra.mxu0 %v2805
        %2964 = vmatprep.subr.bf16.mxu0 0
        %2965 = vmatpush2.bf16.msra.mxu0 %v2804
        %2966 = vmatprep.subr.bf16.mxu0 0
        %2967 = vmatpush2.bf16.msra.mxu0 %v2803
        %2968 = vmatprep.subr.bf16.mxu0 0
        %2969 = vmatpush2.bf16.msra.mxu0 %v2802
        %2970 = vmatprep.mubr.bf16.mxu0 %v2090
        %2971 = vmatmul.mubr.bf16.gmra.mxu0 %v2042
        %v2972 = vpop.f32.mrf.mxu0
        %v2973 = vadd.f32 0.0, %v2972
        %v2974 = vpop.f32.mrf.mxu0
        %v2975 = vpop.f32.mrf.mxu0
        %v2976 = vadd.f32 0.0, %v2975
        %v2977 = vpop.f32.mrf.mxu0
        %2978 = vmatprep.mubr.bf16.mxu0 %v2091
        %2979 = vmatmul.mubr.bf16.gmra.mxu0 %v2043
        %v2980 = vpop.f32.mrf.mxu0
        %v2981 = vadd.f32 0.0, %v2980
        %v2982 = vpop.f32.mrf.mxu0
        %v2983 = vpop.f32.mrf.mxu0
        %v2984 = vadd.f32 0.0, %v2983
        %v2985 = vpop.f32.mrf.mxu0
        %2986 = vmatprep.mubr.bf16.mxu0 %v2092
        %2987 = vmatmul.mubr.bf16.gmra.mxu0 %v2044
        %v2988 = vpop.f32.mrf.mxu0
        %v2989 = vadd.f32 0.0, %v2988
        %v2990 = vpop.f32.mrf.mxu0
        %v2991 = vpop.f32.mrf.mxu0
        %v2992 = vadd.f32 0.0, %v2991
        %v2993 = vpop.f32.mrf.mxu0
        %2994 = vmatprep.mubr.bf16.mxu0 %v2093
        %2995 = vmatmul.mubr.bf16.gmra.mxu0 %v2045
        %v2996 = vpop.f32.mrf.mxu0
        %v2997 = vadd.f32 0.0, %v2996
        %v2998 = vpop.f32.mrf.mxu0
        %v2999 = vpop.f32.mrf.mxu0
        %v3000 = vadd.f32 0.0, %v2999
        %v3001 = vpop.f32.mrf.mxu0
        %3002 = vmatprep.mubr.bf16.mxu0 %v2094
        %3003 = vmatmul.mubr.bf16.gmra.mxu0 %v2046
        %v3004 = vpop.f32.mrf.mxu0
        %v3005 = vadd.f32 0.0, %v3004
        %v3006 = vpop.f32.mrf.mxu0
        %v3007 = vpop.f32.mrf.mxu0
        %v3008 = vadd.f32 0.0, %v3007
        %v3009 = vpop.f32.mrf.mxu0
        %3010 = vmatprep.mubr.bf16.mxu0 %v2095
        %3011 = vmatmul.mubr.bf16.gmra.mxu0 %v2047
        %v3012 = vpop.f32.mrf.mxu0
        %v3013 = vadd.f32 0.0, %v3012
        %v3014 = vpop.f32.mrf.mxu0
        %v3015 = vpop.f32.mrf.mxu0
        %v3016 = vadd.f32 0.0, %v3015
        %v3017 = vpop.f32.mrf.mxu0
        %3018 = vmatprep.mubr.bf16.mxu0 %v2096
        %3019 = vmatmul.mubr.bf16.gmra.mxu0 %v2048
        %v3020 = vpop.f32.mrf.mxu0
        %v3021 = vadd.f32 0.0, %v3020
        %v3022 = vpop.f32.mrf.mxu0
        %v3023 = vpop.f32.mrf.mxu0
        %v3024 = vadd.f32 0.0, %v3023
        %v3025 = vpop.f32.mrf.mxu0
        %3026 = vmatprep.mubr.bf16.mxu0 %v2097
        %3027 = vmatmul.mubr.bf16.gmra.mxu0 %v2049
        %v3028 = vpop.f32.mrf.mxu0
        %v3029 = vadd.f32 0.0, %v3028
        %v3030 = vpop.f32.mrf.mxu0
        %v3031 = vpop.f32.mrf.mxu0
        %v3032 = vadd.f32 0.0, %v3031
        %v3033 = vpop.f32.mrf.mxu0
        %3034 = vdwg.mxu0
        %3035 = vmatprep.subr.bf16.mxu0 0
        %3036 = vmatpush1.bf16.msra.mxu0 %v2817
        %3037 = vmatprep.subr.bf16.mxu0 0
        %3038 = vmatpush1.bf16.msra.mxu0 %v2816
        %3039 = vmatprep.subr.bf16.mxu0 0
        %3040 = vmatpush1.bf16.msra.mxu0 %v2815
        %3041 = vmatprep.subr.bf16.mxu0 0
        %3042 = vmatpush1.bf16.msra.mxu0 %v2814
        %3043 = vmatprep.subr.bf16.mxu0 0
        %3044 = vmatpush1.bf16.msra.mxu0 %v2813
        %3045 = vmatprep.subr.bf16.mxu0 0
        %3046 = vmatpush1.bf16.msra.mxu0 %v2812
        %3047 = vmatprep.subr.bf16.mxu0 0
        %3048 = vmatpush1.bf16.msra.mxu0 %v2811
        %3049 = vmatprep.subr.bf16.mxu0 0
        %3050 = vmatpush1.bf16.msra.mxu0 %v2810
        %3051 = vmatprep.subr.bf16.mxu0 0
        %3052 = vmatpush2.bf16.msra.mxu0 %v2825
        %3053 = vmatprep.subr.bf16.mxu0 0
        %3054 = vmatpush2.bf16.msra.mxu0 %v2824
        %3055 = vmatprep.subr.bf16.mxu0 0
        %3056 = vmatpush2.bf16.msra.mxu0 %v2823
        %3057 = vmatprep.subr.bf16.mxu0 0
        %3058 = vmatpush2.bf16.msra.mxu0 %v2822
        %3059 = vmatprep.subr.bf16.mxu0 0
        %3060 = vmatpush2.bf16.msra.mxu0 %v2821
        %3061 = vmatprep.subr.bf16.mxu0 0
        %3062 = vmatpush2.bf16.msra.mxu0 %v2820
        %3063 = vmatprep.subr.bf16.mxu0 0
        %3064 = vmatpush2.bf16.msra.mxu0 %v2819
        %3065 = vmatprep.subr.bf16.mxu0 0
        %3066 = vmatpush2.bf16.msra.mxu0 %v2818
        %3067 = vmatprep.mubr.bf16.mxu0 %v2154
        %3068 = vmatmul.mubr.bf16.gmra.mxu0 %v2122
        %v3069 = vpop.f32.mrf.mxu0
        %v3070 = vadd.f32 %v2973, %v3069
        %v3071 = vpop.f32.mrf.mxu0
        %v3072 = vpop.f32.mrf.mxu0
        %v3073 = vadd.f32 %v2976, %v3072
        %v3074 = vpop.f32.mrf.mxu0
        %3075 = vmatprep.mubr.bf16.mxu0 %v2155
        %3076 = vmatmul.mubr.bf16.gmra.mxu0 %v2123
        %v3077 = vpop.f32.mrf.mxu0
        %v3078 = vadd.f32 %v2981, %v3077
        %v3079 = vpop.f32.mrf.mxu0
        %v3080 = vpop.f32.mrf.mxu0
        %v3081 = vadd.f32 %v2984, %v3080
        %v3082 = vpop.f32.mrf.mxu0
        %3083 = vmatprep.mubr.bf16.mxu0 %v2156
        %3084 = vmatmul.mubr.bf16.gmra.mxu0 %v2124
        %v3085 = vpop.f32.mrf.mxu0
        %v3086 = vadd.f32 %v2989, %v3085
        %v3087 = vpop.f32.mrf.mxu0
        %v3088 = vpop.f32.mrf.mxu0
        %v3089 = vadd.f32 %v2992, %v3088
        %v3090 = vpop.f32.mrf.mxu0
        %3091 = vmatprep.mubr.bf16.mxu0 %v2157
        %3092 = vmatmul.mubr.bf16.gmra.mxu0 %v2125
        %v3093 = vpop.f32.mrf.mxu0
        %v3094 = vadd.f32 %v2997, %v3093
        %v3095 = vpop.f32.mrf.mxu0
        %v3096 = vpop.f32.mrf.mxu0
        %v3097 = vadd.f32 %v3000, %v3096
        %v3098 = vpop.f32.mrf.mxu0
        %3099 = vmatprep.mubr.bf16.mxu0 %v2158
        %3100 = vmatmul.mubr.bf16.gmra.mxu0 %v2126
        %v3101 = vpop.f32.mrf.mxu0
        %v3102 = vadd.f32 %v3005, %v3101
        %v3103 = vpop.f32.mrf.mxu0
        %v3104 = vpop.f32.mrf.mxu0
        %v3105 = vadd.f32 %v3008, %v3104
        %v3106 = vpop.f32.mrf.mxu0
        %3107 = vmatprep.mubr.bf16.mxu0 %v2159
        %3108 = vmatmul.mubr.bf16.gmra.mxu0 %v2127
        %v3109 = vpop.f32.mrf.mxu0
        %v3110 = vadd.f32 %v3013, %v3109
        %v3111 = vpop.f32.mrf.mxu0
        %v3112 = vpop.f32.mrf.mxu0
        %v3113 = vadd.f32 %v3016, %v3112
        %v3114 = vpop.f32.mrf.mxu0
        %3115 = vmatprep.mubr.bf16.mxu0 %v2160
        %3116 = vmatmul.mubr.bf16.gmra.mxu0 %v2128
        %v3117 = vpop.f32.mrf.mxu0
        %v3118 = vadd.f32 %v3021, %v3117
        %v3119 = vpop.f32.mrf.mxu0
        %v3120 = vpop.f32.mrf.mxu0
        %v3121 = vadd.f32 %v3024, %v3120
        %v3122 = vpop.f32.mrf.mxu0
        %3123 = vmatprep.mubr.bf16.mxu0 %v2161
        %3124 = vmatmul.mubr.bf16.gmra.mxu0 %v2129
        %v3125 = vpop.f32.mrf.mxu0
        %v3126 = vadd.f32 %v3029, %v3125
        %v3127 = vpop.f32.mrf.mxu0
        %v3128 = vpop.f32.mrf.mxu0
        %v3129 = vadd.f32 %v3032, %v3128
        %v3130 = vpop.f32.mrf.mxu0
        %3131 = vdwg.mxu0
        %3132 = vmatprep.subr.bf16.mxu0 0
        %3133 = vmatpush1.bf16.msra.mxu0 %v2833
        %3134 = vmatprep.subr.bf16.mxu0 0
        %3135 = vmatpush1.bf16.msra.mxu0 %v2832
        %3136 = vmatprep.subr.bf16.mxu0 0
        %3137 = vmatpush1.bf16.msra.mxu0 %v2831
        %3138 = vmatprep.subr.bf16.mxu0 0
        %3139 = vmatpush1.bf16.msra.mxu0 %v2830
        %3140 = vmatprep.subr.bf16.mxu0 0
        %3141 = vmatpush1.bf16.msra.mxu0 %v2829
        %3142 = vmatprep.subr.bf16.mxu0 0
        %3143 = vmatpush1.bf16.msra.mxu0 %v2828
        %3144 = vmatprep.subr.bf16.mxu0 0
        %3145 = vmatpush1.bf16.msra.mxu0 %v2827
        %3146 = vmatprep.subr.bf16.mxu0 0
        %3147 = vmatpush1.bf16.msra.mxu0 %v2826
        %3148 = vmatprep.subr.bf16.mxu0 0
        %3149 = vmatpush2.bf16.msra.mxu0 %v2841
        %3150 = vmatprep.subr.bf16.mxu0 0
        %3151 = vmatpush2.bf16.msra.mxu0 %v2840
        %3152 = vmatprep.subr.bf16.mxu0 0
        %3153 = vmatpush2.bf16.msra.mxu0 %v2839
        %3154 = vmatprep.subr.bf16.mxu0 0
        %3155 = vmatpush2.bf16.msra.mxu0 %v2838
        %3156 = vmatprep.subr.bf16.mxu0 0
        %3157 = vmatpush2.bf16.msra.mxu0 %v2837
        %3158 = vmatprep.subr.bf16.mxu0 0
        %3159 = vmatpush2.bf16.msra.mxu0 %v2836
        %3160 = vmatprep.subr.bf16.mxu0 0
        %3161 = vmatpush2.bf16.msra.mxu0 %v2835
        %3162 = vmatprep.subr.bf16.mxu0 0
        %3163 = vmatpush2.bf16.msra.mxu0 %v2834
        %3164 = vmatprep.mubr.bf16.mxu0 %v2234
        %3165 = vmatmul.mubr.bf16.gmra.mxu0 %v2202
        %v3166 = vpop.f32.mrf.mxu0
        %v3167 = vadd.f32 %v3070, %v3166
        %v3168 = vpop.f32.mrf.mxu0
        %v3169 = vpop.f32.mrf.mxu0
        %v3170 = vadd.f32 %v3073, %v3169
        %v3171 = vpop.f32.mrf.mxu0
        %3172 = vmatprep.mubr.bf16.mxu0 %v2235
        %3173 = vmatmul.mubr.bf16.gmra.mxu0 %v2203
        %v3174 = vpop.f32.mrf.mxu0
        %v3175 = vadd.f32 %v3078, %v3174
        %v3176 = vpop.f32.mrf.mxu0
        %v3177 = vpop.f32.mrf.mxu0
        %v3178 = vadd.f32 %v3081, %v3177
        %v3179 = vpop.f32.mrf.mxu0
        %3180 = vmatprep.mubr.bf16.mxu0 %v2236
        %3181 = vmatmul.mubr.bf16.gmra.mxu0 %v2204
        %v3182 = vpop.f32.mrf.mxu0
        %v3183 = vadd.f32 %v3086, %v3182
        %v3184 = vpop.f32.mrf.mxu0
        %v3185 = vpop.f32.mrf.mxu0
        %v3186 = vadd.f32 %v3089, %v3185
        %v3187 = vpop.f32.mrf.mxu0
        %3188 = vmatprep.mubr.bf16.mxu0 %v2237
        %3189 = vmatmul.mubr.bf16.gmra.mxu0 %v2205
        %v3190 = vpop.f32.mrf.mxu0
        %v3191 = vadd.f32 %v3094, %v3190
        %v3192 = vpop.f32.mrf.mxu0
        %v3193 = vpop.f32.mrf.mxu0
        %v3194 = vadd.f32 %v3097, %v3193
        %v3195 = vpop.f32.mrf.mxu0
        %3196 = vmatprep.mubr.bf16.mxu0 %v2238
        %3197 = vmatmul.mubr.bf16.gmra.mxu0 %v2206
        %v3198 = vpop.f32.mrf.mxu0
        %v3199 = vadd.f32 %v3102, %v3198
        %v3200 = vpop.f32.mrf.mxu0
        %v3201 = vpop.f32.mrf.mxu0
        %v3202 = vadd.f32 %v3105, %v3201
        %v3203 = vpop.f32.mrf.mxu0
        %3204 = vmatprep.mubr.bf16.mxu0 %v2239
        %3205 = vmatmul.mubr.bf16.gmra.mxu0 %v2207
        %v3206 = vpop.f32.mrf.mxu0
        %v3207 = vadd.f32 %v3110, %v3206
        %v3208 = vpop.f32.mrf.mxu0
        %v3209 = vpop.f32.mrf.mxu0
        %v3210 = vadd.f32 %v3113, %v3209
        %v3211 = vpop.f32.mrf.mxu0
        %3212 = vmatprep.mubr.bf16.mxu0 %v2240
        %3213 = vmatmul.mubr.bf16.gmra.mxu0 %v2208
        %v3214 = vpop.f32.mrf.mxu0
        %v3215 = vadd.f32 %v3118, %v3214
        %v3216 = vpop.f32.mrf.mxu0
        %v3217 = vpop.f32.mrf.mxu0
        %v3218 = vadd.f32 %v3121, %v3217
        %v3219 = vpop.f32.mrf.mxu0
        %3220 = vmatprep.mubr.bf16.mxu0 %v2241
        %3221 = vmatmul.mubr.bf16.gmra.mxu0 %v2209
        %v3222 = vpop.f32.mrf.mxu0
        %v3223 = vadd.f32 %v3126, %v3222
        %v3224 = vpop.f32.mrf.mxu0
        %v3225 = vpop.f32.mrf.mxu0
        %v3226 = vadd.f32 %v3129, %v3225
        %v3227 = vpop.f32.mrf.mxu0
        %3228 = vdwg.mxu0
        %3229 = vmatprep.subr.bf16.mxu0 0
        %3230 = vmatpush1.bf16.msra.mxu0 %v2849
        %3231 = vmatprep.subr.bf16.mxu0 0
        %3232 = vmatpush1.bf16.msra.mxu0 %v2848
        %3233 = vmatprep.subr.bf16.mxu0 0
        %3234 = vmatpush1.bf16.msra.mxu0 %v2847
        %3235 = vmatprep.subr.bf16.mxu0 0
        %3236 = vmatpush1.bf16.msra.mxu0 %v2846
        %3237 = vmatprep.subr.bf16.mxu0 0
        %3238 = vmatpush1.bf16.msra.mxu0 %v2845
        %3239 = vmatprep.subr.bf16.mxu0 0
        %3240 = vmatpush1.bf16.msra.mxu0 %v2844
        %3241 = vmatprep.subr.bf16.mxu0 0
        %3242 = vmatpush1.bf16.msra.mxu0 %v2843
        %3243 = vmatprep.subr.bf16.mxu0 0
        %3244 = vmatpush1.bf16.msra.mxu0 %v2842
        %3245 = vmatprep.subr.bf16.mxu0 0
        %3246 = vmatpush2.bf16.msra.mxu0 %v2857
        %3247 = vmatprep.subr.bf16.mxu0 0
        %3248 = vmatpush2.bf16.msra.mxu0 %v2856
        %3249 = vmatprep.subr.bf16.mxu0 0
        %3250 = vmatpush2.bf16.msra.mxu0 %v2855
        %3251 = vmatprep.subr.bf16.mxu0 0
        %3252 = vmatpush2.bf16.msra.mxu0 %v2854
        %3253 = vmatprep.subr.bf16.mxu0 0
        %3254 = vmatpush2.bf16.msra.mxu0 %v2853
        %3255 = vmatprep.subr.bf16.mxu0 0
        %3256 = vmatpush2.bf16.msra.mxu0 %v2852
        %3257 = vmatprep.subr.bf16.mxu0 0
        %3258 = vmatpush2.bf16.msra.mxu0 %v2851
        %3259 = vmatprep.subr.bf16.mxu0 0
        %3260 = vmatpush2.bf16.msra.mxu0 %v2850
        %3261 = vmatprep.mubr.bf16.mxu0 %v2314
        %3262 = vmatmul.mubr.bf16.gmra.mxu0 %v2266
        %v3263 = vpop.f32.mrf.mxu0
        %v3264 = vadd.f32 %v3167, %v3263
        %v3265 = vpop.f32.mrf.mxu0
        %v3266 = vpop.f32.mrf.mxu0
        %v3267 = vadd.f32 %v3170, %v3266
        %v3268 = vpop.f32.mrf.mxu0
        %3269 = vmatprep.mubr.bf16.mxu0 %v2315
        %3270 = vmatmul.mubr.bf16.gmra.mxu0 %v2267
        %v3271 = vpop.f32.mrf.mxu0
        %v3272 = vadd.f32 %v3175, %v3271
        %v3273 = vpop.f32.mrf.mxu0
        %v3274 = vpop.f32.mrf.mxu0
        %v3275 = vadd.f32 %v3178, %v3274
        %v3276 = vpop.f32.mrf.mxu0
        %3277 = vmatprep.mubr.bf16.mxu0 %v2316
        %3278 = vmatmul.mubr.bf16.gmra.mxu0 %v2268
        %v3279 = vpop.f32.mrf.mxu0
        %v3280 = vadd.f32 %v3183, %v3279
        %v3281 = vpop.f32.mrf.mxu0
        %v3282 = vpop.f32.mrf.mxu0
        %v3283 = vadd.f32 %v3186, %v3282
        %v3284 = vpop.f32.mrf.mxu0
        %3285 = vmatprep.mubr.bf16.mxu0 %v2317
        %3286 = vmatmul.mubr.bf16.gmra.mxu0 %v2269
        %v3287 = vpop.f32.mrf.mxu0
        %v3288 = vadd.f32 %v3191, %v3287
        %v3289 = vpop.f32.mrf.mxu0
        %v3290 = vpop.f32.mrf.mxu0
        %v3291 = vadd.f32 %v3194, %v3290
        %v3292 = vpop.f32.mrf.mxu0
        %3293 = vmatprep.mubr.bf16.mxu0 %v2318
        %3294 = vmatmul.mubr.bf16.gmra.mxu0 %v2270
        %v3295 = vpop.f32.mrf.mxu0
        %v3296 = vadd.f32 %v3199, %v3295
        %v3297 = vpop.f32.mrf.mxu0
        %v3298 = vpop.f32.mrf.mxu0
        %v3299 = vadd.f32 %v3202, %v3298
        %v3300 = vpop.f32.mrf.mxu0
        %3301 = vmatprep.mubr.bf16.mxu0 %v2319
        %3302 = vmatmul.mubr.bf16.gmra.mxu0 %v2271
        %v3303 = vpop.f32.mrf.mxu0
        %v3304 = vadd.f32 %v3207, %v3303
        %v3305 = vpop.f32.mrf.mxu0
        %v3306 = vpop.f32.mrf.mxu0
        %v3307 = vadd.f32 %v3210, %v3306
        %v3308 = vpop.f32.mrf.mxu0
        %3309 = vmatprep.mubr.bf16.mxu0 %v2320
        %3310 = vmatmul.mubr.bf16.gmra.mxu0 %v2272
        %v3311 = vpop.f32.mrf.mxu0
        %v3312 = vadd.f32 %v3215, %v3311
        %v3313 = vpop.f32.mrf.mxu0
        %v3314 = vpop.f32.mrf.mxu0
        %v3315 = vadd.f32 %v3218, %v3314
        %v3316 = vpop.f32.mrf.mxu0
        %3317 = vmatprep.mubr.bf16.mxu0 %v2321
        %3318 = vmatmul.mubr.bf16.gmra.mxu0 %v2273
        %v3319 = vpop.f32.mrf.mxu0
        %v3320 = vadd.f32 %v3223, %v3319
        %v3321 = vpop.f32.mrf.mxu0
        %v3322 = vpop.f32.mrf.mxu0
        %v3323 = vadd.f32 %v3226, %v3322
        %v3324 = vpop.f32.mrf.mxu0
        %3325 = vdwg.mxu0
        %3326 = vmatprep.subr.bf16.mxu0 0
        %3327 = vmatpush1.bf16.msra.mxu0 %v2865
        %3328 = vmatprep.subr.bf16.mxu0 0
        %3329 = vmatpush1.bf16.msra.mxu0 %v2864
        %3330 = vmatprep.subr.bf16.mxu0 0
        %3331 = vmatpush1.bf16.msra.mxu0 %v2863
        %3332 = vmatprep.subr.bf16.mxu0 0
        %3333 = vmatpush1.bf16.msra.mxu0 %v2862
        %3334 = vmatprep.subr.bf16.mxu0 0
        %3335 = vmatpush1.bf16.msra.mxu0 %v2861
        %3336 = vmatprep.subr.bf16.mxu0 0
        %3337 = vmatpush1.bf16.msra.mxu0 %v2860
        %3338 = vmatprep.subr.bf16.mxu0 0
        %3339 = vmatpush1.bf16.msra.mxu0 %v2859
        %3340 = vmatprep.subr.bf16.mxu0 0
        %3341 = vmatpush1.bf16.msra.mxu0 %v2858
        %3342 = vmatprep.subr.bf16.mxu0 0
        %3343 = vmatpush2.bf16.msra.mxu0 0
        %3344 = vmatprep.subr.bf16.mxu0 0
        %3345 = vmatpush2.bf16.msra.mxu0 0
        %3346 = vmatprep.subr.bf16.mxu0 0
        %3347 = vmatpush2.bf16.msra.mxu0 0
        %3348 = vmatprep.subr.bf16.mxu0 0
        %3349 = vmatpush2.bf16.msra.mxu0 0
        %3350 = vmatprep.subr.bf16.mxu0 0
        %3351 = vmatpush2.bf16.msra.mxu0 0
        %3352 = vmatprep.subr.bf16.mxu0 0
        %3353 = vmatpush2.bf16.msra.mxu0 0
        %3354 = vmatprep.subr.bf16.mxu0 0
        %3355 = vmatpush2.bf16.msra.mxu0 0
        %3356 = vmatprep.subr.bf16.mxu0 0
        %3357 = vmatpush2.bf16.msra.mxu0 0
        %3358 = vmatprep.mubr.bf16.mxu0 0
        %3359 = vmatmul.mubr.bf16.gmra.mxu0 %v2346
        %v3360 = vpop.f32.mrf.mxu0
        %v3361 = vadd.f32 %v3264, %v3360
        %v3362 = vpop.f32.mrf.mxu0
        %v3363 = vpop.f32.mrf.mxu0
        %v3364 = vadd.f32 %v3267, %v3363
        %v3365 = vpop.f32.mrf.mxu0
        %3366 = vmatprep.mubr.bf16.mxu0 0
        %3367 = vmatmul.mubr.bf16.gmra.mxu0 %v2347
        %v3368 = vpop.f32.mrf.mxu0
        %v3369 = vadd.f32 %v3272, %v3368
        %v3370 = vpop.f32.mrf.mxu0
        %v3371 = vpop.f32.mrf.mxu0
        %v3372 = vadd.f32 %v3275, %v3371
        %v3373 = vpop.f32.mrf.mxu0
        %3374 = vmatprep.mubr.bf16.mxu0 0
        %3375 = vmatmul.mubr.bf16.gmra.mxu0 %v2348
        %v3376 = vpop.f32.mrf.mxu0
        %v3377 = vadd.f32 %v3280, %v3376
        %v3378 = vpop.f32.mrf.mxu0
        %v3379 = vpop.f32.mrf.mxu0
        %v3380 = vadd.f32 %v3283, %v3379
        %v3381 = vpop.f32.mrf.mxu0
        %3382 = vmatprep.mubr.bf16.mxu0 0
        %3383 = vmatmul.mubr.bf16.gmra.mxu0 %v2349
        %v3384 = vpop.f32.mrf.mxu0
        %v3385 = vadd.f32 %v3288, %v3384
        %v3386 = vpop.f32.mrf.mxu0
        %v3387 = vpop.f32.mrf.mxu0
        %v3388 = vadd.f32 %v3291, %v3387
        %v3389 = vpop.f32.mrf.mxu0
        %3390 = vmatprep.mubr.bf16.mxu0 0
        %3391 = vmatmul.mubr.bf16.gmra.mxu0 %v2350
        %v3392 = vpop.f32.mrf.mxu0
        %v3393 = vadd.f32 %v3296, %v3392
        %v3394 = vpop.f32.mrf.mxu0
        %v3395 = vpop.f32.mrf.mxu0
        %v3396 = vadd.f32 %v3299, %v3395
        %v3397 = vpop.f32.mrf.mxu0
        %3398 = vmatprep.mubr.bf16.mxu0 0
        %3399 = vmatmul.mubr.bf16.gmra.mxu0 %v2351
        %v3400 = vpop.f32.mrf.mxu0
        %v3401 = vadd.f32 %v3304, %v3400
        %v3402 = vpop.f32.mrf.mxu0
        %v3403 = vpop.f32.mrf.mxu0
        %v3404 = vadd.f32 %v3307, %v3403
        %v3405 = vpop.f32.mrf.mxu0
        %3406 = vmatprep.mubr.bf16.mxu0 0
        %3407 = vmatmul.mubr.bf16.gmra.mxu0 %v2352
        %v3408 = vpop.f32.mrf.mxu0
        %v3409 = vadd.f32 %v3312, %v3408
        %v3410 = vpop.f32.mrf.mxu0
        %v3411 = vpop.f32.mrf.mxu0
        %v3412 = vadd.f32 %v3315, %v3411
        %v3413 = vpop.f32.mrf.mxu0
        %3414 = vmatprep.mubr.bf16.mxu0 0
        %3415 = vmatmul.mubr.bf16.gmra.mxu0 %v2353
        %v3416 = vpop.f32.mrf.mxu0
        %v3417 = vadd.f32 %v3320, %v3416
        %v3418 = vpop.f32.mrf.mxu0
        %v3419 = vpop.f32.mrf.mxu0
        %v3420 = vadd.f32 %v3323, %v3419
        %v3421 = vpop.f32.mrf.mxu0
        %3422 = vdwg.mxu0
        %v3423 = vld [vmem:[%s5] sm:$0x1]
        %v3425 = vlaneseq
        %v3426 = vshrl.u32 %v3425, 7
        %v3427 = vsub.s32 0, %v3426
        %v3428 = vrot.slane %v3423, %v3427
        %v3430 = vmul.f32 %v3361, %v3428
        %v3431 = vmul.f32 %v3364, %v3428
        %v3432 = vmul.f32 %v3369, %v3428
        %v3433 = vmul.f32 %v3372, %v3428
        %v3434 = vmul.f32 %v3377, %v3428
        %v3435 = vmul.f32 %v3380, %v3428
        %v3436 = vmul.f32 %v3385, %v3428
        %v3437 = vmul.f32 %v3388, %v3428
        %v3438 = vmul.f32 %v3393, %v3428
        %v3439 = vmul.f32 %v3396, %v3428
        %v3440 = vmul.f32 %v3401, %v3428
        %v3441 = vmul.f32 %v3404, %v3428
        %v3442 = vmul.f32 %v3409, %v3428
        %v3443 = vmul.f32 %v3412, %v3428
        %v3444 = vmul.f32 %v3417, %v3428
        %v3445 = vmul.f32 %v3420, %v3428
        %v3446 = vld [vmem:[%s6] sm:$0x1]
        %v3448 = vlaneseq
        %v3449 = vshrl.u32 %v3448, 7
        %v3450 = vsub.s32 0, %v3449
        %v3451 = vrot.slane %v3446, %v3450
        %v3453 = vadd.f32 %v3430, %v3451
        %v3454 = vadd.f32 %v3431, %v3451
        %v3455 = vadd.f32 %v3432, %v3451
        %v3456 = vadd.f32 %v3433, %v3451
        %v3457 = vadd.f32 %v3434, %v3451
        %v3458 = vadd.f32 %v3435, %v3451
        %v3459 = vadd.f32 %v3436, %v3451
        %v3460 = vadd.f32 %v3437, %v3451
        %v3461 = vadd.f32 %v3438, %v3451
        %v3462 = vadd.f32 %v3439, %v3451
        %v3463 = vadd.f32 %v3440, %v3451
        %v3464 = vadd.f32 %v3441, %v3451
        %v3465 = vadd.f32 %v3442, %v3451
        %v3466 = vadd.f32 %v3443, %v3451
        %v3467 = vadd.f32 %v3444, %v3451
        %v3468 = vadd.f32 %v3445, %v3451
        %v3469 = vmax.f32 %v3453, 0.0
        %v3470 = vmax.f32 %v3454, 0.0
        %v3471 = vmax.f32 %v3455, 0.0
        %v3472 = vmax.f32 %v3456, 0.0
        %v3473 = vmax.f32 %v3457, 0.0
        %v3474 = vmax.f32 %v3458, 0.0
        %v3475 = vmax.f32 %v3459, 0.0
        %v3476 = vmax.f32 %v3460, 0.0
        %v3477 = vmax.f32 %v3461, 0.0
        %v3478 = vmax.f32 %v3462, 0.0
        %v3479 = vmax.f32 %v3463, 0.0
        %v3480 = vmax.f32 %v3464, 0.0
        %v3481 = vmax.f32 %v3465, 0.0
        %v3482 = vmax.f32 %v3466, 0.0
        %v3483 = vmax.f32 %v3467, 0.0
        %v3484 = vmax.f32 %v3468, 0.0
        %v3485 = vpack.c.bf16 %v3470, %v3469
        %v3486 = vpack.c.bf16 %v3472, %v3471
        %v3487 = vpack.c.bf16 %v3474, %v3473
        %v3488 = vpack.c.bf16 %v3476, %v3475
        %v3489 = vpack.c.bf16 %v3478, %v3477
        %v3490 = vpack.c.bf16 %v3480, %v3479
        %v3491 = vpack.c.bf16 %v3482, %v3481
        %v3492 = vpack.c.bf16 %v3484, %v3483
        %s3493 = sadd.s32 %s533, 1
        %s3494 = smul.u32 %s3493, 2
        %s3495 = smul.addr %s3494, 4
        %s3496 = scalar_lea.vmem %s472, %s3495 [#allocation3]
        %v3497 = vld [vmem:[%s3496] sm:$0xf]
        %v3498 = vld [vmem:[%s3496 + $0x4] sm:$0xf]
        %v3499 = vld [vmem:[%s3496 + $0x8] sm:$0xf]
        %v3500 = vld [vmem:[%s3496 + $0xc] sm:$0xf]
        %v3501 = vld [vmem:[%s3496 + $0x10] sm:$0xf]
        %v3502 = vld [vmem:[%s3496 + $0x14] sm:$0xf]
        %v3503 = vld [vmem:[%s3496 + $0x18] sm:$0xf]
        %v3504 = vld [vmem:[%s3496 + $0x1c] sm:$0xf]
        %v3505 = vld [vmem:[%s3496 + $0x20] sm:$0xf]
        %v3506 = vld [vmem:[%s3496 + $0x24] sm:$0xf]
        %v3507 = vld [vmem:[%s3496 + $0x28] sm:$0xf]
        %v3508 = vld [vmem:[%s3496 + $0x2c] sm:$0xf]
        %v3509 = vld [vmem:[%s3496 + $0x30] sm:$0xf]
        %v3510 = vld [vmem:[%s3496 + $0x34] sm:$0xf]
        %v3511 = vld [vmem:[%s3496 + $0x38] sm:$0xf]
        %v3512 = vld [vmem:[%s3496 + $0x3c] sm:$0xf]
        %v3513 = vld [vmem:[#allocation11] sm:$0xf]
        %v3514 = vld [vmem:[#allocation11 + $0x4] sm:$0xf]
        %v3515 = vld [vmem:[#allocation11 + $0x8] sm:$0xf]
        %v3516 = vld [vmem:[#allocation11 + $0xc] sm:$0xf]
        %v3517 = vld [vmem:[#allocation11 + $0x10] sm:$0xf]
        %v3518 = vld [vmem:[#allocation11 + $0x14] sm:$0xf]
        %v3519 = vld [vmem:[#allocation11 + $0x18] sm:$0xf]
        %v3520 = vld [vmem:[#allocation11 + $0x1c] sm:$0xf]
        %v3521 = vld [vmem:[#allocation11 + $0x20] sm:$0xf]
        %v3522 = vld [vmem:[#allocation11 + $0x24] sm:$0xf]
        %v3523 = vld [vmem:[#allocation11 + $0x28] sm:$0xf]
        %v3524 = vld [vmem:[#allocation11 + $0x2c] sm:$0xf]
        %v3525 = vld [vmem:[#allocation11 + $0x30] sm:$0xf]
        %v3526 = vld [vmem:[#allocation11 + $0x34] sm:$0xf]
        %v3527 = vld [vmem:[#allocation11 + $0x38] sm:$0xf]
        %v3528 = vld [vmem:[#allocation11 + $0x3c] sm:$0xf]
        %v3545 = vunpack.c.l.b16 %v3497
        %v3546 = vunpack.c.l.b16 %v3498
        %v3547 = vunpack.c.l.b16 %v3499
        %v3548 = vunpack.c.l.b16 %v3500
        %v3549 = vunpack.c.l.b16 %v3501
        %v3550 = vunpack.c.l.b16 %v3502
        %v3551 = vunpack.c.l.b16 %v3503
        %v3552 = vunpack.c.l.b16 %v3504
        %v3553 = vunpack.c.l.b16 %v3505
        %v3554 = vunpack.c.l.b16 %v3506
        %v3555 = vunpack.c.l.b16 %v3507
        %v3556 = vunpack.c.l.b16 %v3508
        %v3557 = vunpack.c.l.b16 %v3509
        %v3558 = vunpack.c.l.b16 %v3510
        %v3559 = vunpack.c.l.b16 %v3511
        %v3560 = vunpack.c.l.b16 %v3512
        %v3561 = vpack.c.b16 %v3546, %v3545
        %v3562 = vpack.c.b16 %v3548, %v3547
        %v3563 = vpack.c.b16 %v3550, %v3549
        %v3564 = vpack.c.b16 %v3552, %v3551
        %v3565 = vpack.c.b16 %v3554, %v3553
        %v3566 = vpack.c.b16 %v3556, %v3555
        %v3567 = vpack.c.b16 %v3558, %v3557
        %v3568 = vpack.c.b16 %v3560, %v3559
        %v3593 = vunpack.c.l.b16 %v3513
        %v3594 = vunpack.c.l.b16 %v3514
        %v3595 = vunpack.c.l.b16 %v3515
        %v3596 = vunpack.c.l.b16 %v3516
        %v3597 = vunpack.c.l.b16 %v3517
        %v3598 = vunpack.c.l.b16 %v3518
        %v3599 = vunpack.c.l.b16 %v3519
        %v3600 = vunpack.c.l.b16 %v3520
        %v3601 = vunpack.c.l.b16 %v3521
        %v3602 = vunpack.c.l.b16 %v3522
        %v3603 = vunpack.c.l.b16 %v3523
        %v3604 = vunpack.c.l.b16 %v3524
        %v3605 = vunpack.c.l.b16 %v3525
        %v3606 = vunpack.c.l.b16 %v3526
        %v3607 = vunpack.c.l.b16 %v3527
        %v3608 = vunpack.c.l.b16 %v3528
        %v3609 = vpack.c.b16 %v3594, %v3593
        %v3610 = vpack.c.b16 %v3596, %v3595
        %v3611 = vpack.c.b16 %v3598, %v3597
        %v3612 = vpack.c.b16 %v3600, %v3599
        %v3613 = vpack.c.b16 %v3602, %v3601
        %v3614 = vpack.c.b16 %v3604, %v3603
        %v3615 = vpack.c.b16 %v3606, %v3605
        %v3616 = vpack.c.b16 %v3608, %v3607
        %3625 = vmatprep.subr.bf16.mxu0 0
        %3626 = vmatpush1.bf16.msra.mxu0 %v3616
        %3627 = vmatprep.subr.bf16.mxu0 0
        %3628 = vmatpush1.bf16.msra.mxu0 %v3615
        %3629 = vmatprep.subr.bf16.mxu0 0
        %3630 = vmatpush1.bf16.msra.mxu0 %v3614
        %3631 = vmatprep.subr.bf16.mxu0 0
        %3632 = vmatpush1.bf16.msra.mxu0 %v3613
        %3633 = vmatprep.subr.bf16.mxu0 0
        %3634 = vmatpush1.bf16.msra.mxu0 %v3612
        %3635 = vmatprep.subr.bf16.mxu0 0
        %3636 = vmatpush1.bf16.msra.mxu0 %v3611
        %3637 = vmatprep.subr.bf16.mxu0 0
        %3638 = vmatpush1.bf16.msra.mxu0 %v3610
        %3639 = vmatprep.subr.bf16.mxu0 0
        %3640 = vmatpush1.bf16.msra.mxu0 %v3609
        %3641 = vmatprep.subr.bf16.mxu0 0
        %3642 = vmatpush2.bf16.msra.mxu0 0
        %3643 = vmatprep.subr.bf16.mxu0 0
        %3644 = vmatpush2.bf16.msra.mxu0 0
        %3645 = vmatprep.subr.bf16.mxu0 0
        %3646 = vmatpush2.bf16.msra.mxu0 0
        %3647 = vmatprep.subr.bf16.mxu0 0
        %3648 = vmatpush2.bf16.msra.mxu0 0
        %3649 = vmatprep.subr.bf16.mxu0 0
        %3650 = vmatpush2.bf16.msra.mxu0 0
        %3651 = vmatprep.subr.bf16.mxu0 0
        %3652 = vmatpush2.bf16.msra.mxu0 0
        %3653 = vmatprep.subr.bf16.mxu0 0
        %3654 = vmatpush2.bf16.msra.mxu0 0
        %3655 = vmatprep.subr.bf16.mxu0 0
        %3656 = vmatpush2.bf16.msra.mxu0 0
        %3657 = vmatprep.mubr.bf16.mxu0 0
        %3658 = vmatmul.mubr.bf16.gmra.mxu0 %v3561
        %v3659 = vpop.f32.mrf.mxu0
        %v3660 = vadd.f32 0.0, %v3659
        %v3661 = vpop.f32.mrf.mxu0
        %v3662 = vpop.f32.mrf.mxu0
        %v3663 = vadd.f32 0.0, %v3662
        %v3664 = vpop.f32.mrf.mxu0
        %3665 = vmatprep.mubr.bf16.mxu0 0
        %3666 = vmatmul.mubr.bf16.gmra.mxu0 %v3562
        %v3667 = vpop.f32.mrf.mxu0
        %v3668 = vadd.f32 0.0, %v3667
        %v3669 = vpop.f32.mrf.mxu0
        %v3670 = vpop.f32.mrf.mxu0
        %v3671 = vadd.f32 0.0, %v3670
        %v3672 = vpop.f32.mrf.mxu0
        %3673 = vmatprep.mubr.bf16.mxu0 0
        %3674 = vmatmul.mubr.bf16.gmra.mxu0 %v3563
        %v3675 = vpop.f32.mrf.mxu0
        %v3676 = vadd.f32 0.0, %v3675
        %v3677 = vpop.f32.mrf.mxu0
        %v3678 = vpop.f32.mrf.mxu0
        %v3679 = vadd.f32 0.0, %v3678
        %v3680 = vpop.f32.mrf.mxu0
        %3681 = vmatprep.mubr.bf16.mxu0 0
        %3682 = vmatmul.mubr.bf16.gmra.mxu0 %v3564
        %v3683 = vpop.f32.mrf.mxu0
        %v3684 = vadd.f32 0.0, %v3683
        %v3685 = vpop.f32.mrf.mxu0
        %v3686 = vpop.f32.mrf.mxu0
        %v3687 = vadd.f32 0.0, %v3686
        %v3688 = vpop.f32.mrf.mxu0
        %3689 = vmatprep.mubr.bf16.mxu0 0
        %3690 = vmatmul.mubr.bf16.gmra.mxu0 %v3565
        %v3691 = vpop.f32.mrf.mxu0
        %v3692 = vadd.f32 0.0, %v3691
        %v3693 = vpop.f32.mrf.mxu0
        %v3694 = vpop.f32.mrf.mxu0
        %v3695 = vadd.f32 0.0, %v3694
        %v3696 = vpop.f32.mrf.mxu0
        %3697 = vmatprep.mubr.bf16.mxu0 0
        %3698 = vmatmul.mubr.bf16.gmra.mxu0 %v3566
        %v3699 = vpop.f32.mrf.mxu0
        %v3700 = vadd.f32 0.0, %v3699
        %v3701 = vpop.f32.mrf.mxu0
        %v3702 = vpop.f32.mrf.mxu0
        %v3703 = vadd.f32 0.0, %v3702
        %v3704 = vpop.f32.mrf.mxu0
        %3705 = vmatprep.mubr.bf16.mxu0 0
        %3706 = vmatmul.mubr.bf16.gmra.mxu0 %v3567
        %v3707 = vpop.f32.mrf.mxu0
        %v3708 = vadd.f32 0.0, %v3707
        %v3709 = vpop.f32.mrf.mxu0
        %v3710 = vpop.f32.mrf.mxu0
        %v3711 = vadd.f32 0.0, %v3710
        %v3712 = vpop.f32.mrf.mxu0
        %3713 = vmatprep.mubr.bf16.mxu0 0
        %3714 = vmatmul.mubr.bf16.gmra.mxu0 %v3568
        %v3715 = vpop.f32.mrf.mxu0
        %v3716 = vadd.f32 0.0, %v3715
        %v3717 = vpop.f32.mrf.mxu0
        %v3718 = vpop.f32.mrf.mxu0
        %v3719 = vadd.f32 0.0, %v3718
        %v3720 = vpop.f32.mrf.mxu0
        %3721 = vdwg.mxu0
        %v3722 = vld [vmem:[%s11] sm:$0x1]
        %v3724 = vlaneseq
        %v3725 = vshrl.u32 %v3724, 7
        %v3726 = vsub.s32 0, %v3725
        %v3727 = vrot.slane %v3722, %v3726
        %v3729 = vmul.f32 %v3660, %v3727
        %v3730 = vmul.f32 %v3663, %v3727
        %v3731 = vmul.f32 %v3668, %v3727
        %v3732 = vmul.f32 %v3671, %v3727
        %v3733 = vmul.f32 %v3676, %v3727
        %v3734 = vmul.f32 %v3679, %v3727
        %v3735 = vmul.f32 %v3684, %v3727
        %v3736 = vmul.f32 %v3687, %v3727
        %v3737 = vmul.f32 %v3692, %v3727
        %v3738 = vmul.f32 %v3695, %v3727
        %v3739 = vmul.f32 %v3700, %v3727
        %v3740 = vmul.f32 %v3703, %v3727
        %v3741 = vmul.f32 %v3708, %v3727
        %v3742 = vmul.f32 %v3711, %v3727
        %v3743 = vmul.f32 %v3716, %v3727
        %v3744 = vmul.f32 %v3719, %v3727
        %v3745 = vld [vmem:[%s12] sm:$0x1]
        %v3747 = vlaneseq
        %v3748 = vshrl.u32 %v3747, 7
        %v3749 = vsub.s32 0, %v3748
        %v3750 = vrot.slane %v3745, %v3749
        %v3752 = vadd.f32 %v3729, %v3750
        %v3753 = vadd.f32 %v3730, %v3750
        %v3754 = vadd.f32 %v3731, %v3750
        %v3755 = vadd.f32 %v3732, %v3750
        %v3756 = vadd.f32 %v3733, %v3750
        %v3757 = vadd.f32 %v3734, %v3750
        %v3758 = vadd.f32 %v3735, %v3750
        %v3759 = vadd.f32 %v3736, %v3750
        %v3760 = vadd.f32 %v3737, %v3750
        %v3761 = vadd.f32 %v3738, %v3750
        %v3762 = vadd.f32 %v3739, %v3750
        %v3763 = vadd.f32 %v3740, %v3750
        %v3764 = vadd.f32 %v3741, %v3750
        %v3765 = vadd.f32 %v3742, %v3750
        %v3766 = vadd.f32 %v3743, %v3750
        %v3767 = vadd.f32 %v3744, %v3750
        %v3768 = vld [vmem:[#allocation9] sm:$0xf]
        %v3769 = vld [vmem:[#allocation9 + $0x4] sm:$0xf]
        %v3770 = vld [vmem:[#allocation9 + $0x8] sm:$0xf]
        %v3771 = vld [vmem:[#allocation9 + $0xc] sm:$0xf]
        %v3772 = vld [vmem:[#allocation9 + $0x10] sm:$0xf]
        %v3773 = vld [vmem:[#allocation9 + $0x14] sm:$0xf]
        %v3774 = vld [vmem:[#allocation9 + $0x18] sm:$0xf]
        %v3775 = vld [vmem:[#allocation9 + $0x1c] sm:$0xf]
        %v3776 = vld [vmem:[#allocation9 + $0x20] sm:$0xf]
        %v3777 = vld [vmem:[#allocation9 + $0x24] sm:$0xf]
        %v3778 = vld [vmem:[#allocation9 + $0x28] sm:$0xf]
        %v3779 = vld [vmem:[#allocation9 + $0x2c] sm:$0xf]
        %v3780 = vld [vmem:[#allocation9 + $0x30] sm:$0xf]
        %v3781 = vld [vmem:[#allocation9 + $0x34] sm:$0xf]
        %v3782 = vld [vmem:[#allocation9 + $0x38] sm:$0xf]
        %v3783 = vld [vmem:[#allocation9 + $0x3c] sm:$0xf]
        %v3800 = vunpack.c.l.b16 %v3768
        %v3801 = vunpack.c.l.b16 %v3769
        %v3802 = vunpack.c.l.b16 %v3770
        %v3803 = vunpack.c.l.b16 %v3771
        %v3804 = vunpack.c.l.b16 %v3772
        %v3805 = vunpack.c.l.b16 %v3773
        %v3806 = vunpack.c.l.b16 %v3774
        %v3807 = vunpack.c.l.b16 %v3775
        %v3808 = vunpack.c.l.b16 %v3776
        %v3809 = vunpack.c.l.b16 %v3777
        %v3810 = vunpack.c.l.b16 %v3778
        %v3811 = vunpack.c.l.b16 %v3779
        %v3812 = vunpack.c.l.b16 %v3780
        %v3813 = vunpack.c.l.b16 %v3781
        %v3814 = vunpack.c.l.b16 %v3782
        %v3815 = vunpack.c.l.b16 %v3783
        %v3816 = vpack.c.b16 %v3801, %v3800
        %v3817 = vpack.c.b16 %v3803, %v3802
        %v3818 = vpack.c.b16 %v3805, %v3804
        %v3819 = vpack.c.b16 %v3807, %v3806
        %v3820 = vpack.c.b16 %v3809, %v3808
        %v3821 = vpack.c.b16 %v3811, %v3810
        %v3822 = vpack.c.b16 %v3813, %v3812
        %v3823 = vpack.c.b16 %v3815, %v3814
        %3832 = vmatprep.subr.bf16.mxu0 0
        %3833 = vmatpush1.bf16.msra.mxu0 %v3823
        %3834 = vmatprep.subr.bf16.mxu0 0
        %3835 = vmatpush1.bf16.msra.mxu0 %v3822
        %3836 = vmatprep.subr.bf16.mxu0 0
        %3837 = vmatpush1.bf16.msra.mxu0 %v3821
        %3838 = vmatprep.subr.bf16.mxu0 0
        %3839 = vmatpush1.bf16.msra.mxu0 %v3820
        %3840 = vmatprep.subr.bf16.mxu0 0
        %3841 = vmatpush1.bf16.msra.mxu0 %v3819
        %3842 = vmatprep.subr.bf16.mxu0 0
        %3843 = vmatpush1.bf16.msra.mxu0 %v3818
        %3844 = vmatprep.subr.bf16.mxu0 0
        %3845 = vmatpush1.bf16.msra.mxu0 %v3817
        %3846 = vmatprep.subr.bf16.mxu0 0
        %3847 = vmatpush1.bf16.msra.mxu0 %v3816
        %3848 = vmatprep.subr.bf16.mxu0 0
        %3849 = vmatpush2.bf16.msra.mxu0 0
        %3850 = vmatprep.subr.bf16.mxu0 0
        %3851 = vmatpush2.bf16.msra.mxu0 0
        %3852 = vmatprep.subr.bf16.mxu0 0
        %3853 = vmatpush2.bf16.msra.mxu0 0
        %3854 = vmatprep.subr.bf16.mxu0 0
        %3855 = vmatpush2.bf16.msra.mxu0 0
        %3856 = vmatprep.subr.bf16.mxu0 0
        %3857 = vmatpush2.bf16.msra.mxu0 0
        %3858 = vmatprep.subr.bf16.mxu0 0
        %3859 = vmatpush2.bf16.msra.mxu0 0
        %3860 = vmatprep.subr.bf16.mxu0 0
        %3861 = vmatpush2.bf16.msra.mxu0 0
        %3862 = vmatprep.subr.bf16.mxu0 0
        %3863 = vmatpush2.bf16.msra.mxu0 0
        %3864 = vmatprep.mubr.bf16.mxu0 0
        %3865 = vmatmul.mubr.bf16.gmra.mxu0 %v3485
        %v3866 = vpop.f32.mrf.mxu0
        %v3867 = vadd.f32 0.0, %v3866
        %v3868 = vpop.f32.mrf.mxu0
        %v3869 = vpop.f32.mrf.mxu0
        %v3870 = vadd.f32 0.0, %v3869
        %v3871 = vpop.f32.mrf.mxu0
        %3872 = vmatprep.mubr.bf16.mxu0 0
        %3873 = vmatmul.mubr.bf16.gmra.mxu0 %v3486
        %v3874 = vpop.f32.mrf.mxu0
        %v3875 = vadd.f32 0.0, %v3874
        %v3876 = vpop.f32.mrf.mxu0
        %v3877 = vpop.f32.mrf.mxu0
        %v3878 = vadd.f32 0.0, %v3877
        %v3879 = vpop.f32.mrf.mxu0
        %3880 = vmatprep.mubr.bf16.mxu0 0
        %3881 = vmatmul.mubr.bf16.gmra.mxu0 %v3487
        %v3882 = vpop.f32.mrf.mxu0
        %v3883 = vadd.f32 0.0, %v3882
        %v3884 = vpop.f32.mrf.mxu0
        %v3885 = vpop.f32.mrf.mxu0
        %v3886 = vadd.f32 0.0, %v3885
        %v3887 = vpop.f32.mrf.mxu0
        %3888 = vmatprep.mubr.bf16.mxu0 0
        %3889 = vmatmul.mubr.bf16.gmra.mxu0 %v3488
        %v3890 = vpop.f32.mrf.mxu0
        %v3891 = vadd.f32 0.0, %v3890
        %v3892 = vpop.f32.mrf.mxu0
        %v3893 = vpop.f32.mrf.mxu0
        %v3894 = vadd.f32 0.0, %v3893
        %v3895 = vpop.f32.mrf.mxu0
        %3896 = vmatprep.mubr.bf16.mxu0 0
        %3897 = vmatmul.mubr.bf16.gmra.mxu0 %v3489
        %v3898 = vpop.f32.mrf.mxu0
        %v3899 = vadd.f32 0.0, %v3898
        %v3900 = vpop.f32.mrf.mxu0
        %v3901 = vpop.f32.mrf.mxu0
        %v3902 = vadd.f32 0.0, %v3901
        %v3903 = vpop.f32.mrf.mxu0
        %3904 = vmatprep.mubr.bf16.mxu0 0
        %3905 = vmatmul.mubr.bf16.gmra.mxu0 %v3490
        %v3906 = vpop.f32.mrf.mxu0
        %v3907 = vadd.f32 0.0, %v3906
        %v3908 = vpop.f32.mrf.mxu0
        %v3909 = vpop.f32.mrf.mxu0
        %v3910 = vadd.f32 0.0, %v3909
        %v3911 = vpop.f32.mrf.mxu0
        %3912 = vmatprep.mubr.bf16.mxu0 0
        %3913 = vmatmul.mubr.bf16.gmra.mxu0 %v3491
        %v3914 = vpop.f32.mrf.mxu0
        %v3915 = vadd.f32 0.0, %v3914
        %v3916 = vpop.f32.mrf.mxu0
        %v3917 = vpop.f32.mrf.mxu0
        %v3918 = vadd.f32 0.0, %v3917
        %v3919 = vpop.f32.mrf.mxu0
        %3920 = vmatprep.mubr.bf16.mxu0 0
        %3921 = vmatmul.mubr.bf16.gmra.mxu0 %v3492
        %v3922 = vpop.f32.mrf.mxu0
        %v3923 = vadd.f32 0.0, %v3922
        %v3924 = vpop.f32.mrf.mxu0
        %v3925 = vpop.f32.mrf.mxu0
        %v3926 = vadd.f32 0.0, %v3925
        %v3927 = vpop.f32.mrf.mxu0
        %3928 = vdwg.mxu0
        %v3929 = vld [vmem:[%s8] sm:$0x1]
        %v3931 = vlaneseq
        %v3932 = vshrl.u32 %v3931, 7
        %v3933 = vsub.s32 0, %v3932
        %v3934 = vrot.slane %v3929, %v3933
        %v3936 = vmul.f32 %v3867, %v3934
        %v3937 = vmul.f32 %v3870, %v3934
        %v3938 = vmul.f32 %v3875, %v3934
        %v3939 = vmul.f32 %v3878, %v3934
        %v3940 = vmul.f32 %v3883, %v3934
        %v3941 = vmul.f32 %v3886, %v3934
        %v3942 = vmul.f32 %v3891, %v3934
        %v3943 = vmul.f32 %v3894, %v3934
        %v3944 = vmul.f32 %v3899, %v3934
        %v3945 = vmul.f32 %v3902, %v3934
        %v3946 = vmul.f32 %v3907, %v3934
        %v3947 = vmul.f32 %v3910, %v3934
        %v3948 = vmul.f32 %v3915, %v3934
        %v3949 = vmul.f32 %v3918, %v3934
        %v3950 = vmul.f32 %v3923, %v3934
        %v3951 = vmul.f32 %v3926, %v3934
        %v3952 = vld [vmem:[%s9] sm:$0x1]
        %v3954 = vlaneseq
        %v3955 = vshrl.u32 %v3954, 7
        %v3956 = vsub.s32 0, %v3955
        %v3957 = vrot.slane %v3952, %v3956
        %v3959 = vadd.f32 %v3936, %v3957
        %v3960 = vadd.f32 %v3937, %v3957
        %v3961 = vadd.f32 %v3938, %v3957
        %v3962 = vadd.f32 %v3939, %v3957
        %v3963 = vadd.f32 %v3940, %v3957
        %v3964 = vadd.f32 %v3941, %v3957
        %v3965 = vadd.f32 %v3942, %v3957
        %v3966 = vadd.f32 %v3943, %v3957
        %v3967 = vadd.f32 %v3944, %v3957
        %v3968 = vadd.f32 %v3945, %v3957
        %v3969 = vadd.f32 %v3946, %v3957
        %v3970 = vadd.f32 %v3947, %v3957
        %v3971 = vadd.f32 %v3948, %v3957
        %v3972 = vadd.f32 %v3949, %v3957
        %v3973 = vadd.f32 %v3950, %v3957
        %v3974 = vadd.f32 %v3951, %v3957
        %v3975 = vadd.f32 %v3752, %v3959
        %v3976 = vadd.f32 %v3753, %v3960
        %v3977 = vadd.f32 %v3754, %v3961
        %v3978 = vadd.f32 %v3755, %v3962
        %v3979 = vadd.f32 %v3756, %v3963
        %v3980 = vadd.f32 %v3757, %v3964
        %v3981 = vadd.f32 %v3758, %v3965
        %v3982 = vadd.f32 %v3759, %v3966
        %v3983 = vadd.f32 %v3760, %v3967
        %v3984 = vadd.f32 %v3761, %v3968
        %v3985 = vadd.f32 %v3762, %v3969
        %v3986 = vadd.f32 %v3763, %v3970
        %v3987 = vadd.f32 %v3764, %v3971
        %v3988 = vadd.f32 %v3765, %v3972
        %v3989 = vadd.f32 %v3766, %v3973
        %v3990 = vadd.f32 %v3767, %v3974
        %v3991 = vmax.f32 %v3975, 0.0
        %v3992 = vmax.f32 %v3976, 0.0
        %v3993 = vmax.f32 %v3977, 0.0
        %v3994 = vmax.f32 %v3978, 0.0
        %v3995 = vmax.f32 %v3979, 0.0
        %v3996 = vmax.f32 %v3980, 0.0
        %v3997 = vmax.f32 %v3981, 0.0
        %v3998 = vmax.f32 %v3982, 0.0
        %v3999 = vmax.f32 %v3983, 0.0
        %v4000 = vmax.f32 %v3984, 0.0
        %v4001 = vmax.f32 %v3985, 0.0
        %v4002 = vmax.f32 %v3986, 0.0
        %v4003 = vmax.f32 %v3987, 0.0
        %v4004 = vmax.f32 %v3988, 0.0
        %v4005 = vmax.f32 %v3989, 0.0
        %v4006 = vmax.f32 %v3990, 0.0
        %4007 = vst [vmem:[%s530] sm:$0xff] %v3991
        %4008 = vst [vmem:[%s530 + $0x8] sm:$0xff] %v3992
        %4009 = vst [vmem:[%s530 + $0x10] sm:$0xff] %v3993
        %4010 = vst [vmem:[%s530 + $0x18] sm:$0xff] %v3994
        %4011 = vst [vmem:[%s530 + $0x20] sm:$0xff] %v3995
        %4012 = vst [vmem:[%s530 + $0x28] sm:$0xff] %v3996
        %4013 = vst [vmem:[%s530 + $0x30] sm:$0xff] %v3997
        %4014 = vst [vmem:[%s530 + $0x38] sm:$0xff] %v3998
        %4015 = vst [vmem:[%s530 + $0x40] sm:$0xff] %v3999
        %4016 = vst [vmem:[%s530 + $0x48] sm:$0xff] %v4000
        %4017 = vst [vmem:[%s530 + $0x50] sm:$0xff] %v4001
        %4018 = vst [vmem:[%s530 + $0x58] sm:$0xff] %v4002
        %4019 = vst [vmem:[%s530 + $0x60] sm:$0xff] %v4003
        %4020 = vst [vmem:[%s530 + $0x68] sm:$0xff] %v4004
        %4021 = vst [vmem:[%s530 + $0x70] sm:$0xff] %v4005
        %4022 = vst [vmem:[%s530 + $0x78] sm:$0xff] %v4006
        %s4023 = sand.u32 %s332, 1
        %s4024 = scalar_lea.sflag [#allocation5], %s4023
        %s4025 = sand.u32 %s332, 1
        %s4026 = smul.addr %s4025, 128
        %s4027 = scalar_lea.vmem [#allocation12], %s4026
        // Predicated region
        $region101: #{tpu_custom_call.1} parent=71 // pred_check
          %p4028 = pneg %p342
        $region102: #{tpu_custom_call.1} parent=71 // pred_check_branch
          %4030 = sbr.rel (%p4028) target = $region104
        $region103: #{tpu_custom_call.1} parent=71 // pred_region
          %s4031 = smul.u32 8, %s37
          %s4033 = ssub.s32 2048, 2048
          %4034 = vsyncadd %s4024, %s4033
          %s4035 = smul.addr %s4031, 2
          %s4036 = smul.addr %s36, 32
          %s4037 = sadd.s32 %s4035, %s4036
          %s4038 = smul.addr %s4037, 128
          %s4039 = scalar_lea.hbm %s13, %s4038
          %s4040 = sshll.u32 %s4027, 4
          %s4041 = int_to_ptr.vmem [resolvable:$true] %s4040
          %4046 = dma.vmem_to_hbm [thread:$0]  %s4041, 2048, %s4039, %s4024, 128, 128, 8
        $region104: #{tpu_custom_call.1} parent=71 // pred_fallthru
          _
      $region72: #{tpu_custom_call.1} parent=5 // pred_fallthru
        _
      %p4047 = scmp.le.s32.totalorder 2, %s27
      // Predicated region
      $region105: #{tpu_custom_call.1} parent=5 // pred_check
        %p4048 = pneg %p4047
      $region106: #{tpu_custom_call.1} parent=5 // pred_check_branch
        %4050 = sbr.rel (%p4048) target = $region108
      $region107: #{tpu_custom_call.1} parent=5 // pred_region
        %s4051 = ssub.s32 %s27, 2
        // Predicated region
        $region109: #{tpu_custom_call.1} parent=107 // pred_check
          %p4052 = pneg %p348
        $region110: #{tpu_custom_call.1} parent=107 // pred_check_branch
          %4054 = sbr.rel (%p4052) target = $region112
        $region111: #{tpu_custom_call.1} parent=107 // pred_region
          %s4055 = sand.u32 %s333, 1
          %s4056 = scalar_lea.sflag [#allocation5], %s4055
          %s4057 = sand.u32 %s333, 1
          %s4058 = smul.addr %s4057, 128
          %s4059 = scalar_lea.vmem [#allocation12], %s4058
          %4060 = dma.done %s4056, 2048
        $region112: #{tpu_custom_call.1} parent=107 // pred_fallthru
          _
      $region108: #{tpu_custom_call.1} parent=5 // pred_fallthru
        _
    $region6: #{tpu_custom_call.1} parent=1 // loop_footer
      %s31 = sadd.s32 1, %s27
    $region7: #{tpu_custom_call.1} parent=1 // loop_footer_branch
      %26 = sbr.rel target = $region3
    $region8: #{tpu_custom_call.1} parent=1 // loop_exit
      _
    %4061 = vsyncpa [#allocation4], 1
    %s4062 = scalar_lea.sflag [#allocation4], 1
    %4063 = vsyncpa %s4062, 1
    %4064 = vsyncpa [#allocation7], 1
    %4065 = vsyncpa [#allocation10], 1
    %4066 = vsyncpa [#allocation5], 1
    %s4067 = scalar_lea.sflag [#allocation5], 1
    %4068 = vsyncpa %s4067, 1

</llo_original>
